<compile_context>
chip_gen: v7x
topology: tpu7x:2x2x1
jax: 0.10.0
libtpu: 0.0.40
codegen_flags: <defaults>
</compile_context>

<pallas_src>
import jax
import jax.numpy as jnp
from jax import lax
from jax.experimental import pallas as pl
from jax.experimental.pallas import tpu as pltpu

EPS = 1e-5
MATMUL_DTYPE = jnp.bfloat16            # MXU operand dtype (accumulation is f32)

_TAPS = tuple((ky, kx) for ky in range(3) for kx in range(3))


# ---------------------------------------------------------------------------
# Tiling / VMEM helpers
# ---------------------------------------------------------------------------
def _pick_row_tile(H, W):
    """Largest row strip TH that divides H, leaves >=2 strips (second parallel
    grid axis), keeps TH*W sublane-aligned and bounds per-strip work."""
    for th in range(H // 2, 0, -1):
        if H % th == 0 and (th * W) % 8 == 0 and th * W <= 4096:
            return th
    return H


def _pick_spatial_tile(L):
    for cand in (2048, 1024, 512, 256, 128, 64, 32, 16, 8):
        if L % cand == 0:
            return cand
    return L


def _padded_bytes(shape, dtype):
    """(8,128)-padded VMEM footprint estimate of one buffer."""
    itemsize = jnp.dtype(dtype).itemsize
    dims = list(shape)
    if len(dims) >= 1:
        dims[-1] = -(-dims[-1] // 128) * 128
    if len(dims) >= 2:
        sub = max(8, 32 // itemsize)
        dims[-2] = -(-dims[-2] // sub) * sub
    n = 1
    for d in dims:
        n *= d
    return n * itemsize


def _vmem_limit(entries, headroom=4 << 20):
    """entries: iterable of (shape, dtype, num_buffers)."""
    total = headroom
    for shape, dtype, nbuf in entries:
        total += nbuf * _padded_bytes(shape, dtype)
    # floor well above the scoped default, cap at v7x's 64 MiB physical VMEM
    return int(min(max(total, 32 << 20), 64 << 20))


# ---------------------------------------------------------------------------
# Pass 1: conv1 (channel concat fused via per-tap dots) + one-pass BN1 stats.
# Grid (N, H/TH); padded inputs are whole-image-resident, sliced per strip.
# ---------------------------------------------------------------------------
def conv1_stats_kernel(skip_ref, up_ref, w1_ref, out_ref, stats_ref):
    # skip_ref : (1, H+2, W+2, C2)   zero-padded skip connection (x2), f32
    # up_ref   : (1, H+2, W+2, C1)   zero-padded upsampled x1 (F.pad fused), f32
    # w1_ref   : (9, C2+C1, Cmid)    conv1 weight per tap, bf16
    # out_ref  : (1, TH, W, Cmid)    pre-BN conv1 output strip, f32
    # stats_ref: (1, 1, 2, Cmid)     per-(image,strip) [sum, sum-of-squares]
    TH, W, Cmid = out_ref.shape[1], out_ref.shape[2], out_ref.shape[3]
    C2 = skip_ref.shape[3]
    C1 = up_ref.shape[3]
    r0 = pl.multiple_of(pl.program_id(1) * TH, TH)

    acc = jnp.zeros((TH * W, Cmid), jnp.float32)
    for t, (ky, kx) in enumerate(_TAPS):
        # The channel concat of [x2, upsampled x1] is fused here: two dots per
        # tap, one per half, accumulating into the same f32 accumulator.  No
        # im2col patch matrix (and no 9x VMEM scratch) is ever built.
        sk = skip_ref[0, pl.ds(r0 + ky, TH), kx:kx + W, :]
        upv = up_ref[0, pl.ds(r0 + ky, TH), kx:kx + W, :]
        acc = acc + jnp.dot(sk.reshape(TH * W, C2).astype(MATMUL_DTYPE),
                            w1_ref[t, :C2, :],
                            preferred_element_type=jnp.float32)
        acc = acc + jnp.dot(upv.reshape(TH * W, C1).astype(MATMUL_DTYPE),
                            w1_ref[t, C2:, :],
                            preferred_element_type=jnp.float32)

    out_ref[0] = acc.reshape(TH, W, Cmid)
    # One-pass BN statistics (finalized to scale/shift in JAX).
    stats_ref[0, 0, 0:1, :] = jnp.sum(acc, axis=0, keepdims=True)
    stats_ref[0, 0, 1:2, :] = jnp.sum(acc * acc, axis=0, keepdims=True)


# ---------------------------------------------------------------------------
# Pass 2: BN1 (folded scale/shift) + ReLU + conv2 (per-tap dots) + BN2 stats.
# The padded post-BN1 strip (+1-row halos) lives in a small bf16 scratch.
# ---------------------------------------------------------------------------
def bn_relu_conv2_stats_kernel(h1_ref, scale_ref, shift_ref, w2_ref,
                               out_ref, stats_ref, hp_ref):
    # h1_ref    : (1, H, W, Cmid)    pre-BN conv1 output (resident), f32
    # scale/shift: (1, Cmid)         folded BN1 affine, resident, f32
    # w2_ref    : (9, Cmid, Cout)    conv2 weight per tap, bf16
    # out_ref   : (1, TH*W, Cout)    pre-BN conv2 output strip (flat spatial)
    # stats_ref : (1, 1, 2, Cout)
    # hp_ref    : VMEM scratch (TH+2, W+2, Cmid), bf16 (halo'd padded strip)
    H, W, Cmid = h1_ref.shape[1], h1_ref.shape[2], h1_ref.shape[3]
    TH = hp_ref.shape[0] - 2
    Wp = hp_ref.shape[1]
    Cout = out_ref.shape[2]
    h = pl.program_id(1)
    nh = pl.num_programs(1)
    r0 = pl.multiple_of(h * TH, TH)

    scale = scale_ref[...]            # (1, Cmid)
    shift = shift_ref[...]

    def bn_relu(x):                   # (rows, W, Cmid) f32 -> bf16
        return jnp.maximum(x * scale + shift, 0.0).astype(hp_ref.dtype)

    # Small (TH+2 rows) border/halo handling per strip; interior fully written.
    zcol = jnp.zeros((TH + 2, 1, Cmid), hp_ref.dtype)
    hp_ref[:, 0:1, :] = zcol
    hp_ref[:, Wp - 1:Wp, :] = zcol
    hp_ref[1:TH + 1, 1:W + 1, :] = bn_relu(h1_ref[0, pl.ds(r0, TH), :, :])
    top = bn_relu(h1_ref[0, pl.ds(jnp.maximum(r0 - 1, 0), 1), :, :])
    hp_ref[0:1, 1:W + 1, :] = jnp.where(h > 0, top, jnp.zeros_like(top))
    bot = bn_relu(h1_ref[0, pl.ds(jnp.minimum(r0 + TH, H - 1), 1), :, :])
    hp_ref[TH + 1:TH + 2, 1:W + 1, :] = jnp.where(h < nh - 1, bot,
                                                  jnp.zeros_like(bot))

    acc = jnp.zeros((TH * W, Cout), jnp.float32)
    for t, (ky, kx) in enumerate(_TAPS):
        patch = hp_ref[ky:ky + TH, kx:kx + W, :].reshape(TH * W, Cmid)
        acc = acc + jnp.dot(patch, w2_ref[t],
                            preferred_element_type=jnp.float32)

    out_ref[0] = acc
    stats_ref[0, 0, 0:1, :] = jnp.sum(acc, axis=0, keepdims=True)
    stats_ref[0, 0, 1:2, :] = jnp.sum(acc * acc, axis=0, keepdims=True)


# ---------------------------------------------------------------------------
# Pass 3: BN2 + ReLU.  Per-channel scale/shift stay resident ((1,1,Cout), no
# length-L tiling); runs in place over h2_pre via input_output_aliases.
# ---------------------------------------------------------------------------
def bn_relu_kernel(x_ref, scale_ref, shift_ref, o_ref):
    o_ref[...] = jnp.maximum(x_ref[...] * scale_ref[...] + shift_ref[...], 0.0)


def _stats_to_scale_shift(stats, gamma, beta, count):
    """stats: (N, NH, 2, C) per-strip [sum, sumsq] -> folded BN scale/shift."""
    s = jnp.sum(stats[..., 0, :], axis=(0, 1))
    ss = jnp.sum(stats[..., 1, :], axis=(0, 1))
    mean = s / count
    var = jnp.maximum(ss / count - mean * mean, 0.0)      # biased batch var
    scale = gamma * lax.rsqrt(var + EPS)
    shift = beta - mean * scale
    return scale, shift


# ---------------------------------------------------------------------------
# DoubleConv wrapper: three tiled pallas_calls + tiny JAX stat reductions.
# ---------------------------------------------------------------------------
def double_conv_pallas(skip_p, up_p, params):
    """skip_p / up_p: (N, H+2, W+2, C2/C1) zero-padded halves of the concat."""
    w1, g1, be1, w2, g2, be2 = params
    N, Hp, Wp, C2 = skip_p.shape
    C1 = up_p.shape[-1]
    Cin = C2 + C1
    H, W = Hp - 2, Wp - 2
    Cmid = w1.shape[-1]
    Cout = w2.shape[-1]
    assert w1.shape[:3] == (3, 3, Cin) and w2.shape[:3] == (3, 3, Cmid)

    TH = _pick_row_tile(H, W)
    NH = H // TH

    w1t = w1.reshape(9, Cin, Cmid).astype(MATMUL_DTYPE)   # per-tap weight slabs
    w2t = w2.reshape(9, Cmid, Cout).astype(MATMUL_DTYPE)

    parallel2 = ("parallel", "parallel")

    # ---------------- pass 1: conv1 + BN1 statistics ----------------
    vmem1 = _vmem_limit([
        ((1, Hp, Wp, C2), jnp.float32, 2),
        ((1, Hp, Wp, C1), jnp.float32, 2),
        ((9, Cin, Cmid), MATMUL_DTYPE, 2),
        ((1, TH, W, Cmid), jnp.float32, 2),
        ((1, 1, 2, Cmid), jnp.float32, 2),
        ((TH * W, Cmid), jnp.float32, 4),          # accumulator + temporaries
    ])
    h1_pre, stats1 = pl.pallas_call(
        conv1_stats_kernel,
        grid=(N, NH),
        in_specs=[
            pl.BlockSpec((1, Hp, Wp, C2), lambda n, h: (n, 0, 0, 0)),
            pl.BlockSpec((1, Hp, Wp, C1), lambda n, h: (n, 0, 0, 0)),
            pl.BlockSpec((9, Cin, Cmid), lambda n, h: (0, 0, 0)),
        ],
        out_specs=[
            pl.BlockSpec((1, TH, W, Cmid), lambda n, h: (n, h, 0, 0)),
            pl.BlockSpec((1, 1, 2, Cmid), lambda n, h: (n, h, 0, 0)),
        ],
        out_shape=[
            jax.ShapeDtypeStruct((N, H, W, Cmid), jnp.float32),
            jax.ShapeDtypeStruct((N, NH, 2, Cmid), jnp.float32),
        ],
        compiler_params=pltpu.CompilerParams(
            dimension_semantics=parallel2, vmem_limit_bytes=vmem1),
        cost_estimate=pl.CostEstimate(
            flops=2 * N * H * W * 9 * Cin * Cmid, transcendentals=0,
            bytes_accessed=4 * (skip_p.size + up_p.size + N * H * W * Cmid)
                           + 2 * int(w1t.size)),
    )(skip_p, up_p, w1t)

    scale1, shift1 = _stats_to_scale_shift(stats1, g1, be1, N * H * W)

    # ---------- pass 2: BN1+ReLU (folded) -> conv2 + BN2 statistics ----------
    vmem2 = _vmem_limit([
        ((1, H, W, Cmid), jnp.float32, 2),
        ((1, Cmid), jnp.float32, 2),
        ((1, Cmid), jnp.float32, 2),
        ((9, Cmid, Cout), MATMUL_DTYPE, 2),
        ((1, TH * W, Cout), jnp.float32, 2),
        ((1, 1, 2, Cout), jnp.float32, 2),
        ((TH + 2, Wp, Cmid), MATMUL_DTYPE, 1),
        ((TH * W, Cout), jnp.float32, 4),
    ])
    h2_pre, stats2 = pl.pallas_call(
        bn_relu_conv2_stats_kernel,
        grid=(N, NH),
        in_specs=[
            pl.BlockSpec((1, H, W, Cmid), lambda n, h: (n, 0, 0, 0)),
            pl.BlockSpec((1, Cmid), lambda n, h: (0, 0)),
            pl.BlockSpec((1, Cmid), lambda n, h: (0, 0)),
            pl.BlockSpec((9, Cmid, Cout), lambda n, h: (0, 0, 0)),
        ],
        out_specs=[
            pl.BlockSpec((1, TH * W, Cout), lambda n, h: (n, h, 0)),
            pl.BlockSpec((1, 1, 2, Cout), lambda n, h: (n, h, 0, 0)),
        ],
        out_shape=[
            jax.ShapeDtypeStruct((N, H * W, Cout), jnp.float32),
            jax.ShapeDtypeStruct((N, NH, 2, Cout), jnp.float32),
        ],
        scratch_shapes=[pltpu.VMEM((TH + 2, Wp, Cmid), MATMUL_DTYPE)],
        compiler_params=pltpu.CompilerParams(
            dimension_semantics=parallel2, vmem_limit_bytes=vmem2),
        cost_estimate=pl.CostEstimate(
            flops=2 * N * H * W * 9 * Cmid * Cout, transcendentals=0,
            bytes_accessed=4 * (N * H * W * Cmid + N * H * W * Cout)
                           + 2 * int(w2t.size)),
    )(h1_pre, scale1.reshape(1, Cmid), shift1.reshape(1, Cmid), w2t)

    scale2, shift2 = _stats_to_scale_shift(stats2, g2, be2, N * H * W)

    # ---------------- pass 3: BN2 + ReLU (in place, resident scale/shift) ----
    L = H * W
    TS = _pick_spatial_tile(L)
    vmem3 = _vmem_limit([((1, TS, Cout), jnp.float32, 4),
                         ((1, 1, Cout), jnp.float32, 4)])
    y_flat = pl.pallas_call(
        bn_relu_kernel,
        grid=(N, L // TS),
        in_specs=[
            pl.BlockSpec((1, TS, Cout), lambda n, l: (n, l, 0)),
            pl.BlockSpec((1, 1, Cout), lambda n, l: (0, 0, 0)),
            pl.BlockSpec((1, 1, Cout), lambda n, l: (0, 0, 0)),
        ],
        out_specs=pl.BlockSpec((1, TS, Cout), lambda n, l: (n, l, 0)),
        out_shape=jax.ShapeDtypeStruct((N, L, Cout), jnp.float32),
        input_output_aliases={0: 0},                      # h2_pre is dead after
        compiler_params=pltpu.CompilerParams(
            dimension_semantics=parallel2, vmem_limit_bytes=vmem3),
        cost_estimate=pl.CostEstimate(
            flops=2 * N * L * Cout, transcendentals=0,
            bytes_accessed=8 * N * L * Cout),
    )(h2_pre, scale2.reshape(1, 1, Cout), shift2.reshape(1, 1, Cout))

    return y_flat.reshape(N, H, W, Cout)


# ---------------------------------------------------------------------------
# Glue (plain JAX): bilinear x2 upsample (align_corners=True), pads, layout.
# ---------------------------------------------------------------------------
def upsample_bilinear_x2_align_corners(x_nhwc):
    N, H, W, C = x_nhwc.shape
    Ho, Wo = 2 * H, 2 * W

    def coords(n_in, n_out):
        if n_out == 1 or n_in == 1:
            return (jnp.zeros((n_out,), jnp.float32),
                    jnp.zeros((n_out,), jnp.int32),
                    jnp.zeros((n_out,), jnp.int32))
        s = jnp.arange(n_out, dtype=jnp.float32) * (n_in - 1) / (n_out - 1)
        i0 = jnp.clip(jnp.floor(s).astype(jnp.int32), 0, n_in - 1)
        i1 = jnp.clip(i0 + 1, 0, n_in - 1)
        return s - i0.astype(jnp.float32), i0, i1

    wy, y0, y1 = coords(H, Ho)
    wx, x0, x1 = coords(W, Wo)

    r = (x_nhwc[:, y0, :, :] * (1.0 - wy)[None, :, None, None]
         + x_nhwc[:, y1, :, :] * wy[None, :, None, None])
    out = (r[:, :, x0, :] * (1.0 - wx)[None, None, :, None]
           + r[:, :, x1, :] * wx[None, None, :, None])
    return out


@jax.jit
def up_forward(x1_nchw, x2_nchw, params):
    # NCHW -> NHWC
    x1 = jnp.transpose(x1_nchw, (0, 2, 3, 1)).astype(jnp.float32)
    x2 = jnp.transpose(x2_nchw, (0, 2, 3, 1)).astype(jnp.float32)

    x1u = upsample_bilinear_x2_align_corners(x1)

    diffY = x2.shape[1] - x1u.shape[1]
    diffX = x2.shape[2] - x1u.shape[2]
    # F.pad (spatial match) and conv padding=1 fused into one pad; the channel
    # concat itself is fused into the conv1 Pallas kernel.
    up_p = jnp.pad(x1u, ((0, 0),
                         (diffY // 2 + 1, diffY - diffY // 2 + 1),
                         (diffX // 2 + 1, diffX - diffX // 2 + 1),
                         (0, 0)))
    skip_p = jnp.pad(x2, ((0, 0), (1, 1), (1, 1), (0, 0)))

    y = double_conv_pallas(skip_p, up_p, params)
    return jnp.transpose(y, (0, 3, 1, 2))       # back to NCHW


# ---------------------------------------------------------------------------
# Pure-JAX references.  operand_dtype=bfloat16 emulates the kernel's MXU
# operand rounding (tight logic check); float32 is the exact reference.
# ---------------------------------------------------------------------------
def double_conv_ref(x_nhwc, params, operand_dtype=jnp.float32):
    w1, g1, be1, w2, g2, be2 = params

    def conv3x3(x, w):
        return lax.conv_general_dilated(
            x.astype(operand_dtype).astype(jnp.float32),
            w.astype(operand_dtype).astype(jnp.float32),
            window_strides=(1, 1), padding='SAME',
            dimension_numbers=('NHWC', 'HWIO', 'NHWC'),
            precision=lax.Precision.HIGHEST)

    def bn_relu(h, g, be):
        mean = h.mean(axis=(0, 1, 2))
        var = ((h - mean) ** 2).mean(axis=(0, 1, 2))
        return jnp.maximum((h - mean) / jnp.sqrt(var + EPS) * g + be, 0.0)

    h = bn_relu(conv3x3(x_nhwc, w1), g1, be1)
    return bn_relu(conv3x3(h, w2), g2, be2)


def up_forward_ref(x1_nchw, x2_nchw, params, operand_dtype=jnp.float32):
    x1 = jnp.transpose(x1_nchw, (0, 2, 3, 1)).astype(jnp.float32)
    x2 = jnp.transpose(x2_nchw, (0, 2, 3, 1)).astype(jnp.float32)
    x1u = upsample_bilinear_x2_align_corners(x1)
    diffY = x2.shape[1] - x1u.shape[1]
    diffX = x2.shape[2] - x1u.shape[2]
    x1u = jnp.pad(x1u, ((0, 0),
                        (diffY // 2, diffY - diffY // 2),
                        (diffX // 2, diffX - diffX // 2),
                        (0, 0)))
    x = jnp.concatenate([x2, x1u], axis=-1)
    return jnp.transpose(double_conv_ref(x, params, operand_dtype), (0, 3, 1, 2))


# ---------------------------------------------------------------------------
# Deterministic parameter init (shapes implied by Up(..., bilinear=True)).
# Conv biases are omitted: under training-mode BN the per-channel bias is
# cancelled exactly by the batch-mean subtraction (PyTorch zero-inits them).
# ---------------------------------------------------------------------------
def init_params(key, in_channels, out_channels):
    mid_channels = in_channels // 2        # bilinear=True branch
    k1, k2, k3, k4 = jax.random.split(key, 4)

    def kaiming_uniform(k, kh, kw, cin, cout):
        bound = (6.0 / (cin * kh * kw)) ** 0.5
        return jax.random.uniform(k, (kh, kw, cin, cout), jnp.float32,
                                  minval=-bound, maxval=bound)

    w1 = kaiming_uniform(k1, 3, 3, in_channels, mid_channels)
    g1 = 1.0 + 0.02 * jax.random.normal(k2, (mid_channels,), jnp.float32)
    be1 = jnp.zeros((mid_channels,), jnp.float32)

    w2 = kaiming_uniform(k3, 3, 3, mid_channels, out_channels)
    g2 = 1.0 + 0.02 * jax.random.normal(k4, (out_channels,), jnp.float32)
    be2 = jnp.zeros((out_channels,), jnp.float32)

    return (w1, g1, be1, w2, g2, be2)


if __name__ == "__main__":
    key = jax.random.PRNGKey(0)
    kx1, kx2, kp = jax.random.split(key, 3)

    # Up(in_channels=8, out_channels=4, bilinear=True)
    # x1: deeper feature map (NCHW), x2: skip connection (NCHW)
    in_channels, out_channels = 8, 4
    x1 = jax.random.normal(kx1, (2, 4, 8, 8), jnp.float32)    # 4+4=8 ch after concat
    x2 = jax.random.normal(kx2, (2, 4, 16, 16), jnp.float32)

    params = init_params(kp, in_channels, out_channels)

    y = jax.block_until_ready(up_forward(x1, x2, params))
    assert y.shape == (2, out_channels, 16, 16), y.shape

    # Tight check vs an independent lax.conv reference with the same bf16 MXU
    # operand rounding (isolates kernel-logic errors from dtype effects).
    y_bf = up_forward_ref(x1, x2, params, operand_dtype=MATMUL_DTYPE)
    err_bf = float(jnp.max(jnp.abs(y - y_bf)))
    assert jnp.allclose(y, y_bf, rtol=5e-3, atol=5e-3), err_bf

    # Loose check vs the exact f32 reference (kernel uses bf16 MXU operands).
    y_f32 = up_forward_ref(x1, x2, params, operand_dtype=jnp.float32)
    err_f32 = float(jnp.max(jnp.abs(y - y_f32)))
    assert jnp.allclose(y, y_f32, rtol=1e-1, atol=1e-1), err_f32

    print("KERNEL_OK")
</pallas_src>

<mosaic_0001>
module attributes {stable_mosaic.version = 11 : i64} {
  func.func @conv1_stats_kernel(%arg0: i32, %arg1: i32, %arg2: memref<1x18x18x4xf32, #tpu.memory_space<vmem>>, %arg3: memref<1x18x18x4xf32, #tpu.memory_space<vmem>>, %arg4: memref<9x8x4xbf16, #tpu.memory_space<vmem>>, %arg5: memref<1x8x16x4xf32, #tpu.memory_space<vmem>>, %arg6: memref<1x1x2x4xf32, #tpu.memory_space<vmem>>) attributes {dimension_semantics = [#tpu.dimension_semantics<parallel>, #tpu.dimension_semantics<parallel>], iteration_bounds = array<i64: 2, 2>, scalar_prefetch = 0 : i64, scratch_operands = 0 : i64, tpu.core_type = #tpu.core_type<tc>, window_params = [{transform_indices = @transform_0, window_bounds = array<i64: 1, 18, 18, 4>}, {transform_indices = @transform_1, window_bounds = array<i64: 1, 18, 18, 4>}, {pipeline_mode = #tpu.pipeline_mode<synchronous>, transform_indices = @transform_2, window_bounds = array<i64: 9, 8, 4>}, {transform_indices = @transform_3, window_bounds = array<i64: 1, 8, 16, 4>}, {transform_indices = @transform_4, window_bounds = array<i64: 1, 1, 2, 4>}]} {
    %c8_i32 = arith.constant 8 : i32
    %0 = arith.muli %arg1, %c8_i32 : i32
    %1 = tpu.assume_multiple %0, 8 : i32
    %cst = arith.constant 0.000000e+00 : f32
    %2 = vector.broadcast %cst : f32 to vector<128x4xf32>
    %c0_i32 = arith.constant 0 : i32
    %3 = arith.addi %1, %c0_i32 : i32
    %c0 = arith.constant 0 : index
    %4 = arith.index_cast %3 : i32 to index
    %c0_0 = arith.constant 0 : index
    %c0_1 = arith.constant 0 : index
    %5 = vector.load %arg2[%c0, %4, %c0_0, %c0_1] : memref<1x18x18x4xf32, #tpu.memory_space<vmem>>, vector<1x8x16x4xf32>
    %6 = vector.shape_cast %5 : vector<1x8x16x4xf32> to vector<8x16x4xf32>
    %c0_i32_2 = arith.constant 0 : i32
    %7 = arith.addi %1, %c0_i32_2 : i32
    %c0_3 = arith.constant 0 : index
    %8 = arith.index_cast %7 : i32 to index
    %c0_4 = arith.constant 0 : index
    %c0_5 = arith.constant 0 : index
    %9 = vector.load %arg3[%c0_3, %8, %c0_4, %c0_5] : memref<1x18x18x4xf32, #tpu.memory_space<vmem>>, vector<1x8x16x4xf32>
    %10 = vector.shape_cast %9 : vector<1x8x16x4xf32> to vector<8x16x4xf32>
    %11 = vector.shape_cast %6 : vector<8x16x4xf32> to vector<128x4xf32>
    %12 = arith.truncf %11 : vector<128x4xf32> to vector<128x4xbf16>
    %c0_6 = arith.constant 0 : index
    %c0_7 = arith.constant 0 : index
    %c0_8 = arith.constant 0 : index
    %13 = vector.load %arg4[%c0_6, %c0_7, %c0_8] : memref<9x8x4xbf16, #tpu.memory_space<vmem>>, vector<1x4x4xbf16>
    %14 = vector.shape_cast %13 : vector<1x4x4xbf16> to vector<4x4xbf16>
    %cst_9 = arith.constant dense<0.000000e+00> : vector<128x4xf32>
    %15 = tpu.matmul %12, %14, %cst_9 {dimension_numbers = #tpu.dot_dimension_numbers<[1], [0], [0], [1], [0, 0, 1, 1], [], []>} : vector<128x4xbf16>, vector<4x4xbf16>, vector<128x4xf32> -> vector<128x4xf32>
    %16 = arith.addf %2, %15 : vector<128x4xf32>
    %17 = vector.shape_cast %10 : vector<8x16x4xf32> to vector<128x4xf32>
    %18 = arith.truncf %17 : vector<128x4xf32> to vector<128x4xbf16>
    %c0_10 = arith.constant 0 : index
    %c4 = arith.constant 4 : index
    %c0_11 = arith.constant 0 : index
    %19 = vector.load %arg4[%c0_10, %c4, %c0_11] : memref<9x8x4xbf16, #tpu.memory_space<vmem>>, vector<1x4x4xbf16>
    %20 = vector.shape_cast %19 : vector<1x4x4xbf16> to vector<4x4xbf16>
    %cst_12 = arith.constant dense<0.000000e+00> : vector<128x4xf32>
    %21 = tpu.matmul %18, %20, %cst_12 {dimension_numbers = #tpu.dot_dimension_numbers<[1], [0], [0], [1], [0, 0, 1, 1], [], []>} : vector<128x4xbf16>, vector<4x4xbf16>, vector<128x4xf32> -> vector<128x4xf32>
    %22 = arith.addf %16, %21 : vector<128x4xf32>
    %c0_i32_13 = arith.constant 0 : i32
    %23 = arith.addi %1, %c0_i32_13 : i32
    %c0_14 = arith.constant 0 : index
    %24 = arith.index_cast %23 : i32 to index
    %c1 = arith.constant 1 : index
    %c0_15 = arith.constant 0 : index
    %25 = vector.load %arg2[%c0_14, %24, %c1, %c0_15] : memref<1x18x18x4xf32, #tpu.memory_space<vmem>>, vector<1x8x16x4xf32>
    %26 = vector.shape_cast %25 : vector<1x8x16x4xf32> to vector<8x16x4xf32>
    %c0_i32_16 = arith.constant 0 : i32
    %27 = arith.addi %1, %c0_i32_16 : i32
    %c0_17 = arith.constant 0 : index
    %28 = arith.index_cast %27 : i32 to index
    %c1_18 = arith.constant 1 : index
    %c0_19 = arith.constant 0 : index
    %29 = vector.load %arg3[%c0_17, %28, %c1_18, %c0_19] : memref<1x18x18x4xf32, #tpu.memory_space<vmem>>, vector<1x8x16x4xf32>
    %30 = vector.shape_cast %29 : vector<1x8x16x4xf32> to vector<8x16x4xf32>
    %31 = vector.shape_cast %26 : vector<8x16x4xf32> to vector<128x4xf32>
    %32 = arith.truncf %31 : vector<128x4xf32> to vector<128x4xbf16>
    %c1_20 = arith.constant 1 : index
    %c0_21 = arith.constant 0 : index
    %c0_22 = arith.constant 0 : index
    %33 = vector.load %arg4[%c1_20, %c0_21, %c0_22] : memref<9x8x4xbf16, #tpu.memory_space<vmem>>, vector<1x4x4xbf16>
    %34 = vector.shape_cast %33 : vector<1x4x4xbf16> to vector<4x4xbf16>
    %cst_23 = arith.constant dense<0.000000e+00> : vector<128x4xf32>
    %35 = tpu.matmul %32, %34, %cst_23 {dimension_numbers = #tpu.dot_dimension_numbers<[1], [0], [0], [1], [0, 0, 1, 1], [], []>} : vector<128x4xbf16>, vector<4x4xbf16>, vector<128x4xf32> -> vector<128x4xf32>
    %36 = arith.addf %22, %35 : vector<128x4xf32>
    %37 = vector.shape_cast %30 : vector<8x16x4xf32> to vector<128x4xf32>
    %38 = arith.truncf %37 : vector<128x4xf32> to vector<128x4xbf16>
    %c1_24 = arith.constant 1 : index
    %c4_25 = arith.constant 4 : index
    %c0_26 = arith.constant 0 : index
    %39 = vector.load %arg4[%c1_24, %c4_25, %c0_26] : memref<9x8x4xbf16, #tpu.memory_space<vmem>>, vector<1x4x4xbf16>
    %40 = vector.shape_cast %39 : vector<1x4x4xbf16> to vector<4x4xbf16>
    %cst_27 = arith.constant dense<0.000000e+00> : vector<128x4xf32>
    %41 = tpu.matmul %38, %40, %cst_27 {dimension_numbers = #tpu.dot_dimension_numbers<[1], [0], [0], [1], [0, 0, 1, 1], [], []>} : vector<128x4xbf16>, vector<4x4xbf16>, vector<128x4xf32> -> vector<128x4xf32>
    %42 = arith.addf %36, %41 : vector<128x4xf32>
    %c0_i32_28 = arith.constant 0 : i32
    %43 = arith.addi %1, %c0_i32_28 : i32
    %c0_29 = arith.constant 0 : index
    %44 = arith.index_cast %43 : i32 to index
    %c2 = arith.constant 2 : index
    %c0_30 = arith.constant 0 : index
    %45 = vector.load %arg2[%c0_29, %44, %c2, %c0_30] : memref<1x18x18x4xf32, #tpu.memory_space<vmem>>, vector<1x8x16x4xf32>
    %46 = vector.shape_cast %45 : vector<1x8x16x4xf32> to vector<8x16x4xf32>
    %c0_i32_31 = arith.constant 0 : i32
    %47 = arith.addi %1, %c0_i32_31 : i32
    %c0_32 = arith.constant 0 : index
    %48 = arith.index_cast %47 : i32 to index
    %c2_33 = arith.constant 2 : index
    %c0_34 = arith.constant 0 : index
    %49 = vector.load %arg3[%c0_32, %48, %c2_33, %c0_34] : memref<1x18x18x4xf32, #tpu.memory_space<vmem>>, vector<1x8x16x4xf32>
    %50 = vector.shape_cast %49 : vector<1x8x16x4xf32> to vector<8x16x4xf32>
    %51 = vector.shape_cast %46 : vector<8x16x4xf32> to vector<128x4xf32>
    %52 = arith.truncf %51 : vector<128x4xf32> to vector<128x4xbf16>
    %c2_35 = arith.constant 2 : index
    %c0_36 = arith.constant 0 : index
    %c0_37 = arith.constant 0 : index
    %53 = vector.load %arg4[%c2_35, %c0_36, %c0_37] : memref<9x8x4xbf16, #tpu.memory_space<vmem>>, vector<1x4x4xbf16>
    %54 = vector.shape_cast %53 : vector<1x4x4xbf16> to vector<4x4xbf16>
    %cst_38 = arith.constant dense<0.000000e+00> : vector<128x4xf32>
    %55 = tpu.matmul %52, %54, %cst_38 {dimension_numbers = #tpu.dot_dimension_numbers<[1], [0], [0], [1], [0, 0, 1, 1], [], []>} : vector<128x4xbf16>, vector<4x4xbf16>, vector<128x4xf32> -> vector<128x4xf32>
    %56 = arith.addf %42, %55 : vector<128x4xf32>
    %57 = vector.shape_cast %50 : vector<8x16x4xf32> to vector<128x4xf32>
    %58 = arith.truncf %57 : vector<128x4xf32> to vector<128x4xbf16>
    %c2_39 = arith.constant 2 : index
    %c4_40 = arith.constant 4 : index
    %c0_41 = arith.constant 0 : index
    %59 = vector.load %arg4[%c2_39, %c4_40, %c0_41] : memref<9x8x4xbf16, #tpu.memory_space<vmem>>, vector<1x4x4xbf16>
    %60 = vector.shape_cast %59 : vector<1x4x4xbf16> to vector<4x4xbf16>
    %cst_42 = arith.constant dense<0.000000e+00> : vector<128x4xf32>
    %61 = tpu.matmul %58, %60, %cst_42 {dimension_numbers = #tpu.dot_dimension_numbers<[1], [0], [0], [1], [0, 0, 1, 1], [], []>} : vector<128x4xbf16>, vector<4x4xbf16>, vector<128x4xf32> -> vector<128x4xf32>
    %62 = arith.addf %56, %61 : vector<128x4xf32>
    %c1_i32 = arith.constant 1 : i32
    %63 = arith.addi %1, %c1_i32 : i32
    %c0_43 = arith.constant 0 : index
    %64 = arith.index_cast %63 : i32 to index
    %c0_44 = arith.constant 0 : index
    %c0_45 = arith.constant 0 : index
    %65 = vector.load %arg2[%c0_43, %64, %c0_44, %c0_45] : memref<1x18x18x4xf32, #tpu.memory_space<vmem>>, vector<1x8x16x4xf32>
    %66 = vector.shape_cast %65 : vector<1x8x16x4xf32> to vector<8x16x4xf32>
    %c1_i32_46 = arith.constant 1 : i32
    %67 = arith.addi %1, %c1_i32_46 : i32
    %c0_47 = arith.constant 0 : index
    %68 = arith.index_cast %67 : i32 to index
    %c0_48 = arith.constant 0 : index
    %c0_49 = arith.constant 0 : index
    %69 = vector.load %arg3[%c0_47, %68, %c0_48, %c0_49] : memref<1x18x18x4xf32, #tpu.memory_space<vmem>>, vector<1x8x16x4xf32>
    %70 = vector.shape_cast %69 : vector<1x8x16x4xf32> to vector<8x16x4xf32>
    %71 = vector.shape_cast %66 : vector<8x16x4xf32> to vector<128x4xf32>
    %72 = arith.truncf %71 : vector<128x4xf32> to vector<128x4xbf16>
    %c3 = arith.constant 3 : index
    %c0_50 = arith.constant 0 : index
    %c0_51 = arith.constant 0 : index
    %73 = vector.load %arg4[%c3, %c0_50, %c0_51] : memref<9x8x4xbf16, #tpu.memory_space<vmem>>, vector<1x4x4xbf16>
    %74 = vector.shape_cast %73 : vector<1x4x4xbf16> to vector<4x4xbf16>
    %cst_52 = arith.constant dense<0.000000e+00> : vector<128x4xf32>
    %75 = tpu.matmul %72, %74, %cst_52 {dimension_numbers = #tpu.dot_dimension_numbers<[1], [0], [0], [1], [0, 0, 1, 1], [], []>} : vector<128x4xbf16>, vector<4x4xbf16>, vector<128x4xf32> -> vector<128x4xf32>
    %76 = arith.addf %62, %75 : vector<128x4xf32>
    %77 = vector.shape_cast %70 : vector<8x16x4xf32> to vector<128x4xf32>
    %78 = arith.truncf %77 : vector<128x4xf32> to vector<128x4xbf16>
    %c3_53 = arith.constant 3 : index
    %c4_54 = arith.constant 4 : index
    %c0_55 = arith.constant 0 : index
    %79 = vector.load %arg4[%c3_53, %c4_54, %c0_55] : memref<9x8x4xbf16, #tpu.memory_space<vmem>>, vector<1x4x4xbf16>
    %80 = vector.shape_cast %79 : vector<1x4x4xbf16> to vector<4x4xbf16>
    %cst_56 = arith.constant dense<0.000000e+00> : vector<128x4xf32>
    %81 = tpu.matmul %78, %80, %cst_56 {dimension_numbers = #tpu.dot_dimension_numbers<[1], [0], [0], [1], [0, 0, 1, 1], [], []>} : vector<128x4xbf16>, vector<4x4xbf16>, vector<128x4xf32> -> vector<128x4xf32>
    %82 = arith.addf %76, %81 : vector<128x4xf32>
    %c1_i32_57 = arith.constant 1 : i32
    %83 = arith.addi %1, %c1_i32_57 : i32
    %c0_58 = arith.constant 0 : index
    %84 = arith.index_cast %83 : i32 to index
    %c1_59 = arith.constant 1 : index
    %c0_60 = arith.constant 0 : index
    %85 = vector.load %arg2[%c0_58, %84, %c1_59, %c0_60] : memref<1x18x18x4xf32, #tpu.memory_space<vmem>>, vector<1x8x16x4xf32>
    %86 = vector.shape_cast %85 : vector<1x8x16x4xf32> to vector<8x16x4xf32>
    %c1_i32_61 = arith.constant 1 : i32
    %87 = arith.addi %1, %c1_i32_61 : i32
    %c0_62 = arith.constant 0 : index
    %88 = arith.index_cast %87 : i32 to index
    %c1_63 = arith.constant 1 : index
    %c0_64 = arith.constant 0 : index
    %89 = vector.load %arg3[%c0_62, %88, %c1_63, %c0_64] : memref<1x18x18x4xf32, #tpu.memory_space<vmem>>, vector<1x8x16x4xf32>
    %90 = vector.shape_cast %89 : vector<1x8x16x4xf32> to vector<8x16x4xf32>
    %91 = vector.shape_cast %86 : vector<8x16x4xf32> to vector<128x4xf32>
    %92 = arith.truncf %91 : vector<128x4xf32> to vector<128x4xbf16>
    %c4_65 = arith.constant 4 : index
    %c0_66 = arith.constant 0 : index
    %c0_67 = arith.constant 0 : index
    %93 = vector.load %arg4[%c4_65, %c0_66, %c0_67] : memref<9x8x4xbf16, #tpu.memory_space<vmem>>, vector<1x4x4xbf16>
    %94 = vector.shape_cast %93 : vector<1x4x4xbf16> to vector<4x4xbf16>
    %cst_68 = arith.constant dense<0.000000e+00> : vector<128x4xf32>
    %95 = tpu.matmul %92, %94, %cst_68 {dimension_numbers = #tpu.dot_dimension_numbers<[1], [0], [0], [1], [0, 0, 1, 1], [], []>} : vector<128x4xbf16>, vector<4x4xbf16>, vector<128x4xf32> -> vector<128x4xf32>
    %96 = arith.addf %82, %95 : vector<128x4xf32>
    %97 = vector.shape_cast %90 : vector<8x16x4xf32> to vector<128x4xf32>
    %98 = arith.truncf %97 : vector<128x4xf32> to vector<128x4xbf16>
    %c4_69 = arith.constant 4 : index
    %c4_70 = arith.constant 4 : index
    %c0_71 = arith.constant 0 : index
    %99 = vector.load %arg4[%c4_69, %c4_70, %c0_71] : memref<9x8x4xbf16, #tpu.memory_space<vmem>>, vector<1x4x4xbf16>
    %100 = vector.shape_cast %99 : vector<1x4x4xbf16> to vector<4x4xbf16>
    %cst_72 = arith.constant dense<0.000000e+00> : vector<128x4xf32>
    %101 = tpu.matmul %98, %100, %cst_72 {dimension_numbers = #tpu.dot_dimension_numbers<[1], [0], [0], [1], [0, 0, 1, 1], [], []>} : vector<128x4xbf16>, vector<4x4xbf16>, vector<128x4xf32> -> vector<128x4xf32>
    %102 = arith.addf %96, %101 : vector<128x4xf32>
    %c1_i32_73 = arith.constant 1 : i32
    %103 = arith.addi %1, %c1_i32_73 : i32
    %c0_74 = arith.constant 0 : index
    %104 = arith.index_cast %103 : i32 to index
    %c2_75 = arith.constant 2 : index
    %c0_76 = arith.constant 0 : index
    %105 = vector.load %arg2[%c0_74, %104, %c2_75, %c0_76] : memref<1x18x18x4xf32, #tpu.memory_space<vmem>>, vector<1x8x16x4xf32>
    %106 = vector.shape_cast %105 : vector<1x8x16x4xf32> to vector<8x16x4xf32>
    %c1_i32_77 = arith.constant 1 : i32
    %107 = arith.addi %1, %c1_i32_77 : i32
    %c0_78 = arith.constant 0 : index
    %108 = arith.index_cast %107 : i32 to index
    %c2_79 = arith.constant 2 : index
    %c0_80 = arith.constant 0 : index
    %109 = vector.load %arg3[%c0_78, %108, %c2_79, %c0_80] : memref<1x18x18x4xf32, #tpu.memory_space<vmem>>, vector<1x8x16x4xf32>
    %110 = vector.shape_cast %109 : vector<1x8x16x4xf32> to vector<8x16x4xf32>
    %111 = vector.shape_cast %106 : vector<8x16x4xf32> to vector<128x4xf32>
    %112 = arith.truncf %111 : vector<128x4xf32> to vector<128x4xbf16>
    %c5 = arith.constant 5 : index
    %c0_81 = arith.constant 0 : index
    %c0_82 = arith.constant 0 : index
    %113 = vector.load %arg4[%c5, %c0_81, %c0_82] : memref<9x8x4xbf16, #tpu.memory_space<vmem>>, vector<1x4x4xbf16>
    %114 = vector.shape_cast %113 : vector<1x4x4xbf16> to vector<4x4xbf16>
    %cst_83 = arith.constant dense<0.000000e+00> : vector<128x4xf32>
    %115 = tpu.matmul %112, %114, %cst_83 {dimension_numbers = #tpu.dot_dimension_numbers<[1], [0], [0], [1], [0, 0, 1, 1], [], []>} : vector<128x4xbf16>, vector<4x4xbf16>, vector<128x4xf32> -> vector<128x4xf32>
    %116 = arith.addf %102, %115 : vector<128x4xf32>
    %117 = vector.shape_cast %110 : vector<8x16x4xf32> to vector<128x4xf32>
    %118 = arith.truncf %117 : vector<128x4xf32> to vector<128x4xbf16>
    %c5_84 = arith.constant 5 : index
    %c4_85 = arith.constant 4 : index
    %c0_86 = arith.constant 0 : index
    %119 = vector.load %arg4[%c5_84, %c4_85, %c0_86] : memref<9x8x4xbf16, #tpu.memory_space<vmem>>, vector<1x4x4xbf16>
    %120 = vector.shape_cast %119 : vector<1x4x4xbf16> to vector<4x4xbf16>
    %cst_87 = arith.constant dense<0.000000e+00> : vector<128x4xf32>
    %121 = tpu.matmul %118, %120, %cst_87 {dimension_numbers = #tpu.dot_dimension_numbers<[1], [0], [0], [1], [0, 0, 1, 1], [], []>} : vector<128x4xbf16>, vector<4x4xbf16>, vector<128x4xf32> -> vector<128x4xf32>
    %122 = arith.addf %116, %121 : vector<128x4xf32>
    %c2_i32 = arith.constant 2 : i32
    %123 = arith.addi %1, %c2_i32 : i32
    %c0_88 = arith.constant 0 : index
    %124 = arith.index_cast %123 : i32 to index
    %c0_89 = arith.constant 0 : index
    %c0_90 = arith.constant 0 : index
    %125 = vector.load %arg2[%c0_88, %124, %c0_89, %c0_90] : memref<1x18x18x4xf32, #tpu.memory_space<vmem>>, vector<1x8x16x4xf32>
    %126 = vector.shape_cast %125 : vector<1x8x16x4xf32> to vector<8x16x4xf32>
    %c2_i32_91 = arith.constant 2 : i32
    %127 = arith.addi %1, %c2_i32_91 : i32
    %c0_92 = arith.constant 0 : index
    %128 = arith.index_cast %127 : i32 to index
    %c0_93 = arith.constant 0 : index
    %c0_94 = arith.constant 0 : index
    %129 = vector.load %arg3[%c0_92, %128, %c0_93, %c0_94] : memref<1x18x18x4xf32, #tpu.memory_space<vmem>>, vector<1x8x16x4xf32>
    %130 = vector.shape_cast %129 : vector<1x8x16x4xf32> to vector<8x16x4xf32>
    %131 = vector.shape_cast %126 : vector<8x16x4xf32> to vector<128x4xf32>
    %132 = arith.truncf %131 : vector<128x4xf32> to vector<128x4xbf16>
    %c6 = arith.constant 6 : index
    %c0_95 = arith.constant 0 : index
    %c0_96 = arith.constant 0 : index
    %133 = vector.load %arg4[%c6, %c0_95, %c0_96] : memref<9x8x4xbf16, #tpu.memory_space<vmem>>, vector<1x4x4xbf16>
    %134 = vector.shape_cast %133 : vector<1x4x4xbf16> to vector<4x4xbf16>
    %cst_97 = arith.constant dense<0.000000e+00> : vector<128x4xf32>
    %135 = tpu.matmul %132, %134, %cst_97 {dimension_numbers = #tpu.dot_dimension_numbers<[1], [0], [0], [1], [0, 0, 1, 1], [], []>} : vector<128x4xbf16>, vector<4x4xbf16>, vector<128x4xf32> -> vector<128x4xf32>
    %136 = arith.addf %122, %135 : vector<128x4xf32>
    %137 = vector.shape_cast %130 : vector<8x16x4xf32> to vector<128x4xf32>
    %138 = arith.truncf %137 : vector<128x4xf32> to vector<128x4xbf16>
    %c6_98 = arith.constant 6 : index
    %c4_99 = arith.constant 4 : index
    %c0_100 = arith.constant 0 : index
    %139 = vector.load %arg4[%c6_98, %c4_99, %c0_100] : memref<9x8x4xbf16, #tpu.memory_space<vmem>>, vector<1x4x4xbf16>
    %140 = vector.shape_cast %139 : vector<1x4x4xbf16> to vector<4x4xbf16>
    %cst_101 = arith.constant dense<0.000000e+00> : vector<128x4xf32>
    %141 = tpu.matmul %138, %140, %cst_101 {dimension_numbers = #tpu.dot_dimension_numbers<[1], [0], [0], [1], [0, 0, 1, 1], [], []>} : vector<128x4xbf16>, vector<4x4xbf16>, vector<128x4xf32> -> vector<128x4xf32>
    %142 = arith.addf %136, %141 : vector<128x4xf32>
    %c2_i32_102 = arith.constant 2 : i32
    %143 = arith.addi %1, %c2_i32_102 : i32
    %c0_103 = arith.constant 0 : index
    %144 = arith.index_cast %143 : i32 to index
    %c1_104 = arith.constant 1 : index
    %c0_105 = arith.constant 0 : index
    %145 = vector.load %arg2[%c0_103, %144, %c1_104, %c0_105] : memref<1x18x18x4xf32, #tpu.memory_space<vmem>>, vector<1x8x16x4xf32>
    %146 = vector.shape_cast %145 : vector<1x8x16x4xf32> to vector<8x16x4xf32>
    %c2_i32_106 = arith.constant 2 : i32
    %147 = arith.addi %1, %c2_i32_106 : i32
    %c0_107 = arith.constant 0 : index
    %148 = arith.index_cast %147 : i32 to index
    %c1_108 = arith.constant 1 : index
    %c0_109 = arith.constant 0 : index
    %149 = vector.load %arg3[%c0_107, %148, %c1_108, %c0_109] : memref<1x18x18x4xf32, #tpu.memory_space<vmem>>, vector<1x8x16x4xf32>
    %150 = vector.shape_cast %149 : vector<1x8x16x4xf32> to vector<8x16x4xf32>
    %151 = vector.shape_cast %146 : vector<8x16x4xf32> to vector<128x4xf32>
    %152 = arith.truncf %151 : vector<128x4xf32> to vector<128x4xbf16>
    %c7 = arith.constant 7 : index
    %c0_110 = arith.constant 0 : index
    %c0_111 = arith.constant 0 : index
    %153 = vector.load %arg4[%c7, %c0_110, %c0_111] : memref<9x8x4xbf16, #tpu.memory_space<vmem>>, vector<1x4x4xbf16>
    %154 = vector.shape_cast %153 : vector<1x4x4xbf16> to vector<4x4xbf16>
    %cst_112 = arith.constant dense<0.000000e+00> : vector<128x4xf32>
    %155 = tpu.matmul %152, %154, %cst_112 {dimension_numbers = #tpu.dot_dimension_numbers<[1], [0], [0], [1], [0, 0, 1, 1], [], []>} : vector<128x4xbf16>, vector<4x4xbf16>, vector<128x4xf32> -> vector<128x4xf32>
    %156 = arith.addf %142, %155 : vector<128x4xf32>
    %157 = vector.shape_cast %150 : vector<8x16x4xf32> to vector<128x4xf32>
    %158 = arith.truncf %157 : vector<128x4xf32> to vector<128x4xbf16>
    %c7_113 = arith.constant 7 : index
    %c4_114 = arith.constant 4 : index
    %c0_115 = arith.constant 0 : index
    %159 = vector.load %arg4[%c7_113, %c4_114, %c0_115] : memref<9x8x4xbf16, #tpu.memory_space<vmem>>, vector<1x4x4xbf16>
    %160 = vector.shape_cast %159 : vector<1x4x4xbf16> to vector<4x4xbf16>
    %cst_116 = arith.constant dense<0.000000e+00> : vector<128x4xf32>
    %161 = tpu.matmul %158, %160, %cst_116 {dimension_numbers = #tpu.dot_dimension_numbers<[1], [0], [0], [1], [0, 0, 1, 1], [], []>} : vector<128x4xbf16>, vector<4x4xbf16>, vector<128x4xf32> -> vector<128x4xf32>
    %162 = arith.addf %156, %161 : vector<128x4xf32>
    %c2_i32_117 = arith.constant 2 : i32
    %163 = arith.addi %1, %c2_i32_117 : i32
    %c0_118 = arith.constant 0 : index
    %164 = arith.index_cast %163 : i32 to index
    %c2_119 = arith.constant 2 : index
    %c0_120 = arith.constant 0 : index
    %165 = vector.load %arg2[%c0_118, %164, %c2_119, %c0_120] : memref<1x18x18x4xf32, #tpu.memory_space<vmem>>, vector<1x8x16x4xf32>
    %166 = vector.shape_cast %165 : vector<1x8x16x4xf32> to vector<8x16x4xf32>
    %c2_i32_121 = arith.constant 2 : i32
    %167 = arith.addi %1, %c2_i32_121 : i32
    %c0_122 = arith.constant 0 : index
    %168 = arith.index_cast %167 : i32 to index
    %c2_123 = arith.constant 2 : index
    %c0_124 = arith.constant 0 : index
    %169 = vector.load %arg3[%c0_122, %168, %c2_123, %c0_124] : memref<1x18x18x4xf32, #tpu.memory_space<vmem>>, vector<1x8x16x4xf32>
    %170 = vector.shape_cast %169 : vector<1x8x16x4xf32> to vector<8x16x4xf32>
    %171 = vector.shape_cast %166 : vector<8x16x4xf32> to vector<128x4xf32>
    %172 = arith.truncf %171 : vector<128x4xf32> to vector<128x4xbf16>
    %c8 = arith.constant 8 : index
    %c0_125 = arith.constant 0 : index
    %c0_126 = arith.constant 0 : index
    %173 = vector.load %arg4[%c8, %c0_125, %c0_126] : memref<9x8x4xbf16, #tpu.memory_space<vmem>>, vector<1x4x4xbf16>
    %174 = vector.shape_cast %173 : vector<1x4x4xbf16> to vector<4x4xbf16>
    %cst_127 = arith.constant dense<0.000000e+00> : vector<128x4xf32>
    %175 = tpu.matmul %172, %174, %cst_127 {dimension_numbers = #tpu.dot_dimension_numbers<[1], [0], [0], [1], [0, 0, 1, 1], [], []>} : vector<128x4xbf16>, vector<4x4xbf16>, vector<128x4xf32> -> vector<128x4xf32>
    %176 = arith.addf %162, %175 : vector<128x4xf32>
    %177 = vector.shape_cast %170 : vector<8x16x4xf32> to vector<128x4xf32>
    %178 = arith.truncf %177 : vector<128x4xf32> to vector<128x4xbf16>
    %c8_128 = arith.constant 8 : index
    %c4_129 = arith.constant 4 : index
    %c0_130 = arith.constant 0 : index
    %179 = vector.load %arg4[%c8_128, %c4_129, %c0_130] : memref<9x8x4xbf16, #tpu.memory_space<vmem>>, vector<1x4x4xbf16>
    %180 = vector.shape_cast %179 : vector<1x4x4xbf16> to vector<4x4xbf16>
    %cst_131 = arith.constant dense<0.000000e+00> : vector<128x4xf32>
    %181 = tpu.matmul %178, %180, %cst_131 {dimension_numbers = #tpu.dot_dimension_numbers<[1], [0], [0], [1], [0, 0, 1, 1], [], []>} : vector<128x4xbf16>, vector<4x4xbf16>, vector<128x4xf32> -> vector<128x4xf32>
    %182 = arith.addf %176, %181 : vector<128x4xf32>
    %183 = vector.shape_cast %182 : vector<128x4xf32> to vector<8x16x4xf32>
    %c0_132 = arith.constant 0 : index
    %c0_133 = arith.constant 0 : index
    %c0_134 = arith.constant 0 : index
    %c0_135 = arith.constant 0 : index
    %184 = vector.load %arg5[%c0_132, %c0_133, %c0_134, %c0_135] : memref<1x8x16x4xf32, #tpu.memory_space<vmem>>, vector<1x8x16x4xf32>
    %185 = vector.shape_cast %184 : vector<1x8x16x4xf32> to vector<8x16x4xf32>
    %186 = vector.shape_cast %183 : vector<8x16x4xf32> to vector<1x8x16x4xf32>
    tpu.vector_store %arg5[%c0_132, %c0_133, %c0_134, %c0_135], %186 {strides = array<i32>} : memref<1x8x16x4xf32, #tpu.memory_space<vmem>>, vector<1x8x16x4xf32>,
    %cst_136 = arith.constant dense<0.000000e+00> : vector<4xf32>
    %187 = vector.multi_reduction <add>, %182, %cst_136 [0] : vector<128x4xf32> to vector<4xf32>
    %188 = vector.shape_cast %187 : vector<4xf32> to vector<1x4xf32>
    %c0_137 = arith.constant 0 : index
    %c0_138 = arith.constant 0 : index
    %c0_139 = arith.constant 0 : index
    %c0_140 = arith.constant 0 : index
    %189 = vector.load %arg6[%c0_137, %c0_138, %c0_139, %c0_140] : memref<1x1x2x4xf32, #tpu.memory_space<vmem>>, vector<1x1x1x4xf32>
    %190 = vector.shape_cast %189 : vector<1x1x1x4xf32> to vector<1x4xf32>
    %191 = vector.shape_cast %188 : vector<1x4xf32> to vector<1x1x1x4xf32>
    tpu.vector_store %arg6[%c0_137, %c0_138, %c0_139, %c0_140], %191 {strides = array<i32>} : memref<1x1x2x4xf32, #tpu.memory_space<vmem>>, vector<1x1x1x4xf32>,
    %192 = arith.mulf %182, %182 : vector<128x4xf32>
    %cst_141 = arith.constant dense<0.000000e+00> : vector<4xf32>
    %193 = vector.multi_reduction <add>, %192, %cst_141 [0] : vector<128x4xf32> to vector<4xf32>
    %194 = vector.shape_cast %193 : vector<4xf32> to vector<1x4xf32>
    %c0_142 = arith.constant 0 : index
    %c0_143 = arith.constant 0 : index
    %c1_144 = arith.constant 1 : index
    %c0_145 = arith.constant 0 : index
    %195 = vector.load %arg6[%c0_142, %c0_143, %c1_144, %c0_145] : memref<1x1x2x4xf32, #tpu.memory_space<vmem>>, vector<1x1x1x4xf32>
    %196 = vector.shape_cast %195 : vector<1x1x1x4xf32> to vector<1x4xf32>
    %197 = vector.shape_cast %194 : vector<1x4xf32> to vector<1x1x1x4xf32>
    tpu.vector_store %arg6[%c0_142, %c0_143, %c1_144, %c0_145], %197 {strides = array<i32>} : memref<1x1x2x4xf32, #tpu.memory_space<vmem>>, vector<1x1x1x4xf32>,
    return
  }
  func.func @transform_0(%arg0: i32, %arg1: i32) -> (i32, i32, i32, i32) {
    %c0_i32 = arith.constant 0 : i32
    %c0_i32_0 = arith.constant 0 : i32
    %c0_i32_1 = arith.constant 0 : i32
    %c0_i32_2 = arith.constant 0 : i32
    return %arg0, %c0_i32, %c0_i32_0, %c0_i32_1 : i32, i32, i32, i32
  }
  func.func @transform_1(%arg0: i32, %arg1: i32) -> (i32, i32, i32, i32) {
    %c0_i32 = arith.constant 0 : i32
    %c0_i32_0 = arith.constant 0 : i32
    %c0_i32_1 = arith.constant 0 : i32
    %c0_i32_2 = arith.constant 0 : i32
    return %arg0, %c0_i32, %c0_i32_0, %c0_i32_1 : i32, i32, i32, i32
  }
  func.func @transform_2(%arg0: i32, %arg1: i32) -> (i32, i32, i32) {
    %c0_i32 = arith.constant 0 : i32
    %c0_i32_0 = arith.constant 0 : i32
    %c0_i32_1 = arith.constant 0 : i32
    %c0_i32_2 = arith.constant 0 : i32
    return %c0_i32, %c0_i32_0, %c0_i32_1 : i32, i32, i32
  }
  func.func @transform_3(%arg0: i32, %arg1: i32) -> (i32, i32, i32, i32) {
    %c0_i32 = arith.constant 0 : i32
    %c0_i32_0 = arith.constant 0 : i32
    %c0_i32_1 = arith.constant 0 : i32
    return %arg0, %arg1, %c0_i32, %c0_i32_0 : i32, i32, i32, i32
  }
  func.func @transform_4(%arg0: i32, %arg1: i32) -> (i32, i32, i32, i32) {
    %c0_i32 = arith.constant 0 : i32
    %c0_i32_0 = arith.constant 0 : i32
    %c0_i32_1 = arith.constant 0 : i32
    return %arg0, %arg1, %c0_i32, %c0_i32_0 : i32, i32, i32, i32
  }
}

module attributes {stable_mosaic.version = 11 : i64} {
  func.func @bn_relu_kernel(%arg0: i32, %arg1: i32, %arg2: memref<1x256x4xf32, #tpu.memory_space<vmem>>, %arg3: memref<1x1x4xf32, #tpu.memory_space<vmem>>, %arg4: memref<1x1x4xf32, #tpu.memory_space<vmem>>, %arg5: memref<1x256x4xf32, #tpu.memory_space<vmem>>) attributes {dimension_semantics = [#tpu.dimension_semantics<parallel>, #tpu.dimension_semantics<parallel>], iteration_bounds = array<i64: 2, 1>, scalar_prefetch = 0 : i64, scratch_operands = 0 : i64, tpu.core_type = #tpu.core_type<tc>, window_params = [{transform_indices = @transform_0, window_bounds = array<i64: 1, 256, 4>}, {pipeline_mode = #tpu.pipeline_mode<synchronous>, transform_indices = @transform_1, window_bounds = array<i64: 1, 1, 4>}, {pipeline_mode = #tpu.pipeline_mode<synchronous>, transform_indices = @transform_2, window_bounds = array<i64: 1, 1, 4>}, {transform_indices = @transform_3, window_bounds = array<i64: 1, 256, 4>}]} {
    %c0 = arith.constant 0 : index
    %c0_0 = arith.constant 0 : index
    %c0_1 = arith.constant 0 : index
    %0 = vector.load %arg2[%c0, %c0_0, %c0_1] : memref<1x256x4xf32, #tpu.memory_space<vmem>>, vector<1x256x4xf32>
    %c0_2 = arith.constant 0 : index
    %c0_3 = arith.constant 0 : index
    %c0_4 = arith.constant 0 : index
    %1 = vector.load %arg3[%c0_2, %c0_3, %c0_4] : memref<1x1x4xf32, #tpu.memory_space<vmem>>, vector<1x1x4xf32>
    %2 = vector.broadcast %1 : vector<1x1x4xf32> to vector<1x256x4xf32>
    %3 = arith.mulf %0, %2 : vector<1x256x4xf32>
    %c0_5 = arith.constant 0 : index
    %c0_6 = arith.constant 0 : index
    %c0_7 = arith.constant 0 : index
    %4 = vector.load %arg4[%c0_5, %c0_6, %c0_7] : memref<1x1x4xf32, #tpu.memory_space<vmem>>, vector<1x1x4xf32>
    %5 = vector.broadcast %4 : vector<1x1x4xf32> to vector<1x256x4xf32>
    %6 = arith.addf %3, %5 : vector<1x256x4xf32>
    %cst = arith.constant 0.000000e+00 : f32
    %7 = vector.broadcast %cst : f32 to vector<1x256x4xf32>
    %8 = arith.maximumf %6, %7 : vector<1x256x4xf32>
    %c0_8 = arith.constant 0 : index
    %c0_9 = arith.constant 0 : index
    %c0_10 = arith.constant 0 : index
    %9 = vector.load %arg5[%c0_8, %c0_9, %c0_10] : memref<1x256x4xf32, #tpu.memory_space<vmem>>, vector<1x256x4xf32>
    tpu.vector_store %arg5[%c0_8, %c0_9, %c0_10], %8 {strides = array<i32>} : memref<1x256x4xf32, #tpu.memory_space<vmem>>, vector<1x256x4xf32>,
    return
  }
  func.func @transform_0(%arg0: i32, %arg1: i32) -> (i32, i32, i32) {
    %c0_i32 = arith.constant 0 : i32
    %c0_i32_0 = arith.constant 0 : i32
    return %arg0, %arg1, %c0_i32 : i32, i32, i32
  }
  func.func @transform_1(%arg0: i32, %arg1: i32) -> (i32, i32, i32) {
    %c0_i32 = arith.constant 0 : i32
    %c0_i32_0 = arith.constant 0 : i32
    %c0_i32_1 = arith.constant 0 : i32
    %c0_i32_2 = arith.constant 0 : i32
    return %c0_i32, %c0_i32_0, %c0_i32_1 : i32, i32, i32
  }
  func.func @transform_2(%arg0: i32, %arg1: i32) -> (i32, i32, i32) {
    %c0_i32 = arith.constant 0 : i32
    %c0_i32_0 = arith.constant 0 : i32
    %c0_i32_1 = arith.constant 0 : i32
    %c0_i32_2 = arith.constant 0 : i32
    return %c0_i32, %c0_i32_0, %c0_i32_1 : i32, i32, i32
  }
  func.func @transform_3(%arg0: i32, %arg1: i32) -> (i32, i32, i32) {
    %c0_i32 = arith.constant 0 : i32
    %c0_i32_0 = arith.constant 0 : i32
    return %arg0, %arg1, %c0_i32 : i32, i32, i32
  }
}

module attributes {stable_mosaic.version = 11 : i64} {
  func.func @bn_relu_conv2_stats_kernel(%arg0: i32, %arg1: i32, %arg2: memref<1x16x16x4xf32, #tpu.memory_space<vmem>>, %arg3: memref<1x4xf32, #tpu.memory_space<vmem>>, %arg4: memref<1x4xf32, #tpu.memory_space<vmem>>, %arg5: memref<9x4x4xbf16, #tpu.memory_space<vmem>>, %arg6: memref<1x128x4xf32, #tpu.memory_space<vmem>>, %arg7: memref<1x1x2x4xf32, #tpu.memory_space<vmem>>, %arg8: memref<10x18x4xbf16, #tpu.memory_space<vmem>>) attributes {dimension_semantics = [#tpu.dimension_semantics<parallel>, #tpu.dimension_semantics<parallel>], iteration_bounds = array<i64: 2, 2>, scalar_prefetch = 0 : i64, scratch_operands = 1 : i64, tpu.core_type = #tpu.core_type<tc>, window_params = [{transform_indices = @transform_0, window_bounds = array<i64: 1, 16, 16, 4>}, {pipeline_mode = #tpu.pipeline_mode<synchronous>, transform_indices = @transform_1, window_bounds = array<i64: 1, 4>}, {pipeline_mode = #tpu.pipeline_mode<synchronous>, transform_indices = @transform_2, window_bounds = array<i64: 1, 4>}, {pipeline_mode = #tpu.pipeline_mode<synchronous>, transform_indices = @transform_3, window_bounds = array<i64: 9, 4, 4>}, {transform_indices = @transform_4, window_bounds = array<i64: 1, 128, 4>}, {transform_indices = @transform_5, window_bounds = array<i64: 1, 1, 2, 4>}]} {
    %c8_i32 = arith.constant 8 : i32
    %0 = arith.muli %arg1, %c8_i32 : i32
    %1 = tpu.assume_multiple %0, 8 : i32
    %c0 = arith.constant 0 : index
    %c0_0 = arith.constant 0 : index
    %2 = vector.load %arg3[%c0, %c0_0] : memref<1x4xf32, #tpu.memory_space<vmem>>, vector<1x4xf32>
    %c0_1 = arith.constant 0 : index
    %c0_2 = arith.constant 0 : index
    %3 = vector.load %arg4[%c0_1, %c0_2] : memref<1x4xf32, #tpu.memory_space<vmem>>, vector<1x4xf32>
    %cst = arith.constant 0.000000e+00 : bf16
    %4 = vector.broadcast %cst : bf16 to vector<10x1x4xbf16>
    %c0_3 = arith.constant 0 : index
    %c0_4 = arith.constant 0 : index
    %c0_5 = arith.constant 0 : index
    %5 = vector.load %arg8[%c0_3, %c0_4, %c0_5] : memref<10x18x4xbf16, #tpu.memory_space<vmem>>, vector<10x1x4xbf16>
    tpu.vector_store %arg8[%c0_3, %c0_4, %c0_5], %4 {strides = array<i32>} : memref<10x18x4xbf16, #tpu.memory_space<vmem>>, vector<10x1x4xbf16>,
    %c0_6 = arith.constant 0 : index
    %c17 = arith.constant 17 : index
    %c0_7 = arith.constant 0 : index
    %6 = vector.load %arg8[%c0_6, %c17, %c0_7] : memref<10x18x4xbf16, #tpu.memory_space<vmem>>, vector<10x1x4xbf16>
    tpu.vector_store %arg8[%c0_6, %c17, %c0_7], %4 {strides = array<i32>} : memref<10x18x4xbf16, #tpu.memory_space<vmem>>, vector<10x1x4xbf16>,
    %c0_8 = arith.constant 0 : index
    %7 = arith.index_cast %1 : i32 to index
    %c0_9 = arith.constant 0 : index
    %c0_10 = arith.constant 0 : index
    %8 = vector.load %arg2[%c0_8, %7, %c0_9, %c0_10] : memref<1x16x16x4xf32, #tpu.memory_space<vmem>>, vector<1x8x16x4xf32>
    %9 = vector.shape_cast %8 : vector<1x8x16x4xf32> to vector<8x16x4xf32>
    %10 = vector.shape_cast %2 : vector<1x4xf32> to vector<1x1x4xf32>
    %11 = vector.broadcast %10 : vector<1x1x4xf32> to vector<8x16x4xf32>
    %12 = arith.mulf %9, %11 : vector<8x16x4xf32>
    %13 = vector.shape_cast %3 : vector<1x4xf32> to vector<1x1x4xf32>
    %14 = vector.broadcast %13 : vector<1x1x4xf32> to vector<8x16x4xf32>
    %15 = arith.addf %12, %14 : vector<8x16x4xf32>
    %cst_11 = arith.constant 0.000000e+00 : f32
    %16 = vector.broadcast %cst_11 : f32 to vector<8x16x4xf32>
    %17 = arith.maximumf %15, %16 : vector<8x16x4xf32>
    %18 = arith.truncf %17 : vector<8x16x4xf32> to vector<8x16x4xbf16>
    %c1 = arith.constant 1 : index
    %c1_12 = arith.constant 1 : index
    %c0_13 = arith.constant 0 : index
    %19 = vector.load %arg8[%c1, %c1_12, %c0_13] : memref<10x18x4xbf16, #tpu.memory_space<vmem>>, vector<8x16x4xbf16>
    tpu.vector_store %arg8[%c1, %c1_12, %c0_13], %18 {strides = array<i32>} : memref<10x18x4xbf16, #tpu.memory_space<vmem>>, vector<8x16x4xbf16>,
    %c1_i32 = arith.constant 1 : i32
    %20 = arith.subi %1, %c1_i32 : i32
    %c0_i32 = arith.constant 0 : i32
    %21 = arith.maxsi %20, %c0_i32 : i32
    %c0_14 = arith.constant 0 : index
    %22 = arith.index_cast %21 : i32 to index
    %c0_15 = arith.constant 0 : index
    %c0_16 = arith.constant 0 : index
    %23 = vector.load %arg2[%c0_14, %22, %c0_15, %c0_16] : memref<1x16x16x4xf32, #tpu.memory_space<vmem>>, vector<1x1x16x4xf32>
    %24 = vector.shape_cast %23 : vector<1x1x16x4xf32> to vector<1x16x4xf32>
    %25 = vector.shape_cast %2 : vector<1x4xf32> to vector<1x1x4xf32>
    %26 = vector.broadcast %25 : vector<1x1x4xf32> to vector<1x16x4xf32>
    %27 = arith.mulf %24, %26 : vector<1x16x4xf32>
    %28 = vector.shape_cast %3 : vector<1x4xf32> to vector<1x1x4xf32>
    %29 = vector.broadcast %28 : vector<1x1x4xf32> to vector<1x16x4xf32>
    %30 = arith.addf %27, %29 : vector<1x16x4xf32>
    %cst_17 = arith.constant 0.000000e+00 : f32
    %31 = vector.broadcast %cst_17 : f32 to vector<1x16x4xf32>
    %32 = arith.maximumf %30, %31 : vector<1x16x4xf32>
    %33 = arith.truncf %32 : vector<1x16x4xf32> to vector<1x16x4xbf16>
    %c0_i32_18 = arith.constant 0 : i32
    %34 = arith.cmpi sgt, %arg1, %c0_i32_18 : i32
    %cst_19 = arith.constant 0.000000e+00 : bf16
    %35 = vector.broadcast %cst_19 : bf16 to vector<1x16x4xbf16>
    %36 = arith.select %34, %33, %35 : vector<1x16x4xbf16>
    %c0_20 = arith.constant 0 : index
    %c1_21 = arith.constant 1 : index
    %c0_22 = arith.constant 0 : index
    %37 = vector.load %arg8[%c0_20, %c1_21, %c0_22] : memref<10x18x4xbf16, #tpu.memory_space<vmem>>, vector<1x16x4xbf16>
    tpu.vector_store %arg8[%c0_20, %c1_21, %c0_22], %36 {strides = array<i32>} : memref<10x18x4xbf16, #tpu.memory_space<vmem>>, vector<1x16x4xbf16>,
    %c8_i32_23 = arith.constant 8 : i32
    %38 = arith.addi %1, %c8_i32_23 : i32
    %c15_i32 = arith.constant 15 : i32
    %39 = arith.minsi %38, %c15_i32 : i32
    %c0_24 = arith.constant 0 : index
    %40 = arith.index_cast %39 : i32 to index
    %c0_25 = arith.constant 0 : index
    %c0_26 = arith.constant 0 : index
    %41 = vector.load %arg2[%c0_24, %40, %c0_25, %c0_26] : memref<1x16x16x4xf32, #tpu.memory_space<vmem>>, vector<1x1x16x4xf32>
    %42 = vector.shape_cast %41 : vector<1x1x16x4xf32> to vector<1x16x4xf32>
    %43 = vector.shape_cast %2 : vector<1x4xf32> to vector<1x1x4xf32>
    %44 = vector.broadcast %43 : vector<1x1x4xf32> to vector<1x16x4xf32>
    %45 = arith.mulf %42, %44 : vector<1x16x4xf32>
    %46 = vector.shape_cast %3 : vector<1x4xf32> to vector<1x1x4xf32>
    %47 = vector.broadcast %46 : vector<1x1x4xf32> to vector<1x16x4xf32>
    %48 = arith.addf %45, %47 : vector<1x16x4xf32>
    %cst_27 = arith.constant 0.000000e+00 : f32
    %49 = vector.broadcast %cst_27 : f32 to vector<1x16x4xf32>
    %50 = arith.maximumf %48, %49 : vector<1x16x4xf32>
    %51 = arith.truncf %50 : vector<1x16x4xf32> to vector<1x16x4xbf16>
    %c1_i32_28 = arith.constant 1 : i32
    %52 = arith.cmpi slt, %arg1, %c1_i32_28 : i32
    %cst_29 = arith.constant 0.000000e+00 : bf16
    %53 = vector.broadcast %cst_29 : bf16 to vector<1x16x4xbf16>
    %54 = arith.select %52, %51, %53 : vector<1x16x4xbf16>
    %c9 = arith.constant 9 : index
    %c1_30 = arith.constant 1 : index
    %c0_31 = arith.constant 0 : index
    %55 = vector.load %arg8[%c9, %c1_30, %c0_31] : memref<10x18x4xbf16, #tpu.memory_space<vmem>>, vector<1x16x4xbf16>
    tpu.vector_store %arg8[%c9, %c1_30, %c0_31], %54 {strides = array<i32>} : memref<10x18x4xbf16, #tpu.memory_space<vmem>>, vector<1x16x4xbf16>,
    %cst_32 = arith.constant 0.000000e+00 : f32
    %56 = vector.broadcast %cst_32 : f32 to vector<128x4xf32>
    %c0_33 = arith.constant 0 : index
    %c0_34 = arith.constant 0 : index
    %c0_35 = arith.constant 0 : index
    %57 = vector.load %arg8[%c0_33, %c0_34, %c0_35] : memref<10x18x4xbf16, #tpu.memory_space<vmem>>, vector<8x16x4xbf16>
    %58 = vector.shape_cast %57 : vector<8x16x4xbf16> to vector<128x4xbf16>
    %c0_36 = arith.constant 0 : index
    %c0_37 = arith.constant 0 : index
    %c0_38 = arith.constant 0 : index
    %59 = vector.load %arg5[%c0_36, %c0_37, %c0_38] : memref<9x4x4xbf16, #tpu.memory_space<vmem>>, vector<1x4x4xbf16>
    %60 = vector.shape_cast %59 : vector<1x4x4xbf16> to vector<4x4xbf16>
    %cst_39 = arith.constant dense<0.000000e+00> : vector<128x4xf32>
    %61 = tpu.matmul %58, %60, %cst_39 {dimension_numbers = #tpu.dot_dimension_numbers<[1], [0], [0], [1], [0, 0, 1, 1], [], []>} : vector<128x4xbf16>, vector<4x4xbf16>, vector<128x4xf32> -> vector<128x4xf32>
    %62 = arith.addf %56, %61 : vector<128x4xf32>
    %c0_40 = arith.constant 0 : index
    %c1_41 = arith.constant 1 : index
    %c0_42 = arith.constant 0 : index
    %63 = vector.load %arg8[%c0_40, %c1_41, %c0_42] : memref<10x18x4xbf16, #tpu.memory_space<vmem>>, vector<8x16x4xbf16>
    %64 = vector.shape_cast %63 : vector<8x16x4xbf16> to vector<128x4xbf16>
    %c1_43 = arith.constant 1 : index
    %c0_44 = arith.constant 0 : index
    %c0_45 = arith.constant 0 : index
    %65 = vector.load %arg5[%c1_43, %c0_44, %c0_45] : memref<9x4x4xbf16, #tpu.memory_space<vmem>>, vector<1x4x4xbf16>
    %66 = vector.shape_cast %65 : vector<1x4x4xbf16> to vector<4x4xbf16>
    %cst_46 = arith.constant dense<0.000000e+00> : vector<128x4xf32>
    %67 = tpu.matmul %64, %66, %cst_46 {dimension_numbers = #tpu.dot_dimension_numbers<[1], [0], [0], [1], [0, 0, 1, 1], [], []>} : vector<128x4xbf16>, vector<4x4xbf16>, vector<128x4xf32> -> vector<128x4xf32>
    %68 = arith.addf %62, %67 : vector<128x4xf32>
    %c0_47 = arith.constant 0 : index
    %c2 = arith.constant 2 : index
    %c0_48 = arith.constant 0 : index
    %69 = vector.load %arg8[%c0_47, %c2, %c0_48] : memref<10x18x4xbf16, #tpu.memory_space<vmem>>, vector<8x16x4xbf16>
    %70 = vector.shape_cast %69 : vector<8x16x4xbf16> to vector<128x4xbf16>
    %c2_49 = arith.constant 2 : index
    %c0_50 = arith.constant 0 : index
    %c0_51 = arith.constant 0 : index
    %71 = vector.load %arg5[%c2_49, %c0_50, %c0_51] : memref<9x4x4xbf16, #tpu.memory_space<vmem>>, vector<1x4x4xbf16>
    %72 = vector.shape_cast %71 : vector<1x4x4xbf16> to vector<4x4xbf16>
    %cst_52 = arith.constant dense<0.000000e+00> : vector<128x4xf32>
    %73 = tpu.matmul %70, %72, %cst_52 {dimension_numbers = #tpu.dot_dimension_numbers<[1], [0], [0], [1], [0, 0, 1, 1], [], []>} : vector<128x4xbf16>, vector<4x4xbf16>, vector<128x4xf32> -> vector<128x4xf32>
    %74 = arith.addf %68, %73 : vector<128x4xf32>
    %c1_53 = arith.constant 1 : index
    %c0_54 = arith.constant 0 : index
    %c0_55 = arith.constant 0 : index
    %75 = vector.load %arg8[%c1_53, %c0_54, %c0_55] : memref<10x18x4xbf16, #tpu.memory_space<vmem>>, vector<8x16x4xbf16>
    %76 = vector.shape_cast %75 : vector<8x16x4xbf16> to vector<128x4xbf16>
    %c3 = arith.constant 3 : index
    %c0_56 = arith.constant 0 : index
    %c0_57 = arith.constant 0 : index
    %77 = vector.load %arg5[%c3, %c0_56, %c0_57] : memref<9x4x4xbf16, #tpu.memory_space<vmem>>, vector<1x4x4xbf16>
    %78 = vector.shape_cast %77 : vector<1x4x4xbf16> to vector<4x4xbf16>
    %cst_58 = arith.constant dense<0.000000e+00> : vector<128x4xf32>
    %79 = tpu.matmul %76, %78, %cst_58 {dimension_numbers = #tpu.dot_dimension_numbers<[1], [0], [0], [1], [0, 0, 1, 1], [], []>} : vector<128x4xbf16>, vector<4x4xbf16>, vector<128x4xf32> -> vector<128x4xf32>
    %80 = arith.addf %74, %79 : vector<128x4xf32>
    %c1_59 = arith.constant 1 : index
    %c1_60 = arith.constant 1 : index
    %c0_61 = arith.constant 0 : index
    %81 = vector.load %arg8[%c1_59, %c1_60, %c0_61] : memref<10x18x4xbf16, #tpu.memory_space<vmem>>, vector<8x16x4xbf16>
    %82 = vector.shape_cast %81 : vector<8x16x4xbf16> to vector<128x4xbf16>
    %c4 = arith.constant 4 : index
    %c0_62 = arith.constant 0 : index
    %c0_63 = arith.constant 0 : index
    %83 = vector.load %arg5[%c4, %c0_62, %c0_63] : memref<9x4x4xbf16, #tpu.memory_space<vmem>>, vector<1x4x4xbf16>
    %84 = vector.shape_cast %83 : vector<1x4x4xbf16> to vector<4x4xbf16>
    %cst_64 = arith.constant dense<0.000000e+00> : vector<128x4xf32>
    %85 = tpu.matmul %82, %84, %cst_64 {dimension_numbers = #tpu.dot_dimension_numbers<[1], [0], [0], [1], [0, 0, 1, 1], [], []>} : vector<128x4xbf16>, vector<4x4xbf16>, vector<128x4xf32> -> vector<128x4xf32>
    %86 = arith.addf %80, %85 : vector<128x4xf32>
    %c1_65 = arith.constant 1 : index
    %c2_66 = arith.constant 2 : index
    %c0_67 = arith.constant 0 : index
    %87 = vector.load %arg8[%c1_65, %c2_66, %c0_67] : memref<10x18x4xbf16, #tpu.memory_space<vmem>>, vector<8x16x4xbf16>
    %88 = vector.shape_cast %87 : vector<8x16x4xbf16> to vector<128x4xbf16>
    %c5 = arith.constant 5 : index
    %c0_68 = arith.constant 0 : index
    %c0_69 = arith.constant 0 : index
    %89 = vector.load %arg5[%c5, %c0_68, %c0_69] : memref<9x4x4xbf16, #tpu.memory_space<vmem>>, vector<1x4x4xbf16>
    %90 = vector.shape_cast %89 : vector<1x4x4xbf16> to vector<4x4xbf16>
    %cst_70 = arith.constant dense<0.000000e+00> : vector<128x4xf32>
    %91 = tpu.matmul %88, %90, %cst_70 {dimension_numbers = #tpu.dot_dimension_numbers<[1], [0], [0], [1], [0, 0, 1, 1], [], []>} : vector<128x4xbf16>, vector<4x4xbf16>, vector<128x4xf32> -> vector<128x4xf32>
    %92 = arith.addf %86, %91 : vector<128x4xf32>
    %c2_71 = arith.constant 2 : index
    %c0_72 = arith.constant 0 : index
    %c0_73 = arith.constant 0 : index
    %93 = vector.load %arg8[%c2_71, %c0_72, %c0_73] : memref<10x18x4xbf16, #tpu.memory_space<vmem>>, vector<8x16x4xbf16>
    %94 = vector.shape_cast %93 : vector<8x16x4xbf16> to vector<128x4xbf16>
    %c6 = arith.constant 6 : index
    %c0_74 = arith.constant 0 : index
    %c0_75 = arith.constant 0 : index
    %95 = vector.load %arg5[%c6, %c0_74, %c0_75] : memref<9x4x4xbf16, #tpu.memory_space<vmem>>, vector<1x4x4xbf16>
    %96 = vector.shape_cast %95 : vector<1x4x4xbf16> to vector<4x4xbf16>
    %cst_76 = arith.constant dense<0.000000e+00> : vector<128x4xf32>
    %97 = tpu.matmul %94, %96, %cst_76 {dimension_numbers = #tpu.dot_dimension_numbers<[1], [0], [0], [1], [0, 0, 1, 1], [], []>} : vector<128x4xbf16>, vector<4x4xbf16>, vector<128x4xf32> -> vector<128x4xf32>
    %98 = arith.addf %92, %97 : vector<128x4xf32>
    %c2_77 = arith.constant 2 : index
    %c1_78 = arith.constant 1 : index
    %c0_79 = arith.constant 0 : index
    %99 = vector.load %arg8[%c2_77, %c1_78, %c0_79] : memref<10x18x4xbf16, #tpu.memory_space<vmem>>, vector<8x16x4xbf16>
    %100 = vector.shape_cast %99 : vector<8x16x4xbf16> to vector<128x4xbf16>
    %c7 = arith.constant 7 : index
    %c0_80 = arith.constant 0 : index
    %c0_81 = arith.constant 0 : index
    %101 = vector.load %arg5[%c7, %c0_80, %c0_81] : memref<9x4x4xbf16, #tpu.memory_space<vmem>>, vector<1x4x4xbf16>
    %102 = vector.shape_cast %101 : vector<1x4x4xbf16> to vector<4x4xbf16>
    %cst_82 = arith.constant dense<0.000000e+00> : vector<128x4xf32>
    %103 = tpu.matmul %100, %102, %cst_82 {dimension_numbers = #tpu.dot_dimension_numbers<[1], [0], [0], [1], [0, 0, 1, 1], [], []>} : vector<128x4xbf16>, vector<4x4xbf16>, vector<128x4xf32> -> vector<128x4xf32>
    %104 = arith.addf %98, %103 : vector<128x4xf32>
    %c2_83 = arith.constant 2 : index
    %c2_84 = arith.constant 2 : index
    %c0_85 = arith.constant 0 : index
    %105 = vector.load %arg8[%c2_83, %c2_84, %c0_85] : memref<10x18x4xbf16, #tpu.memory_space<vmem>>, vector<8x16x4xbf16>
    %106 = vector.shape_cast %105 : vector<8x16x4xbf16> to vector<128x4xbf16>
    %c8 = arith.constant 8 : index
    %c0_86 = arith.constant 0 : index
    %c0_87 = arith.constant 0 : index
    %107 = vector.load %arg5[%c8, %c0_86, %c0_87] : memref<9x4x4xbf16, #tpu.memory_space<vmem>>, vector<1x4x4xbf16>
    %108 = vector.shape_cast %107 : vector<1x4x4xbf16> to vector<4x4xbf16>
    %cst_88 = arith.constant dense<0.000000e+00> : vector<128x4xf32>
    %109 = tpu.matmul %106, %108, %cst_88 {dimension_numbers = #tpu.dot_dimension_numbers<[1], [0], [0], [1], [0, 0, 1, 1], [], []>} : vector<128x4xbf16>, vector<4x4xbf16>, vector<128x4xf32> -> vector<128x4xf32>
    %110 = arith.addf %104, %109 : vector<128x4xf32>
    %c0_89 = arith.constant 0 : index
    %c0_90 = arith.constant 0 : index
    %c0_91 = arith.constant 0 : index
    %111 = vector.load %arg6[%c0_89, %c0_90, %c0_91] : memref<1x128x4xf32, #tpu.memory_space<vmem>>, vector<1x128x4xf32>
    %112 = vector.shape_cast %111 : vector<1x128x4xf32> to vector<128x4xf32>
    %113 = vector.shape_cast %110 : vector<128x4xf32> to vector<1x128x4xf32>
    tpu.vector_store %arg6[%c0_89, %c0_90, %c0_91], %113 {strides = array<i32>} : memref<1x128x4xf32, #tpu.memory_space<vmem>>, vector<1x128x4xf32>,
    %cst_92 = arith.constant dense<0.000000e+00> : vector<4xf32>
    %114 = vector.multi_reduction <add>, %110, %cst_92 [0] : vector<128x4xf32> to vector<4xf32>
    %115 = vector.shape_cast %114 : vector<4xf32> to vector<1x4xf32>
    %c0_93 = arith.constant 0 : index
    %c0_94 = arith.constant 0 : index
    %c0_95 = arith.constant 0 : index
    %c0_96 = arith.constant 0 : index
    %116 = vector.load %arg7[%c0_93, %c0_94, %c0_95, %c0_96] : memref<1x1x2x4xf32, #tpu.memory_space<vmem>>, vector<1x1x1x4xf32>
    %117 = vector.shape_cast %116 : vector<1x1x1x4xf32> to vector<1x4xf32>
    %118 = vector.shape_cast %115 : vector<1x4xf32> to vector<1x1x1x4xf32>
    tpu.vector_store %arg7[%c0_93, %c0_94, %c0_95, %c0_96], %118 {strides = array<i32>} : memref<1x1x2x4xf32, #tpu.memory_space<vmem>>, vector<1x1x1x4xf32>,
    %119 = arith.mulf %110, %110 : vector<128x4xf32>
    %cst_97 = arith.constant dense<0.000000e+00> : vector<4xf32>
    %120 = vector.multi_reduction <add>, %119, %cst_97 [0] : vector<128x4xf32> to vector<4xf32>
    %121 = vector.shape_cast %120 : vector<4xf32> to vector<1x4xf32>
    %c0_98 = arith.constant 0 : index
    %c0_99 = arith.constant 0 : index
    %c1_100 = arith.constant 1 : index
    %c0_101 = arith.constant 0 : index
    %122 = vector.load %arg7[%c0_98, %c0_99, %c1_100, %c0_101] : memref<1x1x2x4xf32, #tpu.memory_space<vmem>>, vector<1x1x1x4xf32>
    %123 = vector.shape_cast %122 : vector<1x1x1x4xf32> to vector<1x4xf32>
    %124 = vector.shape_cast %121 : vector<1x4xf32> to vector<1x1x1x4xf32>
    tpu.vector_store %arg7[%c0_98, %c0_99, %c1_100, %c0_101], %124 {strides = array<i32>} : memref<1x1x2x4xf32, #tpu.memory_space<vmem>>, vector<1x1x1x4xf32>,
    return
  }
  func.func @transform_0(%arg0: i32, %arg1: i32) -> (i32, i32, i32, i32) {
    %c0_i32 = arith.constant 0 : i32
    %c0_i32_0 = arith.constant 0 : i32
    %c0_i32_1 = arith.constant 0 : i32
    %c0_i32_2 = arith.constant 0 : i32
    return %arg0, %c0_i32, %c0_i32_0, %c0_i32_1 : i32, i32, i32, i32
  }
  func.func @transform_1(%arg0: i32, %arg1: i32) -> (i32, i32) {
    %c0_i32 = arith.constant 0 : i32
    %c0_i32_0 = arith.constant 0 : i32
    %c0_i32_1 = arith.constant 0 : i32
    return %c0_i32, %c0_i32_0 : i32, i32
  }
  func.func @transform_2(%arg0: i32, %arg1: i32) -> (i32, i32) {
    %c0_i32 = arith.constant 0 : i32
    %c0_i32_0 = arith.constant 0 : i32
    %c0_i32_1 = arith.constant 0 : i32
    return %c0_i32, %c0_i32_0 : i32, i32
  }
  func.func @transform_3(%arg0: i32, %arg1: i32) -> (i32, i32, i32) {
    %c0_i32 = arith.constant 0 : i32
    %c0_i32_0 = arith.constant 0 : i32
    %c0_i32_1 = arith.constant 0 : i32
    %c0_i32_2 = arith.constant 0 : i32
    return %c0_i32, %c0_i32_0, %c0_i32_1 : i32, i32, i32
  }
  func.func @transform_4(%arg0: i32, %arg1: i32) -> (i32, i32, i32) {
    %c0_i32 = arith.constant 0 : i32
    %c0_i32_0 = arith.constant 0 : i32
    return %arg0, %arg1, %c0_i32 : i32, i32, i32
  }
  func.func @transform_5(%arg0: i32, %arg1: i32) -> (i32, i32, i32, i32) {
    %c0_i32 = arith.constant 0 : i32
    %c0_i32_0 = arith.constant 0 : i32
    %c0_i32_1 = arith.constant 0 : i32
    return %arg0, %arg1, %c0_i32, %c0_i32_0 : i32, i32, i32, i32
  }
}

</mosaic_0001>

<llo_original>
// kernel: up_forward.5
$region0: #{up_forward.5}
  #allocation0 [shape = 'u32[]', space=smem, size = 0x4, offset = 0x4, fixed_abs, tag = 'smem constant byte address 0x4 - core index']
  #allocation1 [shape = 'u32[144,128]{1,0:T(1,128)}', space=vmem, size = 0x12000, scoped, tag = 'internal scratch']
  %s0 = inlined_call_operand.vmem [shape: f32[2,256,4], index: 0, kind: input, shape index: {}, may-alias: {0,3}]
  %s1 = inlined_call_operand.vmem [shape: f32[1,1,4], index: 1, kind: input, shape index: {}]
  %s2 = inlined_call_operand.vmem [shape: f32[1,1,4], index: 2, kind: input, shape index: {}]
  %s3 = inlined_call_operand.vmem [shape: f32[2,256,4], index: 3, kind: output, shape index: {}, may-alias: {0,3}]
  %s4 = sld [smem:[#allocation0]]
  $region45: #{up_forward.5} parent=0
    _
  %s6 = ssub.s32 1, %s4
  %s7 = scalar_select 0, %s6, %s4
  loop: start=0, step=1, limit=4
  $region2: #{up_forward.5} parent=0 // loop_pre_header
    _
  $region3: #{up_forward.5} parent=0 // loop_header
    %s9 = sphi 0, %s13
    %p10 = scmp.ge.s32.totalorder %s9, 4
    %s16 = sphi 0, %s28
    %s17 = sphi 0, %s24
    %s18 = sphi 0, %s16
    %s19 = sphi 0, %s17
    %s20 = sphi 0, %s18
    %s21 = sphi 0, %s19
    %s33 = sphi 0, %s35
    %s36 = sphi 0, %s33
    %s37 = sphi 0, %s36
    %s53 = sphi 0, %s37
    %s57 = sphi 0, %s57
    %s59 = sphi 0, %s57
    %s60 = sphi 0, %s59
    %s74 = sphi 0, %s60
    %s78 = sphi 0, %s78
    %s80 = sphi 0, %s78
    %s81 = sphi 0, %s80
    %s95 = sphi 0, %s81
    %s103 = sphi 0, %s105
    %s106 = sphi 0, %s103
    %s107 = sphi 0, %s106
    %s123 = sphi 0, %s107
  $region4: #{up_forward.5} parent=0 // loop_header_branch
    %12 = sbr.rel (%p10) target = $region8
  $region5: #{up_forward.5} parent=0 // loop_body
    %s14 = ssub.s32 %s9, 1
    %s15 = ssub.s32 %s9, 2
    %s22 = sadd.s32 1, %s17
    %p23 = scmp.ge.s32.totalorder %s22, 1
    %s24 = scalar_select %p23, 0, %s22
    %s25 = sadd.s32 1, %s16
    %s26 = scalar_select %p23, %s25, %s16
    %p27 = scmp.ge.s32.totalorder %s26, 2
    %s28 = scalar_select %p27, 0, %s26
    %s29 = ssub.s32 %s16, %s28
    %s30 = ssub.s32 %s17, %s24
    %s31 = sor.u32 %s29, %s30
    %p32 = scmp.eq.s32.totalorder %s31, 0
    %s34 = sadd.s32 %s33, 1
    %s35 = scalar_select %p32, %s33, %s34
    %p38 = pneg %p32
    %p39 = scmp.eq.s32.totalorder %s9, 1
    %p40 = por %p38, %p39
    %p41 = scmp.ne.s32.totalorder %s33, %s36
    %p42 = scmp.eq.s32.totalorder %s9, 0
    %p43 = por %p41, %p42
    %p44 = scmp.ne.s32.totalorder %s33, %s36
    %p45 = scmp.eq.s32.totalorder %s14, 1
    %p46 = por %p44, %p45
    %p47 = scmp.ne.s32.totalorder %s36, %s37
    %p48 = scmp.eq.s32.totalorder %s14, 0
    %p49 = por %p47, %p48
    %p50 = scmp.ne.s32.totalorder %s36, %s37
    %p51 = scmp.eq.s32.totalorder %s15, 1
    %p52 = por %p50, %p51
    %p54 = scmp.ne.s32.totalorder %s37, %s53
    %p55 = scmp.eq.s32.totalorder %s15, 0
    %p56 = por %p54, %p55
    %s58 = sadd.s32 %s57, 1
    %p61 = scmp.eq.s32.totalorder %s9, 1
    %p62 = scmp.ne.s32.totalorder %s57, %s59
    %p63 = scmp.eq.s32.totalorder %s9, 0
    %p64 = por %p62, %p63
    %p65 = scmp.ne.s32.totalorder %s57, %s59
    %p66 = scmp.eq.s32.totalorder %s14, 1
    %p67 = por %p65, %p66
    %p68 = scmp.ne.s32.totalorder %s59, %s60
    %p69 = scmp.eq.s32.totalorder %s14, 0
    %p70 = por %p68, %p69
    %p71 = scmp.ne.s32.totalorder %s59, %s60
    %p72 = scmp.eq.s32.totalorder %s15, 1
    %p73 = por %p71, %p72
    %p75 = scmp.ne.s32.totalorder %s60, %s74
    %p76 = scmp.eq.s32.totalorder %s15, 0
    %p77 = por %p75, %p76
    %s79 = sadd.s32 %s78, 1
    %p82 = scmp.eq.s32.totalorder %s9, 1
    %p83 = scmp.ne.s32.totalorder %s78, %s80
    %p84 = scmp.eq.s32.totalorder %s9, 0
    %p85 = por %p83, %p84
    %p86 = scmp.ne.s32.totalorder %s78, %s80
    %p87 = scmp.eq.s32.totalorder %s14, 1
    %p88 = por %p86, %p87
    %p89 = scmp.ne.s32.totalorder %s80, %s81
    %p90 = scmp.eq.s32.totalorder %s14, 0
    %p91 = por %p89, %p90
    %p92 = scmp.ne.s32.totalorder %s80, %s81
    %p93 = scmp.eq.s32.totalorder %s15, 1
    %p94 = por %p92, %p93
    %p96 = scmp.ne.s32.totalorder %s81, %s95
    %p97 = scmp.eq.s32.totalorder %s15, 0
    %p98 = por %p96, %p97
    %s99 = ssub.s32 %s16, %s28
    %s100 = ssub.s32 %s17, %s24
    %s101 = sor.u32 %s99, %s100
    %p102 = scmp.eq.s32.totalorder %s101, 0
    %s104 = sadd.s32 %s103, 1
    %s105 = scalar_select %p102, %s103, %s104
    %p108 = pneg %p102
    %p109 = scmp.eq.s32.totalorder %s9, 1
    %p110 = por %p108, %p109
    %p111 = scmp.ne.s32.totalorder %s103, %s106
    %p112 = scmp.eq.s32.totalorder %s9, 0
    %p113 = por %p111, %p112
    %p114 = scmp.ne.s32.totalorder %s103, %s106
    %p115 = scmp.eq.s32.totalorder %s14, 1
    %p116 = por %p114, %p115
    %p117 = scmp.ne.s32.totalorder %s106, %s107
    %p118 = scmp.eq.s32.totalorder %s14, 0
    %p119 = por %p117, %p118
    %p120 = scmp.ne.s32.totalorder %s106, %s107
    %p121 = scmp.eq.s32.totalorder %s15, 1
    %p122 = por %p120, %p121
    %p124 = scmp.ne.s32.totalorder %s107, %s123
    %p125 = scmp.eq.s32.totalorder %s15, 0
    %p126 = por %p124, %p125
    %p127 = scmp.le.s32.totalorder 1, %s9
    %p128 = scmp.lt.s32.totalorder %s9, 3
    %p129 = pnand %p127, %p128
    %p130 = pneg %p129
    // Predicated region
    $region9: #{up_forward.5} parent=5 // pred_check
      _
    $region10: #{up_forward.5} parent=5 // pred_check_branch
      %132 = sbr.rel (%p129) target = $region12
    $region11: #{up_forward.5} parent=5 // pred_region
      %s133 = ssub.s32 %s9, 1
      // Predicated region
      $region13: #{up_forward.5} parent=11 // pred_check
        %p134 = pneg %p70
      $region14: #{up_forward.5} parent=11 // pred_check_branch
        %136 = sbr.rel (%p134) target = $region16
      $region15: #{up_forward.5} parent=11 // pred_region
        _
      $region16: #{up_forward.5} parent=11 // pred_fallthru
        _
      // Predicated region
      $region17: #{up_forward.5} parent=11 // pred_check
        %p137 = pneg %p91
      $region18: #{up_forward.5} parent=11 // pred_check_branch
        %139 = sbr.rel (%p137) target = $region20
      $region19: #{up_forward.5} parent=11 // pred_region
        _
      $region20: #{up_forward.5} parent=11 // pred_fallthru
        _
    $region12: #{up_forward.5} parent=5 // pred_fallthru
      _
    %p140 = scmp.lt.s32.totalorder %s9, 2
    // Predicated region
    $region21: #{up_forward.5} parent=5 // pred_check
      %p141 = pneg %p140
    $region22: #{up_forward.5} parent=5 // pred_check_branch
      %143 = sbr.rel (%p141) target = $region24
    $region23: #{up_forward.5} parent=5 // pred_region
      // Predicated region
      $region25: #{up_forward.5} parent=23 // pred_check
        %p144 = pneg %p43
      $region26: #{up_forward.5} parent=23 // pred_check_branch
        %146 = sbr.rel (%p144) target = $region28
      $region27: #{up_forward.5} parent=23 // pred_region
        %s147 = smul.u32 32, %s17
        %p148 = scmp.lt.s32.totalorder %s16, 1
        %s149 = scalar_select %p148, %s16, 1
        %p150 = scmp.lt.s32.totalorder %s147, 31
        %s151 = scalar_select %p150, %s147, 31
        %s152 = smul.addr %s149, 32
        %s153 = sadd.s32 %s151, %s152
        %s154 = smul.addr %s153, 8
        %s155 = scalar_lea.vmem %s0, %s154
        %s156 = smul.u32 32, %s17
      $region28: #{up_forward.5} parent=23 // pred_fallthru
        _
    $region24: #{up_forward.5} parent=5 // pred_fallthru
      _
    %p157 = scmp.le.s32.totalorder 1, %s9
    %p158 = scmp.lt.s32.totalorder %s9, 3
    %p159 = pnand %p157, %p158
    %p160 = pneg %p159
    // Predicated region
    $region29: #{up_forward.5} parent=5 // pred_check
      _
    $region30: #{up_forward.5} parent=5 // pred_check_branch
      %162 = sbr.rel (%p159) target = $region32
    $region31: #{up_forward.5} parent=5 // pred_region
      %s163 = ssub.s32 %s9, 1
      %s164 = smul.u32 32, %s19
      %p165 = scmp.lt.s32.totalorder %s18, 1
      %s166 = scalar_select %p165, %s18, 1
      %p167 = scmp.lt.s32.totalorder %s164, 31
      %s168 = scalar_select %p167, %s164, 31
      %s169 = smul.addr %s166, 32
      %s170 = sadd.s32 %s168, %s169
      %s171 = smul.addr %s170, 8
      %s172 = scalar_lea.vmem %s0, %s171
      %p173 = pneg %p49
      %p174 = pneg %p46
      %p175 = pneg %p70
      %p176 = pneg %p67
      %p177 = pneg %p91
      %p178 = pneg %p88
      %p179 = pneg %p119
      %p180 = pneg %p116
      %s181 = smul.u32 32, %s19
      %p182 = scmp.lt.s32.totalorder %s18, 1
      %s183 = scalar_select %p182, %s18, 1
      %p184 = scmp.lt.s32.totalorder %s181, 31
      %s185 = scalar_select %p184, %s181, 31
      %s186 = smul.addr %s183, 32
      %s187 = sadd.s32 %s185, %s186
      %s188 = smul.addr %s187, 8
      %s189 = scalar_lea.vmem %s3, %s188
      %s190 = smul.u32 32, %s19
      %p191 = scmp.lt.s32.totalorder %s18, 1
      %s192 = scalar_select %p191, %s18, 1
      %p193 = scmp.lt.s32.totalorder %s190, 31
      %s194 = scalar_select %p193, %s190, 31
      %s195 = smul.addr %s192, 32
      %s196 = sadd.s32 %s194, %s195
      %s197 = smul.addr %s196, 8
      %s198 = scalar_lea.vmem %s0, %s197
      %s199 = smul.u32 32, %s19
      %s200 = smul.u32 32, %s19
      %p201 = scmp.lt.s32.totalorder %s18, 1
      %s202 = scalar_select %p201, %s18, 1
      %p203 = scmp.lt.s32.totalorder %s200, 31
      %s204 = scalar_select %p203, %s200, 31
      %s205 = smul.addr %s202, 32
      %s206 = sadd.s32 %s204, %s205
      %s207 = smul.addr %s206, 8
      %s208 = scalar_lea.vmem %s3, %s207
      %s209 = smul.u32 32, %s19
      %v210 = vld [vmem:[%s198] sm:$0xff]
      %v211 = vld [vmem:[%s198 + $0x8] sm:$0xff]
      %v212 = vld [vmem:[%s198 + $0x10] sm:$0xff]
      %v213 = vld [vmem:[%s198 + $0x18] sm:$0xff]
      %v214 = vld [vmem:[%s198 + $0x20] sm:$0xff]
      %v215 = vld [vmem:[%s198 + $0x28] sm:$0xff]
      %v216 = vld [vmem:[%s198 + $0x30] sm:$0xff]
      %v217 = vld [vmem:[%s198 + $0x38] sm:$0xff]
      %v218 = vld [vmem:[%s198 + $0x40] sm:$0xff]
      %v219 = vld [vmem:[%s198 + $0x48] sm:$0xff]
      %v220 = vld [vmem:[%s198 + $0x50] sm:$0xff]
      %v221 = vld [vmem:[%s198 + $0x58] sm:$0xff]
      %v222 = vld [vmem:[%s198 + $0x60] sm:$0xff]
      %v223 = vld [vmem:[%s198 + $0x68] sm:$0xff]
      %v224 = vld [vmem:[%s198 + $0x70] sm:$0xff]
      %v225 = vld [vmem:[%s198 + $0x78] sm:$0xff]
      %v226 = vld [vmem:[%s198 + $0x80] sm:$0xff]
      %v227 = vld [vmem:[%s198 + $0x88] sm:$0xff]
      %v228 = vld [vmem:[%s198 + $0x90] sm:$0xff]
      %v229 = vld [vmem:[%s198 + $0x98] sm:$0xff]
      %v230 = vld [vmem:[%s198 + $0xa0] sm:$0xff]
      %v231 = vld [vmem:[%s198 + $0xa8] sm:$0xff]
      %v232 = vld [vmem:[%s198 + $0xb0] sm:$0xff]
      %v233 = vld [vmem:[%s198 + $0xb8] sm:$0xff]
      %v234 = vld [vmem:[%s198 + $0xc0] sm:$0xff]
      %v235 = vld [vmem:[%s198 + $0xc8] sm:$0xff]
      %v236 = vld [vmem:[%s198 + $0xd0] sm:$0xff]
      %v237 = vld [vmem:[%s198 + $0xd8] sm:$0xff]
      %v238 = vld [vmem:[%s198 + $0xe0] sm:$0xff]
      %v239 = vld [vmem:[%s198 + $0xe8] sm:$0xff]
      %v240 = vld [vmem:[%s198 + $0xf0] sm:$0xff]
      %v241 = vld [vmem:[%s198 + $0xf8] sm:$0xff]
      %v242 = vld [vmem:[%s1] sm:$0x1]
      %v244 = vlaneseq
      %v245 = vshrl.u32 %v244, 7
      %v246 = vsub.s32 0, %v245
      %v247 = vrot.slane %v242, %v246
      %v249 = vmul.f32 %v210, %v247
      %v250 = vmul.f32 %v211, %v247
      %v251 = vmul.f32 %v212, %v247
      %v252 = vmul.f32 %v213, %v247
      %v253 = vmul.f32 %v214, %v247
      %v254 = vmul.f32 %v215, %v247
      %v255 = vmul.f32 %v216, %v247
      %v256 = vmul.f32 %v217, %v247
      %v257 = vmul.f32 %v218, %v247
      %v258 = vmul.f32 %v219, %v247
      %v259 = vmul.f32 %v220, %v247
      %v260 = vmul.f32 %v221, %v247
      %v261 = vmul.f32 %v222, %v247
      %v262 = vmul.f32 %v223, %v247
      %v263 = vmul.f32 %v224, %v247
      %v264 = vmul.f32 %v225, %v247
      %v265 = vmul.f32 %v226, %v247
      %v266 = vmul.f32 %v227, %v247
      %v267 = vmul.f32 %v228, %v247
      %v268 = vmul.f32 %v229, %v247
      %v269 = vmul.f32 %v230, %v247
      %v270 = vmul.f32 %v231, %v247
      %v271 = vmul.f32 %v232, %v247
      %v272 = vmul.f32 %v233, %v247
      %v273 = vmul.f32 %v234, %v247
      %v274 = vmul.f32 %v235, %v247
      %v275 = vmul.f32 %v236, %v247
      %v276 = vmul.f32 %v237, %v247
      %v277 = vmul.f32 %v238, %v247
      %v278 = vmul.f32 %v239, %v247
      %v279 = vmul.f32 %v240, %v247
      %v280 = vmul.f32 %v241, %v247
      %v281 = vld [vmem:[%s2] sm:$0x1]
      %v283 = vlaneseq
      %v284 = vshrl.u32 %v283, 7
      %v285 = vsub.s32 0, %v284
      %v286 = vrot.slane %v281, %v285
      %v288 = vadd.f32 %v249, %v286
      %v289 = vadd.f32 %v250, %v286
      %v290 = vadd.f32 %v251, %v286
      %v291 = vadd.f32 %v252, %v286
      %v292 = vadd.f32 %v253, %v286
      %v293 = vadd.f32 %v254, %v286
      %v294 = vadd.f32 %v255, %v286
      %v295 = vadd.f32 %v256, %v286
      %v296 = vadd.f32 %v257, %v286
      %v297 = vadd.f32 %v258, %v286
      %v298 = vadd.f32 %v259, %v286
      %v299 = vadd.f32 %v260, %v286
      %v300 = vadd.f32 %v261, %v286
      %v301 = vadd.f32 %v262, %v286
      %v302 = vadd.f32 %v263, %v286
      %v303 = vadd.f32 %v264, %v286
      %v304 = vadd.f32 %v265, %v286
      %v305 = vadd.f32 %v266, %v286
      %v306 = vadd.f32 %v267, %v286
      %v307 = vadd.f32 %v268, %v286
      %v308 = vadd.f32 %v269, %v286
      %v309 = vadd.f32 %v270, %v286
      %v310 = vadd.f32 %v271, %v286
      %v311 = vadd.f32 %v272, %v286
      %v312 = vadd.f32 %v273, %v286
      %v313 = vadd.f32 %v274, %v286
      %v314 = vadd.f32 %v275, %v286
      %v315 = vadd.f32 %v276, %v286
      %v316 = vadd.f32 %v277, %v286
      %v317 = vadd.f32 %v278, %v286
      %v318 = vadd.f32 %v279, %v286
      %v319 = vadd.f32 %v280, %v286
      %v320 = vmax.f32 %v288, 0.0
      %v321 = vmax.f32 %v289, 0.0
      %v322 = vmax.f32 %v290, 0.0
      %v323 = vmax.f32 %v291, 0.0
      %v324 = vmax.f32 %v292, 0.0
      %v325 = vmax.f32 %v293, 0.0
      %v326 = vmax.f32 %v294, 0.0
      %v327 = vmax.f32 %v295, 0.0
      %v328 = vmax.f32 %v296, 0.0
      %v329 = vmax.f32 %v297, 0.0
      %v330 = vmax.f32 %v298, 0.0
      %v331 = vmax.f32 %v299, 0.0
      %v332 = vmax.f32 %v300, 0.0
      %v333 = vmax.f32 %v301, 0.0
      %v334 = vmax.f32 %v302, 0.0
      %v335 = vmax.f32 %v303, 0.0
      %v336 = vmax.f32 %v304, 0.0
      %v337 = vmax.f32 %v305, 0.0
      %v338 = vmax.f32 %v306, 0.0
      %v339 = vmax.f32 %v307, 0.0
      %v340 = vmax.f32 %v308, 0.0
      %v341 = vmax.f32 %v309, 0.0
      %v342 = vmax.f32 %v310, 0.0
      %v343 = vmax.f32 %v311, 0.0
      %v344 = vmax.f32 %v312, 0.0
      %v345 = vmax.f32 %v313, 0.0
      %v346 = vmax.f32 %v314, 0.0
      %v347 = vmax.f32 %v315, 0.0
      %v348 = vmax.f32 %v316, 0.0
      %v349 = vmax.f32 %v317, 0.0
      %v350 = vmax.f32 %v318, 0.0
      %v351 = vmax.f32 %v319, 0.0
      %vm352 = vcmask 31744
      %353 = vst.msk [vmem:[%s208] sm:$0xff] %vm352, %v320
      %354 = vst.msk [vmem:[%s208 + $0x8] sm:$0xff] %vm352, %v321
      %355 = vst.msk [vmem:[%s208 + $0x10] sm:$0xff] %vm352, %v322
      %356 = vst.msk [vmem:[%s208 + $0x18] sm:$0xff] %vm352, %v323
      %357 = vst.msk [vmem:[%s208 + $0x20] sm:$0xff] %vm352, %v324
      %358 = vst.msk [vmem:[%s208 + $0x28] sm:$0xff] %vm352, %v325
      %359 = vst.msk [vmem:[%s208 + $0x30] sm:$0xff] %vm352, %v326
      %360 = vst.msk [vmem:[%s208 + $0x38] sm:$0xff] %vm352, %v327
      %361 = vst.msk [vmem:[%s208 + $0x40] sm:$0xff] %vm352, %v328
      %362 = vst.msk [vmem:[%s208 + $0x48] sm:$0xff] %vm352, %v329
      %363 = vst.msk [vmem:[%s208 + $0x50] sm:$0xff] %vm352, %v330
      %364 = vst.msk [vmem:[%s208 + $0x58] sm:$0xff] %vm352, %v331
      %365 = vst.msk [vmem:[%s208 + $0x60] sm:$0xff] %vm352, %v332
      %366 = vst.msk [vmem:[%s208 + $0x68] sm:$0xff] %vm352, %v333
      %367 = vst.msk [vmem:[%s208 + $0x70] sm:$0xff] %vm352, %v334
      %368 = vst.msk [vmem:[%s208 + $0x78] sm:$0xff] %vm352, %v335
      %369 = vst.msk [vmem:[%s208 + $0x80] sm:$0xff] %vm352, %v336
      %370 = vst.msk [vmem:[%s208 + $0x88] sm:$0xff] %vm352, %v337
      %371 = vst.msk [vmem:[%s208 + $0x90] sm:$0xff] %vm352, %v338
      %372 = vst.msk [vmem:[%s208 + $0x98] sm:$0xff] %vm352, %v339
      %373 = vst.msk [vmem:[%s208 + $0xa0] sm:$0xff] %vm352, %v340
      %374 = vst.msk [vmem:[%s208 + $0xa8] sm:$0xff] %vm352, %v341
      %375 = vst.msk [vmem:[%s208 + $0xb0] sm:$0xff] %vm352, %v342
      %376 = vst.msk [vmem:[%s208 + $0xb8] sm:$0xff] %vm352, %v343
      %377 = vst.msk [vmem:[%s208 + $0xc0] sm:$0xff] %vm352, %v344
      %378 = vst.msk [vmem:[%s208 + $0xc8] sm:$0xff] %vm352, %v345
      %379 = vst.msk [vmem:[%s208 + $0xd0] sm:$0xff] %vm352, %v346
      %380 = vst.msk [vmem:[%s208 + $0xd8] sm:$0xff] %vm352, %v347
      %381 = vst.msk [vmem:[%s208 + $0xe0] sm:$0xff] %vm352, %v348
      %382 = vst.msk [vmem:[%s208 + $0xe8] sm:$0xff] %vm352, %v349
      %383 = vst.msk [vmem:[%s208 + $0xf0] sm:$0xff] %vm352, %v350
      %384 = vst.msk [vmem:[%s208 + $0xf8] sm:$0xff] %vm352, %v351
      %s385 = smul.u32 32, %s19
      %p386 = scmp.lt.s32.totalorder %s18, 1
      %s387 = scalar_select %p386, %s18, 1
      %p388 = scmp.lt.s32.totalorder %s385, 31
      %s389 = scalar_select %p388, %s385, 31
      %s390 = smul.addr %s387, 32
      %s391 = sadd.s32 %s389, %s390
      %s392 = smul.addr %s391, 8
      %s393 = scalar_lea.vmem %s3, %s392
      // Predicated region
      $region33: #{up_forward.5} parent=31 // pred_check
        %p394 = pneg %p116
      $region34: #{up_forward.5} parent=31 // pred_check_branch
        %396 = sbr.rel (%p394) target = $region36
      $region35: #{up_forward.5} parent=31 // pred_region
        %s397 = smul.u32 32, %s19
      $region36: #{up_forward.5} parent=31 // pred_fallthru
        _
    $region32: #{up_forward.5} parent=5 // pred_fallthru
      _
    %p398 = scmp.le.s32.totalorder 2, %s9
    // Predicated region
    $region37: #{up_forward.5} parent=5 // pred_check
      %p399 = pneg %p398
    $region38: #{up_forward.5} parent=5 // pred_check_branch
      %401 = sbr.rel (%p399) target = $region40
    $region39: #{up_forward.5} parent=5 // pred_region
      %s402 = ssub.s32 %s9, 2
      // Predicated region
      $region41: #{up_forward.5} parent=39 // pred_check
        %p403 = pneg %p122
      $region42: #{up_forward.5} parent=39 // pred_check_branch
        %405 = sbr.rel (%p403) target = $region44
      $region43: #{up_forward.5} parent=39 // pred_region
        %s406 = smul.u32 32, %s21
        %p407 = scmp.lt.s32.totalorder %s20, 1
        %s408 = scalar_select %p407, %s20, 1
        %p409 = scmp.lt.s32.totalorder %s406, 31
        %s410 = scalar_select %p409, %s406, 31
        %s411 = smul.addr %s408, 32
        %s412 = sadd.s32 %s410, %s411
        %s413 = smul.addr %s412, 8
        %s414 = scalar_lea.vmem %s3, %s413
      $region44: #{up_forward.5} parent=39 // pred_fallthru
        _
    $region40: #{up_forward.5} parent=5 // pred_fallthru
      _
  $region6: #{up_forward.5} parent=0 // loop_footer
    %s13 = sadd.s32 1, %s9
  $region7: #{up_forward.5} parent=0 // loop_footer_branch
    %8 = sbr.rel target = $region3
  $region8: #{up_forward.5} parent=0 // loop_exit
    _

// kernel: up_forward.3
$region0: #{up_forward.3}
  #allocation0 [shape = 'u32[]', space=smem, size = 0x4, offset = 0x4, fixed_abs, tag = 'smem constant byte address 0x4 - core index']
  #allocation1 [shape = 'u32[144,128]{1,0:T(1,128)}', space=vmem, size = 0x12000, scoped, tag = 'internal scratch']
  %s0 = inlined_call_operand.vmem [shape: f32[2,18,18,4], index: 0, kind: input, shape index: {}]
  %s1 = inlined_call_operand.vmem [shape: f32[2,18,18,4], index: 1, kind: input, shape index: {}]
  %s2 = inlined_call_operand.vmem [shape: bf16[9,8,4], index: 2, kind: input, shape index: {}]
  %s3 = inlined_call_operand.vmem [shape: f32[2,16,16,4], index: 3, kind: output, shape index: {0}]
  %s4 = inlined_call_operand.vmem [shape: f32[2,2,2,4], index: 4, kind: output, shape index: {1}]
  %5 = xla_tuple %s3, %s4
  %s6 = sld [smem:[#allocation0]]
  $region53: #{up_forward.3} parent=0
    _
  %s8 = ssub.s32 1, %s6
  %s9 = scalar_select 0, %s8, %s6
  loop: start=0, step=1, limit=6
  $region2: #{up_forward.3} parent=0 // loop_pre_header
    _
  $region3: #{up_forward.3} parent=0 // loop_header
    %s11 = sphi 0, %s15
    %p12 = scmp.ge.s32.totalorder %s11, 6
    %s18 = sphi 0, %s30
    %s19 = sphi 0, %s26
    %s20 = sphi 0, %s18
    %s21 = sphi 0, %s19
    %s22 = sphi 0, %s20
    %s23 = sphi 0, %s21
    %s33 = sphi 0, %s35
    %s36 = sphi 0, %s33
    %s37 = sphi 0, %s36
    %s53 = sphi 0, %s37
    %s59 = sphi 0, %s61
    %s62 = sphi 0, %s59
    %s63 = sphi 0, %s62
    %s79 = sphi 0, %s63
    %s83 = sphi 0, %s83
    %s85 = sphi 0, %s83
    %s86 = sphi 0, %s85
    %s100 = sphi 0, %s86
    %s108 = sphi 0, %s110
    %s111 = sphi 0, %s108
    %s112 = sphi 0, %s111
    %s128 = sphi 0, %s112
    %s136 = sphi 0, %s138
    %s139 = sphi 0, %s136
    %s140 = sphi 0, %s139
    %s156 = sphi 0, %s140
  $region4: #{up_forward.3} parent=0 // loop_header_branch
    %14 = sbr.rel (%p12) target = $region8
  $region5: #{up_forward.3} parent=0 // loop_body
    %s16 = ssub.s32 %s11, 1
    %s17 = ssub.s32 %s11, 2
    %s24 = sadd.s32 1, %s19
    %p25 = scmp.ge.s32.totalorder %s24, 2
    %s26 = scalar_select %p25, 0, %s24
    %s27 = sadd.s32 1, %s18
    %s28 = scalar_select %p25, %s27, %s18
    %p29 = scmp.ge.s32.totalorder %s28, 2
    %s30 = scalar_select %p29, 0, %s28
    %s31 = ssub.s32 %s18, %s30
    %p32 = scmp.eq.s32.totalorder %s31, 0
    %s34 = sadd.s32 %s33, 1
    %s35 = scalar_select %p32, %s33, %s34
    %p38 = pneg %p32
    %p39 = scmp.eq.s32.totalorder %s11, 3
    %p40 = por %p38, %p39
    %p41 = scmp.ne.s32.totalorder %s33, %s36
    %p42 = scmp.eq.s32.totalorder %s11, 0
    %p43 = por %p41, %p42
    %p44 = scmp.ne.s32.totalorder %s33, %s36
    %p45 = scmp.eq.s32.totalorder %s16, 3
    %p46 = por %p44, %p45
    %p47 = scmp.ne.s32.totalorder %s36, %s37
    %p48 = scmp.eq.s32.totalorder %s16, 0
    %p49 = por %p47, %p48
    %p50 = scmp.ne.s32.totalorder %s36, %s37
    %p51 = scmp.eq.s32.totalorder %s17, 3
    %p52 = por %p50, %p51
    %p54 = scmp.ne.s32.totalorder %s37, %s53
    %p55 = scmp.eq.s32.totalorder %s17, 0
    %p56 = por %p54, %p55
    %s57 = ssub.s32 %s18, %s30
    %p58 = scmp.eq.s32.totalorder %s57, 0
    %s60 = sadd.s32 %s59, 1
    %s61 = scalar_select %p58, %s59, %s60
    %p64 = pneg %p58
    %p65 = scmp.eq.s32.totalorder %s11, 3
    %p66 = por %p64, %p65
    %p67 = scmp.ne.s32.totalorder %s59, %s62
    %p68 = scmp.eq.s32.totalorder %s11, 0
    %p69 = por %p67, %p68
    %p70 = scmp.ne.s32.totalorder %s59, %s62
    %p71 = scmp.eq.s32.totalorder %s16, 3
    %p72 = por %p70, %p71
    %p73 = scmp.ne.s32.totalorder %s62, %s63
    %p74 = scmp.eq.s32.totalorder %s16, 0
    %p75 = por %p73, %p74
    %p76 = scmp.ne.s32.totalorder %s62, %s63
    %p77 = scmp.eq.s32.totalorder %s17, 3
    %p78 = por %p76, %p77
    %p80 = scmp.ne.s32.totalorder %s63, %s79
    %p81 = scmp.eq.s32.totalorder %s17, 0
    %p82 = por %p80, %p81
    %s84 = sadd.s32 %s83, 1
    %p87 = scmp.eq.s32.totalorder %s11, 3
    %p88 = scmp.ne.s32.totalorder %s83, %s85
    %p89 = scmp.eq.s32.totalorder %s11, 0
    %p90 = por %p88, %p89
    %p91 = scmp.ne.s32.totalorder %s83, %s85
    %p92 = scmp.eq.s32.totalorder %s16, 3
    %p93 = por %p91, %p92
    %p94 = scmp.ne.s32.totalorder %s85, %s86
    %p95 = scmp.eq.s32.totalorder %s16, 0
    %p96 = por %p94, %p95
    %p97 = scmp.ne.s32.totalorder %s85, %s86
    %p98 = scmp.eq.s32.totalorder %s17, 3
    %p99 = por %p97, %p98
    %p101 = scmp.ne.s32.totalorder %s86, %s100
    %p102 = scmp.eq.s32.totalorder %s17, 0
    %p103 = por %p101, %p102
    %s104 = ssub.s32 %s18, %s30
    %s105 = ssub.s32 %s19, %s26
    %s106 = sor.u32 %s104, %s105
    %p107 = scmp.eq.s32.totalorder %s106, 0
    %s109 = sadd.s32 %s108, 1
    %s110 = scalar_select %p107, %s108, %s109
    %p113 = pneg %p107
    %p114 = scmp.eq.s32.totalorder %s11, 3
    %p115 = por %p113, %p114
    %p116 = scmp.ne.s32.totalorder %s108, %s111
    %p117 = scmp.eq.s32.totalorder %s11, 0
    %p118 = por %p116, %p117
    %p119 = scmp.ne.s32.totalorder %s108, %s111
    %p120 = scmp.eq.s32.totalorder %s16, 3
    %p121 = por %p119, %p120
    %p122 = scmp.ne.s32.totalorder %s111, %s112
    %p123 = scmp.eq.s32.totalorder %s16, 0
    %p124 = por %p122, %p123
    %p125 = scmp.ne.s32.totalorder %s111, %s112
    %p126 = scmp.eq.s32.totalorder %s17, 3
    %p127 = por %p125, %p126
    %p129 = scmp.ne.s32.totalorder %s112, %s128
    %p130 = scmp.eq.s32.totalorder %s17, 0
    %p131 = por %p129, %p130
    %s132 = ssub.s32 %s18, %s30
    %s133 = ssub.s32 %s19, %s26
    %s134 = sor.u32 %s132, %s133
    %p135 = scmp.eq.s32.totalorder %s134, 0
    %s137 = sadd.s32 %s136, 1
    %s138 = scalar_select %p135, %s136, %s137
    %p141 = pneg %p135
    %p142 = scmp.eq.s32.totalorder %s11, 3
    %p143 = por %p141, %p142
    %p144 = scmp.ne.s32.totalorder %s136, %s139
    %p145 = scmp.eq.s32.totalorder %s11, 0
    %p146 = por %p144, %p145
    %p147 = scmp.ne.s32.totalorder %s136, %s139
    %p148 = scmp.eq.s32.totalorder %s16, 3
    %p149 = por %p147, %p148
    %p150 = scmp.ne.s32.totalorder %s139, %s140
    %p151 = scmp.eq.s32.totalorder %s16, 0
    %p152 = por %p150, %p151
    %p153 = scmp.ne.s32.totalorder %s139, %s140
    %p154 = scmp.eq.s32.totalorder %s17, 3
    %p155 = por %p153, %p154
    %p157 = scmp.ne.s32.totalorder %s140, %s156
    %p158 = scmp.eq.s32.totalorder %s17, 0
    %p159 = por %p157, %p158
    %p160 = scmp.le.s32.totalorder 1, %s11
    %p161 = scmp.lt.s32.totalorder %s11, 5
    %p162 = pnand %p160, %p161
    %p163 = pneg %p162
    // Predicated region
    $region9: #{up_forward.3} parent=5 // pred_check
      _
    $region10: #{up_forward.3} parent=5 // pred_check_branch
      %165 = sbr.rel (%p162) target = $region12
    $region11: #{up_forward.3} parent=5 // pred_region
      %s166 = ssub.s32 %s11, 1
      // Predicated region
      $region13: #{up_forward.3} parent=11 // pred_check
        %p167 = pneg %p96
      $region14: #{up_forward.3} parent=11 // pred_check_branch
        %169 = sbr.rel (%p167) target = $region16
      $region15: #{up_forward.3} parent=11 // pred_region
        _
      $region16: #{up_forward.3} parent=11 // pred_fallthru
        _
    $region12: #{up_forward.3} parent=5 // pred_fallthru
      _
    %p170 = scmp.lt.s32.totalorder %s11, 4
    // Predicated region
    $region17: #{up_forward.3} parent=5 // pred_check
      %p171 = pneg %p170
    $region18: #{up_forward.3} parent=5 // pred_check_branch
      %173 = sbr.rel (%p171) target = $region20
    $region19: #{up_forward.3} parent=5 // pred_region
      // Predicated region
      $region21: #{up_forward.3} parent=19 // pred_check
        %p174 = pneg %p43
      $region22: #{up_forward.3} parent=19 // pred_check_branch
        %176 = sbr.rel (%p174) target = $region24
      $region23: #{up_forward.3} parent=19 // pred_region
        %p177 = scmp.lt.s32.totalorder %s18, 1
        %s178 = scalar_select %p177, %s18, 1
        %s179 = smul.addr %s178, 54
        %s180 = smul.addr %s179, 8
        %s181 = scalar_lea.vmem %s0, %s180
      $region24: #{up_forward.3} parent=19 // pred_fallthru
        _
      // Predicated region
      $region25: #{up_forward.3} parent=19 // pred_check
        %p182 = pneg %p69
      $region26: #{up_forward.3} parent=19 // pred_check_branch
        %184 = sbr.rel (%p182) target = $region28
      $region27: #{up_forward.3} parent=19 // pred_region
        %p185 = scmp.lt.s32.totalorder %s18, 1
        %s186 = scalar_select %p185, %s18, 1
        %s187 = smul.addr %s186, 54
        %s188 = smul.addr %s187, 8
        %s189 = scalar_lea.vmem %s1, %s188
      $region28: #{up_forward.3} parent=19 // pred_fallthru
        _
    $region20: #{up_forward.3} parent=5 // pred_fallthru
      _
    %p190 = scmp.le.s32.totalorder 1, %s11
    %p191 = scmp.lt.s32.totalorder %s11, 5
    %p192 = pnand %p190, %p191
    %p193 = pneg %p192
    // Predicated region
    $region29: #{up_forward.3} parent=5 // pred_check
      _
    $region30: #{up_forward.3} parent=5 // pred_check_branch
      %195 = sbr.rel (%p192) target = $region32
    $region31: #{up_forward.3} parent=5 // pred_region
      %s196 = ssub.s32 %s11, 1
      %p197 = scmp.lt.s32.totalorder %s20, 1
      %s198 = scalar_select %p197, %s20, 1
      %s199 = smul.addr %s198, 54
      %s200 = smul.addr %s199, 8
      %s201 = scalar_lea.vmem %s0, %s200
      %p202 = pneg %p49
      %p203 = pneg %p46
      %p204 = scmp.lt.s32.totalorder %s20, 1
      %s205 = scalar_select %p204, %s20, 1
      %s206 = smul.addr %s205, 54
      %s207 = smul.addr %s206, 8
      %s208 = scalar_lea.vmem %s1, %s207
      %p209 = pneg %p75
      %p210 = pneg %p72
      %p211 = pneg %p96
      %p212 = pneg %p93
      %p213 = pneg %p124
      %p214 = pneg %p121
      %s215 = smul.u32 8, %s21
      %p216 = scmp.lt.s32.totalorder %s20, 1
      %s217 = scalar_select %p216, %s20, 1
      %p218 = scmp.lt.s32.totalorder %s215, 15
      %s219 = scalar_select %p218, %s215, 15
      %s220 = smul.addr %s219, 2
      %s221 = smul.addr %s217, 32
      %s222 = sadd.s32 %s220, %s221
      %s223 = smul.addr %s222, 8
      %s224 = scalar_lea.vmem %s3, %s223
      %p225 = pneg %p152
      %p226 = pneg %p149
      %p227 = scmp.lt.s32.totalorder %s20, 1
      %s228 = scalar_select %p227, %s20, 1
      %p229 = scmp.lt.s32.totalorder %s21, 1
      %s230 = scalar_select %p229, %s21, 1
      %s231 = smul.addr %s228, 2
      %s232 = sadd.s32 %s230, %s231
      %s233 = smul.addr %s232, 2
      %s234 = scalar_lea.vmem %s4, %s233
      %p235 = scmp.lt.s32.totalorder %s20, 1
      %s236 = scalar_select %p235, %s20, 1
      %s237 = smul.addr %s236, 54
      %s238 = smul.addr %s237, 8
      %s239 = scalar_lea.vmem %s0, %s238
      %p240 = scmp.lt.s32.totalorder %s20, 1
      %s241 = scalar_select %p240, %s20, 1
      %s242 = smul.addr %s241, 54
      %s243 = smul.addr %s242, 8
      %s244 = scalar_lea.vmem %s1, %s243
      %s245 = smul.u32 8, %s21
      %p246 = scmp.lt.s32.totalorder %s20, 1
      %s247 = scalar_select %p246, %s20, 1
      %p248 = scmp.lt.s32.totalorder %s245, 15
      %s249 = scalar_select %p248, %s245, 15
      %s250 = smul.addr %s249, 2
      %s251 = smul.addr %s247, 32
      %s252 = sadd.s32 %s250, %s251
      %s253 = smul.addr %s252, 8
      %s254 = scalar_lea.vmem %s3, %s253
      %s255 = smul.u32 8, %s21
      %p256 = scmp.lt.s32.totalorder %s20, 1
      %s257 = scalar_select %p256, %s20, 1
      %p258 = scmp.lt.s32.totalorder %s21, 1
      %s259 = scalar_select %p258, %s21, 1
      %s260 = smul.addr %s257, 2
      %s261 = sadd.s32 %s259, %s260
      %s262 = smul.addr %s261, 2
      %s263 = scalar_lea.vmem %s4, %s262
      %s265 = smul.u32 %s21, 8
      %s266 = smul.u32 %s265, 24
      %s267 = scalar_lea.vmem %s239, %s266
      %v268 = vld [vmem:[%s267] sm:$0xff]
      %v269 = vld [vmem:[%s267 + $0x8] sm:$0xff]
      %v270 = vld [vmem:[%s267 + $0x18] sm:$0xff]
      %v271 = vld [vmem:[%s267 + $0x20] sm:$0xff]
      %v272 = vld [vmem:[%s267 + $0x30] sm:$0xff]
      %v273 = vld [vmem:[%s267 + $0x38] sm:$0xff]
      %v274 = vld [vmem:[%s267 + $0x48] sm:$0xff]
      %v275 = vld [vmem:[%s267 + $0x50] sm:$0xff]
      %v276 = vld [vmem:[%s267 + $0x60] sm:$0xff]
      %v277 = vld [vmem:[%s267 + $0x68] sm:$0xff]
      %v278 = vld [vmem:[%s267 + $0x78] sm:$0xff]
      %v279 = vld [vmem:[%s267 + $0x80] sm:$0xff]
      %v280 = vld [vmem:[%s267 + $0x90] sm:$0xff]
      %v281 = vld [vmem:[%s267 + $0x98] sm:$0xff]
      %v282 = vld [vmem:[%s267 + $0xa8] sm:$0xff]
      %v283 = vld [vmem:[%s267 + $0xb0] sm:$0xff]
      %s284 = scalar_lea.vmem %s244, %s266
      %v285 = vld [vmem:[%s284] sm:$0xff]
      %v286 = vld [vmem:[%s284 + $0x8] sm:$0xff]
      %v287 = vld [vmem:[%s284 + $0x18] sm:$0xff]
      %v288 = vld [vmem:[%s284 + $0x20] sm:$0xff]
      %v289 = vld [vmem:[%s284 + $0x30] sm:$0xff]
      %v290 = vld [vmem:[%s284 + $0x38] sm:$0xff]
      %v291 = vld [vmem:[%s284 + $0x48] sm:$0xff]
      %v292 = vld [vmem:[%s284 + $0x50] sm:$0xff]
      %v293 = vld [vmem:[%s284 + $0x60] sm:$0xff]
      %v294 = vld [vmem:[%s284 + $0x68] sm:$0xff]
      %v295 = vld [vmem:[%s284 + $0x78] sm:$0xff]
      %v296 = vld [vmem:[%s284 + $0x80] sm:$0xff]
      %v297 = vld [vmem:[%s284 + $0x90] sm:$0xff]
      %v298 = vld [vmem:[%s284 + $0x98] sm:$0xff]
      %v299 = vld [vmem:[%s284 + $0xa8] sm:$0xff]
      %v300 = vld [vmem:[%s284 + $0xb0] sm:$0xff]
      %v301 = vpack.c.bf16 %v269, %v268
      %v302 = vpack.c.bf16 %v271, %v270
      %v303 = vpack.c.bf16 %v273, %v272
      %v304 = vpack.c.bf16 %v275, %v274
      %v305 = vpack.c.bf16 %v277, %v276
      %v306 = vpack.c.bf16 %v279, %v278
      %v307 = vpack.c.bf16 %v281, %v280
      %v308 = vpack.c.bf16 %v283, %v282
      %v309 = vld [vmem:[%s2] sm:$0x3]
      %v310 = vpack.c.bf16 %v286, %v285
      %v311 = vpack.c.bf16 %v288, %v287
      %v312 = vpack.c.bf16 %v290, %v289
      %v313 = vpack.c.bf16 %v292, %v291
      %v314 = vpack.c.bf16 %v294, %v293
      %v315 = vpack.c.bf16 %v296, %v295
      %v316 = vpack.c.bf16 %v298, %v297
      %v317 = vpack.c.bf16 %v300, %v299
      %v318 = vld [vmem:[%s2] sm:$0xc]
      %v320 = vunpack.c.l.b16 %v318
      %v321 = vpack.c.b16 %v320, %v320
      %v322 = vrot.slane %v321, 2
      %vm323 = vcmask 31744
      %v325 = vsel %vm323, %v310, 0
      %v328 = vsel %vm323, %v311, 0
      %v331 = vsel %vm323, %v312, 0
      %v334 = vsel %vm323, %v313, 0
      %v337 = vsel %vm323, %v314, 0
      %v340 = vsel %vm323, %v315, 0
      %v343 = vsel %vm323, %v316, 0
      %v346 = vsel %vm323, %v317, 0
      %vm348 = vcmask 1041408
      %v350 = vsel %vm348, %v322, 0
      %352 = vmatprep.subr.bf16.mxu0 0
      %353 = vmatpush1.bf16.msra.mxu0 %v350
      %354 = vmatprep.subr.bf16.mxu0 0
      %355 = vmatpush1.bf16.msra.mxu0 0
      %356 = vmatprep.subr.bf16.mxu0 0
      %357 = vmatpush1.bf16.msra.mxu0 0
      %358 = vmatprep.subr.bf16.mxu0 0
      %359 = vmatpush1.bf16.msra.mxu0 0
      %360 = vmatprep.subr.bf16.mxu0 0
      %361 = vmatpush1.bf16.msra.mxu0 0
      %362 = vmatprep.subr.bf16.mxu0 0
      %363 = vmatpush1.bf16.msra.mxu0 0
      %364 = vmatprep.subr.bf16.mxu0 0
      %365 = vmatpush1.bf16.msra.mxu0 0
      %366 = vmatprep.subr.bf16.mxu0 0
      %367 = vmatpush1.bf16.msra.mxu0 0
      %368 = vmatprep.subr.bf16.mxu0 0
      %369 = vmatpush1.bf16.msra.mxu0 0
      %370 = vmatprep.subr.bf16.mxu0 0
      %371 = vmatpush1.bf16.msra.mxu0 0
      %372 = vmatprep.subr.bf16.mxu0 0
      %373 = vmatpush1.bf16.msra.mxu0 0
      %374 = vmatprep.subr.bf16.mxu0 0
      %375 = vmatpush1.bf16.msra.mxu0 0
      %376 = vmatprep.subr.bf16.mxu0 0
      %377 = vmatpush1.bf16.msra.mxu0 0
      %378 = vmatprep.subr.bf16.mxu0 0
      %379 = vmatpush1.bf16.msra.mxu0 0
      %380 = vmatprep.subr.bf16.mxu0 0
      %381 = vmatpush1.bf16.msra.mxu0 0
      %382 = vmatprep.subr.bf16.mxu0 0
      %383 = vmatpush1.bf16.msra.mxu0 0
      %384 = vmatprep.mubr.bf16.mxu0 0
      %385 = vmatmul.mubr.bf16.gmra.mrb[0].mxu0 %v325
      %v386 = vpop.f32.mrb[0].mxu0
      %v387 = vadd.f32 0.0, %v386
      %v388 = vpop.f32.mrb[0].mxu0
      %v389 = vpop.f32.mrb[0].mxu0
      %v390 = vadd.f32 0.0, %v389
      %v391 = vpop.f32.mrb[0].mxu0
      %392 = vmatprep.mubr.bf16.mxu0 0
      %393 = vmatmul.mubr.bf16.gmra.mrb[0].mxu0 %v328
      %v394 = vpop.f32.mrb[0].mxu0
      %v395 = vadd.f32 0.0, %v394
      %v396 = vpop.f32.mrb[0].mxu0
      %v397 = vpop.f32.mrb[0].mxu0
      %v398 = vadd.f32 0.0, %v397
      %v399 = vpop.f32.mrb[0].mxu0
      %400 = vmatprep.mubr.bf16.mxu0 0
      %401 = vmatmul.mubr.bf16.gmra.mrb[0].mxu0 %v331
      %v402 = vpop.f32.mrb[0].mxu0
      %v403 = vadd.f32 0.0, %v402
      %v404 = vpop.f32.mrb[0].mxu0
      %v405 = vpop.f32.mrb[0].mxu0
      %v406 = vadd.f32 0.0, %v405
      %v407 = vpop.f32.mrb[0].mxu0
      %408 = vmatprep.mubr.bf16.mxu0 0
      %409 = vmatmul.mubr.bf16.gmra.mrb[0].mxu0 %v334
      %v410 = vpop.f32.mrb[0].mxu0
      %v411 = vadd.f32 0.0, %v410
      %v412 = vpop.f32.mrb[0].mxu0
      %v413 = vpop.f32.mrb[0].mxu0
      %v414 = vadd.f32 0.0, %v413
      %v415 = vpop.f32.mrb[0].mxu0
      %416 = vmatprep.mubr.bf16.mxu0 0
      %417 = vmatmul.mubr.bf16.gmra.mrb[0].mxu0 %v337
      %v418 = vpop.f32.mrb[0].mxu0
      %v419 = vadd.f32 0.0, %v418
      %v420 = vpop.f32.mrb[0].mxu0
      %v421 = vpop.f32.mrb[0].mxu0
      %v422 = vadd.f32 0.0, %v421
      %v423 = vpop.f32.mrb[0].mxu0
      %424 = vmatprep.mubr.bf16.mxu0 0
      %425 = vmatmul.mubr.bf16.gmra.mrb[0].mxu0 %v340
      %v426 = vpop.f32.mrb[0].mxu0
      %v427 = vadd.f32 0.0, %v426
      %v428 = vpop.f32.mrb[0].mxu0
      %v429 = vpop.f32.mrb[0].mxu0
      %v430 = vadd.f32 0.0, %v429
      %v431 = vpop.f32.mrb[0].mxu0
      %432 = vmatprep.mubr.bf16.mxu0 0
      %433 = vmatmul.mubr.bf16.gmra.mrb[0].mxu0 %v343
      %v434 = vpop.f32.mrb[0].mxu0
      %v435 = vadd.f32 0.0, %v434
      %v436 = vpop.f32.mrb[0].mxu0
      %v437 = vpop.f32.mrb[0].mxu0
      %v438 = vadd.f32 0.0, %v437
      %v439 = vpop.f32.mrb[0].mxu0
      %440 = vmatprep.mubr.bf16.mxu0 0
      %441 = vmatmul.mubr.bf16.gmra.mrb[0].mxu0 %v346
      %v442 = vpop.f32.mrb[0].mxu0
      %v443 = vadd.f32 0.0, %v442
      %v444 = vpop.f32.mrb[0].mxu0
      %v445 = vpop.f32.mrb[0].mxu0
      %v446 = vadd.f32 0.0, %v445
      %v447 = vpop.f32.mrb[0].mxu0
      %448 = vdwg.mxu0
      %v450 = vsel %vm323, %v301, 0
      %v453 = vsel %vm323, %v302, 0
      %v456 = vsel %vm323, %v303, 0
      %v459 = vsel %vm323, %v304, 0
      %v462 = vsel %vm323, %v305, 0
      %v465 = vsel %vm323, %v306, 0
      %v468 = vsel %vm323, %v307, 0
      %v471 = vsel %vm323, %v308, 0
      %v474 = vsel %vm348, %v309, 0
      %476 = vmatprep.subr.bf16.mxu0 0
      %477 = vmatpush1.bf16.msra.mxu0 %v474
      %478 = vmatprep.subr.bf16.mxu0 0
      %479 = vmatpush1.bf16.msra.mxu0 0
      %480 = vmatprep.subr.bf16.mxu0 0
      %481 = vmatpush1.bf16.msra.mxu0 0
      %482 = vmatprep.subr.bf16.mxu0 0
      %483 = vmatpush1.bf16.msra.mxu0 0
      %484 = vmatprep.subr.bf16.mxu0 0
      %485 = vmatpush1.bf16.msra.mxu0 0
      %486 = vmatprep.subr.bf16.mxu0 0
      %487 = vmatpush1.bf16.msra.mxu0 0
      %488 = vmatprep.subr.bf16.mxu0 0
      %489 = vmatpush1.bf16.msra.mxu0 0
      %490 = vmatprep.subr.bf16.mxu0 0
      %491 = vmatpush1.bf16.msra.mxu0 0
      %492 = vmatprep.subr.bf16.mxu0 0
      %493 = vmatpush1.bf16.msra.mxu0 0
      %494 = vmatprep.subr.bf16.mxu0 0
      %495 = vmatpush1.bf16.msra.mxu0 0
      %496 = vmatprep.subr.bf16.mxu0 0
      %497 = vmatpush1.bf16.msra.mxu0 0
      %498 = vmatprep.subr.bf16.mxu0 0
      %499 = vmatpush1.bf16.msra.mxu0 0
      %500 = vmatprep.subr.bf16.mxu0 0
      %501 = vmatpush1.bf16.msra.mxu0 0
      %502 = vmatprep.subr.bf16.mxu0 0
      %503 = vmatpush1.bf16.msra.mxu0 0
      %504 = vmatprep.subr.bf16.mxu0 0
      %505 = vmatpush1.bf16.msra.mxu0 0
      %506 = vmatprep.subr.bf16.mxu0 0
      %507 = vmatpush1.bf16.msra.mxu0 0
      %508 = vmatprep.mubr.bf16.mxu0 0
      %509 = vmatmul.mubr.bf16.gmra.mrb[0].mxu0 %v450
      %v510 = vpop.f32.mrb[0].mxu0
      %v511 = vadd.f32 %v387, %v510
      %v512 = vpop.f32.mrb[0].mxu0
      %v513 = vpop.f32.mrb[0].mxu0
      %v514 = vadd.f32 %v390, %v513
      %v515 = vpop.f32.mrb[0].mxu0
      %516 = vmatprep.mubr.bf16.mxu0 0
      %517 = vmatmul.mubr.bf16.gmra.mrb[0].mxu0 %v453
      %v518 = vpop.f32.mrb[0].mxu0
      %v519 = vadd.f32 %v395, %v518
      %v520 = vpop.f32.mrb[0].mxu0
      %v521 = vpop.f32.mrb[0].mxu0
      %v522 = vadd.f32 %v398, %v521
      %v523 = vpop.f32.mrb[0].mxu0
      %524 = vmatprep.mubr.bf16.mxu0 0
      %525 = vmatmul.mubr.bf16.gmra.mrb[0].mxu0 %v456
      %v526 = vpop.f32.mrb[0].mxu0
      %v527 = vadd.f32 %v403, %v526
      %v528 = vpop.f32.mrb[0].mxu0
      %v529 = vpop.f32.mrb[0].mxu0
      %v530 = vadd.f32 %v406, %v529
      %v531 = vpop.f32.mrb[0].mxu0
      %532 = vmatprep.mubr.bf16.mxu0 0
      %533 = vmatmul.mubr.bf16.gmra.mrb[0].mxu0 %v459
      %v534 = vpop.f32.mrb[0].mxu0
      %v535 = vadd.f32 %v411, %v534
      %v536 = vpop.f32.mrb[0].mxu0
      %v537 = vpop.f32.mrb[0].mxu0
      %v538 = vadd.f32 %v414, %v537
      %v539 = vpop.f32.mrb[0].mxu0
      %540 = vmatprep.mubr.bf16.mxu0 0
      %541 = vmatmul.mubr.bf16.gmra.mrb[0].mxu0 %v462
      %v542 = vpop.f32.mrb[0].mxu0
      %v543 = vadd.f32 %v419, %v542
      %v544 = vpop.f32.mrb[0].mxu0
      %v545 = vpop.f32.mrb[0].mxu0
      %v546 = vadd.f32 %v422, %v545
      %v547 = vpop.f32.mrb[0].mxu0
      %548 = vmatprep.mubr.bf16.mxu0 0
      %549 = vmatmul.mubr.bf16.gmra.mrb[0].mxu0 %v465
      %v550 = vpop.f32.mrb[0].mxu0
      %v551 = vadd.f32 %v427, %v550
      %v552 = vpop.f32.mrb[0].mxu0
      %v553 = vpop.f32.mrb[0].mxu0
      %v554 = vadd.f32 %v430, %v553
      %v555 = vpop.f32.mrb[0].mxu0
      %556 = vmatprep.mubr.bf16.mxu0 0
      %557 = vmatmul.mubr.bf16.gmra.mrb[0].mxu0 %v468
      %v558 = vpop.f32.mrb[0].mxu0
      %v559 = vadd.f32 %v435, %v558
      %v560 = vpop.f32.mrb[0].mxu0
      %v561 = vpop.f32.mrb[0].mxu0
      %v562 = vadd.f32 %v438, %v561
      %v563 = vpop.f32.mrb[0].mxu0
      %564 = vmatprep.mubr.bf16.mxu0 0
      %565 = vmatmul.mubr.bf16.gmra.mrb[0].mxu0 %v471
      %v566 = vpop.f32.mrb[0].mxu0
      %v567 = vadd.f32 %v443, %v566
      %v568 = vpop.f32.mrb[0].mxu0
      %v569 = vpop.f32.mrb[0].mxu0
      %v570 = vadd.f32 %v446, %v569
      %v571 = vpop.f32.mrb[0].mxu0
      %572 = vdwg.mxu0
      %v573 = vld [vmem:[%s267 + $0x1] sm:$0xff]
      %v574 = vld [vmem:[%s267 + $0x9] sm:$0xff]
      %v575 = vld [vmem:[%s267 + $0x19] sm:$0xff]
      %v576 = vld [vmem:[%s267 + $0x21] sm:$0xff]
      %v577 = vld [vmem:[%s267 + $0x31] sm:$0xff]
      %v578 = vld [vmem:[%s267 + $0x39] sm:$0xff]
      %v579 = vld [vmem:[%s267 + $0x49] sm:$0xff]
      %v580 = vld [vmem:[%s267 + $0x51] sm:$0xff]
      %v581 = vld [vmem:[%s267 + $0x61] sm:$0xff]
      %v582 = vld [vmem:[%s267 + $0x69] sm:$0xff]
      %v583 = vld [vmem:[%s267 + $0x79] sm:$0xff]
      %v584 = vld [vmem:[%s267 + $0x81] sm:$0xff]
      %v585 = vld [vmem:[%s267 + $0x91] sm:$0xff]
      %v586 = vld [vmem:[%s267 + $0x99] sm:$0xff]
      %v587 = vld [vmem:[%s267 + $0xa9] sm:$0xff]
      %v588 = vld [vmem:[%s267 + $0xb1] sm:$0xff]
      %v589 = vld [vmem:[%s284 + $0x1] sm:$0xff]
      %v590 = vld [vmem:[%s284 + $0x9] sm:$0xff]
      %v591 = vld [vmem:[%s284 + $0x19] sm:$0xff]
      %v592 = vld [vmem:[%s284 + $0x21] sm:$0xff]
      %v593 = vld [vmem:[%s284 + $0x31] sm:$0xff]
      %v594 = vld [vmem:[%s284 + $0x39] sm:$0xff]
      %v595 = vld [vmem:[%s284 + $0x49] sm:$0xff]
      %v596 = vld [vmem:[%s284 + $0x51] sm:$0xff]
      %v597 = vld [vmem:[%s284 + $0x61] sm:$0xff]
      %v598 = vld [vmem:[%s284 + $0x69] sm:$0xff]
      %v599 = vld [vmem:[%s284 + $0x79] sm:$0xff]
      %v600 = vld [vmem:[%s284 + $0x81] sm:$0xff]
      %v601 = vld [vmem:[%s284 + $0x91] sm:$0xff]
      %v602 = vld [vmem:[%s284 + $0x99] sm:$0xff]
      %v603 = vld [vmem:[%s284 + $0xa9] sm:$0xff]
      %v604 = vld [vmem:[%s284 + $0xb1] sm:$0xff]
      %v605 = vpack.c.bf16 %v574, %v573
      %v606 = vpack.c.bf16 %v576, %v575
      %v607 = vpack.c.bf16 %v578, %v577
      %v608 = vpack.c.bf16 %v580, %v579
      %v609 = vpack.c.bf16 %v582, %v581
      %v610 = vpack.c.bf16 %v584, %v583
      %v611 = vpack.c.bf16 %v586, %v585
      %v612 = vpack.c.bf16 %v588, %v587
      %s613 = scalar_lea.vmem %s2, 4
      %v614 = vld [vmem:[%s613] sm:$0x3]
      %v616 = vsel %vm323, %v605, 0
      %v619 = vsel %vm323, %v606, 0
      %v622 = vsel %vm323, %v607, 0
      %v625 = vsel %vm323, %v608, 0
      %v628 = vsel %vm323, %v609, 0
      %v631 = vsel %vm323, %v610, 0
      %v634 = vsel %vm323, %v611, 0
      %v637 = vsel %vm323, %v612, 0
      %v640 = vsel %vm348, %v614, 0
      %642 = vmatprep.subr.bf16.mxu0 0
      %643 = vmatpush1.bf16.msra.mxu0 %v640
      %644 = vmatprep.subr.bf16.mxu0 0
      %645 = vmatpush1.bf16.msra.mxu0 0
      %646 = vmatprep.subr.bf16.mxu0 0
      %647 = vmatpush1.bf16.msra.mxu0 0
      %648 = vmatprep.subr.bf16.mxu0 0
      %649 = vmatpush1.bf16.msra.mxu0 0
      %650 = vmatprep.subr.bf16.mxu0 0
      %651 = vmatpush1.bf16.msra.mxu0 0
      %652 = vmatprep.subr.bf16.mxu0 0
      %653 = vmatpush1.bf16.msra.mxu0 0
      %654 = vmatprep.subr.bf16.mxu0 0
      %655 = vmatpush1.bf16.msra.mxu0 0
      %656 = vmatprep.subr.bf16.mxu0 0
      %657 = vmatpush1.bf16.msra.mxu0 0
      %658 = vmatprep.subr.bf16.mxu0 0
      %659 = vmatpush1.bf16.msra.mxu0 0
      %660 = vmatprep.subr.bf16.mxu0 0
      %661 = vmatpush1.bf16.msra.mxu0 0
      %662 = vmatprep.subr.bf16.mxu0 0
      %663 = vmatpush1.bf16.msra.mxu0 0
      %664 = vmatprep.subr.bf16.mxu0 0
      %665 = vmatpush1.bf16.msra.mxu0 0
      %666 = vmatprep.subr.bf16.mxu0 0
      %667 = vmatpush1.bf16.msra.mxu0 0
      %668 = vmatprep.subr.bf16.mxu0 0
      %669 = vmatpush1.bf16.msra.mxu0 0
      %670 = vmatprep.subr.bf16.mxu0 0
      %671 = vmatpush1.bf16.msra.mxu0 0
      %672 = vmatprep.subr.bf16.mxu0 0
      %673 = vmatpush1.bf16.msra.mxu0 0
      %674 = vmatprep.mubr.bf16.mxu0 0
      %675 = vmatmul.mubr.bf16.gmra.mrb[0].mxu0 %v616
      %v676 = vpop.f32.mrb[0].mxu0
      %v677 = vadd.f32 0.0, %v676
      %v678 = vpop.f32.mrb[0].mxu0
      %v679 = vpop.f32.mrb[0].mxu0
      %v680 = vadd.f32 0.0, %v679
      %v681 = vpop.f32.mrb[0].mxu0
      %682 = vmatprep.mubr.bf16.mxu0 0
      %683 = vmatmul.mubr.bf16.gmra.mrb[0].mxu0 %v619
      %v684 = vpop.f32.mrb[0].mxu0
      %v685 = vadd.f32 0.0, %v684
      %v686 = vpop.f32.mrb[0].mxu0
      %v687 = vpop.f32.mrb[0].mxu0
      %v688 = vadd.f32 0.0, %v687
      %v689 = vpop.f32.mrb[0].mxu0
      %690 = vmatprep.mubr.bf16.mxu0 0
      %691 = vmatmul.mubr.bf16.gmra.mrb[0].mxu0 %v622
      %v692 = vpop.f32.mrb[0].mxu0
      %v693 = vadd.f32 0.0, %v692
      %v694 = vpop.f32.mrb[0].mxu0
      %v695 = vpop.f32.mrb[0].mxu0
      %v696 = vadd.f32 0.0, %v695
      %v697 = vpop.f32.mrb[0].mxu0
      %698 = vmatprep.mubr.bf16.mxu0 0
      %699 = vmatmul.mubr.bf16.gmra.mrb[0].mxu0 %v625
      %v700 = vpop.f32.mrb[0].mxu0
      %v701 = vadd.f32 0.0, %v700
      %v702 = vpop.f32.mrb[0].mxu0
      %v703 = vpop.f32.mrb[0].mxu0
      %v704 = vadd.f32 0.0, %v703
      %v705 = vpop.f32.mrb[0].mxu0
      %706 = vmatprep.mubr.bf16.mxu0 0
      %707 = vmatmul.mubr.bf16.gmra.mrb[0].mxu0 %v628
      %v708 = vpop.f32.mrb[0].mxu0
      %v709 = vadd.f32 0.0, %v708
      %v710 = vpop.f32.mrb[0].mxu0
      %v711 = vpop.f32.mrb[0].mxu0
      %v712 = vadd.f32 0.0, %v711
      %v713 = vpop.f32.mrb[0].mxu0
      %714 = vmatprep.mubr.bf16.mxu0 0
      %715 = vmatmul.mubr.bf16.gmra.mrb[0].mxu0 %v631
      %v716 = vpop.f32.mrb[0].mxu0
      %v717 = vadd.f32 0.0, %v716
      %v718 = vpop.f32.mrb[0].mxu0
      %v719 = vpop.f32.mrb[0].mxu0
      %v720 = vadd.f32 0.0, %v719
      %v721 = vpop.f32.mrb[0].mxu0
      %722 = vmatprep.mubr.bf16.mxu0 0
      %723 = vmatmul.mubr.bf16.gmra.mrb[0].mxu0 %v634
      %v724 = vpop.f32.mrb[0].mxu0
      %v725 = vadd.f32 0.0, %v724
      %v726 = vpop.f32.mrb[0].mxu0
      %v727 = vpop.f32.mrb[0].mxu0
      %v728 = vadd.f32 0.0, %v727
      %v729 = vpop.f32.mrb[0].mxu0
      %730 = vmatprep.mubr.bf16.mxu0 0
      %731 = vmatmul.mubr.bf16.gmra.mrb[0].mxu0 %v637
      %v732 = vpop.f32.mrb[0].mxu0
      %v733 = vadd.f32 0.0, %v732
      %v734 = vpop.f32.mrb[0].mxu0
      %v735 = vpop.f32.mrb[0].mxu0
      %v736 = vadd.f32 0.0, %v735
      %v737 = vpop.f32.mrb[0].mxu0
      %738 = vdwg.mxu0
      %v739 = vadd.f32 %v511, %v677
      %v740 = vadd.f32 %v514, %v680
      %v741 = vadd.f32 %v519, %v685
      %v742 = vadd.f32 %v522, %v688
      %v743 = vadd.f32 %v527, %v693
      %v744 = vadd.f32 %v530, %v696
      %v745 = vadd.f32 %v535, %v701
      %v746 = vadd.f32 %v538, %v704
      %v747 = vadd.f32 %v543, %v709
      %v748 = vadd.f32 %v546, %v712
      %v749 = vadd.f32 %v551, %v717
      %v750 = vadd.f32 %v554, %v720
      %v751 = vadd.f32 %v559, %v725
      %v752 = vadd.f32 %v562, %v728
      %v753 = vadd.f32 %v567, %v733
      %v754 = vadd.f32 %v570, %v736
      %v755 = vpack.c.bf16 %v590, %v589
      %v756 = vpack.c.bf16 %v592, %v591
      %v757 = vpack.c.bf16 %v594, %v593
      %v758 = vpack.c.bf16 %v596, %v595
      %v759 = vpack.c.bf16 %v598, %v597
      %v760 = vpack.c.bf16 %v600, %v599
      %v761 = vpack.c.bf16 %v602, %v601
      %v762 = vpack.c.bf16 %v604, %v603
      %v763 = vld [vmem:[%s613] sm:$0xc]
      %v765 = vunpack.c.l.b16 %v763
      %v766 = vpack.c.b16 %v765, %v765
      %v767 = vrot.slane %v766, 2
      %v769 = vsel %vm323, %v755, 0
      %v772 = vsel %vm323, %v756, 0
      %v775 = vsel %vm323, %v757, 0
      %v778 = vsel %vm323, %v758, 0
      %v781 = vsel %vm323, %v759, 0
      %v784 = vsel %vm323, %v760, 0
      %v787 = vsel %vm323, %v761, 0
      %v790 = vsel %vm323, %v762, 0
      %v793 = vsel %vm348, %v767, 0
      %795 = vmatprep.subr.bf16.mxu0 0
      %796 = vmatpush1.bf16.msra.mxu0 %v793
      %797 = vmatprep.subr.bf16.mxu0 0
      %798 = vmatpush1.bf16.msra.mxu0 0
      %799 = vmatprep.subr.bf16.mxu0 0
      %800 = vmatpush1.bf16.msra.mxu0 0
      %801 = vmatprep.subr.bf16.mxu0 0
      %802 = vmatpush1.bf16.msra.mxu0 0
      %803 = vmatprep.subr.bf16.mxu0 0
      %804 = vmatpush1.bf16.msra.mxu0 0
      %805 = vmatprep.subr.bf16.mxu0 0
      %806 = vmatpush1.bf16.msra.mxu0 0
      %807 = vmatprep.subr.bf16.mxu0 0
      %808 = vmatpush1.bf16.msra.mxu0 0
      %809 = vmatprep.subr.bf16.mxu0 0
      %810 = vmatpush1.bf16.msra.mxu0 0
      %811 = vmatprep.subr.bf16.mxu0 0
      %812 = vmatpush1.bf16.msra.mxu0 0
      %813 = vmatprep.subr.bf16.mxu0 0
      %814 = vmatpush1.bf16.msra.mxu0 0
      %815 = vmatprep.subr.bf16.mxu0 0
      %816 = vmatpush1.bf16.msra.mxu0 0
      %817 = vmatprep.subr.bf16.mxu0 0
      %818 = vmatpush1.bf16.msra.mxu0 0
      %819 = vmatprep.subr.bf16.mxu0 0
      %820 = vmatpush1.bf16.msra.mxu0 0
      %821 = vmatprep.subr.bf16.mxu0 0
      %822 = vmatpush1.bf16.msra.mxu0 0
      %823 = vmatprep.subr.bf16.mxu0 0
      %824 = vmatpush1.bf16.msra.mxu0 0
      %825 = vmatprep.subr.bf16.mxu0 0
      %826 = vmatpush1.bf16.msra.mxu0 0
      %827 = vmatprep.mubr.bf16.mxu0 0
      %828 = vmatmul.mubr.bf16.gmra.mrb[0].mxu0 %v769
      %v829 = vpop.f32.mrb[0].mxu0
      %v830 = vadd.f32 0.0, %v829
      %v831 = vpop.f32.mrb[0].mxu0
      %v832 = vpop.f32.mrb[0].mxu0
      %v833 = vadd.f32 0.0, %v832
      %v834 = vpop.f32.mrb[0].mxu0
      %835 = vmatprep.mubr.bf16.mxu0 0
      %836 = vmatmul.mubr.bf16.gmra.mrb[0].mxu0 %v772
      %v837 = vpop.f32.mrb[0].mxu0
      %v838 = vadd.f32 0.0, %v837
      %v839 = vpop.f32.mrb[0].mxu0
      %v840 = vpop.f32.mrb[0].mxu0
      %v841 = vadd.f32 0.0, %v840
      %v842 = vpop.f32.mrb[0].mxu0
      %843 = vmatprep.mubr.bf16.mxu0 0
      %844 = vmatmul.mubr.bf16.gmra.mrb[0].mxu0 %v775
      %v845 = vpop.f32.mrb[0].mxu0
      %v846 = vadd.f32 0.0, %v845
      %v847 = vpop.f32.mrb[0].mxu0
      %v848 = vpop.f32.mrb[0].mxu0
      %v849 = vadd.f32 0.0, %v848
      %v850 = vpop.f32.mrb[0].mxu0
      %851 = vmatprep.mubr.bf16.mxu0 0
      %852 = vmatmul.mubr.bf16.gmra.mrb[0].mxu0 %v778
      %v853 = vpop.f32.mrb[0].mxu0
      %v854 = vadd.f32 0.0, %v853
      %v855 = vpop.f32.mrb[0].mxu0
      %v856 = vpop.f32.mrb[0].mxu0
      %v857 = vadd.f32 0.0, %v856
      %v858 = vpop.f32.mrb[0].mxu0
      %859 = vmatprep.mubr.bf16.mxu0 0
      %860 = vmatmul.mubr.bf16.gmra.mrb[0].mxu0 %v781
      %v861 = vpop.f32.mrb[0].mxu0
      %v862 = vadd.f32 0.0, %v861
      %v863 = vpop.f32.mrb[0].mxu0
      %v864 = vpop.f32.mrb[0].mxu0
      %v865 = vadd.f32 0.0, %v864
      %v866 = vpop.f32.mrb[0].mxu0
      %867 = vmatprep.mubr.bf16.mxu0 0
      %868 = vmatmul.mubr.bf16.gmra.mrb[0].mxu0 %v784
      %v869 = vpop.f32.mrb[0].mxu0
      %v870 = vadd.f32 0.0, %v869
      %v871 = vpop.f32.mrb[0].mxu0
      %v872 = vpop.f32.mrb[0].mxu0
      %v873 = vadd.f32 0.0, %v872
      %v874 = vpop.f32.mrb[0].mxu0
      %875 = vmatprep.mubr.bf16.mxu0 0
      %876 = vmatmul.mubr.bf16.gmra.mrb[0].mxu0 %v787
      %v877 = vpop.f32.mrb[0].mxu0
      %v878 = vadd.f32 0.0, %v877
      %v879 = vpop.f32.mrb[0].mxu0
      %v880 = vpop.f32.mrb[0].mxu0
      %v881 = vadd.f32 0.0, %v880
      %v882 = vpop.f32.mrb[0].mxu0
      %883 = vmatprep.mubr.bf16.mxu0 0
      %884 = vmatmul.mubr.bf16.gmra.mrb[0].mxu0 %v790
      %v885 = vpop.f32.mrb[0].mxu0
      %v886 = vadd.f32 0.0, %v885
      %v887 = vpop.f32.mrb[0].mxu0
      %v888 = vpop.f32.mrb[0].mxu0
      %v889 = vadd.f32 0.0, %v888
      %v890 = vpop.f32.mrb[0].mxu0
      %891 = vdwg.mxu0
      %v892 = vadd.f32 %v739, %v830
      %v893 = vadd.f32 %v740, %v833
      %v894 = vadd.f32 %v741, %v838
      %v895 = vadd.f32 %v742, %v841
      %v896 = vadd.f32 %v743, %v846
      %v897 = vadd.f32 %v744, %v849
      %v898 = vadd.f32 %v745, %v854
      %v899 = vadd.f32 %v746, %v857
      %v900 = vadd.f32 %v747, %v862
      %v901 = vadd.f32 %v748, %v865
      %v902 = vadd.f32 %v749, %v870
      %v903 = vadd.f32 %v750, %v873
      %v904 = vadd.f32 %v751, %v878
      %v905 = vadd.f32 %v752, %v881
      %v906 = vadd.f32 %v753, %v886
      %v907 = vadd.f32 %v754, %v889
      %v908 = vld [vmem:[%s267 + $0x2] sm:$0xff]
      %v909 = vld [vmem:[%s267 + $0xa] sm:$0xff]
      %v910 = vld [vmem:[%s267 + $0x1a] sm:$0xff]
      %v911 = vld [vmem:[%s267 + $0x22] sm:$0xff]
      %v912 = vld [vmem:[%s267 + $0x32] sm:$0xff]
      %v913 = vld [vmem:[%s267 + $0x3a] sm:$0xff]
      %v914 = vld [vmem:[%s267 + $0x4a] sm:$0xff]
      %v915 = vld [vmem:[%s267 + $0x52] sm:$0xff]
      %v916 = vld [vmem:[%s267 + $0x62] sm:$0xff]
      %v917 = vld [vmem:[%s267 + $0x6a] sm:$0xff]
      %v918 = vld [vmem:[%s267 + $0x7a] sm:$0xff]
      %v919 = vld [vmem:[%s267 + $0x82] sm:$0xff]
      %v920 = vld [vmem:[%s267 + $0x92] sm:$0xff]
      %v921 = vld [vmem:[%s267 + $0x9a] sm:$0xff]
      %v922 = vld [vmem:[%s267 + $0xaa] sm:$0xff]
      %v923 = vld [vmem:[%s267 + $0xb2] sm:$0xff]
      %v924 = vld [vmem:[%s284 + $0x2] sm:$0xff]
      %v925 = vld [vmem:[%s284 + $0xa] sm:$0xff]
      %v926 = vld [vmem:[%s284 + $0x1a] sm:$0xff]
      %v927 = vld [vmem:[%s284 + $0x22] sm:$0xff]
      %v928 = vld [vmem:[%s284 + $0x32] sm:$0xff]
      %v929 = vld [vmem:[%s284 + $0x3a] sm:$0xff]
      %v930 = vld [vmem:[%s284 + $0x4a] sm:$0xff]
      %v931 = vld [vmem:[%s284 + $0x52] sm:$0xff]
      %v932 = vld [vmem:[%s284 + $0x62] sm:$0xff]
      %v933 = vld [vmem:[%s284 + $0x6a] sm:$0xff]
      %v934 = vld [vmem:[%s284 + $0x7a] sm:$0xff]
      %v935 = vld [vmem:[%s284 + $0x82] sm:$0xff]
      %v936 = vld [vmem:[%s284 + $0x92] sm:$0xff]
      %v937 = vld [vmem:[%s284 + $0x9a] sm:$0xff]
      %v938 = vld [vmem:[%s284 + $0xaa] sm:$0xff]
      %v939 = vld [vmem:[%s284 + $0xb2] sm:$0xff]
      %v940 = vpack.c.bf16 %v909, %v908
      %v941 = vpack.c.bf16 %v911, %v910
      %v942 = vpack.c.bf16 %v913, %v912
      %v943 = vpack.c.bf16 %v915, %v914
      %v944 = vpack.c.bf16 %v917, %v916
      %v945 = vpack.c.bf16 %v919, %v918
      %v946 = vpack.c.bf16 %v921, %v920
      %v947 = vpack.c.bf16 %v923, %v922
      %s948 = scalar_lea.vmem %s2, 8
      %v949 = vld [vmem:[%s948] sm:$0x3]
      %v951 = vsel %vm323, %v940, 0
      %v954 = vsel %vm323, %v941, 0
      %v957 = vsel %vm323, %v942, 0
      %v960 = vsel %vm323, %v943, 0
      %v963 = vsel %vm323, %v944, 0
      %v966 = vsel %vm323, %v945, 0
      %v969 = vsel %vm323, %v946, 0
      %v972 = vsel %vm323, %v947, 0
      %v975 = vsel %vm348, %v949, 0
      %977 = vmatprep.subr.bf16.mxu0 0
      %978 = vmatpush1.bf16.msra.mxu0 %v975
      %979 = vmatprep.subr.bf16.mxu0 0
      %980 = vmatpush1.bf16.msra.mxu0 0
      %981 = vmatprep.subr.bf16.mxu0 0
      %982 = vmatpush1.bf16.msra.mxu0 0
      %983 = vmatprep.subr.bf16.mxu0 0
      %984 = vmatpush1.bf16.msra.mxu0 0
      %985 = vmatprep.subr.bf16.mxu0 0
      %986 = vmatpush1.bf16.msra.mxu0 0
      %987 = vmatprep.subr.bf16.mxu0 0
      %988 = vmatpush1.bf16.msra.mxu0 0
      %989 = vmatprep.subr.bf16.mxu0 0
      %990 = vmatpush1.bf16.msra.mxu0 0
      %991 = vmatprep.subr.bf16.mxu0 0
      %992 = vmatpush1.bf16.msra.mxu0 0
      %993 = vmatprep.subr.bf16.mxu0 0
      %994 = vmatpush1.bf16.msra.mxu0 0
      %995 = vmatprep.subr.bf16.mxu0 0
      %996 = vmatpush1.bf16.msra.mxu0 0
      %997 = vmatprep.subr.bf16.mxu0 0
      %998 = vmatpush1.bf16.msra.mxu0 0
      %999 = vmatprep.subr.bf16.mxu0 0
      %1000 = vmatpush1.bf16.msra.mxu0 0
      %1001 = vmatprep.subr.bf16.mxu0 0
      %1002 = vmatpush1.bf16.msra.mxu0 0
      %1003 = vmatprep.subr.bf16.mxu0 0
      %1004 = vmatpush1.bf16.msra.mxu0 0
      %1005 = vmatprep.subr.bf16.mxu0 0
      %1006 = vmatpush1.bf16.msra.mxu0 0
      %1007 = vmatprep.subr.bf16.mxu0 0
      %1008 = vmatpush1.bf16.msra.mxu0 0
      %1009 = vmatprep.mubr.bf16.mxu0 0
      %1010 = vmatmul.mubr.bf16.gmra.mrb[0].mxu0 %v951
      %v1011 = vpop.f32.mrb[0].mxu0
      %v1012 = vadd.f32 0.0, %v1011
      %v1013 = vpop.f32.mrb[0].mxu0
      %v1014 = vpop.f32.mrb[0].mxu0
      %v1015 = vadd.f32 0.0, %v1014
      %v1016 = vpop.f32.mrb[0].mxu0
      %1017 = vmatprep.mubr.bf16.mxu0 0
      %1018 = vmatmul.mubr.bf16.gmra.mrb[0].mxu0 %v954
      %v1019 = vpop.f32.mrb[0].mxu0
      %v1020 = vadd.f32 0.0, %v1019
      %v1021 = vpop.f32.mrb[0].mxu0
      %v1022 = vpop.f32.mrb[0].mxu0
      %v1023 = vadd.f32 0.0, %v1022
      %v1024 = vpop.f32.mrb[0].mxu0
      %1025 = vmatprep.mubr.bf16.mxu0 0
      %1026 = vmatmul.mubr.bf16.gmra.mrb[0].mxu0 %v957
      %v1027 = vpop.f32.mrb[0].mxu0
      %v1028 = vadd.f32 0.0, %v1027
      %v1029 = vpop.f32.mrb[0].mxu0
      %v1030 = vpop.f32.mrb[0].mxu0
      %v1031 = vadd.f32 0.0, %v1030
      %v1032 = vpop.f32.mrb[0].mxu0
      %1033 = vmatprep.mubr.bf16.mxu0 0
      %1034 = vmatmul.mubr.bf16.gmra.mrb[0].mxu0 %v960
      %v1035 = vpop.f32.mrb[0].mxu0
      %v1036 = vadd.f32 0.0, %v1035
      %v1037 = vpop.f32.mrb[0].mxu0
      %v1038 = vpop.f32.mrb[0].mxu0
      %v1039 = vadd.f32 0.0, %v1038
      %v1040 = vpop.f32.mrb[0].mxu0
      %1041 = vmatprep.mubr.bf16.mxu0 0
      %1042 = vmatmul.mubr.bf16.gmra.mrb[0].mxu0 %v963
      %v1043 = vpop.f32.mrb[0].mxu0
      %v1044 = vadd.f32 0.0, %v1043
      %v1045 = vpop.f32.mrb[0].mxu0
      %v1046 = vpop.f32.mrb[0].mxu0
      %v1047 = vadd.f32 0.0, %v1046
      %v1048 = vpop.f32.mrb[0].mxu0
      %1049 = vmatprep.mubr.bf16.mxu0 0
      %1050 = vmatmul.mubr.bf16.gmra.mrb[0].mxu0 %v966
      %v1051 = vpop.f32.mrb[0].mxu0
      %v1052 = vadd.f32 0.0, %v1051
      %v1053 = vpop.f32.mrb[0].mxu0
      %v1054 = vpop.f32.mrb[0].mxu0
      %v1055 = vadd.f32 0.0, %v1054
      %v1056 = vpop.f32.mrb[0].mxu0
      %1057 = vmatprep.mubr.bf16.mxu0 0
      %1058 = vmatmul.mubr.bf16.gmra.mrb[0].mxu0 %v969
      %v1059 = vpop.f32.mrb[0].mxu0
      %v1060 = vadd.f32 0.0, %v1059
      %v1061 = vpop.f32.mrb[0].mxu0
      %v1062 = vpop.f32.mrb[0].mxu0
      %v1063 = vadd.f32 0.0, %v1062
      %v1064 = vpop.f32.mrb[0].mxu0
      %1065 = vmatprep.mubr.bf16.mxu0 0
      %1066 = vmatmul.mubr.bf16.gmra.mrb[0].mxu0 %v972
      %v1067 = vpop.f32.mrb[0].mxu0
      %v1068 = vadd.f32 0.0, %v1067
      %v1069 = vpop.f32.mrb[0].mxu0
      %v1070 = vpop.f32.mrb[0].mxu0
      %v1071 = vadd.f32 0.0, %v1070
      %v1072 = vpop.f32.mrb[0].mxu0
      %1073 = vdwg.mxu0
      %v1074 = vadd.f32 %v892, %v1012
      %v1075 = vadd.f32 %v893, %v1015
      %v1076 = vadd.f32 %v894, %v1020
      %v1077 = vadd.f32 %v895, %v1023
      %v1078 = vadd.f32 %v896, %v1028
      %v1079 = vadd.f32 %v897, %v1031
      %v1080 = vadd.f32 %v898, %v1036
      %v1081 = vadd.f32 %v899, %v1039
      %v1082 = vadd.f32 %v900, %v1044
      %v1083 = vadd.f32 %v901, %v1047
      %v1084 = vadd.f32 %v902, %v1052
      %v1085 = vadd.f32 %v903, %v1055
      %v1086 = vadd.f32 %v904, %v1060
      %v1087 = vadd.f32 %v905, %v1063
      %v1088 = vadd.f32 %v906, %v1068
      %v1089 = vadd.f32 %v907, %v1071
      %v1090 = vpack.c.bf16 %v925, %v924
      %v1091 = vpack.c.bf16 %v927, %v926
      %v1092 = vpack.c.bf16 %v929, %v928
      %v1093 = vpack.c.bf16 %v931, %v930
      %v1094 = vpack.c.bf16 %v933, %v932
      %v1095 = vpack.c.bf16 %v935, %v934
      %v1096 = vpack.c.bf16 %v937, %v936
      %v1097 = vpack.c.bf16 %v939, %v938
      %v1098 = vld [vmem:[%s948] sm:$0xc]
      %v1100 = vunpack.c.l.b16 %v1098
      %v1101 = vpack.c.b16 %v1100, %v1100
      %v1102 = vrot.slane %v1101, 2
      %v1104 = vsel %vm323, %v1090, 0
      %v1107 = vsel %vm323, %v1091, 0
      %v1110 = vsel %vm323, %v1092, 0
      %v1113 = vsel %vm323, %v1093, 0
      %v1116 = vsel %vm323, %v1094, 0
      %v1119 = vsel %vm323, %v1095, 0
      %v1122 = vsel %vm323, %v1096, 0
      %v1125 = vsel %vm323, %v1097, 0
      %v1128 = vsel %vm348, %v1102, 0
      %1130 = vmatprep.subr.bf16.mxu0 0
      %1131 = vmatpush1.bf16.msra.mxu0 %v1128
      %1132 = vmatprep.subr.bf16.mxu0 0
      %1133 = vmatpush1.bf16.msra.mxu0 0
      %1134 = vmatprep.subr.bf16.mxu0 0
      %1135 = vmatpush1.bf16.msra.mxu0 0
      %1136 = vmatprep.subr.bf16.mxu0 0
      %1137 = vmatpush1.bf16.msra.mxu0 0
      %1138 = vmatprep.subr.bf16.mxu0 0
      %1139 = vmatpush1.bf16.msra.mxu0 0
      %1140 = vmatprep.subr.bf16.mxu0 0
      %1141 = vmatpush1.bf16.msra.mxu0 0
      %1142 = vmatprep.subr.bf16.mxu0 0
      %1143 = vmatpush1.bf16.msra.mxu0 0
      %1144 = vmatprep.subr.bf16.mxu0 0
      %1145 = vmatpush1.bf16.msra.mxu0 0
      %1146 = vmatprep.subr.bf16.mxu0 0
      %1147 = vmatpush1.bf16.msra.mxu0 0
      %1148 = vmatprep.subr.bf16.mxu0 0
      %1149 = vmatpush1.bf16.msra.mxu0 0
      %1150 = vmatprep.subr.bf16.mxu0 0
      %1151 = vmatpush1.bf16.msra.mxu0 0
      %1152 = vmatprep.subr.bf16.mxu0 0
      %1153 = vmatpush1.bf16.msra.mxu0 0
      %1154 = vmatprep.subr.bf16.mxu0 0
      %1155 = vmatpush1.bf16.msra.mxu0 0
      %1156 = vmatprep.subr.bf16.mxu0 0
      %1157 = vmatpush1.bf16.msra.mxu0 0
      %1158 = vmatprep.subr.bf16.mxu0 0
      %1159 = vmatpush1.bf16.msra.mxu0 0
      %1160 = vmatprep.subr.bf16.mxu0 0
      %1161 = vmatpush1.bf16.msra.mxu0 0
      %1162 = vmatprep.mubr.bf16.mxu0 0
      %1163 = vmatmul.mubr.bf16.gmra.mrb[0].mxu0 %v1104
      %v1164 = vpop.f32.mrb[0].mxu0
      %v1165 = vadd.f32 0.0, %v1164
      %v1166 = vpop.f32.mrb[0].mxu0
      %v1167 = vpop.f32.mrb[0].mxu0
      %v1168 = vadd.f32 0.0, %v1167
      %v1169 = vpop.f32.mrb[0].mxu0
      %1170 = vmatprep.mubr.bf16.mxu0 0
      %1171 = vmatmul.mubr.bf16.gmra.mrb[0].mxu0 %v1107
      %v1172 = vpop.f32.mrb[0].mxu0
      %v1173 = vadd.f32 0.0, %v1172
      %v1174 = vpop.f32.mrb[0].mxu0
      %v1175 = vpop.f32.mrb[0].mxu0
      %v1176 = vadd.f32 0.0, %v1175
      %v1177 = vpop.f32.mrb[0].mxu0
      %1178 = vmatprep.mubr.bf16.mxu0 0
      %1179 = vmatmul.mubr.bf16.gmra.mrb[0].mxu0 %v1110
      %v1180 = vpop.f32.mrb[0].mxu0
      %v1181 = vadd.f32 0.0, %v1180
      %v1182 = vpop.f32.mrb[0].mxu0
      %v1183 = vpop.f32.mrb[0].mxu0
      %v1184 = vadd.f32 0.0, %v1183
      %v1185 = vpop.f32.mrb[0].mxu0
      %1186 = vmatprep.mubr.bf16.mxu0 0
      %1187 = vmatmul.mubr.bf16.gmra.mrb[0].mxu0 %v1113
      %v1188 = vpop.f32.mrb[0].mxu0
      %v1189 = vadd.f32 0.0, %v1188
      %v1190 = vpop.f32.mrb[0].mxu0
      %v1191 = vpop.f32.mrb[0].mxu0
      %v1192 = vadd.f32 0.0, %v1191
      %v1193 = vpop.f32.mrb[0].mxu0
      %1194 = vmatprep.mubr.bf16.mxu0 0
      %1195 = vmatmul.mubr.bf16.gmra.mrb[0].mxu0 %v1116
      %v1196 = vpop.f32.mrb[0].mxu0
      %v1197 = vadd.f32 0.0, %v1196
      %v1198 = vpop.f32.mrb[0].mxu0
      %v1199 = vpop.f32.mrb[0].mxu0
      %v1200 = vadd.f32 0.0, %v1199
      %v1201 = vpop.f32.mrb[0].mxu0
      %1202 = vmatprep.mubr.bf16.mxu0 0
      %1203 = vmatmul.mubr.bf16.gmra.mrb[0].mxu0 %v1119
      %v1204 = vpop.f32.mrb[0].mxu0
      %v1205 = vadd.f32 0.0, %v1204
      %v1206 = vpop.f32.mrb[0].mxu0
      %v1207 = vpop.f32.mrb[0].mxu0
      %v1208 = vadd.f32 0.0, %v1207
      %v1209 = vpop.f32.mrb[0].mxu0
      %1210 = vmatprep.mubr.bf16.mxu0 0
      %1211 = vmatmul.mubr.bf16.gmra.mrb[0].mxu0 %v1122
      %v1212 = vpop.f32.mrb[0].mxu0
      %v1213 = vadd.f32 0.0, %v1212
      %v1214 = vpop.f32.mrb[0].mxu0
      %v1215 = vpop.f32.mrb[0].mxu0
      %v1216 = vadd.f32 0.0, %v1215
      %v1217 = vpop.f32.mrb[0].mxu0
      %1218 = vmatprep.mubr.bf16.mxu0 0
      %1219 = vmatmul.mubr.bf16.gmra.mrb[0].mxu0 %v1125
      %v1220 = vpop.f32.mrb[0].mxu0
      %v1221 = vadd.f32 0.0, %v1220
      %v1222 = vpop.f32.mrb[0].mxu0
      %v1223 = vpop.f32.mrb[0].mxu0
      %v1224 = vadd.f32 0.0, %v1223
      %v1225 = vpop.f32.mrb[0].mxu0
      %1226 = vdwg.mxu0
      %v1227 = vadd.f32 %v1074, %v1165
      %v1228 = vadd.f32 %v1075, %v1168
      %v1229 = vadd.f32 %v1076, %v1173
      %v1230 = vadd.f32 %v1077, %v1176
      %v1231 = vadd.f32 %v1078, %v1181
      %v1232 = vadd.f32 %v1079, %v1184
      %v1233 = vadd.f32 %v1080, %v1189
      %v1234 = vadd.f32 %v1081, %v1192
      %v1235 = vadd.f32 %v1082, %v1197
      %v1236 = vadd.f32 %v1083, %v1200
      %v1237 = vadd.f32 %v1084, %v1205
      %v1238 = vadd.f32 %v1085, %v1208
      %v1239 = vadd.f32 %v1086, %v1213
      %v1240 = vadd.f32 %v1087, %v1216
      %v1241 = vadd.f32 %v1088, %v1221
      %v1242 = vadd.f32 %v1089, %v1224
      %s1243 = sadd.s32 %s265, 1
      %s1244 = smul.u32 %s1243, 24
      %s1245 = scalar_lea.vmem %s239, %s1244
      %v1246 = vld [vmem:[%s1245] sm:$0xff]
      %v1247 = vld [vmem:[%s1245 + $0x8] sm:$0xff]
      %v1248 = vld [vmem:[%s1245 + $0x18] sm:$0xff]
      %v1249 = vld [vmem:[%s1245 + $0x20] sm:$0xff]
      %v1250 = vld [vmem:[%s1245 + $0x30] sm:$0xff]
      %v1251 = vld [vmem:[%s1245 + $0x38] sm:$0xff]
      %v1252 = vld [vmem:[%s1245 + $0x48] sm:$0xff]
      %v1253 = vld [vmem:[%s1245 + $0x50] sm:$0xff]
      %v1254 = vld [vmem:[%s1245 + $0x60] sm:$0xff]
      %v1255 = vld [vmem:[%s1245 + $0x68] sm:$0xff]
      %v1256 = vld [vmem:[%s1245 + $0x78] sm:$0xff]
      %v1257 = vld [vmem:[%s1245 + $0x80] sm:$0xff]
      %v1258 = vld [vmem:[%s1245 + $0x90] sm:$0xff]
      %v1259 = vld [vmem:[%s1245 + $0x98] sm:$0xff]
      %v1260 = vld [vmem:[%s1245 + $0xa8] sm:$0xff]
      %v1261 = vld [vmem:[%s1245 + $0xb0] sm:$0xff]
      %s1262 = scalar_lea.vmem %s244, %s1244
      %v1263 = vld [vmem:[%s1262] sm:$0xff]
      %v1264 = vld [vmem:[%s1262 + $0x8] sm:$0xff]
      %v1265 = vld [vmem:[%s1262 + $0x18] sm:$0xff]
      %v1266 = vld [vmem:[%s1262 + $0x20] sm:$0xff]
      %v1267 = vld [vmem:[%s1262 + $0x30] sm:$0xff]
      %v1268 = vld [vmem:[%s1262 + $0x38] sm:$0xff]
      %v1269 = vld [vmem:[%s1262 + $0x48] sm:$0xff]
      %v1270 = vld [vmem:[%s1262 + $0x50] sm:$0xff]
      %v1271 = vld [vmem:[%s1262 + $0x60] sm:$0xff]
      %v1272 = vld [vmem:[%s1262 + $0x68] sm:$0xff]
      %v1273 = vld [vmem:[%s1262 + $0x78] sm:$0xff]
      %v1274 = vld [vmem:[%s1262 + $0x80] sm:$0xff]
      %v1275 = vld [vmem:[%s1262 + $0x90] sm:$0xff]
      %v1276 = vld [vmem:[%s1262 + $0x98] sm:$0xff]
      %v1277 = vld [vmem:[%s1262 + $0xa8] sm:$0xff]
      %v1278 = vld [vmem:[%s1262 + $0xb0] sm:$0xff]
      %v1279 = vpack.c.bf16 %v1247, %v1246
      %v1280 = vpack.c.bf16 %v1249, %v1248
      %v1281 = vpack.c.bf16 %v1251, %v1250
      %v1282 = vpack.c.bf16 %v1253, %v1252
      %v1283 = vpack.c.bf16 %v1255, %v1254
      %v1284 = vpack.c.bf16 %v1257, %v1256
      %v1285 = vpack.c.bf16 %v1259, %v1258
      %v1286 = vpack.c.bf16 %v1261, %v1260
      %s1287 = scalar_lea.vmem %s2, 12
      %v1288 = vld [vmem:[%s1287] sm:$0x3]
      %v1290 = vsel %vm323, %v1279, 0
      %v1293 = vsel %vm323, %v1280, 0
      %v1296 = vsel %vm323, %v1281, 0
      %v1299 = vsel %vm323, %v1282, 0
      %v1302 = vsel %vm323, %v1283, 0
      %v1305 = vsel %vm323, %v1284, 0
      %v1308 = vsel %vm323, %v1285, 0
      %v1311 = vsel %vm323, %v1286, 0
      %v1314 = vsel %vm348, %v1288, 0
      %1316 = vmatprep.subr.bf16.mxu0 0
      %1317 = vmatpush1.bf16.msra.mxu0 %v1314
      %1318 = vmatprep.subr.bf16.mxu0 0
      %1319 = vmatpush1.bf16.msra.mxu0 0
      %1320 = vmatprep.subr.bf16.mxu0 0
      %1321 = vmatpush1.bf16.msra.mxu0 0
      %1322 = vmatprep.subr.bf16.mxu0 0
      %1323 = vmatpush1.bf16.msra.mxu0 0
      %1324 = vmatprep.subr.bf16.mxu0 0
      %1325 = vmatpush1.bf16.msra.mxu0 0
      %1326 = vmatprep.subr.bf16.mxu0 0
      %1327 = vmatpush1.bf16.msra.mxu0 0
      %1328 = vmatprep.subr.bf16.mxu0 0
      %1329 = vmatpush1.bf16.msra.mxu0 0
      %1330 = vmatprep.subr.bf16.mxu0 0
      %1331 = vmatpush1.bf16.msra.mxu0 0
      %1332 = vmatprep.subr.bf16.mxu0 0
      %1333 = vmatpush1.bf16.msra.mxu0 0
      %1334 = vmatprep.subr.bf16.mxu0 0
      %1335 = vmatpush1.bf16.msra.mxu0 0
      %1336 = vmatprep.subr.bf16.mxu0 0
      %1337 = vmatpush1.bf16.msra.mxu0 0
      %1338 = vmatprep.subr.bf16.mxu0 0
      %1339 = vmatpush1.bf16.msra.mxu0 0
      %1340 = vmatprep.subr.bf16.mxu0 0
      %1341 = vmatpush1.bf16.msra.mxu0 0
      %1342 = vmatprep.subr.bf16.mxu0 0
      %1343 = vmatpush1.bf16.msra.mxu0 0
      %1344 = vmatprep.subr.bf16.mxu0 0
      %1345 = vmatpush1.bf16.msra.mxu0 0
      %1346 = vmatprep.subr.bf16.mxu0 0
      %1347 = vmatpush1.bf16.msra.mxu0 0
      %1348 = vmatprep.mubr.bf16.mxu0 0
      %1349 = vmatmul.mubr.bf16.gmra.mrb[0].mxu0 %v1290
      %v1350 = vpop.f32.mrb[0].mxu0
      %v1351 = vadd.f32 0.0, %v1350
      %v1352 = vpop.f32.mrb[0].mxu0
      %v1353 = vpop.f32.mrb[0].mxu0
      %v1354 = vadd.f32 0.0, %v1353
      %v1355 = vpop.f32.mrb[0].mxu0
      %1356 = vmatprep.mubr.bf16.mxu0 0
      %1357 = vmatmul.mubr.bf16.gmra.mrb[0].mxu0 %v1293
      %v1358 = vpop.f32.mrb[0].mxu0
      %v1359 = vadd.f32 0.0, %v1358
      %v1360 = vpop.f32.mrb[0].mxu0
      %v1361 = vpop.f32.mrb[0].mxu0
      %v1362 = vadd.f32 0.0, %v1361
      %v1363 = vpop.f32.mrb[0].mxu0
      %1364 = vmatprep.mubr.bf16.mxu0 0
      %1365 = vmatmul.mubr.bf16.gmra.mrb[0].mxu0 %v1296
      %v1366 = vpop.f32.mrb[0].mxu0
      %v1367 = vadd.f32 0.0, %v1366
      %v1368 = vpop.f32.mrb[0].mxu0
      %v1369 = vpop.f32.mrb[0].mxu0
      %v1370 = vadd.f32 0.0, %v1369
      %v1371 = vpop.f32.mrb[0].mxu0
      %1372 = vmatprep.mubr.bf16.mxu0 0
      %1373 = vmatmul.mubr.bf16.gmra.mrb[0].mxu0 %v1299
      %v1374 = vpop.f32.mrb[0].mxu0
      %v1375 = vadd.f32 0.0, %v1374
      %v1376 = vpop.f32.mrb[0].mxu0
      %v1377 = vpop.f32.mrb[0].mxu0
      %v1378 = vadd.f32 0.0, %v1377
      %v1379 = vpop.f32.mrb[0].mxu0
      %1380 = vmatprep.mubr.bf16.mxu0 0
      %1381 = vmatmul.mubr.bf16.gmra.mrb[0].mxu0 %v1302
      %v1382 = vpop.f32.mrb[0].mxu0
      %v1383 = vadd.f32 0.0, %v1382
      %v1384 = vpop.f32.mrb[0].mxu0
      %v1385 = vpop.f32.mrb[0].mxu0
      %v1386 = vadd.f32 0.0, %v1385
      %v1387 = vpop.f32.mrb[0].mxu0
      %1388 = vmatprep.mubr.bf16.mxu0 0
      %1389 = vmatmul.mubr.bf16.gmra.mrb[0].mxu0 %v1305
      %v1390 = vpop.f32.mrb[0].mxu0
      %v1391 = vadd.f32 0.0, %v1390
      %v1392 = vpop.f32.mrb[0].mxu0
      %v1393 = vpop.f32.mrb[0].mxu0
      %v1394 = vadd.f32 0.0, %v1393
      %v1395 = vpop.f32.mrb[0].mxu0
      %1396 = vmatprep.mubr.bf16.mxu0 0
      %1397 = vmatmul.mubr.bf16.gmra.mrb[0].mxu0 %v1308
      %v1398 = vpop.f32.mrb[0].mxu0
      %v1399 = vadd.f32 0.0, %v1398
      %v1400 = vpop.f32.mrb[0].mxu0
      %v1401 = vpop.f32.mrb[0].mxu0
      %v1402 = vadd.f32 0.0, %v1401
      %v1403 = vpop.f32.mrb[0].mxu0
      %1404 = vmatprep.mubr.bf16.mxu0 0
      %1405 = vmatmul.mubr.bf16.gmra.mrb[0].mxu0 %v1311
      %v1406 = vpop.f32.mrb[0].mxu0
      %v1407 = vadd.f32 0.0, %v1406
      %v1408 = vpop.f32.mrb[0].mxu0
      %v1409 = vpop.f32.mrb[0].mxu0
      %v1410 = vadd.f32 0.0, %v1409
      %v1411 = vpop.f32.mrb[0].mxu0
      %1412 = vdwg.mxu0
      %v1413 = vadd.f32 %v1227, %v1351
      %v1414 = vadd.f32 %v1228, %v1354
      %v1415 = vadd.f32 %v1229, %v1359
      %v1416 = vadd.f32 %v1230, %v1362
      %v1417 = vadd.f32 %v1231, %v1367
      %v1418 = vadd.f32 %v1232, %v1370
      %v1419 = vadd.f32 %v1233, %v1375
      %v1420 = vadd.f32 %v1234, %v1378
      %v1421 = vadd.f32 %v1235, %v1383
      %v1422 = vadd.f32 %v1236, %v1386
      %v1423 = vadd.f32 %v1237, %v1391
      %v1424 = vadd.f32 %v1238, %v1394
      %v1425 = vadd.f32 %v1239, %v1399
      %v1426 = vadd.f32 %v1240, %v1402
      %v1427 = vadd.f32 %v1241, %v1407
      %v1428 = vadd.f32 %v1242, %v1410
      %v1429 = vpack.c.bf16 %v1264, %v1263
      %v1430 = vpack.c.bf16 %v1266, %v1265
      %v1431 = vpack.c.bf16 %v1268, %v1267
      %v1432 = vpack.c.bf16 %v1270, %v1269
      %v1433 = vpack.c.bf16 %v1272, %v1271
      %v1434 = vpack.c.bf16 %v1274, %v1273
      %v1435 = vpack.c.bf16 %v1276, %v1275
      %v1436 = vpack.c.bf16 %v1278, %v1277
      %v1437 = vld [vmem:[%s1287] sm:$0xc]
      %v1439 = vunpack.c.l.b16 %v1437
      %v1440 = vpack.c.b16 %v1439, %v1439
      %v1441 = vrot.slane %v1440, 2
      %v1443 = vsel %vm323, %v1429, 0
      %v1446 = vsel %vm323, %v1430, 0
      %v1449 = vsel %vm323, %v1431, 0
      %v1452 = vsel %vm323, %v1432, 0
      %v1455 = vsel %vm323, %v1433, 0
      %v1458 = vsel %vm323, %v1434, 0
      %v1461 = vsel %vm323, %v1435, 0
      %v1464 = vsel %vm323, %v1436, 0
      %v1467 = vsel %vm348, %v1441, 0
      %1469 = vmatprep.subr.bf16.mxu0 0
      %1470 = vmatpush1.bf16.msra.mxu0 %v1467
      %1471 = vmatprep.subr.bf16.mxu0 0
      %1472 = vmatpush1.bf16.msra.mxu0 0
      %1473 = vmatprep.subr.bf16.mxu0 0
      %1474 = vmatpush1.bf16.msra.mxu0 0
      %1475 = vmatprep.subr.bf16.mxu0 0
      %1476 = vmatpush1.bf16.msra.mxu0 0
      %1477 = vmatprep.subr.bf16.mxu0 0
      %1478 = vmatpush1.bf16.msra.mxu0 0
      %1479 = vmatprep.subr.bf16.mxu0 0
      %1480 = vmatpush1.bf16.msra.mxu0 0
      %1481 = vmatprep.subr.bf16.mxu0 0
      %1482 = vmatpush1.bf16.msra.mxu0 0
      %1483 = vmatprep.subr.bf16.mxu0 0
      %1484 = vmatpush1.bf16.msra.mxu0 0
      %1485 = vmatprep.subr.bf16.mxu0 0
      %1486 = vmatpush1.bf16.msra.mxu0 0
      %1487 = vmatprep.subr.bf16.mxu0 0
      %1488 = vmatpush1.bf16.msra.mxu0 0
      %1489 = vmatprep.subr.bf16.mxu0 0
      %1490 = vmatpush1.bf16.msra.mxu0 0
      %1491 = vmatprep.subr.bf16.mxu0 0
      %1492 = vmatpush1.bf16.msra.mxu0 0
      %1493 = vmatprep.subr.bf16.mxu0 0
      %1494 = vmatpush1.bf16.msra.mxu0 0
      %1495 = vmatprep.subr.bf16.mxu0 0
      %1496 = vmatpush1.bf16.msra.mxu0 0
      %1497 = vmatprep.subr.bf16.mxu0 0
      %1498 = vmatpush1.bf16.msra.mxu0 0
      %1499 = vmatprep.subr.bf16.mxu0 0
      %1500 = vmatpush1.bf16.msra.mxu0 0
      %1501 = vmatprep.mubr.bf16.mxu0 0
      %1502 = vmatmul.mubr.bf16.gmra.mrb[0].mxu0 %v1443
      %v1503 = vpop.f32.mrb[0].mxu0
      %v1504 = vadd.f32 0.0, %v1503
      %v1505 = vpop.f32.mrb[0].mxu0
      %v1506 = vpop.f32.mrb[0].mxu0
      %v1507 = vadd.f32 0.0, %v1506
      %v1508 = vpop.f32.mrb[0].mxu0
      %1509 = vmatprep.mubr.bf16.mxu0 0
      %1510 = vmatmul.mubr.bf16.gmra.mrb[0].mxu0 %v1446
      %v1511 = vpop.f32.mrb[0].mxu0
      %v1512 = vadd.f32 0.0, %v1511
      %v1513 = vpop.f32.mrb[0].mxu0
      %v1514 = vpop.f32.mrb[0].mxu0
      %v1515 = vadd.f32 0.0, %v1514
      %v1516 = vpop.f32.mrb[0].mxu0
      %1517 = vmatprep.mubr.bf16.mxu0 0
      %1518 = vmatmul.mubr.bf16.gmra.mrb[0].mxu0 %v1449
      %v1519 = vpop.f32.mrb[0].mxu0
      %v1520 = vadd.f32 0.0, %v1519
      %v1521 = vpop.f32.mrb[0].mxu0
      %v1522 = vpop.f32.mrb[0].mxu0
      %v1523 = vadd.f32 0.0, %v1522
      %v1524 = vpop.f32.mrb[0].mxu0
      %1525 = vmatprep.mubr.bf16.mxu0 0
      %1526 = vmatmul.mubr.bf16.gmra.mrb[0].mxu0 %v1452
      %v1527 = vpop.f32.mrb[0].mxu0
      %v1528 = vadd.f32 0.0, %v1527
      %v1529 = vpop.f32.mrb[0].mxu0
      %v1530 = vpop.f32.mrb[0].mxu0
      %v1531 = vadd.f32 0.0, %v1530
      %v1532 = vpop.f32.mrb[0].mxu0
      %1533 = vmatprep.mubr.bf16.mxu0 0
      %1534 = vmatmul.mubr.bf16.gmra.mrb[0].mxu0 %v1455
      %v1535 = vpop.f32.mrb[0].mxu0
      %v1536 = vadd.f32 0.0, %v1535
      %v1537 = vpop.f32.mrb[0].mxu0
      %v1538 = vpop.f32.mrb[0].mxu0
      %v1539 = vadd.f32 0.0, %v1538
      %v1540 = vpop.f32.mrb[0].mxu0
      %1541 = vmatprep.mubr.bf16.mxu0 0
      %1542 = vmatmul.mubr.bf16.gmra.mrb[0].mxu0 %v1458
      %v1543 = vpop.f32.mrb[0].mxu0
      %v1544 = vadd.f32 0.0, %v1543
      %v1545 = vpop.f32.mrb[0].mxu0
      %v1546 = vpop.f32.mrb[0].mxu0
      %v1547 = vadd.f32 0.0, %v1546
      %v1548 = vpop.f32.mrb[0].mxu0
      %1549 = vmatprep.mubr.bf16.mxu0 0
      %1550 = vmatmul.mubr.bf16.gmra.mrb[0].mxu0 %v1461
      %v1551 = vpop.f32.mrb[0].mxu0
      %v1552 = vadd.f32 0.0, %v1551
      %v1553 = vpop.f32.mrb[0].mxu0
      %v1554 = vpop.f32.mrb[0].mxu0
      %v1555 = vadd.f32 0.0, %v1554
      %v1556 = vpop.f32.mrb[0].mxu0
      %1557 = vmatprep.mubr.bf16.mxu0 0
      %1558 = vmatmul.mubr.bf16.gmra.mrb[0].mxu0 %v1464
      %v1559 = vpop.f32.mrb[0].mxu0
      %v1560 = vadd.f32 0.0, %v1559
      %v1561 = vpop.f32.mrb[0].mxu0
      %v1562 = vpop.f32.mrb[0].mxu0
      %v1563 = vadd.f32 0.0, %v1562
      %v1564 = vpop.f32.mrb[0].mxu0
      %1565 = vdwg.mxu0
      %v1566 = vadd.f32 %v1413, %v1504
      %v1567 = vadd.f32 %v1414, %v1507
      %v1568 = vadd.f32 %v1415, %v1512
      %v1569 = vadd.f32 %v1416, %v1515
      %v1570 = vadd.f32 %v1417, %v1520
      %v1571 = vadd.f32 %v1418, %v1523
      %v1572 = vadd.f32 %v1419, %v1528
      %v1573 = vadd.f32 %v1420, %v1531
      %v1574 = vadd.f32 %v1421, %v1536
      %v1575 = vadd.f32 %v1422, %v1539
      %v1576 = vadd.f32 %v1423, %v1544
      %v1577 = vadd.f32 %v1424, %v1547
      %v1578 = vadd.f32 %v1425, %v1552
      %v1579 = vadd.f32 %v1426, %v1555
      %v1580 = vadd.f32 %v1427, %v1560
      %v1581 = vadd.f32 %v1428, %v1563
      %v1582 = vld [vmem:[%s1245 + $0x1] sm:$0xff]
      %v1583 = vld [vmem:[%s1245 + $0x9] sm:$0xff]
      %v1584 = vld [vmem:[%s1245 + $0x19] sm:$0xff]
      %v1585 = vld [vmem:[%s1245 + $0x21] sm:$0xff]
      %v1586 = vld [vmem:[%s1245 + $0x31] sm:$0xff]
      %v1587 = vld [vmem:[%s1245 + $0x39] sm:$0xff]
      %v1588 = vld [vmem:[%s1245 + $0x49] sm:$0xff]
      %v1589 = vld [vmem:[%s1245 + $0x51] sm:$0xff]
      %v1590 = vld [vmem:[%s1245 + $0x61] sm:$0xff]
      %v1591 = vld [vmem:[%s1245 + $0x69] sm:$0xff]
      %v1592 = vld [vmem:[%s1245 + $0x79] sm:$0xff]
      %v1593 = vld [vmem:[%s1245 + $0x81] sm:$0xff]
      %v1594 = vld [vmem:[%s1245 + $0x91] sm:$0xff]
      %v1595 = vld [vmem:[%s1245 + $0x99] sm:$0xff]
      %v1596 = vld [vmem:[%s1245 + $0xa9] sm:$0xff]
      %v1597 = vld [vmem:[%s1245 + $0xb1] sm:$0xff]
      %v1598 = vld [vmem:[%s1262 + $0x1] sm:$0xff]
      %v1599 = vld [vmem:[%s1262 + $0x9] sm:$0xff]
      %v1600 = vld [vmem:[%s1262 + $0x19] sm:$0xff]
      %v1601 = vld [vmem:[%s1262 + $0x21] sm:$0xff]
      %v1602 = vld [vmem:[%s1262 + $0x31] sm:$0xff]
      %v1603 = vld [vmem:[%s1262 + $0x39] sm:$0xff]
      %v1604 = vld [vmem:[%s1262 + $0x49] sm:$0xff]
      %v1605 = vld [vmem:[%s1262 + $0x51] sm:$0xff]
      %v1606 = vld [vmem:[%s1262 + $0x61] sm:$0xff]
      %v1607 = vld [vmem:[%s1262 + $0x69] sm:$0xff]
      %v1608 = vld [vmem:[%s1262 + $0x79] sm:$0xff]
      %v1609 = vld [vmem:[%s1262 + $0x81] sm:$0xff]
      %v1610 = vld [vmem:[%s1262 + $0x91] sm:$0xff]
      %v1611 = vld [vmem:[%s1262 + $0x99] sm:$0xff]
      %v1612 = vld [vmem:[%s1262 + $0xa9] sm:$0xff]
      %v1613 = vld [vmem:[%s1262 + $0xb1] sm:$0xff]
      %v1614 = vpack.c.bf16 %v1583, %v1582
      %v1615 = vpack.c.bf16 %v1585, %v1584
      %v1616 = vpack.c.bf16 %v1587, %v1586
      %v1617 = vpack.c.bf16 %v1589, %v1588
      %v1618 = vpack.c.bf16 %v1591, %v1590
      %v1619 = vpack.c.bf16 %v1593, %v1592
      %v1620 = vpack.c.bf16 %v1595, %v1594
      %v1621 = vpack.c.bf16 %v1597, %v1596
      %s1622 = scalar_lea.vmem %s2, 16
      %v1623 = vld [vmem:[%s1622] sm:$0x3]
      %v1625 = vsel %vm323, %v1614, 0
      %v1628 = vsel %vm323, %v1615, 0
      %v1631 = vsel %vm323, %v1616, 0
      %v1634 = vsel %vm323, %v1617, 0
      %v1637 = vsel %vm323, %v1618, 0
      %v1640 = vsel %vm323, %v1619, 0
      %v1643 = vsel %vm323, %v1620, 0
      %v1646 = vsel %vm323, %v1621, 0
      %v1649 = vsel %vm348, %v1623, 0
      %1651 = vmatprep.subr.bf16.mxu0 0
      %1652 = vmatpush1.bf16.msra.mxu0 %v1649
      %1653 = vmatprep.subr.bf16.mxu0 0
      %1654 = vmatpush1.bf16.msra.mxu0 0
      %1655 = vmatprep.subr.bf16.mxu0 0
      %1656 = vmatpush1.bf16.msra.mxu0 0
      %1657 = vmatprep.subr.bf16.mxu0 0
      %1658 = vmatpush1.bf16.msra.mxu0 0
      %1659 = vmatprep.subr.bf16.mxu0 0
      %1660 = vmatpush1.bf16.msra.mxu0 0
      %1661 = vmatprep.subr.bf16.mxu0 0
      %1662 = vmatpush1.bf16.msra.mxu0 0
      %1663 = vmatprep.subr.bf16.mxu0 0
      %1664 = vmatpush1.bf16.msra.mxu0 0
      %1665 = vmatprep.subr.bf16.mxu0 0
      %1666 = vmatpush1.bf16.msra.mxu0 0
      %1667 = vmatprep.subr.bf16.mxu0 0
      %1668 = vmatpush1.bf16.msra.mxu0 0
      %1669 = vmatprep.subr.bf16.mxu0 0
      %1670 = vmatpush1.bf16.msra.mxu0 0
      %1671 = vmatprep.subr.bf16.mxu0 0
      %1672 = vmatpush1.bf16.msra.mxu0 0
      %1673 = vmatprep.subr.bf16.mxu0 0
      %1674 = vmatpush1.bf16.msra.mxu0 0
      %1675 = vmatprep.subr.bf16.mxu0 0
      %1676 = vmatpush1.bf16.msra.mxu0 0
      %1677 = vmatprep.subr.bf16.mxu0 0
      %1678 = vmatpush1.bf16.msra.mxu0 0
      %1679 = vmatprep.subr.bf16.mxu0 0
      %1680 = vmatpush1.bf16.msra.mxu0 0
      %1681 = vmatprep.subr.bf16.mxu0 0
      %1682 = vmatpush1.bf16.msra.mxu0 0
      %1683 = vmatprep.mubr.bf16.mxu0 0
      %1684 = vmatmul.mubr.bf16.gmra.mrb[0].mxu0 %v1625
      %v1685 = vpop.f32.mrb[0].mxu0
      %v1686 = vadd.f32 0.0, %v1685
      %v1687 = vpop.f32.mrb[0].mxu0
      %v1688 = vpop.f32.mrb[0].mxu0
      %v1689 = vadd.f32 0.0, %v1688
      %v1690 = vpop.f32.mrb[0].mxu0
      %1691 = vmatprep.mubr.bf16.mxu0 0
      %1692 = vmatmul.mubr.bf16.gmra.mrb[0].mxu0 %v1628
      %v1693 = vpop.f32.mrb[0].mxu0
      %v1694 = vadd.f32 0.0, %v1693
      %v1695 = vpop.f32.mrb[0].mxu0
      %v1696 = vpop.f32.mrb[0].mxu0
      %v1697 = vadd.f32 0.0, %v1696
      %v1698 = vpop.f32.mrb[0].mxu0
      %1699 = vmatprep.mubr.bf16.mxu0 0
      %1700 = vmatmul.mubr.bf16.gmra.mrb[0].mxu0 %v1631
      %v1701 = vpop.f32.mrb[0].mxu0
      %v1702 = vadd.f32 0.0, %v1701
      %v1703 = vpop.f32.mrb[0].mxu0
      %v1704 = vpop.f32.mrb[0].mxu0
      %v1705 = vadd.f32 0.0, %v1704
      %v1706 = vpop.f32.mrb[0].mxu0
      %1707 = vmatprep.mubr.bf16.mxu0 0
      %1708 = vmatmul.mubr.bf16.gmra.mrb[0].mxu0 %v1634
      %v1709 = vpop.f32.mrb[0].mxu0
      %v1710 = vadd.f32 0.0, %v1709
      %v1711 = vpop.f32.mrb[0].mxu0
      %v1712 = vpop.f32.mrb[0].mxu0
      %v1713 = vadd.f32 0.0, %v1712
      %v1714 = vpop.f32.mrb[0].mxu0
      %1715 = vmatprep.mubr.bf16.mxu0 0
      %1716 = vmatmul.mubr.bf16.gmra.mrb[0].mxu0 %v1637
      %v1717 = vpop.f32.mrb[0].mxu0
      %v1718 = vadd.f32 0.0, %v1717
      %v1719 = vpop.f32.mrb[0].mxu0
      %v1720 = vpop.f32.mrb[0].mxu0
      %v1721 = vadd.f32 0.0, %v1720
      %v1722 = vpop.f32.mrb[0].mxu0
      %1723 = vmatprep.mubr.bf16.mxu0 0
      %1724 = vmatmul.mubr.bf16.gmra.mrb[0].mxu0 %v1640
      %v1725 = vpop.f32.mrb[0].mxu0
      %v1726 = vadd.f32 0.0, %v1725
      %v1727 = vpop.f32.mrb[0].mxu0
      %v1728 = vpop.f32.mrb[0].mxu0
      %v1729 = vadd.f32 0.0, %v1728
      %v1730 = vpop.f32.mrb[0].mxu0
      %1731 = vmatprep.mubr.bf16.mxu0 0
      %1732 = vmatmul.mubr.bf16.gmra.mrb[0].mxu0 %v1643
      %v1733 = vpop.f32.mrb[0].mxu0
      %v1734 = vadd.f32 0.0, %v1733
      %v1735 = vpop.f32.mrb[0].mxu0
      %v1736 = vpop.f32.mrb[0].mxu0
      %v1737 = vadd.f32 0.0, %v1736
      %v1738 = vpop.f32.mrb[0].mxu0
      %1739 = vmatprep.mubr.bf16.mxu0 0
      %1740 = vmatmul.mubr.bf16.gmra.mrb[0].mxu0 %v1646
      %v1741 = vpop.f32.mrb[0].mxu0
      %v1742 = vadd.f32 0.0, %v1741
      %v1743 = vpop.f32.mrb[0].mxu0
      %v1744 = vpop.f32.mrb[0].mxu0
      %v1745 = vadd.f32 0.0, %v1744
      %v1746 = vpop.f32.mrb[0].mxu0
      %1747 = vdwg.mxu0
      %v1748 = vadd.f32 %v1566, %v1686
      %v1749 = vadd.f32 %v1567, %v1689
      %v1750 = vadd.f32 %v1568, %v1694
      %v1751 = vadd.f32 %v1569, %v1697
      %v1752 = vadd.f32 %v1570, %v1702
      %v1753 = vadd.f32 %v1571, %v1705
      %v1754 = vadd.f32 %v1572, %v1710
      %v1755 = vadd.f32 %v1573, %v1713
      %v1756 = vadd.f32 %v1574, %v1718
      %v1757 = vadd.f32 %v1575, %v1721
      %v1758 = vadd.f32 %v1576, %v1726
      %v1759 = vadd.f32 %v1577, %v1729
      %v1760 = vadd.f32 %v1578, %v1734
      %v1761 = vadd.f32 %v1579, %v1737
      %v1762 = vadd.f32 %v1580, %v1742
      %v1763 = vadd.f32 %v1581, %v1745
      %v1764 = vpack.c.bf16 %v1599, %v1598
      %v1765 = vpack.c.bf16 %v1601, %v1600
      %v1766 = vpack.c.bf16 %v1603, %v1602
      %v1767 = vpack.c.bf16 %v1605, %v1604
      %v1768 = vpack.c.bf16 %v1607, %v1606
      %v1769 = vpack.c.bf16 %v1609, %v1608
      %v1770 = vpack.c.bf16 %v1611, %v1610
      %v1771 = vpack.c.bf16 %v1613, %v1612
      %v1772 = vld [vmem:[%s1622] sm:$0xc]
      %v1774 = vunpack.c.l.b16 %v1772
      %v1775 = vpack.c.b16 %v1774, %v1774
      %v1776 = vrot.slane %v1775, 2
      %v1778 = vsel %vm323, %v1764, 0
      %v1781 = vsel %vm323, %v1765, 0
      %v1784 = vsel %vm323, %v1766, 0
      %v1787 = vsel %vm323, %v1767, 0
      %v1790 = vsel %vm323, %v1768, 0
      %v1793 = vsel %vm323, %v1769, 0
      %v1796 = vsel %vm323, %v1770, 0
      %v1799 = vsel %vm323, %v1771, 0
      %v1802 = vsel %vm348, %v1776, 0
      %1804 = vmatprep.subr.bf16.mxu0 0
      %1805 = vmatpush1.bf16.msra.mxu0 %v1802
      %1806 = vmatprep.subr.bf16.mxu0 0
      %1807 = vmatpush1.bf16.msra.mxu0 0
      %1808 = vmatprep.subr.bf16.mxu0 0
      %1809 = vmatpush1.bf16.msra.mxu0 0
      %1810 = vmatprep.subr.bf16.mxu0 0
      %1811 = vmatpush1.bf16.msra.mxu0 0
      %1812 = vmatprep.subr.bf16.mxu0 0
      %1813 = vmatpush1.bf16.msra.mxu0 0
      %1814 = vmatprep.subr.bf16.mxu0 0
      %1815 = vmatpush1.bf16.msra.mxu0 0
      %1816 = vmatprep.subr.bf16.mxu0 0
      %1817 = vmatpush1.bf16.msra.mxu0 0
      %1818 = vmatprep.subr.bf16.mxu0 0
      %1819 = vmatpush1.bf16.msra.mxu0 0
      %1820 = vmatprep.subr.bf16.mxu0 0
      %1821 = vmatpush1.bf16.msra.mxu0 0
      %1822 = vmatprep.subr.bf16.mxu0 0
      %1823 = vmatpush1.bf16.msra.mxu0 0
      %1824 = vmatprep.subr.bf16.mxu0 0
      %1825 = vmatpush1.bf16.msra.mxu0 0
      %1826 = vmatprep.subr.bf16.mxu0 0
      %1827 = vmatpush1.bf16.msra.mxu0 0
      %1828 = vmatprep.subr.bf16.mxu0 0
      %1829 = vmatpush1.bf16.msra.mxu0 0
      %1830 = vmatprep.subr.bf16.mxu0 0
      %1831 = vmatpush1.bf16.msra.mxu0 0
      %1832 = vmatprep.subr.bf16.mxu0 0
      %1833 = vmatpush1.bf16.msra.mxu0 0
      %1834 = vmatprep.subr.bf16.mxu0 0
      %1835 = vmatpush1.bf16.msra.mxu0 0
      %1836 = vmatprep.mubr.bf16.mxu0 0
      %1837 = vmatmul.mubr.bf16.gmra.mrb[0].mxu0 %v1778
      %v1838 = vpop.f32.mrb[0].mxu0
      %v1839 = vadd.f32 0.0, %v1838
      %v1840 = vpop.f32.mrb[0].mxu0
      %v1841 = vpop.f32.mrb[0].mxu0
      %v1842 = vadd.f32 0.0, %v1841
      %v1843 = vpop.f32.mrb[0].mxu0
      %1844 = vmatprep.mubr.bf16.mxu0 0
      %1845 = vmatmul.mubr.bf16.gmra.mrb[0].mxu0 %v1781
      %v1846 = vpop.f32.mrb[0].mxu0
      %v1847 = vadd.f32 0.0, %v1846
      %v1848 = vpop.f32.mrb[0].mxu0
      %v1849 = vpop.f32.mrb[0].mxu0
      %v1850 = vadd.f32 0.0, %v1849
      %v1851 = vpop.f32.mrb[0].mxu0
      %1852 = vmatprep.mubr.bf16.mxu0 0
      %1853 = vmatmul.mubr.bf16.gmra.mrb[0].mxu0 %v1784
      %v1854 = vpop.f32.mrb[0].mxu0
      %v1855 = vadd.f32 0.0, %v1854
      %v1856 = vpop.f32.mrb[0].mxu0
      %v1857 = vpop.f32.mrb[0].mxu0
      %v1858 = vadd.f32 0.0, %v1857
      %v1859 = vpop.f32.mrb[0].mxu0
      %1860 = vmatprep.mubr.bf16.mxu0 0
      %1861 = vmatmul.mubr.bf16.gmra.mrb[0].mxu0 %v1787
      %v1862 = vpop.f32.mrb[0].mxu0
      %v1863 = vadd.f32 0.0, %v1862
      %v1864 = vpop.f32.mrb[0].mxu0
      %v1865 = vpop.f32.mrb[0].mxu0
      %v1866 = vadd.f32 0.0, %v1865
      %v1867 = vpop.f32.mrb[0].mxu0
      %1868 = vmatprep.mubr.bf16.mxu0 0
      %1869 = vmatmul.mubr.bf16.gmra.mrb[0].mxu0 %v1790
      %v1870 = vpop.f32.mrb[0].mxu0
      %v1871 = vadd.f32 0.0, %v1870
      %v1872 = vpop.f32.mrb[0].mxu0
      %v1873 = vpop.f32.mrb[0].mxu0
      %v1874 = vadd.f32 0.0, %v1873
      %v1875 = vpop.f32.mrb[0].mxu0
      %1876 = vmatprep.mubr.bf16.mxu0 0
      %1877 = vmatmul.mubr.bf16.gmra.mrb[0].mxu0 %v1793
      %v1878 = vpop.f32.mrb[0].mxu0
      %v1879 = vadd.f32 0.0, %v1878
      %v1880 = vpop.f32.mrb[0].mxu0
      %v1881 = vpop.f32.mrb[0].mxu0
      %v1882 = vadd.f32 0.0, %v1881
      %v1883 = vpop.f32.mrb[0].mxu0
      %1884 = vmatprep.mubr.bf16.mxu0 0
      %1885 = vmatmul.mubr.bf16.gmra.mrb[0].mxu0 %v1796
      %v1886 = vpop.f32.mrb[0].mxu0
      %v1887 = vadd.f32 0.0, %v1886
      %v1888 = vpop.f32.mrb[0].mxu0
      %v1889 = vpop.f32.mrb[0].mxu0
      %v1890 = vadd.f32 0.0, %v1889
      %v1891 = vpop.f32.mrb[0].mxu0
      %1892 = vmatprep.mubr.bf16.mxu0 0
      %1893 = vmatmul.mubr.bf16.gmra.mrb[0].mxu0 %v1799
      %v1894 = vpop.f32.mrb[0].mxu0
      %v1895 = vadd.f32 0.0, %v1894
      %v1896 = vpop.f32.mrb[0].mxu0
      %v1897 = vpop.f32.mrb[0].mxu0
      %v1898 = vadd.f32 0.0, %v1897
      %v1899 = vpop.f32.mrb[0].mxu0
      %1900 = vdwg.mxu0
      %v1901 = vadd.f32 %v1748, %v1839
      %v1902 = vadd.f32 %v1749, %v1842
      %v1903 = vadd.f32 %v1750, %v1847
      %v1904 = vadd.f32 %v1751, %v1850
      %v1905 = vadd.f32 %v1752, %v1855
      %v1906 = vadd.f32 %v1753, %v1858
      %v1907 = vadd.f32 %v1754, %v1863
      %v1908 = vadd.f32 %v1755, %v1866
      %v1909 = vadd.f32 %v1756, %v1871
      %v1910 = vadd.f32 %v1757, %v1874
      %v1911 = vadd.f32 %v1758, %v1879
      %v1912 = vadd.f32 %v1759, %v1882
      %v1913 = vadd.f32 %v1760, %v1887
      %v1914 = vadd.f32 %v1761, %v1890
      %v1915 = vadd.f32 %v1762, %v1895
      %v1916 = vadd.f32 %v1763, %v1898
      %v1917 = vld [vmem:[%s1245 + $0x2] sm:$0xff]
      %v1918 = vld [vmem:[%s1245 + $0xa] sm:$0xff]
      %v1919 = vld [vmem:[%s1245 + $0x1a] sm:$0xff]
      %v1920 = vld [vmem:[%s1245 + $0x22] sm:$0xff]
      %v1921 = vld [vmem:[%s1245 + $0x32] sm:$0xff]
      %v1922 = vld [vmem:[%s1245 + $0x3a] sm:$0xff]
      %v1923 = vld [vmem:[%s1245 + $0x4a] sm:$0xff]
      %v1924 = vld [vmem:[%s1245 + $0x52] sm:$0xff]
      %v1925 = vld [vmem:[%s1245 + $0x62] sm:$0xff]
      %v1926 = vld [vmem:[%s1245 + $0x6a] sm:$0xff]
      %v1927 = vld [vmem:[%s1245 + $0x7a] sm:$0xff]
      %v1928 = vld [vmem:[%s1245 + $0x82] sm:$0xff]
      %v1929 = vld [vmem:[%s1245 + $0x92] sm:$0xff]
      %v1930 = vld [vmem:[%s1245 + $0x9a] sm:$0xff]
      %v1931 = vld [vmem:[%s1245 + $0xaa] sm:$0xff]
      %v1932 = vld [vmem:[%s1245 + $0xb2] sm:$0xff]
      %v1933 = vld [vmem:[%s1262 + $0x2] sm:$0xff]
      %v1934 = vld [vmem:[%s1262 + $0xa] sm:$0xff]
      %v1935 = vld [vmem:[%s1262 + $0x1a] sm:$0xff]
      %v1936 = vld [vmem:[%s1262 + $0x22] sm:$0xff]
      %v1937 = vld [vmem:[%s1262 + $0x32] sm:$0xff]
      %v1938 = vld [vmem:[%s1262 + $0x3a] sm:$0xff]
      %v1939 = vld [vmem:[%s1262 + $0x4a] sm:$0xff]
      %v1940 = vld [vmem:[%s1262 + $0x52] sm:$0xff]
      %v1941 = vld [vmem:[%s1262 + $0x62] sm:$0xff]
      %v1942 = vld [vmem:[%s1262 + $0x6a] sm:$0xff]
      %v1943 = vld [vmem:[%s1262 + $0x7a] sm:$0xff]
      %v1944 = vld [vmem:[%s1262 + $0x82] sm:$0xff]
      %v1945 = vld [vmem:[%s1262 + $0x92] sm:$0xff]
      %v1946 = vld [vmem:[%s1262 + $0x9a] sm:$0xff]
      %v1947 = vld [vmem:[%s1262 + $0xaa] sm:$0xff]
      %v1948 = vld [vmem:[%s1262 + $0xb2] sm:$0xff]
      %v1949 = vpack.c.bf16 %v1918, %v1917
      %v1950 = vpack.c.bf16 %v1920, %v1919
      %v1951 = vpack.c.bf16 %v1922, %v1921
      %v1952 = vpack.c.bf16 %v1924, %v1923
      %v1953 = vpack.c.bf16 %v1926, %v1925
      %v1954 = vpack.c.bf16 %v1928, %v1927
      %v1955 = vpack.c.bf16 %v1930, %v1929
      %v1956 = vpack.c.bf16 %v1932, %v1931
      %s1957 = scalar_lea.vmem %s2, 20
      %v1958 = vld [vmem:[%s1957] sm:$0x3]
      %v1960 = vsel %vm323, %v1949, 0
      %v1963 = vsel %vm323, %v1950, 0
      %v1966 = vsel %vm323, %v1951, 0
      %v1969 = vsel %vm323, %v1952, 0
      %v1972 = vsel %vm323, %v1953, 0
      %v1975 = vsel %vm323, %v1954, 0
      %v1978 = vsel %vm323, %v1955, 0
      %v1981 = vsel %vm323, %v1956, 0
      %v1984 = vsel %vm348, %v1958, 0
      %1986 = vmatprep.subr.bf16.mxu0 0
      %1987 = vmatpush1.bf16.msra.mxu0 %v1984
      %1988 = vmatprep.subr.bf16.mxu0 0
      %1989 = vmatpush1.bf16.msra.mxu0 0
      %1990 = vmatprep.subr.bf16.mxu0 0
      %1991 = vmatpush1.bf16.msra.mxu0 0
      %1992 = vmatprep.subr.bf16.mxu0 0
      %1993 = vmatpush1.bf16.msra.mxu0 0
      %1994 = vmatprep.subr.bf16.mxu0 0
      %1995 = vmatpush1.bf16.msra.mxu0 0
      %1996 = vmatprep.subr.bf16.mxu0 0
      %1997 = vmatpush1.bf16.msra.mxu0 0
      %1998 = vmatprep.subr.bf16.mxu0 0
      %1999 = vmatpush1.bf16.msra.mxu0 0
      %2000 = vmatprep.subr.bf16.mxu0 0
      %2001 = vmatpush1.bf16.msra.mxu0 0
      %2002 = vmatprep.subr.bf16.mxu0 0
      %2003 = vmatpush1.bf16.msra.mxu0 0
      %2004 = vmatprep.subr.bf16.mxu0 0
      %2005 = vmatpush1.bf16.msra.mxu0 0
      %2006 = vmatprep.subr.bf16.mxu0 0
      %2007 = vmatpush1.bf16.msra.mxu0 0
      %2008 = vmatprep.subr.bf16.mxu0 0
      %2009 = vmatpush1.bf16.msra.mxu0 0
      %2010 = vmatprep.subr.bf16.mxu0 0
      %2011 = vmatpush1.bf16.msra.mxu0 0
      %2012 = vmatprep.subr.bf16.mxu0 0
      %2013 = vmatpush1.bf16.msra.mxu0 0
      %2014 = vmatprep.subr.bf16.mxu0 0
      %2015 = vmatpush1.bf16.msra.mxu0 0
      %2016 = vmatprep.subr.bf16.mxu0 0
      %2017 = vmatpush1.bf16.msra.mxu0 0
      %2018 = vmatprep.mubr.bf16.mxu0 0
      %2019 = vmatmul.mubr.bf16.gmra.mrb[0].mxu0 %v1960
      %v2020 = vpop.f32.mrb[0].mxu0
      %v2021 = vadd.f32 0.0, %v2020
      %v2022 = vpop.f32.mrb[0].mxu0
      %v2023 = vpop.f32.mrb[0].mxu0
      %v2024 = vadd.f32 0.0, %v2023
      %v2025 = vpop.f32.mrb[0].mxu0
      %2026 = vmatprep.mubr.bf16.mxu0 0
      %2027 = vmatmul.mubr.bf16.gmra.mrb[0].mxu0 %v1963
      %v2028 = vpop.f32.mrb[0].mxu0
      %v2029 = vadd.f32 0.0, %v2028
      %v2030 = vpop.f32.mrb[0].mxu0
      %v2031 = vpop.f32.mrb[0].mxu0
      %v2032 = vadd.f32 0.0, %v2031
      %v2033 = vpop.f32.mrb[0].mxu0
      %2034 = vmatprep.mubr.bf16.mxu0 0
      %2035 = vmatmul.mubr.bf16.gmra.mrb[0].mxu0 %v1966
      %v2036 = vpop.f32.mrb[0].mxu0
      %v2037 = vadd.f32 0.0, %v2036
      %v2038 = vpop.f32.mrb[0].mxu0
      %v2039 = vpop.f32.mrb[0].mxu0
      %v2040 = vadd.f32 0.0, %v2039
      %v2041 = vpop.f32.mrb[0].mxu0
      %2042 = vmatprep.mubr.bf16.mxu0 0
      %2043 = vmatmul.mubr.bf16.gmra.mrb[0].mxu0 %v1969
      %v2044 = vpop.f32.mrb[0].mxu0
      %v2045 = vadd.f32 0.0, %v2044
      %v2046 = vpop.f32.mrb[0].mxu0
      %v2047 = vpop.f32.mrb[0].mxu0
      %v2048 = vadd.f32 0.0, %v2047
      %v2049 = vpop.f32.mrb[0].mxu0
      %2050 = vmatprep.mubr.bf16.mxu0 0
      %2051 = vmatmul.mubr.bf16.gmra.mrb[0].mxu0 %v1972
      %v2052 = vpop.f32.mrb[0].mxu0
      %v2053 = vadd.f32 0.0, %v2052
      %v2054 = vpop.f32.mrb[0].mxu0
      %v2055 = vpop.f32.mrb[0].mxu0
      %v2056 = vadd.f32 0.0, %v2055
      %v2057 = vpop.f32.mrb[0].mxu0
      %2058 = vmatprep.mubr.bf16.mxu0 0
      %2059 = vmatmul.mubr.bf16.gmra.mrb[0].mxu0 %v1975
      %v2060 = vpop.f32.mrb[0].mxu0
      %v2061 = vadd.f32 0.0, %v2060
      %v2062 = vpop.f32.mrb[0].mxu0
      %v2063 = vpop.f32.mrb[0].mxu0
      %v2064 = vadd.f32 0.0, %v2063
      %v2065 = vpop.f32.mrb[0].mxu0
      %2066 = vmatprep.mubr.bf16.mxu0 0
      %2067 = vmatmul.mubr.bf16.gmra.mrb[0].mxu0 %v1978
      %v2068 = vpop.f32.mrb[0].mxu0
      %v2069 = vadd.f32 0.0, %v2068
      %v2070 = vpop.f32.mrb[0].mxu0
      %v2071 = vpop.f32.mrb[0].mxu0
      %v2072 = vadd.f32 0.0, %v2071
      %v2073 = vpop.f32.mrb[0].mxu0
      %2074 = vmatprep.mubr.bf16.mxu0 0
      %2075 = vmatmul.mubr.bf16.gmra.mrb[0].mxu0 %v1981
      %v2076 = vpop.f32.mrb[0].mxu0
      %v2077 = vadd.f32 0.0, %v2076
      %v2078 = vpop.f32.mrb[0].mxu0
      %v2079 = vpop.f32.mrb[0].mxu0
      %v2080 = vadd.f32 0.0, %v2079
      %v2081 = vpop.f32.mrb[0].mxu0
      %2082 = vdwg.mxu0
      %v2083 = vadd.f32 %v1901, %v2021
      %v2084 = vadd.f32 %v1902, %v2024
      %v2085 = vadd.f32 %v1903, %v2029
      %v2086 = vadd.f32 %v1904, %v2032
      %v2087 = vadd.f32 %v1905, %v2037
      %v2088 = vadd.f32 %v1906, %v2040
      %v2089 = vadd.f32 %v1907, %v2045
      %v2090 = vadd.f32 %v1908, %v2048
      %v2091 = vadd.f32 %v1909, %v2053
      %v2092 = vadd.f32 %v1910, %v2056
      %v2093 = vadd.f32 %v1911, %v2061
      %v2094 = vadd.f32 %v1912, %v2064
      %v2095 = vadd.f32 %v1913, %v2069
      %v2096 = vadd.f32 %v1914, %v2072
      %v2097 = vadd.f32 %v1915, %v2077
      %v2098 = vadd.f32 %v1916, %v2080
      %v2099 = vpack.c.bf16 %v1934, %v1933
      %v2100 = vpack.c.bf16 %v1936, %v1935
      %v2101 = vpack.c.bf16 %v1938, %v1937
      %v2102 = vpack.c.bf16 %v1940, %v1939
      %v2103 = vpack.c.bf16 %v1942, %v1941
      %v2104 = vpack.c.bf16 %v1944, %v1943
      %v2105 = vpack.c.bf16 %v1946, %v1945
      %v2106 = vpack.c.bf16 %v1948, %v1947
      %v2107 = vld [vmem:[%s1957] sm:$0xc]
      %v2109 = vunpack.c.l.b16 %v2107
      %v2110 = vpack.c.b16 %v2109, %v2109
      %v2111 = vrot.slane %v2110, 2
      %v2113 = vsel %vm323, %v2099, 0
      %v2116 = vsel %vm323, %v2100, 0
      %v2119 = vsel %vm323, %v2101, 0
      %v2122 = vsel %vm323, %v2102, 0
      %v2125 = vsel %vm323, %v2103, 0
      %v2128 = vsel %vm323, %v2104, 0
      %v2131 = vsel %vm323, %v2105, 0
      %v2134 = vsel %vm323, %v2106, 0
      %v2137 = vsel %vm348, %v2111, 0
      %2139 = vmatprep.subr.bf16.mxu0 0
      %2140 = vmatpush1.bf16.msra.mxu0 %v2137
      %2141 = vmatprep.subr.bf16.mxu0 0
      %2142 = vmatpush1.bf16.msra.mxu0 0
      %2143 = vmatprep.subr.bf16.mxu0 0
      %2144 = vmatpush1.bf16.msra.mxu0 0
      %2145 = vmatprep.subr.bf16.mxu0 0
      %2146 = vmatpush1.bf16.msra.mxu0 0
      %2147 = vmatprep.subr.bf16.mxu0 0
      %2148 = vmatpush1.bf16.msra.mxu0 0
      %2149 = vmatprep.subr.bf16.mxu0 0
      %2150 = vmatpush1.bf16.msra.mxu0 0
      %2151 = vmatprep.subr.bf16.mxu0 0
      %2152 = vmatpush1.bf16.msra.mxu0 0
      %2153 = vmatprep.subr.bf16.mxu0 0
      %2154 = vmatpush1.bf16.msra.mxu0 0
      %2155 = vmatprep.subr.bf16.mxu0 0
      %2156 = vmatpush1.bf16.msra.mxu0 0
      %2157 = vmatprep.subr.bf16.mxu0 0
      %2158 = vmatpush1.bf16.msra.mxu0 0
      %2159 = vmatprep.subr.bf16.mxu0 0
      %2160 = vmatpush1.bf16.msra.mxu0 0
      %2161 = vmatprep.subr.bf16.mxu0 0
      %2162 = vmatpush1.bf16.msra.mxu0 0
      %2163 = vmatprep.subr.bf16.mxu0 0
      %2164 = vmatpush1.bf16.msra.mxu0 0
      %2165 = vmatprep.subr.bf16.mxu0 0
      %2166 = vmatpush1.bf16.msra.mxu0 0
      %2167 = vmatprep.subr.bf16.mxu0 0
      %2168 = vmatpush1.bf16.msra.mxu0 0
      %2169 = vmatprep.subr.bf16.mxu0 0
      %2170 = vmatpush1.bf16.msra.mxu0 0
      %2171 = vmatprep.mubr.bf16.mxu0 0
      %2172 = vmatmul.mubr.bf16.gmra.mrb[0].mxu0 %v2113
      %v2173 = vpop.f32.mrb[0].mxu0
      %v2174 = vadd.f32 0.0, %v2173
      %v2175 = vpop.f32.mrb[0].mxu0
      %v2176 = vpop.f32.mrb[0].mxu0
      %v2177 = vadd.f32 0.0, %v2176
      %v2178 = vpop.f32.mrb[0].mxu0
      %2179 = vmatprep.mubr.bf16.mxu0 0
      %2180 = vmatmul.mubr.bf16.gmra.mrb[0].mxu0 %v2116
      %v2181 = vpop.f32.mrb[0].mxu0
      %v2182 = vadd.f32 0.0, %v2181
      %v2183 = vpop.f32.mrb[0].mxu0
      %v2184 = vpop.f32.mrb[0].mxu0
      %v2185 = vadd.f32 0.0, %v2184
      %v2186 = vpop.f32.mrb[0].mxu0
      %2187 = vmatprep.mubr.bf16.mxu0 0
      %2188 = vmatmul.mubr.bf16.gmra.mrb[0].mxu0 %v2119
      %v2189 = vpop.f32.mrb[0].mxu0
      %v2190 = vadd.f32 0.0, %v2189
      %v2191 = vpop.f32.mrb[0].mxu0
      %v2192 = vpop.f32.mrb[0].mxu0
      %v2193 = vadd.f32 0.0, %v2192
      %v2194 = vpop.f32.mrb[0].mxu0
      %2195 = vmatprep.mubr.bf16.mxu0 0
      %2196 = vmatmul.mubr.bf16.gmra.mrb[0].mxu0 %v2122
      %v2197 = vpop.f32.mrb[0].mxu0
      %v2198 = vadd.f32 0.0, %v2197
      %v2199 = vpop.f32.mrb[0].mxu0
      %v2200 = vpop.f32.mrb[0].mxu0
      %v2201 = vadd.f32 0.0, %v2200
      %v2202 = vpop.f32.mrb[0].mxu0
      %2203 = vmatprep.mubr.bf16.mxu0 0
      %2204 = vmatmul.mubr.bf16.gmra.mrb[0].mxu0 %v2125
      %v2205 = vpop.f32.mrb[0].mxu0
      %v2206 = vadd.f32 0.0, %v2205
      %v2207 = vpop.f32.mrb[0].mxu0
      %v2208 = vpop.f32.mrb[0].mxu0
      %v2209 = vadd.f32 0.0, %v2208
      %v2210 = vpop.f32.mrb[0].mxu0
      %2211 = vmatprep.mubr.bf16.mxu0 0
      %2212 = vmatmul.mubr.bf16.gmra.mrb[0].mxu0 %v2128
      %v2213 = vpop.f32.mrb[0].mxu0
      %v2214 = vadd.f32 0.0, %v2213
      %v2215 = vpop.f32.mrb[0].mxu0
      %v2216 = vpop.f32.mrb[0].mxu0
      %v2217 = vadd.f32 0.0, %v2216
      %v2218 = vpop.f32.mrb[0].mxu0
      %2219 = vmatprep.mubr.bf16.mxu0 0
      %2220 = vmatmul.mubr.bf16.gmra.mrb[0].mxu0 %v2131
      %v2221 = vpop.f32.mrb[0].mxu0
      %v2222 = vadd.f32 0.0, %v2221
      %v2223 = vpop.f32.mrb[0].mxu0
      %v2224 = vpop.f32.mrb[0].mxu0
      %v2225 = vadd.f32 0.0, %v2224
      %v2226 = vpop.f32.mrb[0].mxu0
      %2227 = vmatprep.mubr.bf16.mxu0 0
      %2228 = vmatmul.mubr.bf16.gmra.mrb[0].mxu0 %v2134
      %v2229 = vpop.f32.mrb[0].mxu0
      %v2230 = vadd.f32 0.0, %v2229
      %v2231 = vpop.f32.mrb[0].mxu0
      %v2232 = vpop.f32.mrb[0].mxu0
      %v2233 = vadd.f32 0.0, %v2232
      %v2234 = vpop.f32.mrb[0].mxu0
      %2235 = vdwg.mxu0
      %v2236 = vadd.f32 %v2083, %v2174
      %v2237 = vadd.f32 %v2084, %v2177
      %v2238 = vadd.f32 %v2085, %v2182
      %v2239 = vadd.f32 %v2086, %v2185
      %v2240 = vadd.f32 %v2087, %v2190
      %v2241 = vadd.f32 %v2088, %v2193
      %v2242 = vadd.f32 %v2089, %v2198
      %v2243 = vadd.f32 %v2090, %v2201
      %v2244 = vadd.f32 %v2091, %v2206
      %v2245 = vadd.f32 %v2092, %v2209
      %v2246 = vadd.f32 %v2093, %v2214
      %v2247 = vadd.f32 %v2094, %v2217
      %v2248 = vadd.f32 %v2095, %v2222
      %v2249 = vadd.f32 %v2096, %v2225
      %v2250 = vadd.f32 %v2097, %v2230
      %v2251 = vadd.f32 %v2098, %v2233
      %s2252 = sadd.s32 %s265, 2
      %s2253 = smul.u32 %s2252, 24
      %s2254 = scalar_lea.vmem %s239, %s2253
      %v2255 = vld [vmem:[%s2254] sm:$0xff]
      %v2256 = vld [vmem:[%s2254 + $0x8] sm:$0xff]
      %v2257 = vld [vmem:[%s2254 + $0x18] sm:$0xff]
      %v2258 = vld [vmem:[%s2254 + $0x20] sm:$0xff]
      %v2259 = vld [vmem:[%s2254 + $0x30] sm:$0xff]
      %v2260 = vld [vmem:[%s2254 + $0x38] sm:$0xff]
      %v2261 = vld [vmem:[%s2254 + $0x48] sm:$0xff]
      %v2262 = vld [vmem:[%s2254 + $0x50] sm:$0xff]
      %v2263 = vld [vmem:[%s2254 + $0x60] sm:$0xff]
      %v2264 = vld [vmem:[%s2254 + $0x68] sm:$0xff]
      %v2265 = vld [vmem:[%s2254 + $0x78] sm:$0xff]
      %v2266 = vld [vmem:[%s2254 + $0x80] sm:$0xff]
      %v2267 = vld [vmem:[%s2254 + $0x90] sm:$0xff]
      %v2268 = vld [vmem:[%s2254 + $0x98] sm:$0xff]
      %v2269 = vld [vmem:[%s2254 + $0xa8] sm:$0xff]
      %v2270 = vld [vmem:[%s2254 + $0xb0] sm:$0xff]
      %s2271 = scalar_lea.vmem %s244, %s2253
      %v2272 = vld [vmem:[%s2271] sm:$0xff]
      %v2273 = vld [vmem:[%s2271 + $0x8] sm:$0xff]
      %v2274 = vld [vmem:[%s2271 + $0x18] sm:$0xff]
      %v2275 = vld [vmem:[%s2271 + $0x20] sm:$0xff]
      %v2276 = vld [vmem:[%s2271 + $0x30] sm:$0xff]
      %v2277 = vld [vmem:[%s2271 + $0x38] sm:$0xff]
      %v2278 = vld [vmem:[%s2271 + $0x48] sm:$0xff]
      %v2279 = vld [vmem:[%s2271 + $0x50] sm:$0xff]
      %v2280 = vld [vmem:[%s2271 + $0x60] sm:$0xff]
      %v2281 = vld [vmem:[%s2271 + $0x68] sm:$0xff]
      %v2282 = vld [vmem:[%s2271 + $0x78] sm:$0xff]
      %v2283 = vld [vmem:[%s2271 + $0x80] sm:$0xff]
      %v2284 = vld [vmem:[%s2271 + $0x90] sm:$0xff]
      %v2285 = vld [vmem:[%s2271 + $0x98] sm:$0xff]
      %v2286 = vld [vmem:[%s2271 + $0xa8] sm:$0xff]
      %v2287 = vld [vmem:[%s2271 + $0xb0] sm:$0xff]
      %v2288 = vpack.c.bf16 %v2256, %v2255
      %v2289 = vpack.c.bf16 %v2258, %v2257
      %v2290 = vpack.c.bf16 %v2260, %v2259
      %v2291 = vpack.c.bf16 %v2262, %v2261
      %v2292 = vpack.c.bf16 %v2264, %v2263
      %v2293 = vpack.c.bf16 %v2266, %v2265
      %v2294 = vpack.c.bf16 %v2268, %v2267
      %v2295 = vpack.c.bf16 %v2270, %v2269
      %s2296 = scalar_lea.vmem %s2, 24
      %v2297 = vld [vmem:[%s2296] sm:$0x3]
      %v2299 = vsel %vm323, %v2288, 0
      %v2302 = vsel %vm323, %v2289, 0
      %v2305 = vsel %vm323, %v2290, 0
      %v2308 = vsel %vm323, %v2291, 0
      %v2311 = vsel %vm323, %v2292, 0
      %v2314 = vsel %vm323, %v2293, 0
      %v2317 = vsel %vm323, %v2294, 0
      %v2320 = vsel %vm323, %v2295, 0
      %v2323 = vsel %vm348, %v2297, 0
      %2325 = vmatprep.subr.bf16.mxu0 0
      %2326 = vmatpush1.bf16.msra.mxu0 %v2323
      %2327 = vmatprep.subr.bf16.mxu0 0
      %2328 = vmatpush1.bf16.msra.mxu0 0
      %2329 = vmatprep.subr.bf16.mxu0 0
      %2330 = vmatpush1.bf16.msra.mxu0 0
      %2331 = vmatprep.subr.bf16.mxu0 0
      %2332 = vmatpush1.bf16.msra.mxu0 0
      %2333 = vmatprep.subr.bf16.mxu0 0
      %2334 = vmatpush1.bf16.msra.mxu0 0
      %2335 = vmatprep.subr.bf16.mxu0 0
      %2336 = vmatpush1.bf16.msra.mxu0 0
      %2337 = vmatprep.subr.bf16.mxu0 0
      %2338 = vmatpush1.bf16.msra.mxu0 0
      %2339 = vmatprep.subr.bf16.mxu0 0
      %2340 = vmatpush1.bf16.msra.mxu0 0
      %2341 = vmatprep.subr.bf16.mxu0 0
      %2342 = vmatpush1.bf16.msra.mxu0 0
      %2343 = vmatprep.subr.bf16.mxu0 0
      %2344 = vmatpush1.bf16.msra.mxu0 0
      %2345 = vmatprep.subr.bf16.mxu0 0
      %2346 = vmatpush1.bf16.msra.mxu0 0
      %2347 = vmatprep.subr.bf16.mxu0 0
      %2348 = vmatpush1.bf16.msra.mxu0 0
      %2349 = vmatprep.subr.bf16.mxu0 0
      %2350 = vmatpush1.bf16.msra.mxu0 0
      %2351 = vmatprep.subr.bf16.mxu0 0
      %2352 = vmatpush1.bf16.msra.mxu0 0
      %2353 = vmatprep.subr.bf16.mxu0 0
      %2354 = vmatpush1.bf16.msra.mxu0 0
      %2355 = vmatprep.subr.bf16.mxu0 0
      %2356 = vmatpush1.bf16.msra.mxu0 0
      %2357 = vmatprep.mubr.bf16.mxu0 0
      %2358 = vmatmul.mubr.bf16.gmra.mrb[0].mxu0 %v2299
      %v2359 = vpop.f32.mrb[0].mxu0
      %v2360 = vadd.f32 0.0, %v2359
      %v2361 = vpop.f32.mrb[0].mxu0
      %v2362 = vpop.f32.mrb[0].mxu0
      %v2363 = vadd.f32 0.0, %v2362
      %v2364 = vpop.f32.mrb[0].mxu0
      %2365 = vmatprep.mubr.bf16.mxu0 0
      %2366 = vmatmul.mubr.bf16.gmra.mrb[0].mxu0 %v2302
      %v2367 = vpop.f32.mrb[0].mxu0
      %v2368 = vadd.f32 0.0, %v2367
      %v2369 = vpop.f32.mrb[0].mxu0
      %v2370 = vpop.f32.mrb[0].mxu0
      %v2371 = vadd.f32 0.0, %v2370
      %v2372 = vpop.f32.mrb[0].mxu0
      %2373 = vmatprep.mubr.bf16.mxu0 0
      %2374 = vmatmul.mubr.bf16.gmra.mrb[0].mxu0 %v2305
      %v2375 = vpop.f32.mrb[0].mxu0
      %v2376 = vadd.f32 0.0, %v2375
      %v2377 = vpop.f32.mrb[0].mxu0
      %v2378 = vpop.f32.mrb[0].mxu0
      %v2379 = vadd.f32 0.0, %v2378
      %v2380 = vpop.f32.mrb[0].mxu0
      %2381 = vmatprep.mubr.bf16.mxu0 0
      %2382 = vmatmul.mubr.bf16.gmra.mrb[0].mxu0 %v2308
      %v2383 = vpop.f32.mrb[0].mxu0
      %v2384 = vadd.f32 0.0, %v2383
      %v2385 = vpop.f32.mrb[0].mxu0
      %v2386 = vpop.f32.mrb[0].mxu0
      %v2387 = vadd.f32 0.0, %v2386
      %v2388 = vpop.f32.mrb[0].mxu0
      %2389 = vmatprep.mubr.bf16.mxu0 0
      %2390 = vmatmul.mubr.bf16.gmra.mrb[0].mxu0 %v2311
      %v2391 = vpop.f32.mrb[0].mxu0
      %v2392 = vadd.f32 0.0, %v2391
      %v2393 = vpop.f32.mrb[0].mxu0
      %v2394 = vpop.f32.mrb[0].mxu0
      %v2395 = vadd.f32 0.0, %v2394
      %v2396 = vpop.f32.mrb[0].mxu0
      %2397 = vmatprep.mubr.bf16.mxu0 0
      %2398 = vmatmul.mubr.bf16.gmra.mrb[0].mxu0 %v2314
      %v2399 = vpop.f32.mrb[0].mxu0
      %v2400 = vadd.f32 0.0, %v2399
      %v2401 = vpop.f32.mrb[0].mxu0
      %v2402 = vpop.f32.mrb[0].mxu0
      %v2403 = vadd.f32 0.0, %v2402
      %v2404 = vpop.f32.mrb[0].mxu0
      %2405 = vmatprep.mubr.bf16.mxu0 0
      %2406 = vmatmul.mubr.bf16.gmra.mrb[0].mxu0 %v2317
      %v2407 = vpop.f32.mrb[0].mxu0
      %v2408 = vadd.f32 0.0, %v2407
      %v2409 = vpop.f32.mrb[0].mxu0
      %v2410 = vpop.f32.mrb[0].mxu0
      %v2411 = vadd.f32 0.0, %v2410
      %v2412 = vpop.f32.mrb[0].mxu0
      %2413 = vmatprep.mubr.bf16.mxu0 0
      %2414 = vmatmul.mubr.bf16.gmra.mrb[0].mxu0 %v2320
      %v2415 = vpop.f32.mrb[0].mxu0
      %v2416 = vadd.f32 0.0, %v2415
      %v2417 = vpop.f32.mrb[0].mxu0
      %v2418 = vpop.f32.mrb[0].mxu0
      %v2419 = vadd.f32 0.0, %v2418
      %v2420 = vpop.f32.mrb[0].mxu0
      %2421 = vdwg.mxu0
      %v2422 = vadd.f32 %v2236, %v2360
      %v2423 = vadd.f32 %v2237, %v2363
      %v2424 = vadd.f32 %v2238, %v2368
      %v2425 = vadd.f32 %v2239, %v2371
      %v2426 = vadd.f32 %v2240, %v2376
      %v2427 = vadd.f32 %v2241, %v2379
      %v2428 = vadd.f32 %v2242, %v2384
      %v2429 = vadd.f32 %v2243, %v2387
      %v2430 = vadd.f32 %v2244, %v2392
      %v2431 = vadd.f32 %v2245, %v2395
      %v2432 = vadd.f32 %v2246, %v2400
      %v2433 = vadd.f32 %v2247, %v2403
      %v2434 = vadd.f32 %v2248, %v2408
      %v2435 = vadd.f32 %v2249, %v2411
      %v2436 = vadd.f32 %v2250, %v2416
      %v2437 = vadd.f32 %v2251, %v2419
      %v2438 = vpack.c.bf16 %v2273, %v2272
      %v2439 = vpack.c.bf16 %v2275, %v2274
      %v2440 = vpack.c.bf16 %v2277, %v2276
      %v2441 = vpack.c.bf16 %v2279, %v2278
      %v2442 = vpack.c.bf16 %v2281, %v2280
      %v2443 = vpack.c.bf16 %v2283, %v2282
      %v2444 = vpack.c.bf16 %v2285, %v2284
      %v2445 = vpack.c.bf16 %v2287, %v2286
      %v2446 = vld [vmem:[%s2296] sm:$0xc]
      %v2448 = vunpack.c.l.b16 %v2446
      %v2449 = vpack.c.b16 %v2448, %v2448
      %v2450 = vrot.slane %v2449, 2
      %v2452 = vsel %vm323, %v2438, 0
      %v2455 = vsel %vm323, %v2439, 0
      %v2458 = vsel %vm323, %v2440, 0
      %v2461 = vsel %vm323, %v2441, 0
      %v2464 = vsel %vm323, %v2442, 0
      %v2467 = vsel %vm323, %v2443, 0
      %v2470 = vsel %vm323, %v2444, 0
      %v2473 = vsel %vm323, %v2445, 0
      %v2476 = vsel %vm348, %v2450, 0
      %2478 = vmatprep.subr.bf16.mxu0 0
      %2479 = vmatpush1.bf16.msra.mxu0 %v2476
      %2480 = vmatprep.subr.bf16.mxu0 0
      %2481 = vmatpush1.bf16.msra.mxu0 0
      %2482 = vmatprep.subr.bf16.mxu0 0
      %2483 = vmatpush1.bf16.msra.mxu0 0
      %2484 = vmatprep.subr.bf16.mxu0 0
      %2485 = vmatpush1.bf16.msra.mxu0 0
      %2486 = vmatprep.subr.bf16.mxu0 0
      %2487 = vmatpush1.bf16.msra.mxu0 0
      %2488 = vmatprep.subr.bf16.mxu0 0
      %2489 = vmatpush1.bf16.msra.mxu0 0
      %2490 = vmatprep.subr.bf16.mxu0 0
      %2491 = vmatpush1.bf16.msra.mxu0 0
      %2492 = vmatprep.subr.bf16.mxu0 0
      %2493 = vmatpush1.bf16.msra.mxu0 0
      %2494 = vmatprep.subr.bf16.mxu0 0
      %2495 = vmatpush1.bf16.msra.mxu0 0
      %2496 = vmatprep.subr.bf16.mxu0 0
      %2497 = vmatpush1.bf16.msra.mxu0 0
      %2498 = vmatprep.subr.bf16.mxu0 0
      %2499 = vmatpush1.bf16.msra.mxu0 0
      %2500 = vmatprep.subr.bf16.mxu0 0
      %2501 = vmatpush1.bf16.msra.mxu0 0
      %2502 = vmatprep.subr.bf16.mxu0 0
      %2503 = vmatpush1.bf16.msra.mxu0 0
      %2504 = vmatprep.subr.bf16.mxu0 0
      %2505 = vmatpush1.bf16.msra.mxu0 0
      %2506 = vmatprep.subr.bf16.mxu0 0
      %2507 = vmatpush1.bf16.msra.mxu0 0
      %2508 = vmatprep.subr.bf16.mxu0 0
      %2509 = vmatpush1.bf16.msra.mxu0 0
      %2510 = vmatprep.mubr.bf16.mxu0 0
      %2511 = vmatmul.mubr.bf16.gmra.mrb[0].mxu0 %v2452
      %v2512 = vpop.f32.mrb[0].mxu0
      %v2513 = vadd.f32 0.0, %v2512
      %v2514 = vpop.f32.mrb[0].mxu0
      %v2515 = vpop.f32.mrb[0].mxu0
      %v2516 = vadd.f32 0.0, %v2515
      %v2517 = vpop.f32.mrb[0].mxu0
      %2518 = vmatprep.mubr.bf16.mxu0 0
      %2519 = vmatmul.mubr.bf16.gmra.mrb[0].mxu0 %v2455
      %v2520 = vpop.f32.mrb[0].mxu0
      %v2521 = vadd.f32 0.0, %v2520
      %v2522 = vpop.f32.mrb[0].mxu0
      %v2523 = vpop.f32.mrb[0].mxu0
      %v2524 = vadd.f32 0.0, %v2523
      %v2525 = vpop.f32.mrb[0].mxu0
      %2526 = vmatprep.mubr.bf16.mxu0 0
      %2527 = vmatmul.mubr.bf16.gmra.mrb[0].mxu0 %v2458
      %v2528 = vpop.f32.mrb[0].mxu0
      %v2529 = vadd.f32 0.0, %v2528
      %v2530 = vpop.f32.mrb[0].mxu0
      %v2531 = vpop.f32.mrb[0].mxu0
      %v2532 = vadd.f32 0.0, %v2531
      %v2533 = vpop.f32.mrb[0].mxu0
      %2534 = vmatprep.mubr.bf16.mxu0 0
      %2535 = vmatmul.mubr.bf16.gmra.mrb[0].mxu0 %v2461
      %v2536 = vpop.f32.mrb[0].mxu0
      %v2537 = vadd.f32 0.0, %v2536
      %v2538 = vpop.f32.mrb[0].mxu0
      %v2539 = vpop.f32.mrb[0].mxu0
      %v2540 = vadd.f32 0.0, %v2539
      %v2541 = vpop.f32.mrb[0].mxu0
      %2542 = vmatprep.mubr.bf16.mxu0 0
      %2543 = vmatmul.mubr.bf16.gmra.mrb[0].mxu0 %v2464
      %v2544 = vpop.f32.mrb[0].mxu0
      %v2545 = vadd.f32 0.0, %v2544
      %v2546 = vpop.f32.mrb[0].mxu0
      %v2547 = vpop.f32.mrb[0].mxu0
      %v2548 = vadd.f32 0.0, %v2547
      %v2549 = vpop.f32.mrb[0].mxu0
      %2550 = vmatprep.mubr.bf16.mxu0 0
      %2551 = vmatmul.mubr.bf16.gmra.mrb[0].mxu0 %v2467
      %v2552 = vpop.f32.mrb[0].mxu0
      %v2553 = vadd.f32 0.0, %v2552
      %v2554 = vpop.f32.mrb[0].mxu0
      %v2555 = vpop.f32.mrb[0].mxu0
      %v2556 = vadd.f32 0.0, %v2555
      %v2557 = vpop.f32.mrb[0].mxu0
      %2558 = vmatprep.mubr.bf16.mxu0 0
      %2559 = vmatmul.mubr.bf16.gmra.mrb[0].mxu0 %v2470
      %v2560 = vpop.f32.mrb[0].mxu0
      %v2561 = vadd.f32 0.0, %v2560
      %v2562 = vpop.f32.mrb[0].mxu0
      %v2563 = vpop.f32.mrb[0].mxu0
      %v2564 = vadd.f32 0.0, %v2563
      %v2565 = vpop.f32.mrb[0].mxu0
      %2566 = vmatprep.mubr.bf16.mxu0 0
      %2567 = vmatmul.mubr.bf16.gmra.mrb[0].mxu0 %v2473
      %v2568 = vpop.f32.mrb[0].mxu0
      %v2569 = vadd.f32 0.0, %v2568
      %v2570 = vpop.f32.mrb[0].mxu0
      %v2571 = vpop.f32.mrb[0].mxu0
      %v2572 = vadd.f32 0.0, %v2571
      %v2573 = vpop.f32.mrb[0].mxu0
      %2574 = vdwg.mxu0
      %v2575 = vadd.f32 %v2422, %v2513
      %v2576 = vadd.f32 %v2423, %v2516
      %v2577 = vadd.f32 %v2424, %v2521
      %v2578 = vadd.f32 %v2425, %v2524
      %v2579 = vadd.f32 %v2426, %v2529
      %v2580 = vadd.f32 %v2427, %v2532
      %v2581 = vadd.f32 %v2428, %v2537
      %v2582 = vadd.f32 %v2429, %v2540
      %v2583 = vadd.f32 %v2430, %v2545
      %v2584 = vadd.f32 %v2431, %v2548
      %v2585 = vadd.f32 %v2432, %v2553
      %v2586 = vadd.f32 %v2433, %v2556
      %v2587 = vadd.f32 %v2434, %v2561
      %v2588 = vadd.f32 %v2435, %v2564
      %v2589 = vadd.f32 %v2436, %v2569
      %v2590 = vadd.f32 %v2437, %v2572
      %v2591 = vld [vmem:[%s2254 + $0x1] sm:$0xff]
      %v2592 = vld [vmem:[%s2254 + $0x9] sm:$0xff]
      %v2593 = vld [vmem:[%s2254 + $0x19] sm:$0xff]
      %v2594 = vld [vmem:[%s2254 + $0x21] sm:$0xff]
      %v2595 = vld [vmem:[%s2254 + $0x31] sm:$0xff]
      %v2596 = vld [vmem:[%s2254 + $0x39] sm:$0xff]
      %v2597 = vld [vmem:[%s2254 + $0x49] sm:$0xff]
      %v2598 = vld [vmem:[%s2254 + $0x51] sm:$0xff]
      %v2599 = vld [vmem:[%s2254 + $0x61] sm:$0xff]
      %v2600 = vld [vmem:[%s2254 + $0x69] sm:$0xff]
      %v2601 = vld [vmem:[%s2254 + $0x79] sm:$0xff]
      %v2602 = vld [vmem:[%s2254 + $0x81] sm:$0xff]
      %v2603 = vld [vmem:[%s2254 + $0x91] sm:$0xff]
      %v2604 = vld [vmem:[%s2254 + $0x99] sm:$0xff]
      %v2605 = vld [vmem:[%s2254 + $0xa9] sm:$0xff]
      %v2606 = vld [vmem:[%s2254 + $0xb1] sm:$0xff]
      %v2607 = vld [vmem:[%s2271 + $0x1] sm:$0xff]
      %v2608 = vld [vmem:[%s2271 + $0x9] sm:$0xff]
      %v2609 = vld [vmem:[%s2271 + $0x19] sm:$0xff]
      %v2610 = vld [vmem:[%s2271 + $0x21] sm:$0xff]
      %v2611 = vld [vmem:[%s2271 + $0x31] sm:$0xff]
      %v2612 = vld [vmem:[%s2271 + $0x39] sm:$0xff]
      %v2613 = vld [vmem:[%s2271 + $0x49] sm:$0xff]
      %v2614 = vld [vmem:[%s2271 + $0x51] sm:$0xff]
      %v2615 = vld [vmem:[%s2271 + $0x61] sm:$0xff]
      %v2616 = vld [vmem:[%s2271 + $0x69] sm:$0xff]
      %v2617 = vld [vmem:[%s2271 + $0x79] sm:$0xff]
      %v2618 = vld [vmem:[%s2271 + $0x81] sm:$0xff]
      %v2619 = vld [vmem:[%s2271 + $0x91] sm:$0xff]
      %v2620 = vld [vmem:[%s2271 + $0x99] sm:$0xff]
      %v2621 = vld [vmem:[%s2271 + $0xa9] sm:$0xff]
      %v2622 = vld [vmem:[%s2271 + $0xb1] sm:$0xff]
      %v2623 = vpack.c.bf16 %v2592, %v2591
      %v2624 = vpack.c.bf16 %v2594, %v2593
      %v2625 = vpack.c.bf16 %v2596, %v2595
      %v2626 = vpack.c.bf16 %v2598, %v2597
      %v2627 = vpack.c.bf16 %v2600, %v2599
      %v2628 = vpack.c.bf16 %v2602, %v2601
      %v2629 = vpack.c.bf16 %v2604, %v2603
      %v2630 = vpack.c.bf16 %v2606, %v2605
      %s2631 = scalar_lea.vmem %s2, 28
      %v2632 = vld [vmem:[%s2631] sm:$0x3]
      %v2634 = vsel %vm323, %v2623, 0
      %v2637 = vsel %vm323, %v2624, 0
      %v2640 = vsel %vm323, %v2625, 0
      %v2643 = vsel %vm323, %v2626, 0
      %v2646 = vsel %vm323, %v2627, 0
      %v2649 = vsel %vm323, %v2628, 0
      %v2652 = vsel %vm323, %v2629, 0
      %v2655 = vsel %vm323, %v2630, 0
      %v2658 = vsel %vm348, %v2632, 0
      %2660 = vmatprep.subr.bf16.mxu0 0
      %2661 = vmatpush1.bf16.msra.mxu0 %v2658
      %2662 = vmatprep.subr.bf16.mxu0 0
      %2663 = vmatpush1.bf16.msra.mxu0 0
      %2664 = vmatprep.subr.bf16.mxu0 0
      %2665 = vmatpush1.bf16.msra.mxu0 0
      %2666 = vmatprep.subr.bf16.mxu0 0
      %2667 = vmatpush1.bf16.msra.mxu0 0
      %2668 = vmatprep.subr.bf16.mxu0 0
      %2669 = vmatpush1.bf16.msra.mxu0 0
      %2670 = vmatprep.subr.bf16.mxu0 0
      %2671 = vmatpush1.bf16.msra.mxu0 0
      %2672 = vmatprep.subr.bf16.mxu0 0
      %2673 = vmatpush1.bf16.msra.mxu0 0
      %2674 = vmatprep.subr.bf16.mxu0 0
      %2675 = vmatpush1.bf16.msra.mxu0 0
      %2676 = vmatprep.subr.bf16.mxu0 0
      %2677 = vmatpush1.bf16.msra.mxu0 0
      %2678 = vmatprep.subr.bf16.mxu0 0
      %2679 = vmatpush1.bf16.msra.mxu0 0
      %2680 = vmatprep.subr.bf16.mxu0 0
      %2681 = vmatpush1.bf16.msra.mxu0 0
      %2682 = vmatprep.subr.bf16.mxu0 0
      %2683 = vmatpush1.bf16.msra.mxu0 0
      %2684 = vmatprep.subr.bf16.mxu0 0
      %2685 = vmatpush1.bf16.msra.mxu0 0
      %2686 = vmatprep.subr.bf16.mxu0 0
      %2687 = vmatpush1.bf16.msra.mxu0 0
      %2688 = vmatprep.subr.bf16.mxu0 0
      %2689 = vmatpush1.bf16.msra.mxu0 0
      %2690 = vmatprep.subr.bf16.mxu0 0
      %2691 = vmatpush1.bf16.msra.mxu0 0
      %2692 = vmatprep.mubr.bf16.mxu0 0
      %2693 = vmatmul.mubr.bf16.gmra.mrb[0].mxu0 %v2634
      %v2694 = vpop.f32.mrb[0].mxu0
      %v2695 = vadd.f32 0.0, %v2694
      %v2696 = vpop.f32.mrb[0].mxu0
      %v2697 = vpop.f32.mrb[0].mxu0
      %v2698 = vadd.f32 0.0, %v2697
      %v2699 = vpop.f32.mrb[0].mxu0
      %2700 = vmatprep.mubr.bf16.mxu0 0
      %2701 = vmatmul.mubr.bf16.gmra.mrb[0].mxu0 %v2637
      %v2702 = vpop.f32.mrb[0].mxu0
      %v2703 = vadd.f32 0.0, %v2702
      %v2704 = vpop.f32.mrb[0].mxu0
      %v2705 = vpop.f32.mrb[0].mxu0
      %v2706 = vadd.f32 0.0, %v2705
      %v2707 = vpop.f32.mrb[0].mxu0
      %2708 = vmatprep.mubr.bf16.mxu0 0
      %2709 = vmatmul.mubr.bf16.gmra.mrb[0].mxu0 %v2640
      %v2710 = vpop.f32.mrb[0].mxu0
      %v2711 = vadd.f32 0.0, %v2710
      %v2712 = vpop.f32.mrb[0].mxu0
      %v2713 = vpop.f32.mrb[0].mxu0
      %v2714 = vadd.f32 0.0, %v2713
      %v2715 = vpop.f32.mrb[0].mxu0
      %2716 = vmatprep.mubr.bf16.mxu0 0
      %2717 = vmatmul.mubr.bf16.gmra.mrb[0].mxu0 %v2643
      %v2718 = vpop.f32.mrb[0].mxu0
      %v2719 = vadd.f32 0.0, %v2718
      %v2720 = vpop.f32.mrb[0].mxu0
      %v2721 = vpop.f32.mrb[0].mxu0
      %v2722 = vadd.f32 0.0, %v2721
      %v2723 = vpop.f32.mrb[0].mxu0
      %2724 = vmatprep.mubr.bf16.mxu0 0
      %2725 = vmatmul.mubr.bf16.gmra.mrb[0].mxu0 %v2646
      %v2726 = vpop.f32.mrb[0].mxu0
      %v2727 = vadd.f32 0.0, %v2726
      %v2728 = vpop.f32.mrb[0].mxu0
      %v2729 = vpop.f32.mrb[0].mxu0
      %v2730 = vadd.f32 0.0, %v2729
      %v2731 = vpop.f32.mrb[0].mxu0
      %2732 = vmatprep.mubr.bf16.mxu0 0
      %2733 = vmatmul.mubr.bf16.gmra.mrb[0].mxu0 %v2649
      %v2734 = vpop.f32.mrb[0].mxu0
      %v2735 = vadd.f32 0.0, %v2734
      %v2736 = vpop.f32.mrb[0].mxu0
      %v2737 = vpop.f32.mrb[0].mxu0
      %v2738 = vadd.f32 0.0, %v2737
      %v2739 = vpop.f32.mrb[0].mxu0
      %2740 = vmatprep.mubr.bf16.mxu0 0
      %2741 = vmatmul.mubr.bf16.gmra.mrb[0].mxu0 %v2652
      %v2742 = vpop.f32.mrb[0].mxu0
      %v2743 = vadd.f32 0.0, %v2742
      %v2744 = vpop.f32.mrb[0].mxu0
      %v2745 = vpop.f32.mrb[0].mxu0
      %v2746 = vadd.f32 0.0, %v2745
      %v2747 = vpop.f32.mrb[0].mxu0
      %2748 = vmatprep.mubr.bf16.mxu0 0
      %2749 = vmatmul.mubr.bf16.gmra.mrb[0].mxu0 %v2655
      %v2750 = vpop.f32.mrb[0].mxu0
      %v2751 = vadd.f32 0.0, %v2750
      %v2752 = vpop.f32.mrb[0].mxu0
      %v2753 = vpop.f32.mrb[0].mxu0
      %v2754 = vadd.f32 0.0, %v2753
      %v2755 = vpop.f32.mrb[0].mxu0
      %2756 = vdwg.mxu0
      %v2757 = vadd.f32 %v2575, %v2695
      %v2758 = vadd.f32 %v2576, %v2698
      %v2759 = vadd.f32 %v2577, %v2703
      %v2760 = vadd.f32 %v2578, %v2706
      %v2761 = vadd.f32 %v2579, %v2711
      %v2762 = vadd.f32 %v2580, %v2714
      %v2763 = vadd.f32 %v2581, %v2719
      %v2764 = vadd.f32 %v2582, %v2722
      %v2765 = vadd.f32 %v2583, %v2727
      %v2766 = vadd.f32 %v2584, %v2730
      %v2767 = vadd.f32 %v2585, %v2735
      %v2768 = vadd.f32 %v2586, %v2738
      %v2769 = vadd.f32 %v2587, %v2743
      %v2770 = vadd.f32 %v2588, %v2746
      %v2771 = vadd.f32 %v2589, %v2751
      %v2772 = vadd.f32 %v2590, %v2754
      %v2773 = vpack.c.bf16 %v2608, %v2607
      %v2774 = vpack.c.bf16 %v2610, %v2609
      %v2775 = vpack.c.bf16 %v2612, %v2611
      %v2776 = vpack.c.bf16 %v2614, %v2613
      %v2777 = vpack.c.bf16 %v2616, %v2615
      %v2778 = vpack.c.bf16 %v2618, %v2617
      %v2779 = vpack.c.bf16 %v2620, %v2619
      %v2780 = vpack.c.bf16 %v2622, %v2621
      %v2781 = vld [vmem:[%s2631] sm:$0xc]
      %v2783 = vunpack.c.l.b16 %v2781
      %v2784 = vpack.c.b16 %v2783, %v2783
      %v2785 = vrot.slane %v2784, 2
      %v2787 = vsel %vm323, %v2773, 0
      %v2790 = vsel %vm323, %v2774, 0
      %v2793 = vsel %vm323, %v2775, 0
      %v2796 = vsel %vm323, %v2776, 0
      %v2799 = vsel %vm323, %v2777, 0
      %v2802 = vsel %vm323, %v2778, 0
      %v2805 = vsel %vm323, %v2779, 0
      %v2808 = vsel %vm323, %v2780, 0
      %v2811 = vsel %vm348, %v2785, 0
      %2813 = vmatprep.subr.bf16.mxu0 0
      %2814 = vmatpush1.bf16.msra.mxu0 %v2811
      %2815 = vmatprep.subr.bf16.mxu0 0
      %2816 = vmatpush1.bf16.msra.mxu0 0
      %2817 = vmatprep.subr.bf16.mxu0 0
      %2818 = vmatpush1.bf16.msra.mxu0 0
      %2819 = vmatprep.subr.bf16.mxu0 0
      %2820 = vmatpush1.bf16.msra.mxu0 0
      %2821 = vmatprep.subr.bf16.mxu0 0
      %2822 = vmatpush1.bf16.msra.mxu0 0
      %2823 = vmatprep.subr.bf16.mxu0 0
      %2824 = vmatpush1.bf16.msra.mxu0 0
      %2825 = vmatprep.subr.bf16.mxu0 0
      %2826 = vmatpush1.bf16.msra.mxu0 0
      %2827 = vmatprep.subr.bf16.mxu0 0
      %2828 = vmatpush1.bf16.msra.mxu0 0
      %2829 = vmatprep.subr.bf16.mxu0 0
      %2830 = vmatpush1.bf16.msra.mxu0 0
      %2831 = vmatprep.subr.bf16.mxu0 0
      %2832 = vmatpush1.bf16.msra.mxu0 0
      %2833 = vmatprep.subr.bf16.mxu0 0
      %2834 = vmatpush1.bf16.msra.mxu0 0
      %2835 = vmatprep.subr.bf16.mxu0 0
      %2836 = vmatpush1.bf16.msra.mxu0 0
      %2837 = vmatprep.subr.bf16.mxu0 0
      %2838 = vmatpush1.bf16.msra.mxu0 0
      %2839 = vmatprep.subr.bf16.mxu0 0
      %2840 = vmatpush1.bf16.msra.mxu0 0
      %2841 = vmatprep.subr.bf16.mxu0 0
      %2842 = vmatpush1.bf16.msra.mxu0 0
      %2843 = vmatprep.subr.bf16.mxu0 0
      %2844 = vmatpush1.bf16.msra.mxu0 0
      %2845 = vmatprep.mubr.bf16.mxu0 0
      %2846 = vmatmul.mubr.bf16.gmra.mrb[0].mxu0 %v2787
      %v2847 = vpop.f32.mrb[0].mxu0
      %v2848 = vadd.f32 0.0, %v2847
      %v2849 = vpop.f32.mrb[0].mxu0
      %v2850 = vpop.f32.mrb[0].mxu0
      %v2851 = vadd.f32 0.0, %v2850
      %v2852 = vpop.f32.mrb[0].mxu0
      %2853 = vmatprep.mubr.bf16.mxu0 0
      %2854 = vmatmul.mubr.bf16.gmra.mrb[0].mxu0 %v2790
      %v2855 = vpop.f32.mrb[0].mxu0
      %v2856 = vadd.f32 0.0, %v2855
      %v2857 = vpop.f32.mrb[0].mxu0
      %v2858 = vpop.f32.mrb[0].mxu0
      %v2859 = vadd.f32 0.0, %v2858
      %v2860 = vpop.f32.mrb[0].mxu0
      %2861 = vmatprep.mubr.bf16.mxu0 0
      %2862 = vmatmul.mubr.bf16.gmra.mrb[0].mxu0 %v2793
      %v2863 = vpop.f32.mrb[0].mxu0
      %v2864 = vadd.f32 0.0, %v2863
      %v2865 = vpop.f32.mrb[0].mxu0
      %v2866 = vpop.f32.mrb[0].mxu0
      %v2867 = vadd.f32 0.0, %v2866
      %v2868 = vpop.f32.mrb[0].mxu0
      %2869 = vmatprep.mubr.bf16.mxu0 0
      %2870 = vmatmul.mubr.bf16.gmra.mrb[0].mxu0 %v2796
      %v2871 = vpop.f32.mrb[0].mxu0
      %v2872 = vadd.f32 0.0, %v2871
      %v2873 = vpop.f32.mrb[0].mxu0
      %v2874 = vpop.f32.mrb[0].mxu0
      %v2875 = vadd.f32 0.0, %v2874
      %v2876 = vpop.f32.mrb[0].mxu0
      %2877 = vmatprep.mubr.bf16.mxu0 0
      %2878 = vmatmul.mubr.bf16.gmra.mrb[0].mxu0 %v2799
      %v2879 = vpop.f32.mrb[0].mxu0
      %v2880 = vadd.f32 0.0, %v2879
      %v2881 = vpop.f32.mrb[0].mxu0
      %v2882 = vpop.f32.mrb[0].mxu0
      %v2883 = vadd.f32 0.0, %v2882
      %v2884 = vpop.f32.mrb[0].mxu0
      %2885 = vmatprep.mubr.bf16.mxu0 0
      %2886 = vmatmul.mubr.bf16.gmra.mrb[0].mxu0 %v2802
      %v2887 = vpop.f32.mrb[0].mxu0
      %v2888 = vadd.f32 0.0, %v2887
      %v2889 = vpop.f32.mrb[0].mxu0
      %v2890 = vpop.f32.mrb[0].mxu0
      %v2891 = vadd.f32 0.0, %v2890
      %v2892 = vpop.f32.mrb[0].mxu0
      %2893 = vmatprep.mubr.bf16.mxu0 0
      %2894 = vmatmul.mubr.bf16.gmra.mrb[0].mxu0 %v2805
      %v2895 = vpop.f32.mrb[0].mxu0
      %v2896 = vadd.f32 0.0, %v2895
      %v2897 = vpop.f32.mrb[0].mxu0
      %v2898 = vpop.f32.mrb[0].mxu0
      %v2899 = vadd.f32 0.0, %v2898
      %v2900 = vpop.f32.mrb[0].mxu0
      %2901 = vmatprep.mubr.bf16.mxu0 0
      %2902 = vmatmul.mubr.bf16.gmra.mrb[0].mxu0 %v2808
      %v2903 = vpop.f32.mrb[0].mxu0
      %v2904 = vadd.f32 0.0, %v2903
      %v2905 = vpop.f32.mrb[0].mxu0
      %v2906 = vpop.f32.mrb[0].mxu0
      %v2907 = vadd.f32 0.0, %v2906
      %v2908 = vpop.f32.mrb[0].mxu0
      %2909 = vdwg.mxu0
      %v2910 = vadd.f32 %v2757, %v2848
      %v2911 = vadd.f32 %v2758, %v2851
      %v2912 = vadd.f32 %v2759, %v2856
      %v2913 = vadd.f32 %v2760, %v2859
      %v2914 = vadd.f32 %v2761, %v2864
      %v2915 = vadd.f32 %v2762, %v2867
      %v2916 = vadd.f32 %v2763, %v2872
      %v2917 = vadd.f32 %v2764, %v2875
      %v2918 = vadd.f32 %v2765, %v2880
      %v2919 = vadd.f32 %v2766, %v2883
      %v2920 = vadd.f32 %v2767, %v2888
      %v2921 = vadd.f32 %v2768, %v2891
      %v2922 = vadd.f32 %v2769, %v2896
      %v2923 = vadd.f32 %v2770, %v2899
      %v2924 = vadd.f32 %v2771, %v2904
      %v2925 = vadd.f32 %v2772, %v2907
      %v2926 = vld [vmem:[%s2254 + $0x2] sm:$0xff]
      %v2927 = vld [vmem:[%s2254 + $0xa] sm:$0xff]
      %v2928 = vld [vmem:[%s2254 + $0x1a] sm:$0xff]
      %v2929 = vld [vmem:[%s2254 + $0x22] sm:$0xff]
      %v2930 = vld [vmem:[%s2254 + $0x32] sm:$0xff]
      %v2931 = vld [vmem:[%s2254 + $0x3a] sm:$0xff]
      %v2932 = vld [vmem:[%s2254 + $0x4a] sm:$0xff]
      %v2933 = vld [vmem:[%s2254 + $0x52] sm:$0xff]
      %v2934 = vld [vmem:[%s2254 + $0x62] sm:$0xff]
      %v2935 = vld [vmem:[%s2254 + $0x6a] sm:$0xff]
      %v2936 = vld [vmem:[%s2254 + $0x7a] sm:$0xff]
      %v2937 = vld [vmem:[%s2254 + $0x82] sm:$0xff]
      %v2938 = vld [vmem:[%s2254 + $0x92] sm:$0xff]
      %v2939 = vld [vmem:[%s2254 + $0x9a] sm:$0xff]
      %v2940 = vld [vmem:[%s2254 + $0xaa] sm:$0xff]
      %v2941 = vld [vmem:[%s2254 + $0xb2] sm:$0xff]
      %v2942 = vld [vmem:[%s2271 + $0x2] sm:$0xff]
      %v2943 = vld [vmem:[%s2271 + $0xa] sm:$0xff]
      %v2944 = vld [vmem:[%s2271 + $0x1a] sm:$0xff]
      %v2945 = vld [vmem:[%s2271 + $0x22] sm:$0xff]
      %v2946 = vld [vmem:[%s2271 + $0x32] sm:$0xff]
      %v2947 = vld [vmem:[%s2271 + $0x3a] sm:$0xff]
      %v2948 = vld [vmem:[%s2271 + $0x4a] sm:$0xff]
      %v2949 = vld [vmem:[%s2271 + $0x52] sm:$0xff]
      %v2950 = vld [vmem:[%s2271 + $0x62] sm:$0xff]
      %v2951 = vld [vmem:[%s2271 + $0x6a] sm:$0xff]
      %v2952 = vld [vmem:[%s2271 + $0x7a] sm:$0xff]
      %v2953 = vld [vmem:[%s2271 + $0x82] sm:$0xff]
      %v2954 = vld [vmem:[%s2271 + $0x92] sm:$0xff]
      %v2955 = vld [vmem:[%s2271 + $0x9a] sm:$0xff]
      %v2956 = vld [vmem:[%s2271 + $0xaa] sm:$0xff]
      %v2957 = vld [vmem:[%s2271 + $0xb2] sm:$0xff]
      %v2958 = vpack.c.bf16 %v2927, %v2926
      %v2959 = vpack.c.bf16 %v2929, %v2928
      %v2960 = vpack.c.bf16 %v2931, %v2930
      %v2961 = vpack.c.bf16 %v2933, %v2932
      %v2962 = vpack.c.bf16 %v2935, %v2934
      %v2963 = vpack.c.bf16 %v2937, %v2936
      %v2964 = vpack.c.bf16 %v2939, %v2938
      %v2965 = vpack.c.bf16 %v2941, %v2940
      %s2966 = scalar_lea.vmem %s2, 32
      %v2967 = vld [vmem:[%s2966] sm:$0x3]
      %v2969 = vsel %vm323, %v2958, 0
      %v2972 = vsel %vm323, %v2959, 0
      %v2975 = vsel %vm323, %v2960, 0
      %v2978 = vsel %vm323, %v2961, 0
      %v2981 = vsel %vm323, %v2962, 0
      %v2984 = vsel %vm323, %v2963, 0
      %v2987 = vsel %vm323, %v2964, 0
      %v2990 = vsel %vm323, %v2965, 0
      %v2993 = vsel %vm348, %v2967, 0
      %2995 = vmatprep.subr.bf16.mxu0 0
      %2996 = vmatpush1.bf16.msra.mxu0 %v2993
      %2997 = vmatprep.subr.bf16.mxu0 0
      %2998 = vmatpush1.bf16.msra.mxu0 0
      %2999 = vmatprep.subr.bf16.mxu0 0
      %3000 = vmatpush1.bf16.msra.mxu0 0
      %3001 = vmatprep.subr.bf16.mxu0 0
      %3002 = vmatpush1.bf16.msra.mxu0 0
      %3003 = vmatprep.subr.bf16.mxu0 0
      %3004 = vmatpush1.bf16.msra.mxu0 0
      %3005 = vmatprep.subr.bf16.mxu0 0
      %3006 = vmatpush1.bf16.msra.mxu0 0
      %3007 = vmatprep.subr.bf16.mxu0 0
      %3008 = vmatpush1.bf16.msra.mxu0 0
      %3009 = vmatprep.subr.bf16.mxu0 0
      %3010 = vmatpush1.bf16.msra.mxu0 0
      %3011 = vmatprep.subr.bf16.mxu0 0
      %3012 = vmatpush1.bf16.msra.mxu0 0
      %3013 = vmatprep.subr.bf16.mxu0 0
      %3014 = vmatpush1.bf16.msra.mxu0 0
      %3015 = vmatprep.subr.bf16.mxu0 0
      %3016 = vmatpush1.bf16.msra.mxu0 0
      %3017 = vmatprep.subr.bf16.mxu0 0
      %3018 = vmatpush1.bf16.msra.mxu0 0
      %3019 = vmatprep.subr.bf16.mxu0 0
      %3020 = vmatpush1.bf16.msra.mxu0 0
      %3021 = vmatprep.subr.bf16.mxu0 0
      %3022 = vmatpush1.bf16.msra.mxu0 0
      %3023 = vmatprep.subr.bf16.mxu0 0
      %3024 = vmatpush1.bf16.msra.mxu0 0
      %3025 = vmatprep.subr.bf16.mxu0 0
      %3026 = vmatpush1.bf16.msra.mxu0 0
      %3027 = vmatprep.mubr.bf16.mxu0 0
      %3028 = vmatmul.mubr.bf16.gmra.mrb[0].mxu0 %v2969
      %v3029 = vpop.f32.mrb[0].mxu0
      %v3030 = vadd.f32 0.0, %v3029
      %v3031 = vpop.f32.mrb[0].mxu0
      %v3032 = vpop.f32.mrb[0].mxu0
      %v3033 = vadd.f32 0.0, %v3032
      %v3034 = vpop.f32.mrb[0].mxu0
      %3035 = vmatprep.mubr.bf16.mxu0 0
      %3036 = vmatmul.mubr.bf16.gmra.mrb[0].mxu0 %v2972
      %v3037 = vpop.f32.mrb[0].mxu0
      %v3038 = vadd.f32 0.0, %v3037
      %v3039 = vpop.f32.mrb[0].mxu0
      %v3040 = vpop.f32.mrb[0].mxu0
      %v3041 = vadd.f32 0.0, %v3040
      %v3042 = vpop.f32.mrb[0].mxu0
      %3043 = vmatprep.mubr.bf16.mxu0 0
      %3044 = vmatmul.mubr.bf16.gmra.mrb[0].mxu0 %v2975
      %v3045 = vpop.f32.mrb[0].mxu0
      %v3046 = vadd.f32 0.0, %v3045
      %v3047 = vpop.f32.mrb[0].mxu0
      %v3048 = vpop.f32.mrb[0].mxu0
      %v3049 = vadd.f32 0.0, %v3048
      %v3050 = vpop.f32.mrb[0].mxu0
      %3051 = vmatprep.mubr.bf16.mxu0 0
      %3052 = vmatmul.mubr.bf16.gmra.mrb[0].mxu0 %v2978
      %v3053 = vpop.f32.mrb[0].mxu0
      %v3054 = vadd.f32 0.0, %v3053
      %v3055 = vpop.f32.mrb[0].mxu0
      %v3056 = vpop.f32.mrb[0].mxu0
      %v3057 = vadd.f32 0.0, %v3056
      %v3058 = vpop.f32.mrb[0].mxu0
      %3059 = vmatprep.mubr.bf16.mxu0 0
      %3060 = vmatmul.mubr.bf16.gmra.mrb[0].mxu0 %v2981
      %v3061 = vpop.f32.mrb[0].mxu0
      %v3062 = vadd.f32 0.0, %v3061
      %v3063 = vpop.f32.mrb[0].mxu0
      %v3064 = vpop.f32.mrb[0].mxu0
      %v3065 = vadd.f32 0.0, %v3064
      %v3066 = vpop.f32.mrb[0].mxu0
      %3067 = vmatprep.mubr.bf16.mxu0 0
      %3068 = vmatmul.mubr.bf16.gmra.mrb[0].mxu0 %v2984
      %v3069 = vpop.f32.mrb[0].mxu0
      %v3070 = vadd.f32 0.0, %v3069
      %v3071 = vpop.f32.mrb[0].mxu0
      %v3072 = vpop.f32.mrb[0].mxu0
      %v3073 = vadd.f32 0.0, %v3072
      %v3074 = vpop.f32.mrb[0].mxu0
      %3075 = vmatprep.mubr.bf16.mxu0 0
      %3076 = vmatmul.mubr.bf16.gmra.mrb[0].mxu0 %v2987
      %v3077 = vpop.f32.mrb[0].mxu0
      %v3078 = vadd.f32 0.0, %v3077
      %v3079 = vpop.f32.mrb[0].mxu0
      %v3080 = vpop.f32.mrb[0].mxu0
      %v3081 = vadd.f32 0.0, %v3080
      %v3082 = vpop.f32.mrb[0].mxu0
      %3083 = vmatprep.mubr.bf16.mxu0 0
      %3084 = vmatmul.mubr.bf16.gmra.mrb[0].mxu0 %v2990
      %v3085 = vpop.f32.mrb[0].mxu0
      %v3086 = vadd.f32 0.0, %v3085
      %v3087 = vpop.f32.mrb[0].mxu0
      %v3088 = vpop.f32.mrb[0].mxu0
      %v3089 = vadd.f32 0.0, %v3088
      %v3090 = vpop.f32.mrb[0].mxu0
      %3091 = vdwg.mxu0
      %v3092 = vadd.f32 %v2910, %v3030
      %v3093 = vadd.f32 %v2911, %v3033
      %v3094 = vadd.f32 %v2912, %v3038
      %v3095 = vadd.f32 %v2913, %v3041
      %v3096 = vadd.f32 %v2914, %v3046
      %v3097 = vadd.f32 %v2915, %v3049
      %v3098 = vadd.f32 %v2916, %v3054
      %v3099 = vadd.f32 %v2917, %v3057
      %v3100 = vadd.f32 %v2918, %v3062
      %v3101 = vadd.f32 %v2919, %v3065
      %v3102 = vadd.f32 %v2920, %v3070
      %v3103 = vadd.f32 %v2921, %v3073
      %v3104 = vadd.f32 %v2922, %v3078
      %v3105 = vadd.f32 %v2923, %v3081
      %v3106 = vadd.f32 %v2924, %v3086
      %v3107 = vadd.f32 %v2925, %v3089
      %v3108 = vpack.c.bf16 %v2943, %v2942
      %v3109 = vpack.c.bf16 %v2945, %v2944
      %v3110 = vpack.c.bf16 %v2947, %v2946
      %v3111 = vpack.c.bf16 %v2949, %v2948
      %v3112 = vpack.c.bf16 %v2951, %v2950
      %v3113 = vpack.c.bf16 %v2953, %v2952
      %v3114 = vpack.c.bf16 %v2955, %v2954
      %v3115 = vpack.c.bf16 %v2957, %v2956
      %v3116 = vld [vmem:[%s2966] sm:$0xc]
      %v3118 = vunpack.c.l.b16 %v3116
      %v3119 = vpack.c.b16 %v3118, %v3118
      %v3120 = vrot.slane %v3119, 2
      %v3122 = vsel %vm323, %v3108, 0
      %v3125 = vsel %vm323, %v3109, 0
      %v3128 = vsel %vm323, %v3110, 0
      %v3131 = vsel %vm323, %v3111, 0
      %v3134 = vsel %vm323, %v3112, 0
      %v3137 = vsel %vm323, %v3113, 0
      %v3140 = vsel %vm323, %v3114, 0
      %v3143 = vsel %vm323, %v3115, 0
      %v3146 = vsel %vm348, %v3120, 0
      %3148 = vmatprep.subr.bf16.mxu0 0
      %3149 = vmatpush1.bf16.msra.mxu0 %v3146
      %3150 = vmatprep.subr.bf16.mxu0 0
      %3151 = vmatpush1.bf16.msra.mxu0 0
      %3152 = vmatprep.subr.bf16.mxu0 0
      %3153 = vmatpush1.bf16.msra.mxu0 0
      %3154 = vmatprep.subr.bf16.mxu0 0
      %3155 = vmatpush1.bf16.msra.mxu0 0
      %3156 = vmatprep.subr.bf16.mxu0 0
      %3157 = vmatpush1.bf16.msra.mxu0 0
      %3158 = vmatprep.subr.bf16.mxu0 0
      %3159 = vmatpush1.bf16.msra.mxu0 0
      %3160 = vmatprep.subr.bf16.mxu0 0
      %3161 = vmatpush1.bf16.msra.mxu0 0
      %3162 = vmatprep.subr.bf16.mxu0 0
      %3163 = vmatpush1.bf16.msra.mxu0 0
      %3164 = vmatprep.subr.bf16.mxu0 0
      %3165 = vmatpush1.bf16.msra.mxu0 0
      %3166 = vmatprep.subr.bf16.mxu0 0
      %3167 = vmatpush1.bf16.msra.mxu0 0
      %3168 = vmatprep.subr.bf16.mxu0 0
      %3169 = vmatpush1.bf16.msra.mxu0 0
      %3170 = vmatprep.subr.bf16.mxu0 0
      %3171 = vmatpush1.bf16.msra.mxu0 0
      %3172 = vmatprep.subr.bf16.mxu0 0
      %3173 = vmatpush1.bf16.msra.mxu0 0
      %3174 = vmatprep.subr.bf16.mxu0 0
      %3175 = vmatpush1.bf16.msra.mxu0 0
      %3176 = vmatprep.subr.bf16.mxu0 0
      %3177 = vmatpush1.bf16.msra.mxu0 0
      %3178 = vmatprep.subr.bf16.mxu0 0
      %3179 = vmatpush1.bf16.msra.mxu0 0
      %3180 = vmatprep.mubr.bf16.mxu0 0
      %3181 = vmatmul.mubr.bf16.gmra.mrb[0].mxu0 %v3122
      %v3182 = vpop.f32.mrb[0].mxu0
      %v3183 = vadd.f32 0.0, %v3182
      %v3184 = vpop.f32.mrb[0].mxu0
      %v3185 = vpop.f32.mrb[0].mxu0
      %v3186 = vadd.f32 0.0, %v3185
      %v3187 = vpop.f32.mrb[0].mxu0
      %3188 = vmatprep.mubr.bf16.mxu0 0
      %3189 = vmatmul.mubr.bf16.gmra.mrb[0].mxu0 %v3125
      %v3190 = vpop.f32.mrb[0].mxu0
      %v3191 = vadd.f32 0.0, %v3190
      %v3192 = vpop.f32.mrb[0].mxu0
      %v3193 = vpop.f32.mrb[0].mxu0
      %v3194 = vadd.f32 0.0, %v3193
      %v3195 = vpop.f32.mrb[0].mxu0
      %3196 = vmatprep.mubr.bf16.mxu0 0
      %3197 = vmatmul.mubr.bf16.gmra.mrb[0].mxu0 %v3128
      %v3198 = vpop.f32.mrb[0].mxu0
      %v3199 = vadd.f32 0.0, %v3198
      %v3200 = vpop.f32.mrb[0].mxu0
      %v3201 = vpop.f32.mrb[0].mxu0
      %v3202 = vadd.f32 0.0, %v3201
      %v3203 = vpop.f32.mrb[0].mxu0
      %3204 = vmatprep.mubr.bf16.mxu0 0
      %3205 = vmatmul.mubr.bf16.gmra.mrb[0].mxu0 %v3131
      %v3206 = vpop.f32.mrb[0].mxu0
      %v3207 = vadd.f32 0.0, %v3206
      %v3208 = vpop.f32.mrb[0].mxu0
      %v3209 = vpop.f32.mrb[0].mxu0
      %v3210 = vadd.f32 0.0, %v3209
      %v3211 = vpop.f32.mrb[0].mxu0
      %3212 = vmatprep.mubr.bf16.mxu0 0
      %3213 = vmatmul.mubr.bf16.gmra.mrb[0].mxu0 %v3134
      %v3214 = vpop.f32.mrb[0].mxu0
      %v3215 = vadd.f32 0.0, %v3214
      %v3216 = vpop.f32.mrb[0].mxu0
      %v3217 = vpop.f32.mrb[0].mxu0
      %v3218 = vadd.f32 0.0, %v3217
      %v3219 = vpop.f32.mrb[0].mxu0
      %3220 = vmatprep.mubr.bf16.mxu0 0
      %3221 = vmatmul.mubr.bf16.gmra.mrb[0].mxu0 %v3137
      %v3222 = vpop.f32.mrb[0].mxu0
      %v3223 = vadd.f32 0.0, %v3222
      %v3224 = vpop.f32.mrb[0].mxu0
      %v3225 = vpop.f32.mrb[0].mxu0
      %v3226 = vadd.f32 0.0, %v3225
      %v3227 = vpop.f32.mrb[0].mxu0
      %3228 = vmatprep.mubr.bf16.mxu0 0
      %3229 = vmatmul.mubr.bf16.gmra.mrb[0].mxu0 %v3140
      %v3230 = vpop.f32.mrb[0].mxu0
      %v3231 = vadd.f32 0.0, %v3230
      %v3232 = vpop.f32.mrb[0].mxu0
      %v3233 = vpop.f32.mrb[0].mxu0
      %v3234 = vadd.f32 0.0, %v3233
      %v3235 = vpop.f32.mrb[0].mxu0
      %3236 = vmatprep.mubr.bf16.mxu0 0
      %3237 = vmatmul.mubr.bf16.gmra.mrb[0].mxu0 %v3143
      %v3238 = vpop.f32.mrb[0].mxu0
      %v3239 = vadd.f32 0.0, %v3238
      %v3240 = vpop.f32.mrb[0].mxu0
      %v3241 = vpop.f32.mrb[0].mxu0
      %v3242 = vadd.f32 0.0, %v3241
      %v3243 = vpop.f32.mrb[0].mxu0
      %3244 = vdwg.mxu0
      %v3245 = vadd.f32 %v3092, %v3183
      %v3246 = vadd.f32 %v3093, %v3186
      %v3247 = vadd.f32 %v3094, %v3191
      %v3248 = vadd.f32 %v3095, %v3194
      %v3249 = vadd.f32 %v3096, %v3199
      %v3250 = vadd.f32 %v3097, %v3202
      %v3251 = vadd.f32 %v3098, %v3207
      %v3252 = vadd.f32 %v3099, %v3210
      %v3253 = vadd.f32 %v3100, %v3215
      %v3254 = vadd.f32 %v3101, %v3218
      %v3255 = vadd.f32 %v3102, %v3223
      %v3256 = vadd.f32 %v3103, %v3226
      %v3257 = vadd.f32 %v3104, %v3231
      %v3258 = vadd.f32 %v3105, %v3234
      %v3259 = vadd.f32 %v3106, %v3239
      %v3260 = vadd.f32 %v3107, %v3242
      %3261 = vst.msk [vmem:[%s254] sm:$0xff] %vm323, %v3245
      %3262 = vst.msk [vmem:[%s254 + $0x8] sm:$0xff] %vm323, %v3246
      %3263 = vst.msk [vmem:[%s254 + $0x10] sm:$0xff] %vm323, %v3247
      %3264 = vst.msk [vmem:[%s254 + $0x18] sm:$0xff] %vm323, %v3248
      %3265 = vst.msk [vmem:[%s254 + $0x20] sm:$0xff] %vm323, %v3249
      %3266 = vst.msk [vmem:[%s254 + $0x28] sm:$0xff] %vm323, %v3250
      %3267 = vst.msk [vmem:[%s254 + $0x30] sm:$0xff] %vm323, %v3251
      %3268 = vst.msk [vmem:[%s254 + $0x38] sm:$0xff] %vm323, %v3252
      %3269 = vst.msk [vmem:[%s254 + $0x40] sm:$0xff] %vm323, %v3253
      %3270 = vst.msk [vmem:[%s254 + $0x48] sm:$0xff] %vm323, %v3254
      %3271 = vst.msk [vmem:[%s254 + $0x50] sm:$0xff] %vm323, %v3255
      %3272 = vst.msk [vmem:[%s254 + $0x58] sm:$0xff] %vm323, %v3256
      %3273 = vst.msk [vmem:[%s254 + $0x60] sm:$0xff] %vm323, %v3257
      %3274 = vst.msk [vmem:[%s254 + $0x68] sm:$0xff] %vm323, %v3258
      %3275 = vst.msk [vmem:[%s254 + $0x70] sm:$0xff] %vm323, %v3259
      %3276 = vst.msk [vmem:[%s254 + $0x78] sm:$0xff] %vm323, %v3260
      %v3277 = vsel %vm323, %v3245, 0.0
      %v3278 = vsel %vm323, %v3246, 0.0
      %v3279 = vadd.f32 %v3277, %v3278
      %v3280 = vsel %vm323, %v3247, 0.0
      %v3281 = vadd.f32 %v3279, %v3280
      %v3282 = vsel %vm323, %v3248, 0.0
      %v3283 = vadd.f32 %v3281, %v3282
      %v3284 = vsel %vm323, %v3249, 0.0
      %v3285 = vadd.f32 %v3283, %v3284
      %v3286 = vsel %vm323, %v3250, 0.0
      %v3287 = vadd.f32 %v3285, %v3286
      %v3288 = vsel %vm323, %v3251, 0.0
      %v3289 = vadd.f32 %v3287, %v3288
      %v3290 = vsel %vm323, %v3252, 0.0
      %v3291 = vadd.f32 %v3289, %v3290
      %v3292 = vsel %vm323, %v3253, 0.0
      %v3293 = vadd.f32 %v3291, %v3292
      %v3294 = vsel %vm323, %v3254, 0.0
      %v3295 = vadd.f32 %v3293, %v3294
      %v3296 = vsel %vm323, %v3255, 0.0
      %v3297 = vadd.f32 %v3295, %v3296
      %v3298 = vsel %vm323, %v3256, 0.0
      %v3299 = vadd.f32 %v3297, %v3298
      %v3300 = vsel %vm323, %v3257, 0.0
      %v3301 = vadd.f32 %v3299, %v3300
      %v3302 = vsel %vm323, %v3258, 0.0
      %v3303 = vadd.f32 %v3301, %v3302
      %v3304 = vsel %vm323, %v3259, 0.0
      %v3305 = vadd.f32 %v3303, %v3304
      %v3306 = vsel %vm323, %v3260, 0.0
      %v3307 = vadd.f32 %v3305, %v3306
      %v3308 = vrot.slane %v3307, 4
      %v3309 = vadd.f32 %v3307, %v3308
      %v3310 = vrot.slane %v3309, 2
      %v3311 = vadd.f32 %v3309, %v3310
      %v3312 = vrot.slane %v3311, 1
      %v3313 = vadd.f32 %v3311, %v3312
      %vm3314 = vcmask 24576
      %3315 = vst.msk [vmem:[%s263] sm:$0x1] %vm3314, %v3313
      %v3316 = vmul.f32 %v3245, %v3245
      %v3317 = vmul.f32 %v3246, %v3246
      %v3318 = vmul.f32 %v3247, %v3247
      %v3319 = vmul.f32 %v3248, %v3248
      %v3320 = vmul.f32 %v3249, %v3249
      %v3321 = vmul.f32 %v3250, %v3250
      %v3322 = vmul.f32 %v3251, %v3251
      %v3323 = vmul.f32 %v3252, %v3252
      %v3324 = vmul.f32 %v3253, %v3253
      %v3325 = vmul.f32 %v3254, %v3254
      %v3326 = vmul.f32 %v3255, %v3255
      %v3327 = vmul.f32 %v3256, %v3256
      %v3328 = vmul.f32 %v3257, %v3257
      %v3329 = vmul.f32 %v3258, %v3258
      %v3330 = vmul.f32 %v3259, %v3259
      %v3331 = vmul.f32 %v3260, %v3260
      %v3332 = vsel %vm323, %v3316, 0.0
      %v3333 = vsel %vm323, %v3317, 0.0
      %v3334 = vadd.f32 %v3332, %v3333
      %v3335 = vsel %vm323, %v3318, 0.0
      %v3336 = vadd.f32 %v3334, %v3335
      %v3337 = vsel %vm323, %v3319, 0.0
      %v3338 = vadd.f32 %v3336, %v3337
      %v3339 = vsel %vm323, %v3320, 0.0
      %v3340 = vadd.f32 %v3338, %v3339
      %v3341 = vsel %vm323, %v3321, 0.0
      %v3342 = vadd.f32 %v3340, %v3341
      %v3343 = vsel %vm323, %v3322, 0.0
      %v3344 = vadd.f32 %v3342, %v3343
      %v3345 = vsel %vm323, %v3323, 0.0
      %v3346 = vadd.f32 %v3344, %v3345
      %v3347 = vsel %vm323, %v3324, 0.0
      %v3348 = vadd.f32 %v3346, %v3347
      %v3349 = vsel %vm323, %v3325, 0.0
      %v3350 = vadd.f32 %v3348, %v3349
      %v3351 = vsel %vm323, %v3326, 0.0
      %v3352 = vadd.f32 %v3350, %v3351
      %v3353 = vsel %vm323, %v3327, 0.0
      %v3354 = vadd.f32 %v3352, %v3353
      %v3355 = vsel %vm323, %v3328, 0.0
      %v3356 = vadd.f32 %v3354, %v3355
      %v3357 = vsel %vm323, %v3329, 0.0
      %v3358 = vadd.f32 %v3356, %v3357
      %v3359 = vsel %vm323, %v3330, 0.0
      %v3360 = vadd.f32 %v3358, %v3359
      %v3361 = vsel %vm323, %v3331, 0.0
      %v3362 = vadd.f32 %v3360, %v3361
      %v3363 = vrot.slane %v3362, 4
      %v3364 = vadd.f32 %v3362, %v3363
      %v3365 = vrot.slane %v3364, 2
      %v3366 = vadd.f32 %v3364, %v3365
      %v3367 = vrot.slane %v3366, 1
      %v3368 = vadd.f32 %v3366, %v3367
      %3369 = vst.msk [vmem:[%s263 + $0x1] sm:$0x1] %vm3314, %v3368
      %s3370 = smul.u32 8, %s21
      %p3371 = scmp.lt.s32.totalorder %s20, 1
      %s3372 = scalar_select %p3371, %s20, 1
      %p3373 = scmp.lt.s32.totalorder %s3370, 15
      %s3374 = scalar_select %p3373, %s3370, 15
      %s3375 = smul.addr %s3374, 2
      %s3376 = smul.addr %s3372, 32
      %s3377 = sadd.s32 %s3375, %s3376
      %s3378 = smul.addr %s3377, 8
      %s3379 = scalar_lea.vmem %s3, %s3378
      %p3380 = scmp.lt.s32.totalorder %s20, 1
      %s3381 = scalar_select %p3380, %s20, 1
      %p3382 = scmp.lt.s32.totalorder %s21, 1
      %s3383 = scalar_select %p3382, %s21, 1
      %s3384 = smul.addr %s3381, 2
      %s3385 = sadd.s32 %s3383, %s3384
      %s3386 = smul.addr %s3385, 2
      %s3387 = scalar_lea.vmem %s4, %s3386
      // Predicated region
      $region33: #{up_forward.3} parent=31 // pred_check
        %p3388 = pneg %p121
      $region34: #{up_forward.3} parent=31 // pred_check_branch
        %3390 = sbr.rel (%p3388) target = $region36
      $region35: #{up_forward.3} parent=31 // pred_region
        %s3391 = smul.u32 8, %s21
      $region36: #{up_forward.3} parent=31 // pred_fallthru
        _
      // Predicated region
      $region37: #{up_forward.3} parent=31 // pred_check
        %p3392 = pneg %p149
      $region38: #{up_forward.3} parent=31 // pred_check_branch
        %3394 = sbr.rel (%p3392) target = $region40
      $region39: #{up_forward.3} parent=31 // pred_region
        _
      $region40: #{up_forward.3} parent=31 // pred_fallthru
        _
    $region32: #{up_forward.3} parent=5 // pred_fallthru
      _
    %p3395 = scmp.le.s32.totalorder 2, %s11
    // Predicated region
    $region41: #{up_forward.3} parent=5 // pred_check
      %p3396 = pneg %p3395
    $region42: #{up_forward.3} parent=5 // pred_check_branch
      %3398 = sbr.rel (%p3396) target = $region44
    $region43: #{up_forward.3} parent=5 // pred_region
      %s3399 = ssub.s32 %s11, 2
      // Predicated region
      $region45: #{up_forward.3} parent=43 // pred_check
        %p3400 = pneg %p127
      $region46: #{up_forward.3} parent=43 // pred_check_branch
        %3402 = sbr.rel (%p3400) target = $region48
      $region47: #{up_forward.3} parent=43 // pred_region
        %s3403 = smul.u32 8, %s23
        %p3404 = scmp.lt.s32.totalorder %s22, 1
        %s3405 = scalar_select %p3404, %s22, 1
        %p3406 = scmp.lt.s32.totalorder %s3403, 15
        %s3407 = scalar_select %p3406, %s3403, 15
        %s3408 = smul.addr %s3407, 2
        %s3409 = smul.addr %s3405, 32
        %s3410 = sadd.s32 %s3408, %s3409
        %s3411 = smul.addr %s3410, 8
        %s3412 = scalar_lea.vmem %s3, %s3411
      $region48: #{up_forward.3} parent=43 // pred_fallthru
        _
      // Predicated region
      $region49: #{up_forward.3} parent=43 // pred_check
        %p3413 = pneg %p155
      $region50: #{up_forward.3} parent=43 // pred_check_branch
        %3415 = sbr.rel (%p3413) target = $region52
      $region51: #{up_forward.3} parent=43 // pred_region
        %p3416 = scmp.lt.s32.totalorder %s22, 1
        %s3417 = scalar_select %p3416, %s22, 1
        %p3418 = scmp.lt.s32.totalorder %s23, 1
        %s3419 = scalar_select %p3418, %s23, 1
        %s3420 = smul.addr %s3417, 2
        %s3421 = sadd.s32 %s3419, %s3420
        %s3422 = smul.addr %s3421, 2
        %s3423 = scalar_lea.vmem %s4, %s3422
      $region52: #{up_forward.3} parent=43 // pred_fallthru
        _
    $region44: #{up_forward.3} parent=5 // pred_fallthru
      _
  $region6: #{up_forward.3} parent=0 // loop_footer
    %s15 = sadd.s32 1, %s11
  $region7: #{up_forward.3} parent=0 // loop_footer_branch
    %10 = sbr.rel target = $region3
  $region8: #{up_forward.3} parent=0 // loop_exit
    _

// kernel: up_forward.4
$region0: #{up_forward.4}
  #allocation0 [shape = 'u32[]', space=smem, size = 0x4, offset = 0x4, fixed_abs, tag = 'smem constant byte address 0x4 - core index']
  #allocation1 [shape = 'u32[144,128]{1,0:T(1,128)}', space=vmem, size = 0x12000, scoped, tag = 'internal scratch']
  #allocation2 [shape = 'bf16[10,18,4]{2,1,0:T(8,128)(2,1)}', space=vmem, size = 0xf000, scoped, tag = 'scratch operand']
  %s0 = inlined_call_operand.vmem [shape: f32[2,16,16,4], index: 0, kind: input, shape index: {}]
  %s1 = inlined_call_operand.vmem [shape: f32[1,4], index: 1, kind: input, shape index: {}]
  %s2 = inlined_call_operand.vmem [shape: f32[1,4], index: 2, kind: input, shape index: {}]
  %s3 = inlined_call_operand.vmem [shape: bf16[9,4,4], index: 3, kind: input, shape index: {}]
  %s4 = inlined_call_operand.vmem [shape: f32[2,256,4], index: 4, kind: output, shape index: {0}]
  %s5 = inlined_call_operand.vmem [shape: f32[2,2,2,4], index: 5, kind: output, shape index: {1}]
  %6 = xla_tuple %s4, %s5
  %s7 = sld [smem:[#allocation0]]
  $region57: #{up_forward.4} parent=0
    _
  %s9 = ssub.s32 1, %s7
  %s10 = scalar_select 0, %s9, %s7
  loop: start=0, step=1, limit=6
  $region2: #{up_forward.4} parent=0 // loop_pre_header
    _
  $region3: #{up_forward.4} parent=0 // loop_header
    %s12 = sphi 0, %s16
    %p13 = scmp.ge.s32.totalorder %s12, 6
    %s19 = sphi 0, %s31
    %s20 = sphi 0, %s27
    %s21 = sphi 0, %s19
    %s22 = sphi 0, %s20
    %s23 = sphi 0, %s21
    %s24 = sphi 0, %s22
    %s34 = sphi 0, %s36
    %s37 = sphi 0, %s34
    %s38 = sphi 0, %s37
    %s54 = sphi 0, %s38
    %s58 = sphi 0, %s58
    %s60 = sphi 0, %s58
    %s61 = sphi 0, %s60
    %s75 = sphi 0, %s61
    %s79 = sphi 0, %s79
    %s81 = sphi 0, %s79
    %s82 = sphi 0, %s81
    %s96 = sphi 0, %s82
    %s100 = sphi 0, %s100
    %s102 = sphi 0, %s100
    %s103 = sphi 0, %s102
    %s117 = sphi 0, %s103
    %s125 = sphi 0, %s127
    %s128 = sphi 0, %s125
    %s129 = sphi 0, %s128
    %s145 = sphi 0, %s129
    %s153 = sphi 0, %s155
    %s156 = sphi 0, %s153
    %s157 = sphi 0, %s156
    %s173 = sphi 0, %s157
  $region4: #{up_forward.4} parent=0 // loop_header_branch
    %15 = sbr.rel (%p13) target = $region8
  $region5: #{up_forward.4} parent=0 // loop_body
    %s17 = ssub.s32 %s12, 1
    %s18 = ssub.s32 %s12, 2
    %s25 = sadd.s32 1, %s20
    %p26 = scmp.ge.s32.totalorder %s25, 2
    %s27 = scalar_select %p26, 0, %s25
    %s28 = sadd.s32 1, %s19
    %s29 = scalar_select %p26, %s28, %s19
    %p30 = scmp.ge.s32.totalorder %s29, 2
    %s31 = scalar_select %p30, 0, %s29
    %s32 = ssub.s32 %s19, %s31
    %p33 = scmp.eq.s32.totalorder %s32, 0
    %s35 = sadd.s32 %s34, 1
    %s36 = scalar_select %p33, %s34, %s35
    %p39 = pneg %p33
    %p40 = scmp.eq.s32.totalorder %s12, 3
    %p41 = por %p39, %p40
    %p42 = scmp.ne.s32.totalorder %s34, %s37
    %p43 = scmp.eq.s32.totalorder %s12, 0
    %p44 = por %p42, %p43
    %p45 = scmp.ne.s32.totalorder %s34, %s37
    %p46 = scmp.eq.s32.totalorder %s17, 3
    %p47 = por %p45, %p46
    %p48 = scmp.ne.s32.totalorder %s37, %s38
    %p49 = scmp.eq.s32.totalorder %s17, 0
    %p50 = por %p48, %p49
    %p51 = scmp.ne.s32.totalorder %s37, %s38
    %p52 = scmp.eq.s32.totalorder %s18, 3
    %p53 = por %p51, %p52
    %p55 = scmp.ne.s32.totalorder %s38, %s54
    %p56 = scmp.eq.s32.totalorder %s18, 0
    %p57 = por %p55, %p56
    %s59 = sadd.s32 %s58, 1
    %p62 = scmp.eq.s32.totalorder %s12, 3
    %p63 = scmp.ne.s32.totalorder %s58, %s60
    %p64 = scmp.eq.s32.totalorder %s12, 0
    %p65 = por %p63, %p64
    %p66 = scmp.ne.s32.totalorder %s58, %s60
    %p67 = scmp.eq.s32.totalorder %s17, 3
    %p68 = por %p66, %p67
    %p69 = scmp.ne.s32.totalorder %s60, %s61
    %p70 = scmp.eq.s32.totalorder %s17, 0
    %p71 = por %p69, %p70
    %p72 = scmp.ne.s32.totalorder %s60, %s61
    %p73 = scmp.eq.s32.totalorder %s18, 3
    %p74 = por %p72, %p73
    %p76 = scmp.ne.s32.totalorder %s61, %s75
    %p77 = scmp.eq.s32.totalorder %s18, 0
    %p78 = por %p76, %p77
    %s80 = sadd.s32 %s79, 1
    %p83 = scmp.eq.s32.totalorder %s12, 3
    %p84 = scmp.ne.s32.totalorder %s79, %s81
    %p85 = scmp.eq.s32.totalorder %s12, 0
    %p86 = por %p84, %p85
    %p87 = scmp.ne.s32.totalorder %s79, %s81
    %p88 = scmp.eq.s32.totalorder %s17, 3
    %p89 = por %p87, %p88
    %p90 = scmp.ne.s32.totalorder %s81, %s82
    %p91 = scmp.eq.s32.totalorder %s17, 0
    %p92 = por %p90, %p91
    %p93 = scmp.ne.s32.totalorder %s81, %s82
    %p94 = scmp.eq.s32.totalorder %s18, 3
    %p95 = por %p93, %p94
    %p97 = scmp.ne.s32.totalorder %s82, %s96
    %p98 = scmp.eq.s32.totalorder %s18, 0
    %p99 = por %p97, %p98
    %s101 = sadd.s32 %s100, 1
    %p104 = scmp.eq.s32.totalorder %s12, 3
    %p105 = scmp.ne.s32.totalorder %s100, %s102
    %p106 = scmp.eq.s32.totalorder %s12, 0
    %p107 = por %p105, %p106
    %p108 = scmp.ne.s32.totalorder %s100, %s102
    %p109 = scmp.eq.s32.totalorder %s17, 3
    %p110 = por %p108, %p109
    %p111 = scmp.ne.s32.totalorder %s102, %s103
    %p112 = scmp.eq.s32.totalorder %s17, 0
    %p113 = por %p111, %p112
    %p114 = scmp.ne.s32.totalorder %s102, %s103
    %p115 = scmp.eq.s32.totalorder %s18, 3
    %p116 = por %p114, %p115
    %p118 = scmp.ne.s32.totalorder %s103, %s117
    %p119 = scmp.eq.s32.totalorder %s18, 0
    %p120 = por %p118, %p119
    %s121 = ssub.s32 %s19, %s31
    %s122 = ssub.s32 %s20, %s27
    %s123 = sor.u32 %s121, %s122
    %p124 = scmp.eq.s32.totalorder %s123, 0
    %s126 = sadd.s32 %s125, 1
    %s127 = scalar_select %p124, %s125, %s126
    %p130 = pneg %p124
    %p131 = scmp.eq.s32.totalorder %s12, 3
    %p132 = por %p130, %p131
    %p133 = scmp.ne.s32.totalorder %s125, %s128
    %p134 = scmp.eq.s32.totalorder %s12, 0
    %p135 = por %p133, %p134
    %p136 = scmp.ne.s32.totalorder %s125, %s128
    %p137 = scmp.eq.s32.totalorder %s17, 3
    %p138 = por %p136, %p137
    %p139 = scmp.ne.s32.totalorder %s128, %s129
    %p140 = scmp.eq.s32.totalorder %s17, 0
    %p141 = por %p139, %p140
    %p142 = scmp.ne.s32.totalorder %s128, %s129
    %p143 = scmp.eq.s32.totalorder %s18, 3
    %p144 = por %p142, %p143
    %p146 = scmp.ne.s32.totalorder %s129, %s145
    %p147 = scmp.eq.s32.totalorder %s18, 0
    %p148 = por %p146, %p147
    %s149 = ssub.s32 %s19, %s31
    %s150 = ssub.s32 %s20, %s27
    %s151 = sor.u32 %s149, %s150
    %p152 = scmp.eq.s32.totalorder %s151, 0
    %s154 = sadd.s32 %s153, 1
    %s155 = scalar_select %p152, %s153, %s154
    %p158 = pneg %p152
    %p159 = scmp.eq.s32.totalorder %s12, 3
    %p160 = por %p158, %p159
    %p161 = scmp.ne.s32.totalorder %s153, %s156
    %p162 = scmp.eq.s32.totalorder %s12, 0
    %p163 = por %p161, %p162
    %p164 = scmp.ne.s32.totalorder %s153, %s156
    %p165 = scmp.eq.s32.totalorder %s17, 3
    %p166 = por %p164, %p165
    %p167 = scmp.ne.s32.totalorder %s156, %s157
    %p168 = scmp.eq.s32.totalorder %s17, 0
    %p169 = por %p167, %p168
    %p170 = scmp.ne.s32.totalorder %s156, %s157
    %p171 = scmp.eq.s32.totalorder %s18, 3
    %p172 = por %p170, %p171
    %p174 = scmp.ne.s32.totalorder %s157, %s173
    %p175 = scmp.eq.s32.totalorder %s18, 0
    %p176 = por %p174, %p175
    %p177 = scmp.le.s32.totalorder 1, %s12
    %p178 = scmp.lt.s32.totalorder %s12, 5
    %p179 = pnand %p177, %p178
    %p180 = pneg %p179
    // Predicated region
    $region9: #{up_forward.4} parent=5 // pred_check
      _
    $region10: #{up_forward.4} parent=5 // pred_check_branch
      %182 = sbr.rel (%p179) target = $region12
    $region11: #{up_forward.4} parent=5 // pred_region
      %s183 = ssub.s32 %s12, 1
      // Predicated region
      $region13: #{up_forward.4} parent=11 // pred_check
        %p184 = pneg %p71
      $region14: #{up_forward.4} parent=11 // pred_check_branch
        %186 = sbr.rel (%p184) target = $region16
      $region15: #{up_forward.4} parent=11 // pred_region
        _
      $region16: #{up_forward.4} parent=11 // pred_fallthru
        _
      // Predicated region
      $region17: #{up_forward.4} parent=11 // pred_check
        %p187 = pneg %p92
      $region18: #{up_forward.4} parent=11 // pred_check_branch
        %189 = sbr.rel (%p187) target = $region20
      $region19: #{up_forward.4} parent=11 // pred_region
        _
      $region20: #{up_forward.4} parent=11 // pred_fallthru
        _
      // Predicated region
      $region21: #{up_forward.4} parent=11 // pred_check
        %p190 = pneg %p113
      $region22: #{up_forward.4} parent=11 // pred_check_branch
        %192 = sbr.rel (%p190) target = $region24
      $region23: #{up_forward.4} parent=11 // pred_region
        _
      $region24: #{up_forward.4} parent=11 // pred_fallthru
        _
    $region12: #{up_forward.4} parent=5 // pred_fallthru
      _
    %p193 = scmp.lt.s32.totalorder %s12, 4
    // Predicated region
    $region25: #{up_forward.4} parent=5 // pred_check
      %p194 = pneg %p193
    $region26: #{up_forward.4} parent=5 // pred_check_branch
      %196 = sbr.rel (%p194) target = $region28
    $region27: #{up_forward.4} parent=5 // pred_region
      // Predicated region
      $region29: #{up_forward.4} parent=27 // pred_check
        %p197 = pneg %p44
      $region30: #{up_forward.4} parent=27 // pred_check_branch
        %199 = sbr.rel (%p197) target = $region32
      $region31: #{up_forward.4} parent=27 // pred_region
        %p200 = scmp.lt.s32.totalorder %s19, 1
        %s201 = scalar_select %p200, %s19, 1
        %s202 = smul.addr %s201, 32
        %s203 = smul.addr %s202, 8
        %s204 = scalar_lea.vmem %s0, %s203
      $region32: #{up_forward.4} parent=27 // pred_fallthru
        _
    $region28: #{up_forward.4} parent=5 // pred_fallthru
      _
    %p205 = scmp.le.s32.totalorder 1, %s12
    %p206 = scmp.lt.s32.totalorder %s12, 5
    %p207 = pnand %p205, %p206
    %p208 = pneg %p207
    // Predicated region
    $region33: #{up_forward.4} parent=5 // pred_check
      _
    $region34: #{up_forward.4} parent=5 // pred_check_branch
      %210 = sbr.rel (%p207) target = $region36
    $region35: #{up_forward.4} parent=5 // pred_region
      %s211 = ssub.s32 %s12, 1
      %p212 = scmp.lt.s32.totalorder %s21, 1
      %s213 = scalar_select %p212, %s21, 1
      %s214 = smul.addr %s213, 32
      %s215 = smul.addr %s214, 8
      %s216 = scalar_lea.vmem %s0, %s215
      %p217 = pneg %p50
      %p218 = pneg %p47
      %p219 = pneg %p71
      %p220 = pneg %p68
      %p221 = pneg %p92
      %p222 = pneg %p89
      %p223 = pneg %p113
      %p224 = pneg %p110
      %p225 = pneg %p141
      %p226 = pneg %p138
      %s227 = smul.u32 16, %s22
      %p228 = scmp.lt.s32.totalorder %s21, 1
      %s229 = scalar_select %p228, %s21, 1
      %p230 = scmp.lt.s32.totalorder %s227, 31
      %s231 = scalar_select %p230, %s227, 31
      %s232 = smul.addr %s229, 32
      %s233 = sadd.s32 %s231, %s232
      %s234 = smul.addr %s233, 8
      %s235 = scalar_lea.vmem %s4, %s234
      %p236 = pneg %p169
      %p237 = pneg %p166
      %p238 = scmp.lt.s32.totalorder %s21, 1
      %s239 = scalar_select %p238, %s21, 1
      %p240 = scmp.lt.s32.totalorder %s22, 1
      %s241 = scalar_select %p240, %s22, 1
      %s242 = smul.addr %s239, 2
      %s243 = sadd.s32 %s241, %s242
      %s244 = smul.addr %s243, 2
      %s245 = scalar_lea.vmem %s5, %s244
      %p246 = scmp.lt.s32.totalorder %s21, 1
      %s247 = scalar_select %p246, %s21, 1
      %s248 = smul.addr %s247, 32
      %s249 = smul.addr %s248, 8
      %s250 = scalar_lea.vmem %s0, %s249
      %s251 = smul.u32 16, %s22
      %p252 = scmp.lt.s32.totalorder %s21, 1
      %s253 = scalar_select %p252, %s21, 1
      %p254 = scmp.lt.s32.totalorder %s251, 31
      %s255 = scalar_select %p254, %s251, 31
      %s256 = smul.addr %s253, 32
      %s257 = sadd.s32 %s255, %s256
      %s258 = smul.addr %s257, 8
      %s259 = scalar_lea.vmem %s4, %s258
      %s260 = smul.u32 16, %s22
      %p261 = scmp.lt.s32.totalorder %s21, 1
      %s262 = scalar_select %p261, %s21, 1
      %p263 = scmp.lt.s32.totalorder %s22, 1
      %s264 = scalar_select %p263, %s22, 1
      %s265 = smul.addr %s262, 2
      %s266 = sadd.s32 %s264, %s265
      %s267 = smul.addr %s266, 2
      %s268 = scalar_lea.vmem %s5, %s267
      %s270 = smul.u32 %s22, 8
      %v271 = vld [vmem:[%s1] sm:$0x1]
      %v272 = vld [vmem:[%s2] sm:$0x1]
      %vm273 = vcmask 24576
      %vm274 = vsmask.f32 256
      %vm275 = vmand %vm273, %vm274
      %v276 = vld [vmem:[#allocation2] sm:$0x1]
      %v277 = vsel %vm275, 0, %v276
      %278 = vst [vmem:[#allocation2] sm:$0x1] %v277
      %v279 = vld [vmem:[#allocation2 + $0xc] sm:$0x1]
      %v280 = vsel %vm275, 0, %v279
      %281 = vst [vmem:[#allocation2 + $0xc] sm:$0x1] %v280
      %v282 = vld [vmem:[#allocation2 + $0x18] sm:$0x1]
      %v283 = vsel %vm275, 0, %v282
      %284 = vst [vmem:[#allocation2 + $0x18] sm:$0x1] %v283
      %v285 = vld [vmem:[#allocation2 + $0x24] sm:$0x1]
      %v286 = vsel %vm275, 0, %v285
      %287 = vst [vmem:[#allocation2 + $0x24] sm:$0x1] %v286
      %v288 = vld [vmem:[#allocation2 + $0x30] sm:$0x1]
      %v289 = vsel %vm275, 0, %v288
      %290 = vst [vmem:[#allocation2 + $0x30] sm:$0x1] %v289
      %v291 = vld [vmem:[#allocation2 + $0x3c] sm:$0x1]
      %v292 = vsel %vm275, 0, %v291
      %293 = vst [vmem:[#allocation2 + $0x3c] sm:$0x1] %v292
      %v294 = vld [vmem:[#allocation2 + $0x48] sm:$0x1]
      %v295 = vsel %vm275, 0, %v294
      %296 = vst [vmem:[#allocation2 + $0x48] sm:$0x1] %v295
      %v297 = vld [vmem:[#allocation2 + $0x54] sm:$0x1]
      %v298 = vsel %vm275, 0, %v297
      %299 = vst [vmem:[#allocation2 + $0x54] sm:$0x1] %v298
      %v300 = vld [vmem:[#allocation2 + $0x60] sm:$0x1]
      %v301 = vsel %vm275, 0, %v300
      %302 = vst [vmem:[#allocation2 + $0x60] sm:$0x1] %v301
      %v303 = vld [vmem:[#allocation2 + $0x6c] sm:$0x1]
      %v304 = vsel %vm275, 0, %v303
      %305 = vst [vmem:[#allocation2 + $0x6c] sm:$0x1] %v304
      %vm306 = vsmask.f32 7938
      %vm307 = vmand %vm273, %vm306
      %v308 = vld [vmem:[#allocation2 + $0x8] sm:$0x1]
      %v309 = vsel %vm307, 0, %v308
      %310 = vst [vmem:[#allocation2 + $0x8] sm:$0x1] %v309
      %v311 = vld [vmem:[#allocation2 + $0x14] sm:$0x1]
      %v312 = vsel %vm307, 0, %v311
      %313 = vst [vmem:[#allocation2 + $0x14] sm:$0x1] %v312
      %v314 = vld [vmem:[#allocation2 + $0x20] sm:$0x1]
      %v315 = vsel %vm307, 0, %v314
      %316 = vst [vmem:[#allocation2 + $0x20] sm:$0x1] %v315
      %v317 = vld [vmem:[#allocation2 + $0x2c] sm:$0x1]
      %v318 = vsel %vm307, 0, %v317
      %319 = vst [vmem:[#allocation2 + $0x2c] sm:$0x1] %v318
      %v320 = vld [vmem:[#allocation2 + $0x38] sm:$0x1]
      %v321 = vsel %vm307, 0, %v320
      %322 = vst [vmem:[#allocation2 + $0x38] sm:$0x1] %v321
      %v323 = vld [vmem:[#allocation2 + $0x44] sm:$0x1]
      %v324 = vsel %vm307, 0, %v323
      %325 = vst [vmem:[#allocation2 + $0x44] sm:$0x1] %v324
      %v326 = vld [vmem:[#allocation2 + $0x50] sm:$0x1]
      %v327 = vsel %vm307, 0, %v326
      %328 = vst [vmem:[#allocation2 + $0x50] sm:$0x1] %v327
      %v329 = vld [vmem:[#allocation2 + $0x5c] sm:$0x1]
      %v330 = vsel %vm307, 0, %v329
      %331 = vst [vmem:[#allocation2 + $0x5c] sm:$0x1] %v330
      %v332 = vld [vmem:[#allocation2 + $0x68] sm:$0x1]
      %v333 = vsel %vm307, 0, %v332
      %334 = vst [vmem:[#allocation2 + $0x68] sm:$0x1] %v333
      %v335 = vld [vmem:[#allocation2 + $0x74] sm:$0x1]
      %v336 = vsel %vm307, 0, %v335
      %337 = vst [vmem:[#allocation2 + $0x74] sm:$0x1] %v336
      %s338 = smul.u32 %s270, 16
      %s339 = scalar_lea.vmem %s250, %s338
      %v340 = vld [vmem:[%s339] sm:$0xff]
      %v341 = vld [vmem:[%s339 + $0x8] sm:$0xff]
      %v342 = vld [vmem:[%s339 + $0x10] sm:$0xff]
      %v343 = vld [vmem:[%s339 + $0x18] sm:$0xff]
      %v344 = vld [vmem:[%s339 + $0x20] sm:$0xff]
      %v345 = vld [vmem:[%s339 + $0x28] sm:$0xff]
      %v346 = vld [vmem:[%s339 + $0x30] sm:$0xff]
      %v347 = vld [vmem:[%s339 + $0x38] sm:$0xff]
      %v348 = vld [vmem:[%s339 + $0x40] sm:$0xff]
      %v349 = vld [vmem:[%s339 + $0x48] sm:$0xff]
      %v350 = vld [vmem:[%s339 + $0x50] sm:$0xff]
      %v351 = vld [vmem:[%s339 + $0x58] sm:$0xff]
      %v352 = vld [vmem:[%s339 + $0x60] sm:$0xff]
      %v353 = vld [vmem:[%s339 + $0x68] sm:$0xff]
      %v354 = vld [vmem:[%s339 + $0x70] sm:$0xff]
      %v355 = vld [vmem:[%s339 + $0x78] sm:$0xff]
      %v357 = vlaneseq
      %v358 = vshrl.u32 %v357, 7
      %v359 = vsub.s32 0, %v358
      %v360 = vrot.slane %v271, %v359
      %v362 = vmul.f32 %v340, %v360
      %v363 = vmul.f32 %v341, %v360
      %v364 = vmul.f32 %v342, %v360
      %v365 = vmul.f32 %v343, %v360
      %v366 = vmul.f32 %v344, %v360
      %v367 = vmul.f32 %v345, %v360
      %v368 = vmul.f32 %v346, %v360
      %v369 = vmul.f32 %v347, %v360
      %v370 = vmul.f32 %v348, %v360
      %v371 = vmul.f32 %v349, %v360
      %v372 = vmul.f32 %v350, %v360
      %v373 = vmul.f32 %v351, %v360
      %v374 = vmul.f32 %v352, %v360
      %v375 = vmul.f32 %v353, %v360
      %v376 = vmul.f32 %v354, %v360
      %v377 = vmul.f32 %v355, %v360
      %v379 = vlaneseq
      %v380 = vshrl.u32 %v379, 7
      %v381 = vsub.s32 0, %v380
      %v382 = vrot.slane %v272, %v381
      %v384 = vadd.f32 %v362, %v382
      %v385 = vadd.f32 %v363, %v382
      %v386 = vadd.f32 %v364, %v382
      %v387 = vadd.f32 %v365, %v382
      %v388 = vadd.f32 %v366, %v382
      %v389 = vadd.f32 %v367, %v382
      %v390 = vadd.f32 %v368, %v382
      %v391 = vadd.f32 %v369, %v382
      %v392 = vadd.f32 %v370, %v382
      %v393 = vadd.f32 %v371, %v382
      %v394 = vadd.f32 %v372, %v382
      %v395 = vadd.f32 %v373, %v382
      %v396 = vadd.f32 %v374, %v382
      %v397 = vadd.f32 %v375, %v382
      %v398 = vadd.f32 %v376, %v382
      %v399 = vadd.f32 %v377, %v382
      %v400 = vmax.f32 %v384, 0.0
      %v401 = vmax.f32 %v385, 0.0
      %v402 = vmax.f32 %v386, 0.0
      %v403 = vmax.f32 %v387, 0.0
      %v404 = vmax.f32 %v388, 0.0
      %v405 = vmax.f32 %v389, 0.0
      %v406 = vmax.f32 %v390, 0.0
      %v407 = vmax.f32 %v391, 0.0
      %v408 = vmax.f32 %v392, 0.0
      %v409 = vmax.f32 %v393, 0.0
      %v410 = vmax.f32 %v394, 0.0
      %v411 = vmax.f32 %v395, 0.0
      %v412 = vmax.f32 %v396, 0.0
      %v413 = vmax.f32 %v397, 0.0
      %v414 = vmax.f32 %v398, 0.0
      %v415 = vmax.f32 %v399, 0.0
      %v416 = vpack.c.bf16 %v401, %v400
      %v417 = vpack.c.bf16 %v403, %v402
      %v418 = vpack.c.bf16 %v405, %v404
      %v419 = vpack.c.bf16 %v407, %v406
      %v420 = vpack.c.bf16 %v409, %v408
      %v421 = vpack.c.bf16 %v411, %v410
      %v422 = vpack.c.bf16 %v413, %v412
      %v423 = vpack.c.bf16 %v415, %v414
      %v432 = vunpack.c.l.b16 %v416
      %v433 = vunpack.c.h.b16 %v416
      %v434 = vunpack.c.l.b16 %v417
      %v435 = vunpack.c.h.b16 %v417
      %v436 = vunpack.c.l.b16 %v418
      %v437 = vunpack.c.h.b16 %v418
      %v438 = vunpack.c.l.b16 %v419
      %v439 = vunpack.c.h.b16 %v419
      %v440 = vunpack.c.l.b16 %v420
      %v441 = vunpack.c.h.b16 %v420
      %v442 = vunpack.c.l.b16 %v421
      %v443 = vunpack.c.h.b16 %v421
      %v444 = vunpack.c.l.b16 %v422
      %v445 = vunpack.c.h.b16 %v422
      %v446 = vunpack.c.l.b16 %v423
      %v447 = vunpack.c.h.b16 %v423
      %v448 = vpack.c.b16 %v432, %v432
      %v449 = vpack.c.b16 %v433, %v433
      %v450 = vpack.c.b16 %v434, %v434
      %v451 = vpack.c.b16 %v435, %v435
      %v452 = vpack.c.b16 %v436, %v436
      %v453 = vpack.c.b16 %v437, %v437
      %v454 = vpack.c.b16 %v438, %v438
      %v455 = vpack.c.b16 %v439, %v439
      %v456 = vpack.c.b16 %v440, %v440
      %v457 = vpack.c.b16 %v441, %v441
      %v458 = vpack.c.b16 %v442, %v442
      %v459 = vpack.c.b16 %v443, %v443
      %v460 = vpack.c.b16 %v444, %v444
      %v461 = vpack.c.b16 %v445, %v445
      %v462 = vpack.c.b16 %v446, %v446
      %v463 = vpack.c.b16 %v447, %v447
      %vm464 = vsmask.f32 4368
      %vm465 = vmor %vm274, %vm464
      %v467 = vshrl.u32 %v448, 16
      %v469 = vrot.slane %v467, 7
      %v470 = vshll.u32 %v448, 16
      %v472 = vor.u32 %v469, %v470
      %v473 = vrot.slane %v469, 4
      %v475 = vshrl.u32 %v449, 16
      %v477 = vrot.slane %v475, 7
      %v478 = vshll.u32 %v449, 16
      %v480 = vor.u32 %v477, %v478
      %v481 = vsel %vm465, %v473, %v480
      %v482 = vrot.slane %v477, 4
      %v484 = vshrl.u32 %v450, 16
      %v486 = vrot.slane %v484, 7
      %v487 = vshll.u32 %v450, 16
      %v489 = vor.u32 %v486, %v487
      %v490 = vrot.slane %v486, 4
      %v492 = vshrl.u32 %v451, 16
      %v494 = vrot.slane %v492, 7
      %v495 = vshll.u32 %v451, 16
      %v497 = vor.u32 %v494, %v495
      %v498 = vsel %vm465, %v490, %v497
      %v499 = vrot.slane %v494, 4
      %v501 = vshrl.u32 %v452, 16
      %v503 = vrot.slane %v501, 7
      %v504 = vshll.u32 %v452, 16
      %v506 = vor.u32 %v503, %v504
      %v507 = vrot.slane %v503, 4
      %v509 = vshrl.u32 %v453, 16
      %v511 = vrot.slane %v509, 7
      %v512 = vshll.u32 %v453, 16
      %v514 = vor.u32 %v511, %v512
      %v515 = vsel %vm465, %v507, %v514
      %v516 = vrot.slane %v511, 4
      %v518 = vshrl.u32 %v454, 16
      %v520 = vrot.slane %v518, 7
      %v521 = vshll.u32 %v454, 16
      %v523 = vor.u32 %v520, %v521
      %v524 = vrot.slane %v520, 4
      %v526 = vshrl.u32 %v455, 16
      %v528 = vrot.slane %v526, 7
      %v529 = vshll.u32 %v455, 16
      %v531 = vor.u32 %v528, %v529
      %v532 = vsel %vm465, %v524, %v531
      %v533 = vrot.slane %v528, 4
      %v535 = vshrl.u32 %v456, 16
      %v537 = vrot.slane %v535, 7
      %v538 = vshll.u32 %v456, 16
      %v540 = vor.u32 %v537, %v538
      %v541 = vrot.slane %v537, 4
      %v543 = vshrl.u32 %v457, 16
      %v545 = vrot.slane %v543, 7
      %v546 = vshll.u32 %v457, 16
      %v548 = vor.u32 %v545, %v546
      %v549 = vsel %vm465, %v541, %v548
      %v550 = vrot.slane %v545, 4
      %v552 = vshrl.u32 %v458, 16
      %v554 = vrot.slane %v552, 7
      %v555 = vshll.u32 %v458, 16
      %v557 = vor.u32 %v554, %v555
      %v558 = vrot.slane %v554, 4
      %v560 = vshrl.u32 %v459, 16
      %v562 = vrot.slane %v560, 7
      %v563 = vshll.u32 %v459, 16
      %v565 = vor.u32 %v562, %v563
      %v566 = vsel %vm465, %v558, %v565
      %v567 = vrot.slane %v562, 4
      %v569 = vshrl.u32 %v460, 16
      %v571 = vrot.slane %v569, 7
      %v572 = vshll.u32 %v460, 16
      %v574 = vor.u32 %v571, %v572
      %v575 = vrot.slane %v571, 4
      %v577 = vshrl.u32 %v461, 16
      %v579 = vrot.slane %v577, 7
      %v580 = vshll.u32 %v461, 16
      %v582 = vor.u32 %v579, %v580
      %v583 = vsel %vm465, %v575, %v582
      %v584 = vrot.slane %v579, 4
      %v586 = vshrl.u32 %v462, 16
      %v588 = vrot.slane %v586, 7
      %v589 = vshll.u32 %v462, 16
      %v591 = vor.u32 %v588, %v589
      %v592 = vrot.slane %v588, 4
      %v594 = vshrl.u32 %v463, 16
      %v596 = vrot.slane %v594, 7
      %v597 = vshll.u32 %v463, 16
      %v599 = vor.u32 %v596, %v597
      %v600 = vsel %vm465, %v592, %v599
      %v601 = vrot.slane %v596, 4
      %s626 = scalar_lea.vmem [#allocation2], 12
      %vm627 = vcmask 27648
      %vm628 = vmand %vm627, %vm306
      %v629 = vld [vmem:[%s626] sm:$0xf]
      %v630 = vsel %vm628, %v472, %v629
      %631 = vst [vmem:[%s626] sm:$0xf] %v630
      %vm632 = vcmask 27648
      %633 = vst.msk [vmem:[%s626 + $0x4] sm:$0xf] %vm632, %v481
      %v634 = vld [vmem:[%s626 + $0x8] sm:$0x1]
      %v635 = vsel %vm275, %v482, %v634
      %636 = vst [vmem:[%s626 + $0x8] sm:$0x1] %v635
      %v637 = vld [vmem:[%s626 + $0xc] sm:$0xf]
      %v638 = vsel %vm628, %v489, %v637
      %639 = vst [vmem:[%s626 + $0xc] sm:$0xf] %v638
      %640 = vst.msk [vmem:[%s626 + $0x10] sm:$0xf] %vm632, %v498
      %v641 = vld [vmem:[%s626 + $0x14] sm:$0x1]
      %v642 = vsel %vm275, %v499, %v641
      %643 = vst [vmem:[%s626 + $0x14] sm:$0x1] %v642
      %v644 = vld [vmem:[%s626 + $0x18] sm:$0xf]
      %v645 = vsel %vm628, %v506, %v644
      %646 = vst [vmem:[%s626 + $0x18] sm:$0xf] %v645
      %647 = vst.msk [vmem:[%s626 + $0x1c] sm:$0xf] %vm632, %v515
      %v648 = vld [vmem:[%s626 + $0x20] sm:$0x1]
      %v649 = vsel %vm275, %v516, %v648
      %650 = vst [vmem:[%s626 + $0x20] sm:$0x1] %v649
      %v651 = vld [vmem:[%s626 + $0x24] sm:$0xf]
      %v652 = vsel %vm628, %v523, %v651
      %653 = vst [vmem:[%s626 + $0x24] sm:$0xf] %v652
      %654 = vst.msk [vmem:[%s626 + $0x28] sm:$0xf] %vm632, %v532
      %v655 = vld [vmem:[%s626 + $0x2c] sm:$0x1]
      %v656 = vsel %vm275, %v533, %v655
      %657 = vst [vmem:[%s626 + $0x2c] sm:$0x1] %v656
      %v658 = vld [vmem:[%s626 + $0x30] sm:$0xf]
      %v659 = vsel %vm628, %v540, %v658
      %660 = vst [vmem:[%s626 + $0x30] sm:$0xf] %v659
      %661 = vst.msk [vmem:[%s626 + $0x34] sm:$0xf] %vm632, %v549
      %v662 = vld [vmem:[%s626 + $0x38] sm:$0x1]
      %v663 = vsel %vm275, %v550, %v662
      %664 = vst [vmem:[%s626 + $0x38] sm:$0x1] %v663
      %v665 = vld [vmem:[%s626 + $0x3c] sm:$0xf]
      %v666 = vsel %vm628, %v557, %v665
      %667 = vst [vmem:[%s626 + $0x3c] sm:$0xf] %v666
      %668 = vst.msk [vmem:[%s626 + $0x40] sm:$0xf] %vm632, %v566
      %v669 = vld [vmem:[%s626 + $0x44] sm:$0x1]
      %v670 = vsel %vm275, %v567, %v669
      %671 = vst [vmem:[%s626 + $0x44] sm:$0x1] %v670
      %v672 = vld [vmem:[%s626 + $0x48] sm:$0xf]
      %v673 = vsel %vm628, %v574, %v672
      %674 = vst [vmem:[%s626 + $0x48] sm:$0xf] %v673
      %675 = vst.msk [vmem:[%s626 + $0x4c] sm:$0xf] %vm632, %v583
      %v676 = vld [vmem:[%s626 + $0x50] sm:$0x1]
      %v677 = vsel %vm275, %v584, %v676
      %678 = vst [vmem:[%s626 + $0x50] sm:$0x1] %v677
      %v679 = vld [vmem:[%s626 + $0x54] sm:$0xf]
      %v680 = vsel %vm628, %v591, %v679
      %681 = vst [vmem:[%s626 + $0x54] sm:$0xf] %v680
      %682 = vst.msk [vmem:[%s626 + $0x58] sm:$0xf] %vm632, %v600
      %v683 = vld [vmem:[%s626 + $0x5c] sm:$0x1]
      %v684 = vsel %vm275, %v601, %v683
      %685 = vst [vmem:[%s626 + $0x5c] sm:$0x1] %v684
      %s686 = ssub.s32 %s270, 1
      %p687 = scmp.gt.s32.totalorder %s686, 0
      %s688 = scalar_select %p687, %s686, 0
      %s689 = smul.u32 %s688, 16
      %s690 = scalar_lea.vmem %s250, %s689
      %v691 = vld [vmem:[%s690] sm:$0xff]
      %v692 = vld [vmem:[%s690 + $0x8] sm:$0xff]
      %v693 = vmul.f32 %v691, %v360
      %v694 = vmul.f32 %v692, %v360
      %v695 = vadd.f32 %v693, %v382
      %v696 = vadd.f32 %v694, %v382
      %v697 = vmax.f32 %v695, 0.0
      %v698 = vmax.f32 %v696, 0.0
      %v699 = vpack.c.bf16 %v698, %v697
      %p700 = scmp.gt.s32.totalorder %s22, 0
      %s701 = scalar_select %p700, 1, 0
      %v702 = vstv %s701
      %vm703 = vcmp.eq.s32.totalorder %v702, 1
      %v704 = vsel %vm703, %v699, 0
      %v706 = vunpack.c.l.b16 %v704
      %v707 = vunpack.c.h.b16 %v704
      %v708 = vpack.c.b16 %v706, %v706
      %v709 = vpack.c.b16 %v707, %v707
      %v711 = vshrl.u32 %v708, 16
      %v713 = vrot.slane %v711, 7
      %v714 = vshll.u32 %v708, 16
      %v716 = vor.u32 %v713, %v714
      %v717 = vrot.slane %v713, 4
      %v719 = vshrl.u32 %v709, 16
      %v721 = vrot.slane %v719, 7
      %v722 = vshll.u32 %v709, 16
      %v724 = vor.u32 %v721, %v722
      %v725 = vsel %vm465, %v717, %v724
      %v726 = vrot.slane %v721, 4
      %v730 = vld [vmem:[#allocation2] sm:$0xf]
      %v731 = vsel %vm628, %v716, %v730
      %732 = vst [vmem:[#allocation2] sm:$0xf] %v731
      %733 = vst.msk [vmem:[#allocation2 + $0x4] sm:$0xf] %vm632, %v725
      %v734 = vld [vmem:[#allocation2 + $0x8] sm:$0x1]
      %v735 = vsel %vm275, %v726, %v734
      %736 = vst [vmem:[#allocation2 + $0x8] sm:$0x1] %v735
      %s737 = sadd.s32 %s270, 8
      %p738 = scmp.lt.s32.totalorder %s737, 15
      %s739 = scalar_select %p738, %s737, 15
      %s740 = smul.u32 %s739, 16
      %s741 = scalar_lea.vmem %s250, %s740
      %v742 = vld [vmem:[%s741] sm:$0xff]
      %v743 = vld [vmem:[%s741 + $0x8] sm:$0xff]
      %v744 = vmul.f32 %v742, %v360
      %v745 = vmul.f32 %v743, %v360
      %v746 = vadd.f32 %v744, %v382
      %v747 = vadd.f32 %v745, %v382
      %v748 = vmax.f32 %v746, 0.0
      %v749 = vmax.f32 %v747, 0.0
      %v750 = vpack.c.bf16 %v749, %v748
      %p751 = scmp.lt.s32.totalorder %s22, 1
      %s752 = scalar_select %p751, 1, 0
      %v753 = vstv %s752
      %vm754 = vcmp.eq.s32.totalorder %v753, 1
      %v755 = vsel %vm754, %v750, 0
      %v757 = vunpack.c.l.b16 %v755
      %v758 = vunpack.c.h.b16 %v755
      %v759 = vpack.c.b16 %v757, %v757
      %v760 = vpack.c.b16 %v758, %v758
      %v762 = vshrl.u32 %v759, 16
      %v764 = vrot.slane %v762, 7
      %v765 = vshll.u32 %v759, 16
      %v767 = vor.u32 %v764, %v765
      %v768 = vrot.slane %v764, 4
      %v770 = vshrl.u32 %v760, 16
      %v772 = vrot.slane %v770, 7
      %v773 = vshll.u32 %v760, 16
      %v775 = vor.u32 %v772, %v773
      %v776 = vsel %vm465, %v768, %v775
      %v777 = vrot.slane %v772, 4
      %s781 = scalar_lea.vmem [#allocation2], 108
      %v782 = vld [vmem:[%s781] sm:$0xf]
      %v783 = vsel %vm628, %v767, %v782
      %784 = vst [vmem:[%s781] sm:$0xf] %v783
      %785 = vst.msk [vmem:[%s781 + $0x4] sm:$0xf] %vm632, %v776
      %v786 = vld [vmem:[%s781 + $0x8] sm:$0x1]
      %v787 = vsel %vm275, %v777, %v786
      %788 = vst [vmem:[%s781 + $0x8] sm:$0x1] %v787
      %v789 = vld [vmem:[#allocation2] sm:$0xf]
      %v790 = vld [vmem:[#allocation2 + $0x4] sm:$0xf]
      %v791 = vld [vmem:[#allocation2 + $0xc] sm:$0xf]
      %v792 = vld [vmem:[#allocation2 + $0x10] sm:$0xf]
      %v793 = vld [vmem:[#allocation2 + $0x18] sm:$0xf]
      %v794 = vld [vmem:[#allocation2 + $0x1c] sm:$0xf]
      %v795 = vld [vmem:[#allocation2 + $0x24] sm:$0xf]
      %v796 = vld [vmem:[#allocation2 + $0x28] sm:$0xf]
      %v797 = vld [vmem:[#allocation2 + $0x30] sm:$0xf]
      %v798 = vld [vmem:[#allocation2 + $0x34] sm:$0xf]
      %v799 = vld [vmem:[#allocation2 + $0x3c] sm:$0xf]
      %v800 = vld [vmem:[#allocation2 + $0x40] sm:$0xf]
      %v801 = vld [vmem:[#allocation2 + $0x48] sm:$0xf]
      %v802 = vld [vmem:[#allocation2 + $0x4c] sm:$0xf]
      %v803 = vld [vmem:[#allocation2 + $0x54] sm:$0xf]
      %v804 = vld [vmem:[#allocation2 + $0x58] sm:$0xf]
      %v805 = vld [vmem:[%s3] sm:$0x3]
      %v806 = vld [vmem:[#allocation2 + $0x8] sm:$0x1]
      %v807 = vld [vmem:[#allocation2 + $0x14] sm:$0x1]
      %v808 = vld [vmem:[#allocation2 + $0x20] sm:$0x1]
      %v809 = vld [vmem:[#allocation2 + $0x2c] sm:$0x1]
      %v810 = vld [vmem:[#allocation2 + $0x38] sm:$0x1]
      %v811 = vld [vmem:[#allocation2 + $0x44] sm:$0x1]
      %v812 = vld [vmem:[#allocation2 + $0x50] sm:$0x1]
      %v813 = vld [vmem:[#allocation2 + $0x5c] sm:$0x1]
      %vm814 = vsmask.f32 3328
      %vm815 = vsmask.f32 7440
      %vm816 = vmor %vm814, %vm815
      %v818 = vshrl.u32 %v789, 16
      %v820 = vrot.slane %v818, 4
      %v821 = vshll.u32 %v789, 16
      %v823 = vrot.slane %v821, 5
      %v824 = vor.u32 %v820, %v823
      %v825 = vrot.slane %v824, 4
      %v827 = vshll.u32 %v790, 16
      %v829 = vrot.slane %v827, 5
      %v830 = vsel %vm816, %v825, %v829
      %v831 = vshrl.u32 %v790, 16
      %v833 = vrot.slane %v831, 4
      %v834 = vor.u32 %v833, %v829
      %v835 = vrot.slane %v834, 4
      %v837 = vshll.u32 %v806, 16
      %v839 = vrot.slane %v837, 5
      %v840 = vsel %vm816, %v835, %v839
      %v842 = vshrl.u32 %v791, 16
      %v844 = vrot.slane %v842, 4
      %v845 = vshll.u32 %v791, 16
      %v847 = vrot.slane %v845, 5
      %v848 = vor.u32 %v844, %v847
      %v849 = vrot.slane %v848, 4
      %v851 = vshll.u32 %v792, 16
      %v853 = vrot.slane %v851, 5
      %v854 = vsel %vm816, %v849, %v853
      %v855 = vshrl.u32 %v792, 16
      %v857 = vrot.slane %v855, 4
      %v858 = vor.u32 %v857, %v853
      %v859 = vrot.slane %v858, 4
      %v861 = vshll.u32 %v807, 16
      %v863 = vrot.slane %v861, 5
      %v864 = vsel %vm816, %v859, %v863
      %v866 = vshrl.u32 %v793, 16
      %v868 = vrot.slane %v866, 4
      %v869 = vshll.u32 %v793, 16
      %v871 = vrot.slane %v869, 5
      %v872 = vor.u32 %v868, %v871
      %v873 = vrot.slane %v872, 4
      %v875 = vshll.u32 %v794, 16
      %v877 = vrot.slane %v875, 5
      %v878 = vsel %vm816, %v873, %v877
      %v879 = vshrl.u32 %v794, 16
      %v881 = vrot.slane %v879, 4
      %v882 = vor.u32 %v881, %v877
      %v883 = vrot.slane %v882, 4
      %v885 = vshll.u32 %v808, 16
      %v887 = vrot.slane %v885, 5
      %v888 = vsel %vm816, %v883, %v887
      %v890 = vshrl.u32 %v795, 16
      %v892 = vrot.slane %v890, 4
      %v893 = vshll.u32 %v795, 16
      %v895 = vrot.slane %v893, 5
      %v896 = vor.u32 %v892, %v895
      %v897 = vrot.slane %v896, 4
      %v899 = vshll.u32 %v796, 16
      %v901 = vrot.slane %v899, 5
      %v902 = vsel %vm816, %v897, %v901
      %v903 = vshrl.u32 %v796, 16
      %v905 = vrot.slane %v903, 4
      %v906 = vor.u32 %v905, %v901
      %v907 = vrot.slane %v906, 4
      %v909 = vshll.u32 %v809, 16
      %v911 = vrot.slane %v909, 5
      %v912 = vsel %vm816, %v907, %v911
      %v914 = vshrl.u32 %v797, 16
      %v916 = vrot.slane %v914, 4
      %v917 = vshll.u32 %v797, 16
      %v919 = vrot.slane %v917, 5
      %v920 = vor.u32 %v916, %v919
      %v921 = vrot.slane %v920, 4
      %v923 = vshll.u32 %v798, 16
      %v925 = vrot.slane %v923, 5
      %v926 = vsel %vm816, %v921, %v925
      %v927 = vshrl.u32 %v798, 16
      %v929 = vrot.slane %v927, 4
      %v930 = vor.u32 %v929, %v925
      %v931 = vrot.slane %v930, 4
      %v933 = vshll.u32 %v810, 16
      %v935 = vrot.slane %v933, 5
      %v936 = vsel %vm816, %v931, %v935
      %v938 = vshrl.u32 %v799, 16
      %v940 = vrot.slane %v938, 4
      %v941 = vshll.u32 %v799, 16
      %v943 = vrot.slane %v941, 5
      %v944 = vor.u32 %v940, %v943
      %v945 = vrot.slane %v944, 4
      %v947 = vshll.u32 %v800, 16
      %v949 = vrot.slane %v947, 5
      %v950 = vsel %vm816, %v945, %v949
      %v951 = vshrl.u32 %v800, 16
      %v953 = vrot.slane %v951, 4
      %v954 = vor.u32 %v953, %v949
      %v955 = vrot.slane %v954, 4
      %v957 = vshll.u32 %v811, 16
      %v959 = vrot.slane %v957, 5
      %v960 = vsel %vm816, %v955, %v959
      %v962 = vshrl.u32 %v801, 16
      %v964 = vrot.slane %v962, 4
      %v965 = vshll.u32 %v801, 16
      %v967 = vrot.slane %v965, 5
      %v968 = vor.u32 %v964, %v967
      %v969 = vrot.slane %v968, 4
      %v971 = vshll.u32 %v802, 16
      %v973 = vrot.slane %v971, 5
      %v974 = vsel %vm816, %v969, %v973
      %v975 = vshrl.u32 %v802, 16
      %v977 = vrot.slane %v975, 4
      %v978 = vor.u32 %v977, %v973
      %v979 = vrot.slane %v978, 4
      %v981 = vshll.u32 %v812, 16
      %v983 = vrot.slane %v981, 5
      %v984 = vsel %vm816, %v979, %v983
      %v986 = vshrl.u32 %v803, 16
      %v988 = vrot.slane %v986, 4
      %v989 = vshll.u32 %v803, 16
      %v991 = vrot.slane %v989, 5
      %v992 = vor.u32 %v988, %v991
      %v993 = vrot.slane %v992, 4
      %v995 = vshll.u32 %v804, 16
      %v997 = vrot.slane %v995, 5
      %v998 = vsel %vm816, %v993, %v997
      %v999 = vshrl.u32 %v804, 16
      %v1001 = vrot.slane %v999, 4
      %v1002 = vor.u32 %v1001, %v997
      %v1003 = vrot.slane %v1002, 4
      %v1005 = vshll.u32 %v813, 16
      %v1007 = vrot.slane %v1005, 5
      %v1008 = vsel %vm816, %v1003, %v1007
      %s1009 = scalar_lea.vmem %s3, 2
      %v1010 = vld [vmem:[%s1009] sm:$0x3]
      %v1011 = vunpack.c.l.b16 %v830
      %v1012 = vunpack.c.l.b16 %v840
      %v1013 = vunpack.c.l.b16 %v854
      %v1014 = vunpack.c.l.b16 %v864
      %v1015 = vunpack.c.l.b16 %v878
      %v1016 = vunpack.c.l.b16 %v888
      %v1017 = vunpack.c.l.b16 %v902
      %v1018 = vunpack.c.l.b16 %v912
      %v1019 = vunpack.c.l.b16 %v926
      %v1020 = vunpack.c.l.b16 %v936
      %v1021 = vunpack.c.l.b16 %v950
      %v1022 = vunpack.c.l.b16 %v960
      %v1023 = vunpack.c.l.b16 %v974
      %v1024 = vunpack.c.l.b16 %v984
      %v1025 = vunpack.c.l.b16 %v998
      %v1026 = vunpack.c.l.b16 %v1008
      %v1027 = vpack.c.b16 %v1012, %v1011
      %v1028 = vpack.c.b16 %v1014, %v1013
      %v1029 = vpack.c.b16 %v1016, %v1015
      %v1030 = vpack.c.b16 %v1018, %v1017
      %v1031 = vpack.c.b16 %v1020, %v1019
      %v1032 = vpack.c.b16 %v1022, %v1021
      %v1033 = vpack.c.b16 %v1024, %v1023
      %v1034 = vpack.c.b16 %v1026, %v1025
      %vm1035 = vcmask 31744
      %v1037 = vsel %vm1035, %v1027, 0
      %v1040 = vsel %vm1035, %v1028, 0
      %v1043 = vsel %vm1035, %v1029, 0
      %v1046 = vsel %vm1035, %v1030, 0
      %v1049 = vsel %vm1035, %v1031, 0
      %v1052 = vsel %vm1035, %v1032, 0
      %v1055 = vsel %vm1035, %v1033, 0
      %v1058 = vsel %vm1035, %v1034, 0
      %vm1060 = vcmask 1041408
      %v1062 = vsel %vm1060, %v1010, 0
      %1064 = vmatprep.subr.bf16.mxu0 0
      %1065 = vmatpush1.bf16.msra.mxu0 %v1062
      %1066 = vmatprep.subr.bf16.mxu0 0
      %1067 = vmatpush1.bf16.msra.mxu0 0
      %1068 = vmatprep.subr.bf16.mxu0 0
      %1069 = vmatpush1.bf16.msra.mxu0 0
      %1070 = vmatprep.subr.bf16.mxu0 0
      %1071 = vmatpush1.bf16.msra.mxu0 0
      %1072 = vmatprep.subr.bf16.mxu0 0
      %1073 = vmatpush1.bf16.msra.mxu0 0
      %1074 = vmatprep.subr.bf16.mxu0 0
      %1075 = vmatpush1.bf16.msra.mxu0 0
      %1076 = vmatprep.subr.bf16.mxu0 0
      %1077 = vmatpush1.bf16.msra.mxu0 0
      %1078 = vmatprep.subr.bf16.mxu0 0
      %1079 = vmatpush1.bf16.msra.mxu0 0
      %1080 = vmatprep.subr.bf16.mxu0 0
      %1081 = vmatpush1.bf16.msra.mxu0 0
      %1082 = vmatprep.subr.bf16.mxu0 0
      %1083 = vmatpush1.bf16.msra.mxu0 0
      %1084 = vmatprep.subr.bf16.mxu0 0
      %1085 = vmatpush1.bf16.msra.mxu0 0
      %1086 = vmatprep.subr.bf16.mxu0 0
      %1087 = vmatpush1.bf16.msra.mxu0 0
      %1088 = vmatprep.subr.bf16.mxu0 0
      %1089 = vmatpush1.bf16.msra.mxu0 0
      %1090 = vmatprep.subr.bf16.mxu0 0
      %1091 = vmatpush1.bf16.msra.mxu0 0
      %1092 = vmatprep.subr.bf16.mxu0 0
      %1093 = vmatpush1.bf16.msra.mxu0 0
      %1094 = vmatprep.subr.bf16.mxu0 0
      %1095 = vmatpush1.bf16.msra.mxu0 0
      %1096 = vmatprep.mubr.bf16.mxu0 0
      %1097 = vmatmul.mubr.bf16.gmra.mrb[0].mxu0 %v1037
      %v1098 = vpop.f32.mrb[0].mxu0
      %v1099 = vadd.f32 0.0, %v1098
      %v1100 = vpop.f32.mrb[0].mxu0
      %v1101 = vpop.f32.mrb[0].mxu0
      %v1102 = vadd.f32 0.0, %v1101
      %v1103 = vpop.f32.mrb[0].mxu0
      %1104 = vmatprep.mubr.bf16.mxu0 0
      %1105 = vmatmul.mubr.bf16.gmra.mrb[0].mxu0 %v1040
      %v1106 = vpop.f32.mrb[0].mxu0
      %v1107 = vadd.f32 0.0, %v1106
      %v1108 = vpop.f32.mrb[0].mxu0
      %v1109 = vpop.f32.mrb[0].mxu0
      %v1110 = vadd.f32 0.0, %v1109
      %v1111 = vpop.f32.mrb[0].mxu0
      %1112 = vmatprep.mubr.bf16.mxu0 0
      %1113 = vmatmul.mubr.bf16.gmra.mrb[0].mxu0 %v1043
      %v1114 = vpop.f32.mrb[0].mxu0
      %v1115 = vadd.f32 0.0, %v1114
      %v1116 = vpop.f32.mrb[0].mxu0
      %v1117 = vpop.f32.mrb[0].mxu0
      %v1118 = vadd.f32 0.0, %v1117
      %v1119 = vpop.f32.mrb[0].mxu0
      %1120 = vmatprep.mubr.bf16.mxu0 0
      %1121 = vmatmul.mubr.bf16.gmra.mrb[0].mxu0 %v1046
      %v1122 = vpop.f32.mrb[0].mxu0
      %v1123 = vadd.f32 0.0, %v1122
      %v1124 = vpop.f32.mrb[0].mxu0
      %v1125 = vpop.f32.mrb[0].mxu0
      %v1126 = vadd.f32 0.0, %v1125
      %v1127 = vpop.f32.mrb[0].mxu0
      %1128 = vmatprep.mubr.bf16.mxu0 0
      %1129 = vmatmul.mubr.bf16.gmra.mrb[0].mxu0 %v1049
      %v1130 = vpop.f32.mrb[0].mxu0
      %v1131 = vadd.f32 0.0, %v1130
      %v1132 = vpop.f32.mrb[0].mxu0
      %v1133 = vpop.f32.mrb[0].mxu0
      %v1134 = vadd.f32 0.0, %v1133
      %v1135 = vpop.f32.mrb[0].mxu0
      %1136 = vmatprep.mubr.bf16.mxu0 0
      %1137 = vmatmul.mubr.bf16.gmra.mrb[0].mxu0 %v1052
      %v1138 = vpop.f32.mrb[0].mxu0
      %v1139 = vadd.f32 0.0, %v1138
      %v1140 = vpop.f32.mrb[0].mxu0
      %v1141 = vpop.f32.mrb[0].mxu0
      %v1142 = vadd.f32 0.0, %v1141
      %v1143 = vpop.f32.mrb[0].mxu0
      %1144 = vmatprep.mubr.bf16.mxu0 0
      %1145 = vmatmul.mubr.bf16.gmra.mrb[0].mxu0 %v1055
      %v1146 = vpop.f32.mrb[0].mxu0
      %v1147 = vadd.f32 0.0, %v1146
      %v1148 = vpop.f32.mrb[0].mxu0
      %v1149 = vpop.f32.mrb[0].mxu0
      %v1150 = vadd.f32 0.0, %v1149
      %v1151 = vpop.f32.mrb[0].mxu0
      %1152 = vmatprep.mubr.bf16.mxu0 0
      %1153 = vmatmul.mubr.bf16.gmra.mrb[0].mxu0 %v1058
      %v1154 = vpop.f32.mrb[0].mxu0
      %v1155 = vadd.f32 0.0, %v1154
      %v1156 = vpop.f32.mrb[0].mxu0
      %v1157 = vpop.f32.mrb[0].mxu0
      %v1158 = vadd.f32 0.0, %v1157
      %v1159 = vpop.f32.mrb[0].mxu0
      %1160 = vdwg.mxu0
      %v1177 = vunpack.c.l.b16 %v789
      %v1178 = vunpack.c.l.b16 %v790
      %v1179 = vunpack.c.l.b16 %v791
      %v1180 = vunpack.c.l.b16 %v792
      %v1181 = vunpack.c.l.b16 %v793
      %v1182 = vunpack.c.l.b16 %v794
      %v1183 = vunpack.c.l.b16 %v795
      %v1184 = vunpack.c.l.b16 %v796
      %v1185 = vunpack.c.l.b16 %v797
      %v1186 = vunpack.c.l.b16 %v798
      %v1187 = vunpack.c.l.b16 %v799
      %v1188 = vunpack.c.l.b16 %v800
      %v1189 = vunpack.c.l.b16 %v801
      %v1190 = vunpack.c.l.b16 %v802
      %v1191 = vunpack.c.l.b16 %v803
      %v1192 = vunpack.c.l.b16 %v804
      %v1193 = vpack.c.b16 %v1178, %v1177
      %v1194 = vpack.c.b16 %v1180, %v1179
      %v1195 = vpack.c.b16 %v1182, %v1181
      %v1196 = vpack.c.b16 %v1184, %v1183
      %v1197 = vpack.c.b16 %v1186, %v1185
      %v1198 = vpack.c.b16 %v1188, %v1187
      %v1199 = vpack.c.b16 %v1190, %v1189
      %v1200 = vpack.c.b16 %v1192, %v1191
      %v1202 = vsel %vm1035, %v1193, 0
      %v1205 = vsel %vm1035, %v1194, 0
      %v1208 = vsel %vm1035, %v1195, 0
      %v1211 = vsel %vm1035, %v1196, 0
      %v1214 = vsel %vm1035, %v1197, 0
      %v1217 = vsel %vm1035, %v1198, 0
      %v1220 = vsel %vm1035, %v1199, 0
      %v1223 = vsel %vm1035, %v1200, 0
      %v1226 = vsel %vm1060, %v805, 0
      %1228 = vmatprep.subr.bf16.mxu0 0
      %1229 = vmatpush1.bf16.msra.mxu0 %v1226
      %1230 = vmatprep.subr.bf16.mxu0 0
      %1231 = vmatpush1.bf16.msra.mxu0 0
      %1232 = vmatprep.subr.bf16.mxu0 0
      %1233 = vmatpush1.bf16.msra.mxu0 0
      %1234 = vmatprep.subr.bf16.mxu0 0
      %1235 = vmatpush1.bf16.msra.mxu0 0
      %1236 = vmatprep.subr.bf16.mxu0 0
      %1237 = vmatpush1.bf16.msra.mxu0 0
      %1238 = vmatprep.subr.bf16.mxu0 0
      %1239 = vmatpush1.bf16.msra.mxu0 0
      %1240 = vmatprep.subr.bf16.mxu0 0
      %1241 = vmatpush1.bf16.msra.mxu0 0
      %1242 = vmatprep.subr.bf16.mxu0 0
      %1243 = vmatpush1.bf16.msra.mxu0 0
      %1244 = vmatprep.subr.bf16.mxu0 0
      %1245 = vmatpush1.bf16.msra.mxu0 0
      %1246 = vmatprep.subr.bf16.mxu0 0
      %1247 = vmatpush1.bf16.msra.mxu0 0
      %1248 = vmatprep.subr.bf16.mxu0 0
      %1249 = vmatpush1.bf16.msra.mxu0 0
      %1250 = vmatprep.subr.bf16.mxu0 0
      %1251 = vmatpush1.bf16.msra.mxu0 0
      %1252 = vmatprep.subr.bf16.mxu0 0
      %1253 = vmatpush1.bf16.msra.mxu0 0
      %1254 = vmatprep.subr.bf16.mxu0 0
      %1255 = vmatpush1.bf16.msra.mxu0 0
      %1256 = vmatprep.subr.bf16.mxu0 0
      %1257 = vmatpush1.bf16.msra.mxu0 0
      %1258 = vmatprep.subr.bf16.mxu0 0
      %1259 = vmatpush1.bf16.msra.mxu0 0
      %1260 = vmatprep.mubr.bf16.mxu0 0
      %1261 = vmatmul.mubr.bf16.gmra.mrb[0].mxu0 %v1202
      %v1262 = vpop.f32.mrb[0].mxu0
      %v1263 = vadd.f32 %v1099, %v1262
      %v1264 = vpop.f32.mrb[0].mxu0
      %v1265 = vpop.f32.mrb[0].mxu0
      %v1266 = vadd.f32 %v1102, %v1265
      %v1267 = vpop.f32.mrb[0].mxu0
      %1268 = vmatprep.mubr.bf16.mxu0 0
      %1269 = vmatmul.mubr.bf16.gmra.mrb[0].mxu0 %v1205
      %v1270 = vpop.f32.mrb[0].mxu0
      %v1271 = vadd.f32 %v1107, %v1270
      %v1272 = vpop.f32.mrb[0].mxu0
      %v1273 = vpop.f32.mrb[0].mxu0
      %v1274 = vadd.f32 %v1110, %v1273
      %v1275 = vpop.f32.mrb[0].mxu0
      %1276 = vmatprep.mubr.bf16.mxu0 0
      %1277 = vmatmul.mubr.bf16.gmra.mrb[0].mxu0 %v1208
      %v1278 = vpop.f32.mrb[0].mxu0
      %v1279 = vadd.f32 %v1115, %v1278
      %v1280 = vpop.f32.mrb[0].mxu0
      %v1281 = vpop.f32.mrb[0].mxu0
      %v1282 = vadd.f32 %v1118, %v1281
      %v1283 = vpop.f32.mrb[0].mxu0
      %1284 = vmatprep.mubr.bf16.mxu0 0
      %1285 = vmatmul.mubr.bf16.gmra.mrb[0].mxu0 %v1211
      %v1286 = vpop.f32.mrb[0].mxu0
      %v1287 = vadd.f32 %v1123, %v1286
      %v1288 = vpop.f32.mrb[0].mxu0
      %v1289 = vpop.f32.mrb[0].mxu0
      %v1290 = vadd.f32 %v1126, %v1289
      %v1291 = vpop.f32.mrb[0].mxu0
      %1292 = vmatprep.mubr.bf16.mxu0 0
      %1293 = vmatmul.mubr.bf16.gmra.mrb[0].mxu0 %v1214
      %v1294 = vpop.f32.mrb[0].mxu0
      %v1295 = vadd.f32 %v1131, %v1294
      %v1296 = vpop.f32.mrb[0].mxu0
      %v1297 = vpop.f32.mrb[0].mxu0
      %v1298 = vadd.f32 %v1134, %v1297
      %v1299 = vpop.f32.mrb[0].mxu0
      %1300 = vmatprep.mubr.bf16.mxu0 0
      %1301 = vmatmul.mubr.bf16.gmra.mrb[0].mxu0 %v1217
      %v1302 = vpop.f32.mrb[0].mxu0
      %v1303 = vadd.f32 %v1139, %v1302
      %v1304 = vpop.f32.mrb[0].mxu0
      %v1305 = vpop.f32.mrb[0].mxu0
      %v1306 = vadd.f32 %v1142, %v1305
      %v1307 = vpop.f32.mrb[0].mxu0
      %1308 = vmatprep.mubr.bf16.mxu0 0
      %1309 = vmatmul.mubr.bf16.gmra.mrb[0].mxu0 %v1220
      %v1310 = vpop.f32.mrb[0].mxu0
      %v1311 = vadd.f32 %v1147, %v1310
      %v1312 = vpop.f32.mrb[0].mxu0
      %v1313 = vpop.f32.mrb[0].mxu0
      %v1314 = vadd.f32 %v1150, %v1313
      %v1315 = vpop.f32.mrb[0].mxu0
      %1316 = vmatprep.mubr.bf16.mxu0 0
      %1317 = vmatmul.mubr.bf16.gmra.mrb[0].mxu0 %v1223
      %v1318 = vpop.f32.mrb[0].mxu0
      %v1319 = vadd.f32 %v1155, %v1318
      %v1320 = vpop.f32.mrb[0].mxu0
      %v1321 = vpop.f32.mrb[0].mxu0
      %v1322 = vadd.f32 %v1158, %v1321
      %v1323 = vpop.f32.mrb[0].mxu0
      %1324 = vdwg.mxu0
      %v1325 = vld [vmem:[#allocation2] sm:$0xe]
      %v1326 = vld [vmem:[#allocation2 + $0xc] sm:$0xe]
      %v1327 = vld [vmem:[#allocation2 + $0x18] sm:$0xe]
      %v1328 = vld [vmem:[#allocation2 + $0x24] sm:$0xe]
      %v1329 = vld [vmem:[#allocation2 + $0x30] sm:$0xe]
      %v1330 = vld [vmem:[#allocation2 + $0x3c] sm:$0xe]
      %v1331 = vld [vmem:[#allocation2 + $0x48] sm:$0xe]
      %v1332 = vld [vmem:[#allocation2 + $0x54] sm:$0xe]
      %vm1349 = vcmask 1042432
      %vm1350 = vcmask 1046532
      %vm1351 = vmor %vm1349, %vm1350
      %v1352 = vrot.slane %v1325, 5
      %v1353 = vrot.slane %v1352, 4
      %v1354 = vrot.slane %v790, 5
      %v1355 = vsel %vm1351, %v1353, %v1354
      %v1356 = vrot.slane %v1354, 4
      %v1357 = vrot.slane %v806, 5
      %v1358 = vsel %vm1351, %v1356, %v1357
      %v1359 = vrot.slane %v1326, 5
      %v1360 = vrot.slane %v1359, 4
      %v1361 = vrot.slane %v792, 5
      %v1362 = vsel %vm1351, %v1360, %v1361
      %v1363 = vrot.slane %v1361, 4
      %v1364 = vrot.slane %v807, 5
      %v1365 = vsel %vm1351, %v1363, %v1364
      %v1366 = vrot.slane %v1327, 5
      %v1367 = vrot.slane %v1366, 4
      %v1368 = vrot.slane %v794, 5
      %v1369 = vsel %vm1351, %v1367, %v1368
      %v1370 = vrot.slane %v1368, 4
      %v1371 = vrot.slane %v808, 5
      %v1372 = vsel %vm1351, %v1370, %v1371
      %v1373 = vrot.slane %v1328, 5
      %v1374 = vrot.slane %v1373, 4
      %v1375 = vrot.slane %v796, 5
      %v1376 = vsel %vm1351, %v1374, %v1375
      %v1377 = vrot.slane %v1375, 4
      %v1378 = vrot.slane %v809, 5
      %v1379 = vsel %vm1351, %v1377, %v1378
      %v1380 = vrot.slane %v1329, 5
      %v1381 = vrot.slane %v1380, 4
      %v1382 = vrot.slane %v798, 5
      %v1383 = vsel %vm1351, %v1381, %v1382
      %v1384 = vrot.slane %v1382, 4
      %v1385 = vrot.slane %v810, 5
      %v1386 = vsel %vm1351, %v1384, %v1385
      %v1387 = vrot.slane %v1330, 5
      %v1388 = vrot.slane %v1387, 4
      %v1389 = vrot.slane %v800, 5
      %v1390 = vsel %vm1351, %v1388, %v1389
      %v1391 = vrot.slane %v1389, 4
      %v1392 = vrot.slane %v811, 5
      %v1393 = vsel %vm1351, %v1391, %v1392
      %v1394 = vrot.slane %v1331, 5
      %v1395 = vrot.slane %v1394, 4
      %v1396 = vrot.slane %v802, 5
      %v1397 = vsel %vm1351, %v1395, %v1396
      %v1398 = vrot.slane %v1396, 4
      %v1399 = vrot.slane %v812, 5
      %v1400 = vsel %vm1351, %v1398, %v1399
      %v1401 = vrot.slane %v1332, 5
      %v1402 = vrot.slane %v1401, 4
      %v1403 = vrot.slane %v804, 5
      %v1404 = vsel %vm1351, %v1402, %v1403
      %v1405 = vrot.slane %v1403, 4
      %v1406 = vrot.slane %v813, 5
      %v1407 = vsel %vm1351, %v1405, %v1406
      %s1408 = scalar_lea.vmem %s3, 4
      %v1409 = vld [vmem:[%s1408] sm:$0x3]
      %v1410 = vunpack.c.l.b16 %v1355
      %v1411 = vunpack.c.l.b16 %v1358
      %v1412 = vunpack.c.l.b16 %v1362
      %v1413 = vunpack.c.l.b16 %v1365
      %v1414 = vunpack.c.l.b16 %v1369
      %v1415 = vunpack.c.l.b16 %v1372
      %v1416 = vunpack.c.l.b16 %v1376
      %v1417 = vunpack.c.l.b16 %v1379
      %v1418 = vunpack.c.l.b16 %v1383
      %v1419 = vunpack.c.l.b16 %v1386
      %v1420 = vunpack.c.l.b16 %v1390
      %v1421 = vunpack.c.l.b16 %v1393
      %v1422 = vunpack.c.l.b16 %v1397
      %v1423 = vunpack.c.l.b16 %v1400
      %v1424 = vunpack.c.l.b16 %v1404
      %v1425 = vunpack.c.l.b16 %v1407
      %v1426 = vpack.c.b16 %v1411, %v1410
      %v1427 = vpack.c.b16 %v1413, %v1412
      %v1428 = vpack.c.b16 %v1415, %v1414
      %v1429 = vpack.c.b16 %v1417, %v1416
      %v1430 = vpack.c.b16 %v1419, %v1418
      %v1431 = vpack.c.b16 %v1421, %v1420
      %v1432 = vpack.c.b16 %v1423, %v1422
      %v1433 = vpack.c.b16 %v1425, %v1424
      %v1435 = vsel %vm1035, %v1426, 0
      %v1438 = vsel %vm1035, %v1427, 0
      %v1441 = vsel %vm1035, %v1428, 0
      %v1444 = vsel %vm1035, %v1429, 0
      %v1447 = vsel %vm1035, %v1430, 0
      %v1450 = vsel %vm1035, %v1431, 0
      %v1453 = vsel %vm1035, %v1432, 0
      %v1456 = vsel %vm1035, %v1433, 0
      %v1459 = vsel %vm1060, %v1409, 0
      %1461 = vmatprep.subr.bf16.mxu0 0
      %1462 = vmatpush1.bf16.msra.mxu0 %v1459
      %1463 = vmatprep.subr.bf16.mxu0 0
      %1464 = vmatpush1.bf16.msra.mxu0 0
      %1465 = vmatprep.subr.bf16.mxu0 0
      %1466 = vmatpush1.bf16.msra.mxu0 0
      %1467 = vmatprep.subr.bf16.mxu0 0
      %1468 = vmatpush1.bf16.msra.mxu0 0
      %1469 = vmatprep.subr.bf16.mxu0 0
      %1470 = vmatpush1.bf16.msra.mxu0 0
      %1471 = vmatprep.subr.bf16.mxu0 0
      %1472 = vmatpush1.bf16.msra.mxu0 0
      %1473 = vmatprep.subr.bf16.mxu0 0
      %1474 = vmatpush1.bf16.msra.mxu0 0
      %1475 = vmatprep.subr.bf16.mxu0 0
      %1476 = vmatpush1.bf16.msra.mxu0 0
      %1477 = vmatprep.subr.bf16.mxu0 0
      %1478 = vmatpush1.bf16.msra.mxu0 0
      %1479 = vmatprep.subr.bf16.mxu0 0
      %1480 = vmatpush1.bf16.msra.mxu0 0
      %1481 = vmatprep.subr.bf16.mxu0 0
      %1482 = vmatpush1.bf16.msra.mxu0 0
      %1483 = vmatprep.subr.bf16.mxu0 0
      %1484 = vmatpush1.bf16.msra.mxu0 0
      %1485 = vmatprep.subr.bf16.mxu0 0
      %1486 = vmatpush1.bf16.msra.mxu0 0
      %1487 = vmatprep.subr.bf16.mxu0 0
      %1488 = vmatpush1.bf16.msra.mxu0 0
      %1489 = vmatprep.subr.bf16.mxu0 0
      %1490 = vmatpush1.bf16.msra.mxu0 0
      %1491 = vmatprep.subr.bf16.mxu0 0
      %1492 = vmatpush1.bf16.msra.mxu0 0
      %1493 = vmatprep.mubr.bf16.mxu0 0
      %1494 = vmatmul.mubr.bf16.gmra.mrb[0].mxu0 %v1435
      %v1495 = vpop.f32.mrb[0].mxu0
      %v1496 = vadd.f32 0.0, %v1495
      %v1497 = vpop.f32.mrb[0].mxu0
      %v1498 = vpop.f32.mrb[0].mxu0
      %v1499 = vadd.f32 0.0, %v1498
      %v1500 = vpop.f32.mrb[0].mxu0
      %1501 = vmatprep.mubr.bf16.mxu0 0
      %1502 = vmatmul.mubr.bf16.gmra.mrb[0].mxu0 %v1438
      %v1503 = vpop.f32.mrb[0].mxu0
      %v1504 = vadd.f32 0.0, %v1503
      %v1505 = vpop.f32.mrb[0].mxu0
      %v1506 = vpop.f32.mrb[0].mxu0
      %v1507 = vadd.f32 0.0, %v1506
      %v1508 = vpop.f32.mrb[0].mxu0
      %1509 = vmatprep.mubr.bf16.mxu0 0
      %1510 = vmatmul.mubr.bf16.gmra.mrb[0].mxu0 %v1441
      %v1511 = vpop.f32.mrb[0].mxu0
      %v1512 = vadd.f32 0.0, %v1511
      %v1513 = vpop.f32.mrb[0].mxu0
      %v1514 = vpop.f32.mrb[0].mxu0
      %v1515 = vadd.f32 0.0, %v1514
      %v1516 = vpop.f32.mrb[0].mxu0
      %1517 = vmatprep.mubr.bf16.mxu0 0
      %1518 = vmatmul.mubr.bf16.gmra.mrb[0].mxu0 %v1444
      %v1519 = vpop.f32.mrb[0].mxu0
      %v1520 = vadd.f32 0.0, %v1519
      %v1521 = vpop.f32.mrb[0].mxu0
      %v1522 = vpop.f32.mrb[0].mxu0
      %v1523 = vadd.f32 0.0, %v1522
      %v1524 = vpop.f32.mrb[0].mxu0
      %1525 = vmatprep.mubr.bf16.mxu0 0
      %1526 = vmatmul.mubr.bf16.gmra.mrb[0].mxu0 %v1447
      %v1527 = vpop.f32.mrb[0].mxu0
      %v1528 = vadd.f32 0.0, %v1527
      %v1529 = vpop.f32.mrb[0].mxu0
      %v1530 = vpop.f32.mrb[0].mxu0
      %v1531 = vadd.f32 0.0, %v1530
      %v1532 = vpop.f32.mrb[0].mxu0
      %1533 = vmatprep.mubr.bf16.mxu0 0
      %1534 = vmatmul.mubr.bf16.gmra.mrb[0].mxu0 %v1450
      %v1535 = vpop.f32.mrb[0].mxu0
      %v1536 = vadd.f32 0.0, %v1535
      %v1537 = vpop.f32.mrb[0].mxu0
      %v1538 = vpop.f32.mrb[0].mxu0
      %v1539 = vadd.f32 0.0, %v1538
      %v1540 = vpop.f32.mrb[0].mxu0
      %1541 = vmatprep.mubr.bf16.mxu0 0
      %1542 = vmatmul.mubr.bf16.gmra.mrb[0].mxu0 %v1453
      %v1543 = vpop.f32.mrb[0].mxu0
      %v1544 = vadd.f32 0.0, %v1543
      %v1545 = vpop.f32.mrb[0].mxu0
      %v1546 = vpop.f32.mrb[0].mxu0
      %v1547 = vadd.f32 0.0, %v1546
      %v1548 = vpop.f32.mrb[0].mxu0
      %1549 = vmatprep.mubr.bf16.mxu0 0
      %1550 = vmatmul.mubr.bf16.gmra.mrb[0].mxu0 %v1456
      %v1551 = vpop.f32.mrb[0].mxu0
      %v1552 = vadd.f32 0.0, %v1551
      %v1553 = vpop.f32.mrb[0].mxu0
      %v1554 = vpop.f32.mrb[0].mxu0
      %v1555 = vadd.f32 0.0, %v1554
      %v1556 = vpop.f32.mrb[0].mxu0
      %1557 = vdwg.mxu0
      %v1558 = vadd.f32 %v1263, %v1496
      %v1559 = vadd.f32 %v1266, %v1499
      %v1560 = vadd.f32 %v1271, %v1504
      %v1561 = vadd.f32 %v1274, %v1507
      %v1562 = vadd.f32 %v1279, %v1512
      %v1563 = vadd.f32 %v1282, %v1515
      %v1564 = vadd.f32 %v1287, %v1520
      %v1565 = vadd.f32 %v1290, %v1523
      %v1566 = vadd.f32 %v1295, %v1528
      %v1567 = vadd.f32 %v1298, %v1531
      %v1568 = vadd.f32 %v1303, %v1536
      %v1569 = vadd.f32 %v1306, %v1539
      %v1570 = vadd.f32 %v1311, %v1544
      %v1571 = vadd.f32 %v1314, %v1547
      %v1572 = vadd.f32 %v1319, %v1552
      %v1573 = vadd.f32 %v1322, %v1555
      %v1574 = vld [vmem:[%s626] sm:$0xf]
      %v1575 = vld [vmem:[%s626 + $0x4] sm:$0xf]
      %v1576 = vld [vmem:[%s626 + $0xc] sm:$0xf]
      %v1577 = vld [vmem:[%s626 + $0x10] sm:$0xf]
      %v1578 = vld [vmem:[%s626 + $0x18] sm:$0xf]
      %v1579 = vld [vmem:[%s626 + $0x1c] sm:$0xf]
      %v1580 = vld [vmem:[%s626 + $0x24] sm:$0xf]
      %v1581 = vld [vmem:[%s626 + $0x28] sm:$0xf]
      %v1582 = vld [vmem:[%s626 + $0x30] sm:$0xf]
      %v1583 = vld [vmem:[%s626 + $0x34] sm:$0xf]
      %v1584 = vld [vmem:[%s626 + $0x3c] sm:$0xf]
      %v1585 = vld [vmem:[%s626 + $0x40] sm:$0xf]
      %v1586 = vld [vmem:[%s626 + $0x48] sm:$0xf]
      %v1587 = vld [vmem:[%s626 + $0x4c] sm:$0xf]
      %v1588 = vld [vmem:[%s626 + $0x54] sm:$0xf]
      %v1589 = vld [vmem:[%s626 + $0x58] sm:$0xf]
      %s1590 = scalar_lea.vmem %s3, 6
      %v1591 = vld [vmem:[%s1590] sm:$0x3]
      %v1608 = vunpack.c.l.b16 %v1574
      %v1609 = vunpack.c.l.b16 %v1575
      %v1610 = vunpack.c.l.b16 %v1576
      %v1611 = vunpack.c.l.b16 %v1577
      %v1612 = vunpack.c.l.b16 %v1578
      %v1613 = vunpack.c.l.b16 %v1579
      %v1614 = vunpack.c.l.b16 %v1580
      %v1615 = vunpack.c.l.b16 %v1581
      %v1616 = vunpack.c.l.b16 %v1582
      %v1617 = vunpack.c.l.b16 %v1583
      %v1618 = vunpack.c.l.b16 %v1584
      %v1619 = vunpack.c.l.b16 %v1585
      %v1620 = vunpack.c.l.b16 %v1586
      %v1621 = vunpack.c.l.b16 %v1587
      %v1622 = vunpack.c.l.b16 %v1588
      %v1623 = vunpack.c.l.b16 %v1589
      %v1624 = vpack.c.b16 %v1609, %v1608
      %v1625 = vpack.c.b16 %v1611, %v1610
      %v1626 = vpack.c.b16 %v1613, %v1612
      %v1627 = vpack.c.b16 %v1615, %v1614
      %v1628 = vpack.c.b16 %v1617, %v1616
      %v1629 = vpack.c.b16 %v1619, %v1618
      %v1630 = vpack.c.b16 %v1621, %v1620
      %v1631 = vpack.c.b16 %v1623, %v1622
      %v1633 = vsel %vm1035, %v1624, 0
      %v1636 = vsel %vm1035, %v1625, 0
      %v1639 = vsel %vm1035, %v1626, 0
      %v1642 = vsel %vm1035, %v1627, 0
      %v1645 = vsel %vm1035, %v1628, 0
      %v1648 = vsel %vm1035, %v1629, 0
      %v1651 = vsel %vm1035, %v1630, 0
      %v1654 = vsel %vm1035, %v1631, 0
      %v1657 = vsel %vm1060, %v1591, 0
      %1659 = vmatprep.subr.bf16.mxu0 0
      %1660 = vmatpush1.bf16.msra.mxu0 %v1657
      %1661 = vmatprep.subr.bf16.mxu0 0
      %1662 = vmatpush1.bf16.msra.mxu0 0
      %1663 = vmatprep.subr.bf16.mxu0 0
      %1664 = vmatpush1.bf16.msra.mxu0 0
      %1665 = vmatprep.subr.bf16.mxu0 0
      %1666 = vmatpush1.bf16.msra.mxu0 0
      %1667 = vmatprep.subr.bf16.mxu0 0
      %1668 = vmatpush1.bf16.msra.mxu0 0
      %1669 = vmatprep.subr.bf16.mxu0 0
      %1670 = vmatpush1.bf16.msra.mxu0 0
      %1671 = vmatprep.subr.bf16.mxu0 0
      %1672 = vmatpush1.bf16.msra.mxu0 0
      %1673 = vmatprep.subr.bf16.mxu0 0
      %1674 = vmatpush1.bf16.msra.mxu0 0
      %1675 = vmatprep.subr.bf16.mxu0 0
      %1676 = vmatpush1.bf16.msra.mxu0 0
      %1677 = vmatprep.subr.bf16.mxu0 0
      %1678 = vmatpush1.bf16.msra.mxu0 0
      %1679 = vmatprep.subr.bf16.mxu0 0
      %1680 = vmatpush1.bf16.msra.mxu0 0
      %1681 = vmatprep.subr.bf16.mxu0 0
      %1682 = vmatpush1.bf16.msra.mxu0 0
      %1683 = vmatprep.subr.bf16.mxu0 0
      %1684 = vmatpush1.bf16.msra.mxu0 0
      %1685 = vmatprep.subr.bf16.mxu0 0
      %1686 = vmatpush1.bf16.msra.mxu0 0
      %1687 = vmatprep.subr.bf16.mxu0 0
      %1688 = vmatpush1.bf16.msra.mxu0 0
      %1689 = vmatprep.subr.bf16.mxu0 0
      %1690 = vmatpush1.bf16.msra.mxu0 0
      %1691 = vmatprep.mubr.bf16.mxu0 0
      %1692 = vmatmul.mubr.bf16.gmra.mrb[0].mxu0 %v1633
      %v1693 = vpop.f32.mrb[0].mxu0
      %v1694 = vadd.f32 0.0, %v1693
      %v1695 = vpop.f32.mrb[0].mxu0
      %v1696 = vpop.f32.mrb[0].mxu0
      %v1697 = vadd.f32 0.0, %v1696
      %v1698 = vpop.f32.mrb[0].mxu0
      %1699 = vmatprep.mubr.bf16.mxu0 0
      %1700 = vmatmul.mubr.bf16.gmra.mrb[0].mxu0 %v1636
      %v1701 = vpop.f32.mrb[0].mxu0
      %v1702 = vadd.f32 0.0, %v1701
      %v1703 = vpop.f32.mrb[0].mxu0
      %v1704 = vpop.f32.mrb[0].mxu0
      %v1705 = vadd.f32 0.0, %v1704
      %v1706 = vpop.f32.mrb[0].mxu0
      %1707 = vmatprep.mubr.bf16.mxu0 0
      %1708 = vmatmul.mubr.bf16.gmra.mrb[0].mxu0 %v1639
      %v1709 = vpop.f32.mrb[0].mxu0
      %v1710 = vadd.f32 0.0, %v1709
      %v1711 = vpop.f32.mrb[0].mxu0
      %v1712 = vpop.f32.mrb[0].mxu0
      %v1713 = vadd.f32 0.0, %v1712
      %v1714 = vpop.f32.mrb[0].mxu0
      %1715 = vmatprep.mubr.bf16.mxu0 0
      %1716 = vmatmul.mubr.bf16.gmra.mrb[0].mxu0 %v1642
      %v1717 = vpop.f32.mrb[0].mxu0
      %v1718 = vadd.f32 0.0, %v1717
      %v1719 = vpop.f32.mrb[0].mxu0
      %v1720 = vpop.f32.mrb[0].mxu0
      %v1721 = vadd.f32 0.0, %v1720
      %v1722 = vpop.f32.mrb[0].mxu0
      %1723 = vmatprep.mubr.bf16.mxu0 0
      %1724 = vmatmul.mubr.bf16.gmra.mrb[0].mxu0 %v1645
      %v1725 = vpop.f32.mrb[0].mxu0
      %v1726 = vadd.f32 0.0, %v1725
      %v1727 = vpop.f32.mrb[0].mxu0
      %v1728 = vpop.f32.mrb[0].mxu0
      %v1729 = vadd.f32 0.0, %v1728
      %v1730 = vpop.f32.mrb[0].mxu0
      %1731 = vmatprep.mubr.bf16.mxu0 0
      %1732 = vmatmul.mubr.bf16.gmra.mrb[0].mxu0 %v1648
      %v1733 = vpop.f32.mrb[0].mxu0
      %v1734 = vadd.f32 0.0, %v1733
      %v1735 = vpop.f32.mrb[0].mxu0
      %v1736 = vpop.f32.mrb[0].mxu0
      %v1737 = vadd.f32 0.0, %v1736
      %v1738 = vpop.f32.mrb[0].mxu0
      %1739 = vmatprep.mubr.bf16.mxu0 0
      %1740 = vmatmul.mubr.bf16.gmra.mrb[0].mxu0 %v1651
      %v1741 = vpop.f32.mrb[0].mxu0
      %v1742 = vadd.f32 0.0, %v1741
      %v1743 = vpop.f32.mrb[0].mxu0
      %v1744 = vpop.f32.mrb[0].mxu0
      %v1745 = vadd.f32 0.0, %v1744
      %v1746 = vpop.f32.mrb[0].mxu0
      %1747 = vmatprep.mubr.bf16.mxu0 0
      %1748 = vmatmul.mubr.bf16.gmra.mrb[0].mxu0 %v1654
      %v1749 = vpop.f32.mrb[0].mxu0
      %v1750 = vadd.f32 0.0, %v1749
      %v1751 = vpop.f32.mrb[0].mxu0
      %v1752 = vpop.f32.mrb[0].mxu0
      %v1753 = vadd.f32 0.0, %v1752
      %v1754 = vpop.f32.mrb[0].mxu0
      %1755 = vdwg.mxu0
      %v1756 = vadd.f32 %v1558, %v1694
      %v1757 = vadd.f32 %v1559, %v1697
      %v1758 = vadd.f32 %v1560, %v1702
      %v1759 = vadd.f32 %v1561, %v1705
      %v1760 = vadd.f32 %v1562, %v1710
      %v1761 = vadd.f32 %v1563, %v1713
      %v1762 = vadd.f32 %v1564, %v1718
      %v1763 = vadd.f32 %v1565, %v1721
      %v1764 = vadd.f32 %v1566, %v1726
      %v1765 = vadd.f32 %v1567, %v1729
      %v1766 = vadd.f32 %v1568, %v1734
      %v1767 = vadd.f32 %v1569, %v1737
      %v1768 = vadd.f32 %v1570, %v1742
      %v1769 = vadd.f32 %v1571, %v1745
      %v1770 = vadd.f32 %v1572, %v1750
      %v1771 = vadd.f32 %v1573, %v1753
      %v1772 = vld [vmem:[%s626] sm:$0xf]
      %v1773 = vld [vmem:[%s626 + $0x4] sm:$0xf]
      %v1774 = vld [vmem:[%s626 + $0x8] sm:$0x1]
      %v1775 = vld [vmem:[%s626 + $0xc] sm:$0xf]
      %v1776 = vld [vmem:[%s626 + $0x10] sm:$0xf]
      %v1777 = vld [vmem:[%s626 + $0x14] sm:$0x1]
      %v1778 = vld [vmem:[%s626 + $0x18] sm:$0xf]
      %v1779 = vld [vmem:[%s626 + $0x1c] sm:$0xf]
      %v1780 = vld [vmem:[%s626 + $0x20] sm:$0x1]
      %v1781 = vld [vmem:[%s626 + $0x24] sm:$0xf]
      %v1782 = vld [vmem:[%s626 + $0x28] sm:$0xf]
      %v1783 = vld [vmem:[%s626 + $0x2c] sm:$0x1]
      %v1784 = vld [vmem:[%s626 + $0x30] sm:$0xf]
      %v1785 = vld [vmem:[%s626 + $0x34] sm:$0xf]
      %v1786 = vld [vmem:[%s626 + $0x38] sm:$0x1]
      %v1787 = vld [vmem:[%s626 + $0x3c] sm:$0xf]
      %v1788 = vld [vmem:[%s626 + $0x40] sm:$0xf]
      %v1789 = vld [vmem:[%s626 + $0x44] sm:$0x1]
      %v1790 = vld [vmem:[%s626 + $0x48] sm:$0xf]
      %v1791 = vld [vmem:[%s626 + $0x4c] sm:$0xf]
      %v1792 = vld [vmem:[%s626 + $0x50] sm:$0x1]
      %v1793 = vld [vmem:[%s626 + $0x54] sm:$0xf]
      %v1794 = vld [vmem:[%s626 + $0x58] sm:$0xf]
      %v1795 = vld [vmem:[%s626 + $0x5c] sm:$0x1]
      %v1797 = vshrl.u32 %v1772, 16
      %v1799 = vrot.slane %v1797, 4
      %v1800 = vshll.u32 %v1772, 16
      %v1802 = vrot.slane %v1800, 5
      %v1803 = vor.u32 %v1799, %v1802
      %v1804 = vrot.slane %v1803, 4
      %v1806 = vshll.u32 %v1773, 16
      %v1808 = vrot.slane %v1806, 5
      %v1809 = vsel %vm816, %v1804, %v1808
      %v1810 = vshrl.u32 %v1773, 16
      %v1812 = vrot.slane %v1810, 4
      %v1813 = vor.u32 %v1812, %v1808
      %v1814 = vrot.slane %v1813, 4
      %v1816 = vshll.u32 %v1774, 16
      %v1818 = vrot.slane %v1816, 5
      %v1819 = vsel %vm816, %v1814, %v1818
      %v1821 = vshrl.u32 %v1775, 16
      %v1823 = vrot.slane %v1821, 4
      %v1824 = vshll.u32 %v1775, 16
      %v1826 = vrot.slane %v1824, 5
      %v1827 = vor.u32 %v1823, %v1826
      %v1828 = vrot.slane %v1827, 4
      %v1830 = vshll.u32 %v1776, 16
      %v1832 = vrot.slane %v1830, 5
      %v1833 = vsel %vm816, %v1828, %v1832
      %v1834 = vshrl.u32 %v1776, 16
      %v1836 = vrot.slane %v1834, 4
      %v1837 = vor.u32 %v1836, %v1832
      %v1838 = vrot.slane %v1837, 4
      %v1840 = vshll.u32 %v1777, 16
      %v1842 = vrot.slane %v1840, 5
      %v1843 = vsel %vm816, %v1838, %v1842
      %v1845 = vshrl.u32 %v1778, 16
      %v1847 = vrot.slane %v1845, 4
      %v1848 = vshll.u32 %v1778, 16
      %v1850 = vrot.slane %v1848, 5
      %v1851 = vor.u32 %v1847, %v1850
      %v1852 = vrot.slane %v1851, 4
      %v1854 = vshll.u32 %v1779, 16
      %v1856 = vrot.slane %v1854, 5
      %v1857 = vsel %vm816, %v1852, %v1856
      %v1858 = vshrl.u32 %v1779, 16
      %v1860 = vrot.slane %v1858, 4
      %v1861 = vor.u32 %v1860, %v1856
      %v1862 = vrot.slane %v1861, 4
      %v1864 = vshll.u32 %v1780, 16
      %v1866 = vrot.slane %v1864, 5
      %v1867 = vsel %vm816, %v1862, %v1866
      %v1869 = vshrl.u32 %v1781, 16
      %v1871 = vrot.slane %v1869, 4
      %v1872 = vshll.u32 %v1781, 16
      %v1874 = vrot.slane %v1872, 5
      %v1875 = vor.u32 %v1871, %v1874
      %v1876 = vrot.slane %v1875, 4
      %v1878 = vshll.u32 %v1782, 16
      %v1880 = vrot.slane %v1878, 5
      %v1881 = vsel %vm816, %v1876, %v1880
      %v1882 = vshrl.u32 %v1782, 16
      %v1884 = vrot.slane %v1882, 4
      %v1885 = vor.u32 %v1884, %v1880
      %v1886 = vrot.slane %v1885, 4
      %v1888 = vshll.u32 %v1783, 16
      %v1890 = vrot.slane %v1888, 5
      %v1891 = vsel %vm816, %v1886, %v1890
      %v1893 = vshrl.u32 %v1784, 16
      %v1895 = vrot.slane %v1893, 4
      %v1896 = vshll.u32 %v1784, 16
      %v1898 = vrot.slane %v1896, 5
      %v1899 = vor.u32 %v1895, %v1898
      %v1900 = vrot.slane %v1899, 4
      %v1902 = vshll.u32 %v1785, 16
      %v1904 = vrot.slane %v1902, 5
      %v1905 = vsel %vm816, %v1900, %v1904
      %v1906 = vshrl.u32 %v1785, 16
      %v1908 = vrot.slane %v1906, 4
      %v1909 = vor.u32 %v1908, %v1904
      %v1910 = vrot.slane %v1909, 4
      %v1912 = vshll.u32 %v1786, 16
      %v1914 = vrot.slane %v1912, 5
      %v1915 = vsel %vm816, %v1910, %v1914
      %v1917 = vshrl.u32 %v1787, 16
      %v1919 = vrot.slane %v1917, 4
      %v1920 = vshll.u32 %v1787, 16
      %v1922 = vrot.slane %v1920, 5
      %v1923 = vor.u32 %v1919, %v1922
      %v1924 = vrot.slane %v1923, 4
      %v1926 = vshll.u32 %v1788, 16
      %v1928 = vrot.slane %v1926, 5
      %v1929 = vsel %vm816, %v1924, %v1928
      %v1930 = vshrl.u32 %v1788, 16
      %v1932 = vrot.slane %v1930, 4
      %v1933 = vor.u32 %v1932, %v1928
      %v1934 = vrot.slane %v1933, 4
      %v1936 = vshll.u32 %v1789, 16
      %v1938 = vrot.slane %v1936, 5
      %v1939 = vsel %vm816, %v1934, %v1938
      %v1941 = vshrl.u32 %v1790, 16
      %v1943 = vrot.slane %v1941, 4
      %v1944 = vshll.u32 %v1790, 16
      %v1946 = vrot.slane %v1944, 5
      %v1947 = vor.u32 %v1943, %v1946
      %v1948 = vrot.slane %v1947, 4
      %v1950 = vshll.u32 %v1791, 16
      %v1952 = vrot.slane %v1950, 5
      %v1953 = vsel %vm816, %v1948, %v1952
      %v1954 = vshrl.u32 %v1791, 16
      %v1956 = vrot.slane %v1954, 4
      %v1957 = vor.u32 %v1956, %v1952
      %v1958 = vrot.slane %v1957, 4
      %v1960 = vshll.u32 %v1792, 16
      %v1962 = vrot.slane %v1960, 5
      %v1963 = vsel %vm816, %v1958, %v1962
      %v1965 = vshrl.u32 %v1793, 16
      %v1967 = vrot.slane %v1965, 4
      %v1968 = vshll.u32 %v1793, 16
      %v1970 = vrot.slane %v1968, 5
      %v1971 = vor.u32 %v1967, %v1970
      %v1972 = vrot.slane %v1971, 4
      %v1974 = vshll.u32 %v1794, 16
      %v1976 = vrot.slane %v1974, 5
      %v1977 = vsel %vm816, %v1972, %v1976
      %v1978 = vshrl.u32 %v1794, 16
      %v1980 = vrot.slane %v1978, 4
      %v1981 = vor.u32 %v1980, %v1976
      %v1982 = vrot.slane %v1981, 4
      %v1984 = vshll.u32 %v1795, 16
      %v1986 = vrot.slane %v1984, 5
      %v1987 = vsel %vm816, %v1982, %v1986
      %s1988 = scalar_lea.vmem %s3, 8
      %v1989 = vld [vmem:[%s1988] sm:$0x3]
      %v1990 = vunpack.c.l.b16 %v1809
      %v1991 = vunpack.c.l.b16 %v1819
      %v1992 = vunpack.c.l.b16 %v1833
      %v1993 = vunpack.c.l.b16 %v1843
      %v1994 = vunpack.c.l.b16 %v1857
      %v1995 = vunpack.c.l.b16 %v1867
      %v1996 = vunpack.c.l.b16 %v1881
      %v1997 = vunpack.c.l.b16 %v1891
      %v1998 = vunpack.c.l.b16 %v1905
      %v1999 = vunpack.c.l.b16 %v1915
      %v2000 = vunpack.c.l.b16 %v1929
      %v2001 = vunpack.c.l.b16 %v1939
      %v2002 = vunpack.c.l.b16 %v1953
      %v2003 = vunpack.c.l.b16 %v1963
      %v2004 = vunpack.c.l.b16 %v1977
      %v2005 = vunpack.c.l.b16 %v1987
      %v2006 = vpack.c.b16 %v1991, %v1990
      %v2007 = vpack.c.b16 %v1993, %v1992
      %v2008 = vpack.c.b16 %v1995, %v1994
      %v2009 = vpack.c.b16 %v1997, %v1996
      %v2010 = vpack.c.b16 %v1999, %v1998
      %v2011 = vpack.c.b16 %v2001, %v2000
      %v2012 = vpack.c.b16 %v2003, %v2002
      %v2013 = vpack.c.b16 %v2005, %v2004
      %v2015 = vsel %vm1035, %v2006, 0
      %v2018 = vsel %vm1035, %v2007, 0
      %v2021 = vsel %vm1035, %v2008, 0
      %v2024 = vsel %vm1035, %v2009, 0
      %v2027 = vsel %vm1035, %v2010, 0
      %v2030 = vsel %vm1035, %v2011, 0
      %v2033 = vsel %vm1035, %v2012, 0
      %v2036 = vsel %vm1035, %v2013, 0
      %v2039 = vsel %vm1060, %v1989, 0
      %2041 = vmatprep.subr.bf16.mxu0 0
      %2042 = vmatpush1.bf16.msra.mxu0 %v2039
      %2043 = vmatprep.subr.bf16.mxu0 0
      %2044 = vmatpush1.bf16.msra.mxu0 0
      %2045 = vmatprep.subr.bf16.mxu0 0
      %2046 = vmatpush1.bf16.msra.mxu0 0
      %2047 = vmatprep.subr.bf16.mxu0 0
      %2048 = vmatpush1.bf16.msra.mxu0 0
      %2049 = vmatprep.subr.bf16.mxu0 0
      %2050 = vmatpush1.bf16.msra.mxu0 0
      %2051 = vmatprep.subr.bf16.mxu0 0
      %2052 = vmatpush1.bf16.msra.mxu0 0
      %2053 = vmatprep.subr.bf16.mxu0 0
      %2054 = vmatpush1.bf16.msra.mxu0 0
      %2055 = vmatprep.subr.bf16.mxu0 0
      %2056 = vmatpush1.bf16.msra.mxu0 0
      %2057 = vmatprep.subr.bf16.mxu0 0
      %2058 = vmatpush1.bf16.msra.mxu0 0
      %2059 = vmatprep.subr.bf16.mxu0 0
      %2060 = vmatpush1.bf16.msra.mxu0 0
      %2061 = vmatprep.subr.bf16.mxu0 0
      %2062 = vmatpush1.bf16.msra.mxu0 0
      %2063 = vmatprep.subr.bf16.mxu0 0
      %2064 = vmatpush1.bf16.msra.mxu0 0
      %2065 = vmatprep.subr.bf16.mxu0 0
      %2066 = vmatpush1.bf16.msra.mxu0 0
      %2067 = vmatprep.subr.bf16.mxu0 0
      %2068 = vmatpush1.bf16.msra.mxu0 0
      %2069 = vmatprep.subr.bf16.mxu0 0
      %2070 = vmatpush1.bf16.msra.mxu0 0
      %2071 = vmatprep.subr.bf16.mxu0 0
      %2072 = vmatpush1.bf16.msra.mxu0 0
      %2073 = vmatprep.mubr.bf16.mxu0 0
      %2074 = vmatmul.mubr.bf16.gmra.mrb[0].mxu0 %v2015
      %v2075 = vpop.f32.mrb[0].mxu0
      %v2076 = vadd.f32 0.0, %v2075
      %v2077 = vpop.f32.mrb[0].mxu0
      %v2078 = vpop.f32.mrb[0].mxu0
      %v2079 = vadd.f32 0.0, %v2078
      %v2080 = vpop.f32.mrb[0].mxu0
      %2081 = vmatprep.mubr.bf16.mxu0 0
      %2082 = vmatmul.mubr.bf16.gmra.mrb[0].mxu0 %v2018
      %v2083 = vpop.f32.mrb[0].mxu0
      %v2084 = vadd.f32 0.0, %v2083
      %v2085 = vpop.f32.mrb[0].mxu0
      %v2086 = vpop.f32.mrb[0].mxu0
      %v2087 = vadd.f32 0.0, %v2086
      %v2088 = vpop.f32.mrb[0].mxu0
      %2089 = vmatprep.mubr.bf16.mxu0 0
      %2090 = vmatmul.mubr.bf16.gmra.mrb[0].mxu0 %v2021
      %v2091 = vpop.f32.mrb[0].mxu0
      %v2092 = vadd.f32 0.0, %v2091
      %v2093 = vpop.f32.mrb[0].mxu0
      %v2094 = vpop.f32.mrb[0].mxu0
      %v2095 = vadd.f32 0.0, %v2094
      %v2096 = vpop.f32.mrb[0].mxu0
      %2097 = vmatprep.mubr.bf16.mxu0 0
      %2098 = vmatmul.mubr.bf16.gmra.mrb[0].mxu0 %v2024
      %v2099 = vpop.f32.mrb[0].mxu0
      %v2100 = vadd.f32 0.0, %v2099
      %v2101 = vpop.f32.mrb[0].mxu0
      %v2102 = vpop.f32.mrb[0].mxu0
      %v2103 = vadd.f32 0.0, %v2102
      %v2104 = vpop.f32.mrb[0].mxu0
      %2105 = vmatprep.mubr.bf16.mxu0 0
      %2106 = vmatmul.mubr.bf16.gmra.mrb[0].mxu0 %v2027
      %v2107 = vpop.f32.mrb[0].mxu0
      %v2108 = vadd.f32 0.0, %v2107
      %v2109 = vpop.f32.mrb[0].mxu0
      %v2110 = vpop.f32.mrb[0].mxu0
      %v2111 = vadd.f32 0.0, %v2110
      %v2112 = vpop.f32.mrb[0].mxu0
      %2113 = vmatprep.mubr.bf16.mxu0 0
      %2114 = vmatmul.mubr.bf16.gmra.mrb[0].mxu0 %v2030
      %v2115 = vpop.f32.mrb[0].mxu0
      %v2116 = vadd.f32 0.0, %v2115
      %v2117 = vpop.f32.mrb[0].mxu0
      %v2118 = vpop.f32.mrb[0].mxu0
      %v2119 = vadd.f32 0.0, %v2118
      %v2120 = vpop.f32.mrb[0].mxu0
      %2121 = vmatprep.mubr.bf16.mxu0 0
      %2122 = vmatmul.mubr.bf16.gmra.mrb[0].mxu0 %v2033
      %v2123 = vpop.f32.mrb[0].mxu0
      %v2124 = vadd.f32 0.0, %v2123
      %v2125 = vpop.f32.mrb[0].mxu0
      %v2126 = vpop.f32.mrb[0].mxu0
      %v2127 = vadd.f32 0.0, %v2126
      %v2128 = vpop.f32.mrb[0].mxu0
      %2129 = vmatprep.mubr.bf16.mxu0 0
      %2130 = vmatmul.mubr.bf16.gmra.mrb[0].mxu0 %v2036
      %v2131 = vpop.f32.mrb[0].mxu0
      %v2132 = vadd.f32 0.0, %v2131
      %v2133 = vpop.f32.mrb[0].mxu0
      %v2134 = vpop.f32.mrb[0].mxu0
      %v2135 = vadd.f32 0.0, %v2134
      %v2136 = vpop.f32.mrb[0].mxu0
      %2137 = vdwg.mxu0
      %v2138 = vadd.f32 %v1756, %v2076
      %v2139 = vadd.f32 %v1757, %v2079
      %v2140 = vadd.f32 %v1758, %v2084
      %v2141 = vadd.f32 %v1759, %v2087
      %v2142 = vadd.f32 %v1760, %v2092
      %v2143 = vadd.f32 %v1761, %v2095
      %v2144 = vadd.f32 %v1762, %v2100
      %v2145 = vadd.f32 %v1763, %v2103
      %v2146 = vadd.f32 %v1764, %v2108
      %v2147 = vadd.f32 %v1765, %v2111
      %v2148 = vadd.f32 %v1766, %v2116
      %v2149 = vadd.f32 %v1767, %v2119
      %v2150 = vadd.f32 %v1768, %v2124
      %v2151 = vadd.f32 %v1769, %v2127
      %v2152 = vadd.f32 %v1770, %v2132
      %v2153 = vadd.f32 %v1771, %v2135
      %v2154 = vld [vmem:[%s626] sm:$0xe]
      %v2155 = vld [vmem:[%s626 + $0xc] sm:$0xe]
      %v2156 = vld [vmem:[%s626 + $0x18] sm:$0xe]
      %v2157 = vld [vmem:[%s626 + $0x24] sm:$0xe]
      %v2158 = vld [vmem:[%s626 + $0x30] sm:$0xe]
      %v2159 = vld [vmem:[%s626 + $0x3c] sm:$0xe]
      %v2160 = vld [vmem:[%s626 + $0x48] sm:$0xe]
      %v2161 = vld [vmem:[%s626 + $0x54] sm:$0xe]
      %v2186 = vrot.slane %v2154, 5
      %v2187 = vrot.slane %v2186, 4
      %v2188 = vrot.slane %v1773, 5
      %v2189 = vsel %vm1351, %v2187, %v2188
      %v2190 = vrot.slane %v2188, 4
      %v2191 = vrot.slane %v1774, 5
      %v2192 = vsel %vm1351, %v2190, %v2191
      %v2193 = vrot.slane %v2155, 5
      %v2194 = vrot.slane %v2193, 4
      %v2195 = vrot.slane %v1776, 5
      %v2196 = vsel %vm1351, %v2194, %v2195
      %v2197 = vrot.slane %v2195, 4
      %v2198 = vrot.slane %v1777, 5
      %v2199 = vsel %vm1351, %v2197, %v2198
      %v2200 = vrot.slane %v2156, 5
      %v2201 = vrot.slane %v2200, 4
      %v2202 = vrot.slane %v1779, 5
      %v2203 = vsel %vm1351, %v2201, %v2202
      %v2204 = vrot.slane %v2202, 4
      %v2205 = vrot.slane %v1780, 5
      %v2206 = vsel %vm1351, %v2204, %v2205
      %v2207 = vrot.slane %v2157, 5
      %v2208 = vrot.slane %v2207, 4
      %v2209 = vrot.slane %v1782, 5
      %v2210 = vsel %vm1351, %v2208, %v2209
      %v2211 = vrot.slane %v2209, 4
      %v2212 = vrot.slane %v1783, 5
      %v2213 = vsel %vm1351, %v2211, %v2212
      %v2214 = vrot.slane %v2158, 5
      %v2215 = vrot.slane %v2214, 4
      %v2216 = vrot.slane %v1785, 5
      %v2217 = vsel %vm1351, %v2215, %v2216
      %v2218 = vrot.slane %v2216, 4
      %v2219 = vrot.slane %v1786, 5
      %v2220 = vsel %vm1351, %v2218, %v2219
      %v2221 = vrot.slane %v2159, 5
      %v2222 = vrot.slane %v2221, 4
      %v2223 = vrot.slane %v1788, 5
      %v2224 = vsel %vm1351, %v2222, %v2223
      %v2225 = vrot.slane %v2223, 4
      %v2226 = vrot.slane %v1789, 5
      %v2227 = vsel %vm1351, %v2225, %v2226
      %v2228 = vrot.slane %v2160, 5
      %v2229 = vrot.slane %v2228, 4
      %v2230 = vrot.slane %v1791, 5
      %v2231 = vsel %vm1351, %v2229, %v2230
      %v2232 = vrot.slane %v2230, 4
      %v2233 = vrot.slane %v1792, 5
      %v2234 = vsel %vm1351, %v2232, %v2233
      %v2235 = vrot.slane %v2161, 5
      %v2236 = vrot.slane %v2235, 4
      %v2237 = vrot.slane %v1794, 5
      %v2238 = vsel %vm1351, %v2236, %v2237
      %v2239 = vrot.slane %v2237, 4
      %v2240 = vrot.slane %v1795, 5
      %v2241 = vsel %vm1351, %v2239, %v2240
      %s2242 = scalar_lea.vmem %s3, 10
      %v2243 = vld [vmem:[%s2242] sm:$0x3]
      %v2244 = vunpack.c.l.b16 %v2189
      %v2245 = vunpack.c.l.b16 %v2192
      %v2246 = vunpack.c.l.b16 %v2196
      %v2247 = vunpack.c.l.b16 %v2199
      %v2248 = vunpack.c.l.b16 %v2203
      %v2249 = vunpack.c.l.b16 %v2206
      %v2250 = vunpack.c.l.b16 %v2210
      %v2251 = vunpack.c.l.b16 %v2213
      %v2252 = vunpack.c.l.b16 %v2217
      %v2253 = vunpack.c.l.b16 %v2220
      %v2254 = vunpack.c.l.b16 %v2224
      %v2255 = vunpack.c.l.b16 %v2227
      %v2256 = vunpack.c.l.b16 %v2231
      %v2257 = vunpack.c.l.b16 %v2234
      %v2258 = vunpack.c.l.b16 %v2238
      %v2259 = vunpack.c.l.b16 %v2241
      %v2260 = vpack.c.b16 %v2245, %v2244
      %v2261 = vpack.c.b16 %v2247, %v2246
      %v2262 = vpack.c.b16 %v2249, %v2248
      %v2263 = vpack.c.b16 %v2251, %v2250
      %v2264 = vpack.c.b16 %v2253, %v2252
      %v2265 = vpack.c.b16 %v2255, %v2254
      %v2266 = vpack.c.b16 %v2257, %v2256
      %v2267 = vpack.c.b16 %v2259, %v2258
      %v2269 = vsel %vm1035, %v2260, 0
      %v2272 = vsel %vm1035, %v2261, 0
      %v2275 = vsel %vm1035, %v2262, 0
      %v2278 = vsel %vm1035, %v2263, 0
      %v2281 = vsel %vm1035, %v2264, 0
      %v2284 = vsel %vm1035, %v2265, 0
      %v2287 = vsel %vm1035, %v2266, 0
      %v2290 = vsel %vm1035, %v2267, 0
      %v2293 = vsel %vm1060, %v2243, 0
      %2295 = vmatprep.subr.bf16.mxu0 0
      %2296 = vmatpush1.bf16.msra.mxu0 %v2293
      %2297 = vmatprep.subr.bf16.mxu0 0
      %2298 = vmatpush1.bf16.msra.mxu0 0
      %2299 = vmatprep.subr.bf16.mxu0 0
      %2300 = vmatpush1.bf16.msra.mxu0 0
      %2301 = vmatprep.subr.bf16.mxu0 0
      %2302 = vmatpush1.bf16.msra.mxu0 0
      %2303 = vmatprep.subr.bf16.mxu0 0
      %2304 = vmatpush1.bf16.msra.mxu0 0
      %2305 = vmatprep.subr.bf16.mxu0 0
      %2306 = vmatpush1.bf16.msra.mxu0 0
      %2307 = vmatprep.subr.bf16.mxu0 0
      %2308 = vmatpush1.bf16.msra.mxu0 0
      %2309 = vmatprep.subr.bf16.mxu0 0
      %2310 = vmatpush1.bf16.msra.mxu0 0
      %2311 = vmatprep.subr.bf16.mxu0 0
      %2312 = vmatpush1.bf16.msra.mxu0 0
      %2313 = vmatprep.subr.bf16.mxu0 0
      %2314 = vmatpush1.bf16.msra.mxu0 0
      %2315 = vmatprep.subr.bf16.mxu0 0
      %2316 = vmatpush1.bf16.msra.mxu0 0
      %2317 = vmatprep.subr.bf16.mxu0 0
      %2318 = vmatpush1.bf16.msra.mxu0 0
      %2319 = vmatprep.subr.bf16.mxu0 0
      %2320 = vmatpush1.bf16.msra.mxu0 0
      %2321 = vmatprep.subr.bf16.mxu0 0
      %2322 = vmatpush1.bf16.msra.mxu0 0
      %2323 = vmatprep.subr.bf16.mxu0 0
      %2324 = vmatpush1.bf16.msra.mxu0 0
      %2325 = vmatprep.subr.bf16.mxu0 0
      %2326 = vmatpush1.bf16.msra.mxu0 0
      %2327 = vmatprep.mubr.bf16.mxu0 0
      %2328 = vmatmul.mubr.bf16.gmra.mrb[0].mxu0 %v2269
      %v2329 = vpop.f32.mrb[0].mxu0
      %v2330 = vadd.f32 0.0, %v2329
      %v2331 = vpop.f32.mrb[0].mxu0
      %v2332 = vpop.f32.mrb[0].mxu0
      %v2333 = vadd.f32 0.0, %v2332
      %v2334 = vpop.f32.mrb[0].mxu0
      %2335 = vmatprep.mubr.bf16.mxu0 0
      %2336 = vmatmul.mubr.bf16.gmra.mrb[0].mxu0 %v2272
      %v2337 = vpop.f32.mrb[0].mxu0
      %v2338 = vadd.f32 0.0, %v2337
      %v2339 = vpop.f32.mrb[0].mxu0
      %v2340 = vpop.f32.mrb[0].mxu0
      %v2341 = vadd.f32 0.0, %v2340
      %v2342 = vpop.f32.mrb[0].mxu0
      %2343 = vmatprep.mubr.bf16.mxu0 0
      %2344 = vmatmul.mubr.bf16.gmra.mrb[0].mxu0 %v2275
      %v2345 = vpop.f32.mrb[0].mxu0
      %v2346 = vadd.f32 0.0, %v2345
      %v2347 = vpop.f32.mrb[0].mxu0
      %v2348 = vpop.f32.mrb[0].mxu0
      %v2349 = vadd.f32 0.0, %v2348
      %v2350 = vpop.f32.mrb[0].mxu0
      %2351 = vmatprep.mubr.bf16.mxu0 0
      %2352 = vmatmul.mubr.bf16.gmra.mrb[0].mxu0 %v2278
      %v2353 = vpop.f32.mrb[0].mxu0
      %v2354 = vadd.f32 0.0, %v2353
      %v2355 = vpop.f32.mrb[0].mxu0
      %v2356 = vpop.f32.mrb[0].mxu0
      %v2357 = vadd.f32 0.0, %v2356
      %v2358 = vpop.f32.mrb[0].mxu0
      %2359 = vmatprep.mubr.bf16.mxu0 0
      %2360 = vmatmul.mubr.bf16.gmra.mrb[0].mxu0 %v2281
      %v2361 = vpop.f32.mrb[0].mxu0
      %v2362 = vadd.f32 0.0, %v2361
      %v2363 = vpop.f32.mrb[0].mxu0
      %v2364 = vpop.f32.mrb[0].mxu0
      %v2365 = vadd.f32 0.0, %v2364
      %v2366 = vpop.f32.mrb[0].mxu0
      %2367 = vmatprep.mubr.bf16.mxu0 0
      %2368 = vmatmul.mubr.bf16.gmra.mrb[0].mxu0 %v2284
      %v2369 = vpop.f32.mrb[0].mxu0
      %v2370 = vadd.f32 0.0, %v2369
      %v2371 = vpop.f32.mrb[0].mxu0
      %v2372 = vpop.f32.mrb[0].mxu0
      %v2373 = vadd.f32 0.0, %v2372
      %v2374 = vpop.f32.mrb[0].mxu0
      %2375 = vmatprep.mubr.bf16.mxu0 0
      %2376 = vmatmul.mubr.bf16.gmra.mrb[0].mxu0 %v2287
      %v2377 = vpop.f32.mrb[0].mxu0
      %v2378 = vadd.f32 0.0, %v2377
      %v2379 = vpop.f32.mrb[0].mxu0
      %v2380 = vpop.f32.mrb[0].mxu0
      %v2381 = vadd.f32 0.0, %v2380
      %v2382 = vpop.f32.mrb[0].mxu0
      %2383 = vmatprep.mubr.bf16.mxu0 0
      %2384 = vmatmul.mubr.bf16.gmra.mrb[0].mxu0 %v2290
      %v2385 = vpop.f32.mrb[0].mxu0
      %v2386 = vadd.f32 0.0, %v2385
      %v2387 = vpop.f32.mrb[0].mxu0
      %v2388 = vpop.f32.mrb[0].mxu0
      %v2389 = vadd.f32 0.0, %v2388
      %v2390 = vpop.f32.mrb[0].mxu0
      %2391 = vdwg.mxu0
      %v2392 = vadd.f32 %v2138, %v2330
      %v2393 = vadd.f32 %v2139, %v2333
      %v2394 = vadd.f32 %v2140, %v2338
      %v2395 = vadd.f32 %v2141, %v2341
      %v2396 = vadd.f32 %v2142, %v2346
      %v2397 = vadd.f32 %v2143, %v2349
      %v2398 = vadd.f32 %v2144, %v2354
      %v2399 = vadd.f32 %v2145, %v2357
      %v2400 = vadd.f32 %v2146, %v2362
      %v2401 = vadd.f32 %v2147, %v2365
      %v2402 = vadd.f32 %v2148, %v2370
      %v2403 = vadd.f32 %v2149, %v2373
      %v2404 = vadd.f32 %v2150, %v2378
      %v2405 = vadd.f32 %v2151, %v2381
      %v2406 = vadd.f32 %v2152, %v2386
      %v2407 = vadd.f32 %v2153, %v2389
      %s2408 = scalar_lea.vmem [#allocation2], 24
      %v2409 = vld [vmem:[%s2408] sm:$0xf]
      %v2410 = vld [vmem:[%s2408 + $0x4] sm:$0xf]
      %v2411 = vld [vmem:[%s2408 + $0xc] sm:$0xf]
      %v2412 = vld [vmem:[%s2408 + $0x10] sm:$0xf]
      %v2413 = vld [vmem:[%s2408 + $0x18] sm:$0xf]
      %v2414 = vld [vmem:[%s2408 + $0x1c] sm:$0xf]
      %v2415 = vld [vmem:[%s2408 + $0x24] sm:$0xf]
      %v2416 = vld [vmem:[%s2408 + $0x28] sm:$0xf]
      %v2417 = vld [vmem:[%s2408 + $0x30] sm:$0xf]
      %v2418 = vld [vmem:[%s2408 + $0x34] sm:$0xf]
      %v2419 = vld [vmem:[%s2408 + $0x3c] sm:$0xf]
      %v2420 = vld [vmem:[%s2408 + $0x40] sm:$0xf]
      %v2421 = vld [vmem:[%s2408 + $0x48] sm:$0xf]
      %v2422 = vld [vmem:[%s2408 + $0x4c] sm:$0xf]
      %v2423 = vld [vmem:[%s2408 + $0x54] sm:$0xf]
      %v2424 = vld [vmem:[%s2408 + $0x58] sm:$0xf]
      %s2425 = scalar_lea.vmem %s3, 12
      %v2426 = vld [vmem:[%s2425] sm:$0x3]
      %v2443 = vunpack.c.l.b16 %v2409
      %v2444 = vunpack.c.l.b16 %v2410
      %v2445 = vunpack.c.l.b16 %v2411
      %v2446 = vunpack.c.l.b16 %v2412
      %v2447 = vunpack.c.l.b16 %v2413
      %v2448 = vunpack.c.l.b16 %v2414
      %v2449 = vunpack.c.l.b16 %v2415
      %v2450 = vunpack.c.l.b16 %v2416
      %v2451 = vunpack.c.l.b16 %v2417
      %v2452 = vunpack.c.l.b16 %v2418
      %v2453 = vunpack.c.l.b16 %v2419
      %v2454 = vunpack.c.l.b16 %v2420
      %v2455 = vunpack.c.l.b16 %v2421
      %v2456 = vunpack.c.l.b16 %v2422
      %v2457 = vunpack.c.l.b16 %v2423
      %v2458 = vunpack.c.l.b16 %v2424
      %v2459 = vpack.c.b16 %v2444, %v2443
      %v2460 = vpack.c.b16 %v2446, %v2445
      %v2461 = vpack.c.b16 %v2448, %v2447
      %v2462 = vpack.c.b16 %v2450, %v2449
      %v2463 = vpack.c.b16 %v2452, %v2451
      %v2464 = vpack.c.b16 %v2454, %v2453
      %v2465 = vpack.c.b16 %v2456, %v2455
      %v2466 = vpack.c.b16 %v2458, %v2457
      %v2468 = vsel %vm1035, %v2459, 0
      %v2471 = vsel %vm1035, %v2460, 0
      %v2474 = vsel %vm1035, %v2461, 0
      %v2477 = vsel %vm1035, %v2462, 0
      %v2480 = vsel %vm1035, %v2463, 0
      %v2483 = vsel %vm1035, %v2464, 0
      %v2486 = vsel %vm1035, %v2465, 0
      %v2489 = vsel %vm1035, %v2466, 0
      %v2492 = vsel %vm1060, %v2426, 0
      %2494 = vmatprep.subr.bf16.mxu0 0
      %2495 = vmatpush1.bf16.msra.mxu0 %v2492
      %2496 = vmatprep.subr.bf16.mxu0 0
      %2497 = vmatpush1.bf16.msra.mxu0 0
      %2498 = vmatprep.subr.bf16.mxu0 0
      %2499 = vmatpush1.bf16.msra.mxu0 0
      %2500 = vmatprep.subr.bf16.mxu0 0
      %2501 = vmatpush1.bf16.msra.mxu0 0
      %2502 = vmatprep.subr.bf16.mxu0 0
      %2503 = vmatpush1.bf16.msra.mxu0 0
      %2504 = vmatprep.subr.bf16.mxu0 0
      %2505 = vmatpush1.bf16.msra.mxu0 0
      %2506 = vmatprep.subr.bf16.mxu0 0
      %2507 = vmatpush1.bf16.msra.mxu0 0
      %2508 = vmatprep.subr.bf16.mxu0 0
      %2509 = vmatpush1.bf16.msra.mxu0 0
      %2510 = vmatprep.subr.bf16.mxu0 0
      %2511 = vmatpush1.bf16.msra.mxu0 0
      %2512 = vmatprep.subr.bf16.mxu0 0
      %2513 = vmatpush1.bf16.msra.mxu0 0
      %2514 = vmatprep.subr.bf16.mxu0 0
      %2515 = vmatpush1.bf16.msra.mxu0 0
      %2516 = vmatprep.subr.bf16.mxu0 0
      %2517 = vmatpush1.bf16.msra.mxu0 0
      %2518 = vmatprep.subr.bf16.mxu0 0
      %2519 = vmatpush1.bf16.msra.mxu0 0
      %2520 = vmatprep.subr.bf16.mxu0 0
      %2521 = vmatpush1.bf16.msra.mxu0 0
      %2522 = vmatprep.subr.bf16.mxu0 0
      %2523 = vmatpush1.bf16.msra.mxu0 0
      %2524 = vmatprep.subr.bf16.mxu0 0
      %2525 = vmatpush1.bf16.msra.mxu0 0
      %2526 = vmatprep.mubr.bf16.mxu0 0
      %2527 = vmatmul.mubr.bf16.gmra.mrb[0].mxu0 %v2468
      %v2528 = vpop.f32.mrb[0].mxu0
      %v2529 = vadd.f32 0.0, %v2528
      %v2530 = vpop.f32.mrb[0].mxu0
      %v2531 = vpop.f32.mrb[0].mxu0
      %v2532 = vadd.f32 0.0, %v2531
      %v2533 = vpop.f32.mrb[0].mxu0
      %2534 = vmatprep.mubr.bf16.mxu0 0
      %2535 = vmatmul.mubr.bf16.gmra.mrb[0].mxu0 %v2471
      %v2536 = vpop.f32.mrb[0].mxu0
      %v2537 = vadd.f32 0.0, %v2536
      %v2538 = vpop.f32.mrb[0].mxu0
      %v2539 = vpop.f32.mrb[0].mxu0
      %v2540 = vadd.f32 0.0, %v2539
      %v2541 = vpop.f32.mrb[0].mxu0
      %2542 = vmatprep.mubr.bf16.mxu0 0
      %2543 = vmatmul.mubr.bf16.gmra.mrb[0].mxu0 %v2474
      %v2544 = vpop.f32.mrb[0].mxu0
      %v2545 = vadd.f32 0.0, %v2544
      %v2546 = vpop.f32.mrb[0].mxu0
      %v2547 = vpop.f32.mrb[0].mxu0
      %v2548 = vadd.f32 0.0, %v2547
      %v2549 = vpop.f32.mrb[0].mxu0
      %2550 = vmatprep.mubr.bf16.mxu0 0
      %2551 = vmatmul.mubr.bf16.gmra.mrb[0].mxu0 %v2477
      %v2552 = vpop.f32.mrb[0].mxu0
      %v2553 = vadd.f32 0.0, %v2552
      %v2554 = vpop.f32.mrb[0].mxu0
      %v2555 = vpop.f32.mrb[0].mxu0
      %v2556 = vadd.f32 0.0, %v2555
      %v2557 = vpop.f32.mrb[0].mxu0
      %2558 = vmatprep.mubr.bf16.mxu0 0
      %2559 = vmatmul.mubr.bf16.gmra.mrb[0].mxu0 %v2480
      %v2560 = vpop.f32.mrb[0].mxu0
      %v2561 = vadd.f32 0.0, %v2560
      %v2562 = vpop.f32.mrb[0].mxu0
      %v2563 = vpop.f32.mrb[0].mxu0
      %v2564 = vadd.f32 0.0, %v2563
      %v2565 = vpop.f32.mrb[0].mxu0
      %2566 = vmatprep.mubr.bf16.mxu0 0
      %2567 = vmatmul.mubr.bf16.gmra.mrb[0].mxu0 %v2483
      %v2568 = vpop.f32.mrb[0].mxu0
      %v2569 = vadd.f32 0.0, %v2568
      %v2570 = vpop.f32.mrb[0].mxu0
      %v2571 = vpop.f32.mrb[0].mxu0
      %v2572 = vadd.f32 0.0, %v2571
      %v2573 = vpop.f32.mrb[0].mxu0
      %2574 = vmatprep.mubr.bf16.mxu0 0
      %2575 = vmatmul.mubr.bf16.gmra.mrb[0].mxu0 %v2486
      %v2576 = vpop.f32.mrb[0].mxu0
      %v2577 = vadd.f32 0.0, %v2576
      %v2578 = vpop.f32.mrb[0].mxu0
      %v2579 = vpop.f32.mrb[0].mxu0
      %v2580 = vadd.f32 0.0, %v2579
      %v2581 = vpop.f32.mrb[0].mxu0
      %2582 = vmatprep.mubr.bf16.mxu0 0
      %2583 = vmatmul.mubr.bf16.gmra.mrb[0].mxu0 %v2489
      %v2584 = vpop.f32.mrb[0].mxu0
      %v2585 = vadd.f32 0.0, %v2584
      %v2586 = vpop.f32.mrb[0].mxu0
      %v2587 = vpop.f32.mrb[0].mxu0
      %v2588 = vadd.f32 0.0, %v2587
      %v2589 = vpop.f32.mrb[0].mxu0
      %2590 = vdwg.mxu0
      %v2591 = vadd.f32 %v2392, %v2529
      %v2592 = vadd.f32 %v2393, %v2532
      %v2593 = vadd.f32 %v2394, %v2537
      %v2594 = vadd.f32 %v2395, %v2540
      %v2595 = vadd.f32 %v2396, %v2545
      %v2596 = vadd.f32 %v2397, %v2548
      %v2597 = vadd.f32 %v2398, %v2553
      %v2598 = vadd.f32 %v2399, %v2556
      %v2599 = vadd.f32 %v2400, %v2561
      %v2600 = vadd.f32 %v2401, %v2564
      %v2601 = vadd.f32 %v2402, %v2569
      %v2602 = vadd.f32 %v2403, %v2572
      %v2603 = vadd.f32 %v2404, %v2577
      %v2604 = vadd.f32 %v2405, %v2580
      %v2605 = vadd.f32 %v2406, %v2585
      %v2606 = vadd.f32 %v2407, %v2588
      %v2607 = vld [vmem:[%s2408] sm:$0xf]
      %v2608 = vld [vmem:[%s2408 + $0x4] sm:$0xf]
      %v2609 = vld [vmem:[%s2408 + $0x8] sm:$0x1]
      %v2610 = vld [vmem:[%s2408 + $0xc] sm:$0xf]
      %v2611 = vld [vmem:[%s2408 + $0x10] sm:$0xf]
      %v2612 = vld [vmem:[%s2408 + $0x14] sm:$0x1]
      %v2613 = vld [vmem:[%s2408 + $0x18] sm:$0xf]
      %v2614 = vld [vmem:[%s2408 + $0x1c] sm:$0xf]
      %v2615 = vld [vmem:[%s2408 + $0x20] sm:$0x1]
      %v2616 = vld [vmem:[%s2408 + $0x24] sm:$0xf]
      %v2617 = vld [vmem:[%s2408 + $0x28] sm:$0xf]
      %v2618 = vld [vmem:[%s2408 + $0x2c] sm:$0x1]
      %v2619 = vld [vmem:[%s2408 + $0x30] sm:$0xf]
      %v2620 = vld [vmem:[%s2408 + $0x34] sm:$0xf]
      %v2621 = vld [vmem:[%s2408 + $0x38] sm:$0x1]
      %v2622 = vld [vmem:[%s2408 + $0x3c] sm:$0xf]
      %v2623 = vld [vmem:[%s2408 + $0x40] sm:$0xf]
      %v2624 = vld [vmem:[%s2408 + $0x44] sm:$0x1]
      %v2625 = vld [vmem:[%s2408 + $0x48] sm:$0xf]
      %v2626 = vld [vmem:[%s2408 + $0x4c] sm:$0xf]
      %v2627 = vld [vmem:[%s2408 + $0x50] sm:$0x1]
      %v2628 = vld [vmem:[%s2408 + $0x54] sm:$0xf]
      %v2629 = vld [vmem:[%s2408 + $0x58] sm:$0xf]
      %v2630 = vld [vmem:[%s2408 + $0x5c] sm:$0x1]
      %v2632 = vshrl.u32 %v2607, 16
      %v2634 = vrot.slane %v2632, 4
      %v2635 = vshll.u32 %v2607, 16
      %v2637 = vrot.slane %v2635, 5
      %v2638 = vor.u32 %v2634, %v2637
      %v2639 = vrot.slane %v2638, 4
      %v2641 = vshll.u32 %v2608, 16
      %v2643 = vrot.slane %v2641, 5
      %v2644 = vsel %vm816, %v2639, %v2643
      %v2645 = vshrl.u32 %v2608, 16
      %v2647 = vrot.slane %v2645, 4
      %v2648 = vor.u32 %v2647, %v2643
      %v2649 = vrot.slane %v2648, 4
      %v2651 = vshll.u32 %v2609, 16
      %v2653 = vrot.slane %v2651, 5
      %v2654 = vsel %vm816, %v2649, %v2653
      %v2656 = vshrl.u32 %v2610, 16
      %v2658 = vrot.slane %v2656, 4
      %v2659 = vshll.u32 %v2610, 16
      %v2661 = vrot.slane %v2659, 5
      %v2662 = vor.u32 %v2658, %v2661
      %v2663 = vrot.slane %v2662, 4
      %v2665 = vshll.u32 %v2611, 16
      %v2667 = vrot.slane %v2665, 5
      %v2668 = vsel %vm816, %v2663, %v2667
      %v2669 = vshrl.u32 %v2611, 16
      %v2671 = vrot.slane %v2669, 4
      %v2672 = vor.u32 %v2671, %v2667
      %v2673 = vrot.slane %v2672, 4
      %v2675 = vshll.u32 %v2612, 16
      %v2677 = vrot.slane %v2675, 5
      %v2678 = vsel %vm816, %v2673, %v2677
      %v2680 = vshrl.u32 %v2613, 16
      %v2682 = vrot.slane %v2680, 4
      %v2683 = vshll.u32 %v2613, 16
      %v2685 = vrot.slane %v2683, 5
      %v2686 = vor.u32 %v2682, %v2685
      %v2687 = vrot.slane %v2686, 4
      %v2689 = vshll.u32 %v2614, 16
      %v2691 = vrot.slane %v2689, 5
      %v2692 = vsel %vm816, %v2687, %v2691
      %v2693 = vshrl.u32 %v2614, 16
      %v2695 = vrot.slane %v2693, 4
      %v2696 = vor.u32 %v2695, %v2691
      %v2697 = vrot.slane %v2696, 4
      %v2699 = vshll.u32 %v2615, 16
      %v2701 = vrot.slane %v2699, 5
      %v2702 = vsel %vm816, %v2697, %v2701
      %v2704 = vshrl.u32 %v2616, 16
      %v2706 = vrot.slane %v2704, 4
      %v2707 = vshll.u32 %v2616, 16
      %v2709 = vrot.slane %v2707, 5
      %v2710 = vor.u32 %v2706, %v2709
      %v2711 = vrot.slane %v2710, 4
      %v2713 = vshll.u32 %v2617, 16
      %v2715 = vrot.slane %v2713, 5
      %v2716 = vsel %vm816, %v2711, %v2715
      %v2717 = vshrl.u32 %v2617, 16
      %v2719 = vrot.slane %v2717, 4
      %v2720 = vor.u32 %v2719, %v2715
      %v2721 = vrot.slane %v2720, 4
      %v2723 = vshll.u32 %v2618, 16
      %v2725 = vrot.slane %v2723, 5
      %v2726 = vsel %vm816, %v2721, %v2725
      %v2728 = vshrl.u32 %v2619, 16
      %v2730 = vrot.slane %v2728, 4
      %v2731 = vshll.u32 %v2619, 16
      %v2733 = vrot.slane %v2731, 5
      %v2734 = vor.u32 %v2730, %v2733
      %v2735 = vrot.slane %v2734, 4
      %v2737 = vshll.u32 %v2620, 16
      %v2739 = vrot.slane %v2737, 5
      %v2740 = vsel %vm816, %v2735, %v2739
      %v2741 = vshrl.u32 %v2620, 16
      %v2743 = vrot.slane %v2741, 4
      %v2744 = vor.u32 %v2743, %v2739
      %v2745 = vrot.slane %v2744, 4
      %v2747 = vshll.u32 %v2621, 16
      %v2749 = vrot.slane %v2747, 5
      %v2750 = vsel %vm816, %v2745, %v2749
      %v2752 = vshrl.u32 %v2622, 16
      %v2754 = vrot.slane %v2752, 4
      %v2755 = vshll.u32 %v2622, 16
      %v2757 = vrot.slane %v2755, 5
      %v2758 = vor.u32 %v2754, %v2757
      %v2759 = vrot.slane %v2758, 4
      %v2761 = vshll.u32 %v2623, 16
      %v2763 = vrot.slane %v2761, 5
      %v2764 = vsel %vm816, %v2759, %v2763
      %v2765 = vshrl.u32 %v2623, 16
      %v2767 = vrot.slane %v2765, 4
      %v2768 = vor.u32 %v2767, %v2763
      %v2769 = vrot.slane %v2768, 4
      %v2771 = vshll.u32 %v2624, 16
      %v2773 = vrot.slane %v2771, 5
      %v2774 = vsel %vm816, %v2769, %v2773
      %v2776 = vshrl.u32 %v2625, 16
      %v2778 = vrot.slane %v2776, 4
      %v2779 = vshll.u32 %v2625, 16
      %v2781 = vrot.slane %v2779, 5
      %v2782 = vor.u32 %v2778, %v2781
      %v2783 = vrot.slane %v2782, 4
      %v2785 = vshll.u32 %v2626, 16
      %v2787 = vrot.slane %v2785, 5
      %v2788 = vsel %vm816, %v2783, %v2787
      %v2789 = vshrl.u32 %v2626, 16
      %v2791 = vrot.slane %v2789, 4
      %v2792 = vor.u32 %v2791, %v2787
      %v2793 = vrot.slane %v2792, 4
      %v2795 = vshll.u32 %v2627, 16
      %v2797 = vrot.slane %v2795, 5
      %v2798 = vsel %vm816, %v2793, %v2797
      %v2800 = vshrl.u32 %v2628, 16
      %v2802 = vrot.slane %v2800, 4
      %v2803 = vshll.u32 %v2628, 16
      %v2805 = vrot.slane %v2803, 5
      %v2806 = vor.u32 %v2802, %v2805
      %v2807 = vrot.slane %v2806, 4
      %v2809 = vshll.u32 %v2629, 16
      %v2811 = vrot.slane %v2809, 5
      %v2812 = vsel %vm816, %v2807, %v2811
      %v2813 = vshrl.u32 %v2629, 16
      %v2815 = vrot.slane %v2813, 4
      %v2816 = vor.u32 %v2815, %v2811
      %v2817 = vrot.slane %v2816, 4
      %v2819 = vshll.u32 %v2630, 16
      %v2821 = vrot.slane %v2819, 5
      %v2822 = vsel %vm816, %v2817, %v2821
      %s2823 = scalar_lea.vmem %s3, 14
      %v2824 = vld [vmem:[%s2823] sm:$0x3]
      %v2825 = vunpack.c.l.b16 %v2644
      %v2826 = vunpack.c.l.b16 %v2654
      %v2827 = vunpack.c.l.b16 %v2668
      %v2828 = vunpack.c.l.b16 %v2678
      %v2829 = vunpack.c.l.b16 %v2692
      %v2830 = vunpack.c.l.b16 %v2702
      %v2831 = vunpack.c.l.b16 %v2716
      %v2832 = vunpack.c.l.b16 %v2726
      %v2833 = vunpack.c.l.b16 %v2740
      %v2834 = vunpack.c.l.b16 %v2750
      %v2835 = vunpack.c.l.b16 %v2764
      %v2836 = vunpack.c.l.b16 %v2774
      %v2837 = vunpack.c.l.b16 %v2788
      %v2838 = vunpack.c.l.b16 %v2798
      %v2839 = vunpack.c.l.b16 %v2812
      %v2840 = vunpack.c.l.b16 %v2822
      %v2841 = vpack.c.b16 %v2826, %v2825
      %v2842 = vpack.c.b16 %v2828, %v2827
      %v2843 = vpack.c.b16 %v2830, %v2829
      %v2844 = vpack.c.b16 %v2832, %v2831
      %v2845 = vpack.c.b16 %v2834, %v2833
      %v2846 = vpack.c.b16 %v2836, %v2835
      %v2847 = vpack.c.b16 %v2838, %v2837
      %v2848 = vpack.c.b16 %v2840, %v2839
      %v2850 = vsel %vm1035, %v2841, 0
      %v2853 = vsel %vm1035, %v2842, 0
      %v2856 = vsel %vm1035, %v2843, 0
      %v2859 = vsel %vm1035, %v2844, 0
      %v2862 = vsel %vm1035, %v2845, 0
      %v2865 = vsel %vm1035, %v2846, 0
      %v2868 = vsel %vm1035, %v2847, 0
      %v2871 = vsel %vm1035, %v2848, 0
      %v2874 = vsel %vm1060, %v2824, 0
      %2876 = vmatprep.subr.bf16.mxu0 0
      %2877 = vmatpush1.bf16.msra.mxu0 %v2874
      %2878 = vmatprep.subr.bf16.mxu0 0
      %2879 = vmatpush1.bf16.msra.mxu0 0
      %2880 = vmatprep.subr.bf16.mxu0 0
      %2881 = vmatpush1.bf16.msra.mxu0 0
      %2882 = vmatprep.subr.bf16.mxu0 0
      %2883 = vmatpush1.bf16.msra.mxu0 0
      %2884 = vmatprep.subr.bf16.mxu0 0
      %2885 = vmatpush1.bf16.msra.mxu0 0
      %2886 = vmatprep.subr.bf16.mxu0 0
      %2887 = vmatpush1.bf16.msra.mxu0 0
      %2888 = vmatprep.subr.bf16.mxu0 0
      %2889 = vmatpush1.bf16.msra.mxu0 0
      %2890 = vmatprep.subr.bf16.mxu0 0
      %2891 = vmatpush1.bf16.msra.mxu0 0
      %2892 = vmatprep.subr.bf16.mxu0 0
      %2893 = vmatpush1.bf16.msra.mxu0 0
      %2894 = vmatprep.subr.bf16.mxu0 0
      %2895 = vmatpush1.bf16.msra.mxu0 0
      %2896 = vmatprep.subr.bf16.mxu0 0
      %2897 = vmatpush1.bf16.msra.mxu0 0
      %2898 = vmatprep.subr.bf16.mxu0 0
      %2899 = vmatpush1.bf16.msra.mxu0 0
      %2900 = vmatprep.subr.bf16.mxu0 0
      %2901 = vmatpush1.bf16.msra.mxu0 0
      %2902 = vmatprep.subr.bf16.mxu0 0
      %2903 = vmatpush1.bf16.msra.mxu0 0
      %2904 = vmatprep.subr.bf16.mxu0 0
      %2905 = vmatpush1.bf16.msra.mxu0 0
      %2906 = vmatprep.subr.bf16.mxu0 0
      %2907 = vmatpush1.bf16.msra.mxu0 0
      %2908 = vmatprep.mubr.bf16.mxu0 0
      %2909 = vmatmul.mubr.bf16.gmra.mrb[0].mxu0 %v2850
      %v2910 = vpop.f32.mrb[0].mxu0
      %v2911 = vadd.f32 0.0, %v2910
      %v2912 = vpop.f32.mrb[0].mxu0
      %v2913 = vpop.f32.mrb[0].mxu0
      %v2914 = vadd.f32 0.0, %v2913
      %v2915 = vpop.f32.mrb[0].mxu0
      %2916 = vmatprep.mubr.bf16.mxu0 0
      %2917 = vmatmul.mubr.bf16.gmra.mrb[0].mxu0 %v2853
      %v2918 = vpop.f32.mrb[0].mxu0
      %v2919 = vadd.f32 0.0, %v2918
      %v2920 = vpop.f32.mrb[0].mxu0
      %v2921 = vpop.f32.mrb[0].mxu0
      %v2922 = vadd.f32 0.0, %v2921
      %v2923 = vpop.f32.mrb[0].mxu0
      %2924 = vmatprep.mubr.bf16.mxu0 0
      %2925 = vmatmul.mubr.bf16.gmra.mrb[0].mxu0 %v2856
      %v2926 = vpop.f32.mrb[0].mxu0
      %v2927 = vadd.f32 0.0, %v2926
      %v2928 = vpop.f32.mrb[0].mxu0
      %v2929 = vpop.f32.mrb[0].mxu0
      %v2930 = vadd.f32 0.0, %v2929
      %v2931 = vpop.f32.mrb[0].mxu0
      %2932 = vmatprep.mubr.bf16.mxu0 0
      %2933 = vmatmul.mubr.bf16.gmra.mrb[0].mxu0 %v2859
      %v2934 = vpop.f32.mrb[0].mxu0
      %v2935 = vadd.f32 0.0, %v2934
      %v2936 = vpop.f32.mrb[0].mxu0
      %v2937 = vpop.f32.mrb[0].mxu0
      %v2938 = vadd.f32 0.0, %v2937
      %v2939 = vpop.f32.mrb[0].mxu0
      %2940 = vmatprep.mubr.bf16.mxu0 0
      %2941 = vmatmul.mubr.bf16.gmra.mrb[0].mxu0 %v2862
      %v2942 = vpop.f32.mrb[0].mxu0
      %v2943 = vadd.f32 0.0, %v2942
      %v2944 = vpop.f32.mrb[0].mxu0
      %v2945 = vpop.f32.mrb[0].mxu0
      %v2946 = vadd.f32 0.0, %v2945
      %v2947 = vpop.f32.mrb[0].mxu0
      %2948 = vmatprep.mubr.bf16.mxu0 0
      %2949 = vmatmul.mubr.bf16.gmra.mrb[0].mxu0 %v2865
      %v2950 = vpop.f32.mrb[0].mxu0
      %v2951 = vadd.f32 0.0, %v2950
      %v2952 = vpop.f32.mrb[0].mxu0
      %v2953 = vpop.f32.mrb[0].mxu0
      %v2954 = vadd.f32 0.0, %v2953
      %v2955 = vpop.f32.mrb[0].mxu0
      %2956 = vmatprep.mubr.bf16.mxu0 0
      %2957 = vmatmul.mubr.bf16.gmra.mrb[0].mxu0 %v2868
      %v2958 = vpop.f32.mrb[0].mxu0
      %v2959 = vadd.f32 0.0, %v2958
      %v2960 = vpop.f32.mrb[0].mxu0
      %v2961 = vpop.f32.mrb[0].mxu0
      %v2962 = vadd.f32 0.0, %v2961
      %v2963 = vpop.f32.mrb[0].mxu0
      %2964 = vmatprep.mubr.bf16.mxu0 0
      %2965 = vmatmul.mubr.bf16.gmra.mrb[0].mxu0 %v2871
      %v2966 = vpop.f32.mrb[0].mxu0
      %v2967 = vadd.f32 0.0, %v2966
      %v2968 = vpop.f32.mrb[0].mxu0
      %v2969 = vpop.f32.mrb[0].mxu0
      %v2970 = vadd.f32 0.0, %v2969
      %v2971 = vpop.f32.mrb[0].mxu0
      %2972 = vdwg.mxu0
      %v2973 = vadd.f32 %v2591, %v2911
      %v2974 = vadd.f32 %v2592, %v2914
      %v2975 = vadd.f32 %v2593, %v2919
      %v2976 = vadd.f32 %v2594, %v2922
      %v2977 = vadd.f32 %v2595, %v2927
      %v2978 = vadd.f32 %v2596, %v2930
      %v2979 = vadd.f32 %v2597, %v2935
      %v2980 = vadd.f32 %v2598, %v2938
      %v2981 = vadd.f32 %v2599, %v2943
      %v2982 = vadd.f32 %v2600, %v2946
      %v2983 = vadd.f32 %v2601, %v2951
      %v2984 = vadd.f32 %v2602, %v2954
      %v2985 = vadd.f32 %v2603, %v2959
      %v2986 = vadd.f32 %v2604, %v2962
      %v2987 = vadd.f32 %v2605, %v2967
      %v2988 = vadd.f32 %v2606, %v2970
      %v2989 = vld [vmem:[%s2408] sm:$0xe]
      %v2990 = vld [vmem:[%s2408 + $0xc] sm:$0xe]
      %v2991 = vld [vmem:[%s2408 + $0x18] sm:$0xe]
      %v2992 = vld [vmem:[%s2408 + $0x24] sm:$0xe]
      %v2993 = vld [vmem:[%s2408 + $0x30] sm:$0xe]
      %v2994 = vld [vmem:[%s2408 + $0x3c] sm:$0xe]
      %v2995 = vld [vmem:[%s2408 + $0x48] sm:$0xe]
      %v2996 = vld [vmem:[%s2408 + $0x54] sm:$0xe]
      %v3021 = vrot.slane %v2989, 5
      %v3022 = vrot.slane %v3021, 4
      %v3023 = vrot.slane %v2608, 5
      %v3024 = vsel %vm1351, %v3022, %v3023
      %v3025 = vrot.slane %v3023, 4
      %v3026 = vrot.slane %v2609, 5
      %v3027 = vsel %vm1351, %v3025, %v3026
      %v3028 = vrot.slane %v2990, 5
      %v3029 = vrot.slane %v3028, 4
      %v3030 = vrot.slane %v2611, 5
      %v3031 = vsel %vm1351, %v3029, %v3030
      %v3032 = vrot.slane %v3030, 4
      %v3033 = vrot.slane %v2612, 5
      %v3034 = vsel %vm1351, %v3032, %v3033
      %v3035 = vrot.slane %v2991, 5
      %v3036 = vrot.slane %v3035, 4
      %v3037 = vrot.slane %v2614, 5
      %v3038 = vsel %vm1351, %v3036, %v3037
      %v3039 = vrot.slane %v3037, 4
      %v3040 = vrot.slane %v2615, 5
      %v3041 = vsel %vm1351, %v3039, %v3040
      %v3042 = vrot.slane %v2992, 5
      %v3043 = vrot.slane %v3042, 4
      %v3044 = vrot.slane %v2617, 5
      %v3045 = vsel %vm1351, %v3043, %v3044
      %v3046 = vrot.slane %v3044, 4
      %v3047 = vrot.slane %v2618, 5
      %v3048 = vsel %vm1351, %v3046, %v3047
      %v3049 = vrot.slane %v2993, 5
      %v3050 = vrot.slane %v3049, 4
      %v3051 = vrot.slane %v2620, 5
      %v3052 = vsel %vm1351, %v3050, %v3051
      %v3053 = vrot.slane %v3051, 4
      %v3054 = vrot.slane %v2621, 5
      %v3055 = vsel %vm1351, %v3053, %v3054
      %v3056 = vrot.slane %v2994, 5
      %v3057 = vrot.slane %v3056, 4
      %v3058 = vrot.slane %v2623, 5
      %v3059 = vsel %vm1351, %v3057, %v3058
      %v3060 = vrot.slane %v3058, 4
      %v3061 = vrot.slane %v2624, 5
      %v3062 = vsel %vm1351, %v3060, %v3061
      %v3063 = vrot.slane %v2995, 5
      %v3064 = vrot.slane %v3063, 4
      %v3065 = vrot.slane %v2626, 5
      %v3066 = vsel %vm1351, %v3064, %v3065
      %v3067 = vrot.slane %v3065, 4
      %v3068 = vrot.slane %v2627, 5
      %v3069 = vsel %vm1351, %v3067, %v3068
      %v3070 = vrot.slane %v2996, 5
      %v3071 = vrot.slane %v3070, 4
      %v3072 = vrot.slane %v2629, 5
      %v3073 = vsel %vm1351, %v3071, %v3072
      %v3074 = vrot.slane %v3072, 4
      %v3075 = vrot.slane %v2630, 5
      %v3076 = vsel %vm1351, %v3074, %v3075
      %s3077 = scalar_lea.vmem %s3, 16
      %v3078 = vld [vmem:[%s3077] sm:$0x3]
      %v3079 = vunpack.c.l.b16 %v3024
      %v3080 = vunpack.c.l.b16 %v3027
      %v3081 = vunpack.c.l.b16 %v3031
      %v3082 = vunpack.c.l.b16 %v3034
      %v3083 = vunpack.c.l.b16 %v3038
      %v3084 = vunpack.c.l.b16 %v3041
      %v3085 = vunpack.c.l.b16 %v3045
      %v3086 = vunpack.c.l.b16 %v3048
      %v3087 = vunpack.c.l.b16 %v3052
      %v3088 = vunpack.c.l.b16 %v3055
      %v3089 = vunpack.c.l.b16 %v3059
      %v3090 = vunpack.c.l.b16 %v3062
      %v3091 = vunpack.c.l.b16 %v3066
      %v3092 = vunpack.c.l.b16 %v3069
      %v3093 = vunpack.c.l.b16 %v3073
      %v3094 = vunpack.c.l.b16 %v3076
      %v3095 = vpack.c.b16 %v3080, %v3079
      %v3096 = vpack.c.b16 %v3082, %v3081
      %v3097 = vpack.c.b16 %v3084, %v3083
      %v3098 = vpack.c.b16 %v3086, %v3085
      %v3099 = vpack.c.b16 %v3088, %v3087
      %v3100 = vpack.c.b16 %v3090, %v3089
      %v3101 = vpack.c.b16 %v3092, %v3091
      %v3102 = vpack.c.b16 %v3094, %v3093
      %v3104 = vsel %vm1035, %v3095, 0
      %v3107 = vsel %vm1035, %v3096, 0
      %v3110 = vsel %vm1035, %v3097, 0
      %v3113 = vsel %vm1035, %v3098, 0
      %v3116 = vsel %vm1035, %v3099, 0
      %v3119 = vsel %vm1035, %v3100, 0
      %v3122 = vsel %vm1035, %v3101, 0
      %v3125 = vsel %vm1035, %v3102, 0
      %v3128 = vsel %vm1060, %v3078, 0
      %3130 = vmatprep.subr.bf16.mxu0 0
      %3131 = vmatpush1.bf16.msra.mxu0 %v3128
      %3132 = vmatprep.subr.bf16.mxu0 0
      %3133 = vmatpush1.bf16.msra.mxu0 0
      %3134 = vmatprep.subr.bf16.mxu0 0
      %3135 = vmatpush1.bf16.msra.mxu0 0
      %3136 = vmatprep.subr.bf16.mxu0 0
      %3137 = vmatpush1.bf16.msra.mxu0 0
      %3138 = vmatprep.subr.bf16.mxu0 0
      %3139 = vmatpush1.bf16.msra.mxu0 0
      %3140 = vmatprep.subr.bf16.mxu0 0
      %3141 = vmatpush1.bf16.msra.mxu0 0
      %3142 = vmatprep.subr.bf16.mxu0 0
      %3143 = vmatpush1.bf16.msra.mxu0 0
      %3144 = vmatprep.subr.bf16.mxu0 0
      %3145 = vmatpush1.bf16.msra.mxu0 0
      %3146 = vmatprep.subr.bf16.mxu0 0
      %3147 = vmatpush1.bf16.msra.mxu0 0
      %3148 = vmatprep.subr.bf16.mxu0 0
      %3149 = vmatpush1.bf16.msra.mxu0 0
      %3150 = vmatprep.subr.bf16.mxu0 0
      %3151 = vmatpush1.bf16.msra.mxu0 0
      %3152 = vmatprep.subr.bf16.mxu0 0
      %3153 = vmatpush1.bf16.msra.mxu0 0
      %3154 = vmatprep.subr.bf16.mxu0 0
      %3155 = vmatpush1.bf16.msra.mxu0 0
      %3156 = vmatprep.subr.bf16.mxu0 0
      %3157 = vmatpush1.bf16.msra.mxu0 0
      %3158 = vmatprep.subr.bf16.mxu0 0
      %3159 = vmatpush1.bf16.msra.mxu0 0
      %3160 = vmatprep.subr.bf16.mxu0 0
      %3161 = vmatpush1.bf16.msra.mxu0 0
      %3162 = vmatprep.mubr.bf16.mxu0 0
      %3163 = vmatmul.mubr.bf16.gmra.mrb[0].mxu0 %v3104
      %v3164 = vpop.f32.mrb[0].mxu0
      %v3165 = vadd.f32 0.0, %v3164
      %v3166 = vpop.f32.mrb[0].mxu0
      %v3167 = vpop.f32.mrb[0].mxu0
      %v3168 = vadd.f32 0.0, %v3167
      %v3169 = vpop.f32.mrb[0].mxu0
      %3170 = vmatprep.mubr.bf16.mxu0 0
      %3171 = vmatmul.mubr.bf16.gmra.mrb[0].mxu0 %v3107
      %v3172 = vpop.f32.mrb[0].mxu0
      %v3173 = vadd.f32 0.0, %v3172
      %v3174 = vpop.f32.mrb[0].mxu0
      %v3175 = vpop.f32.mrb[0].mxu0
      %v3176 = vadd.f32 0.0, %v3175
      %v3177 = vpop.f32.mrb[0].mxu0
      %3178 = vmatprep.mubr.bf16.mxu0 0
      %3179 = vmatmul.mubr.bf16.gmra.mrb[0].mxu0 %v3110
      %v3180 = vpop.f32.mrb[0].mxu0
      %v3181 = vadd.f32 0.0, %v3180
      %v3182 = vpop.f32.mrb[0].mxu0
      %v3183 = vpop.f32.mrb[0].mxu0
      %v3184 = vadd.f32 0.0, %v3183
      %v3185 = vpop.f32.mrb[0].mxu0
      %3186 = vmatprep.mubr.bf16.mxu0 0
      %3187 = vmatmul.mubr.bf16.gmra.mrb[0].mxu0 %v3113
      %v3188 = vpop.f32.mrb[0].mxu0
      %v3189 = vadd.f32 0.0, %v3188
      %v3190 = vpop.f32.mrb[0].mxu0
      %v3191 = vpop.f32.mrb[0].mxu0
      %v3192 = vadd.f32 0.0, %v3191
      %v3193 = vpop.f32.mrb[0].mxu0
      %3194 = vmatprep.mubr.bf16.mxu0 0
      %3195 = vmatmul.mubr.bf16.gmra.mrb[0].mxu0 %v3116
      %v3196 = vpop.f32.mrb[0].mxu0
      %v3197 = vadd.f32 0.0, %v3196
      %v3198 = vpop.f32.mrb[0].mxu0
      %v3199 = vpop.f32.mrb[0].mxu0
      %v3200 = vadd.f32 0.0, %v3199
      %v3201 = vpop.f32.mrb[0].mxu0
      %3202 = vmatprep.mubr.bf16.mxu0 0
      %3203 = vmatmul.mubr.bf16.gmra.mrb[0].mxu0 %v3119
      %v3204 = vpop.f32.mrb[0].mxu0
      %v3205 = vadd.f32 0.0, %v3204
      %v3206 = vpop.f32.mrb[0].mxu0
      %v3207 = vpop.f32.mrb[0].mxu0
      %v3208 = vadd.f32 0.0, %v3207
      %v3209 = vpop.f32.mrb[0].mxu0
      %3210 = vmatprep.mubr.bf16.mxu0 0
      %3211 = vmatmul.mubr.bf16.gmra.mrb[0].mxu0 %v3122
      %v3212 = vpop.f32.mrb[0].mxu0
      %v3213 = vadd.f32 0.0, %v3212
      %v3214 = vpop.f32.mrb[0].mxu0
      %v3215 = vpop.f32.mrb[0].mxu0
      %v3216 = vadd.f32 0.0, %v3215
      %v3217 = vpop.f32.mrb[0].mxu0
      %3218 = vmatprep.mubr.bf16.mxu0 0
      %3219 = vmatmul.mubr.bf16.gmra.mrb[0].mxu0 %v3125
      %v3220 = vpop.f32.mrb[0].mxu0
      %v3221 = vadd.f32 0.0, %v3220
      %v3222 = vpop.f32.mrb[0].mxu0
      %v3223 = vpop.f32.mrb[0].mxu0
      %v3224 = vadd.f32 0.0, %v3223
      %v3225 = vpop.f32.mrb[0].mxu0
      %3226 = vdwg.mxu0
      %v3227 = vadd.f32 %v2973, %v3165
      %v3228 = vadd.f32 %v2974, %v3168
      %v3229 = vadd.f32 %v2975, %v3173
      %v3230 = vadd.f32 %v2976, %v3176
      %v3231 = vadd.f32 %v2977, %v3181
      %v3232 = vadd.f32 %v2978, %v3184
      %v3233 = vadd.f32 %v2979, %v3189
      %v3234 = vadd.f32 %v2980, %v3192
      %v3235 = vadd.f32 %v2981, %v3197
      %v3236 = vadd.f32 %v2982, %v3200
      %v3237 = vadd.f32 %v2983, %v3205
      %v3238 = vadd.f32 %v2984, %v3208
      %v3239 = vadd.f32 %v2985, %v3213
      %v3240 = vadd.f32 %v2986, %v3216
      %v3241 = vadd.f32 %v2987, %v3221
      %v3242 = vadd.f32 %v2988, %v3224
      %3243 = vst.msk [vmem:[%s259] sm:$0xff] %vm1035, %v3227
      %3244 = vst.msk [vmem:[%s259 + $0x8] sm:$0xff] %vm1035, %v3228
      %3245 = vst.msk [vmem:[%s259 + $0x10] sm:$0xff] %vm1035, %v3229
      %3246 = vst.msk [vmem:[%s259 + $0x18] sm:$0xff] %vm1035, %v3230
      %3247 = vst.msk [vmem:[%s259 + $0x20] sm:$0xff] %vm1035, %v3231
      %3248 = vst.msk [vmem:[%s259 + $0x28] sm:$0xff] %vm1035, %v3232
      %3249 = vst.msk [vmem:[%s259 + $0x30] sm:$0xff] %vm1035, %v3233
      %3250 = vst.msk [vmem:[%s259 + $0x38] sm:$0xff] %vm1035, %v3234
      %3251 = vst.msk [vmem:[%s259 + $0x40] sm:$0xff] %vm1035, %v3235
      %3252 = vst.msk [vmem:[%s259 + $0x48] sm:$0xff] %vm1035, %v3236
      %3253 = vst.msk [vmem:[%s259 + $0x50] sm:$0xff] %vm1035, %v3237
      %3254 = vst.msk [vmem:[%s259 + $0x58] sm:$0xff] %vm1035, %v3238
      %3255 = vst.msk [vmem:[%s259 + $0x60] sm:$0xff] %vm1035, %v3239
      %3256 = vst.msk [vmem:[%s259 + $0x68] sm:$0xff] %vm1035, %v3240
      %3257 = vst.msk [vmem:[%s259 + $0x70] sm:$0xff] %vm1035, %v3241
      %3258 = vst.msk [vmem:[%s259 + $0x78] sm:$0xff] %vm1035, %v3242
      %v3259 = vsel %vm1035, %v3227, 0.0
      %v3260 = vsel %vm1035, %v3228, 0.0
      %v3261 = vadd.f32 %v3259, %v3260
      %v3262 = vsel %vm1035, %v3229, 0.0
      %v3263 = vadd.f32 %v3261, %v3262
      %v3264 = vsel %vm1035, %v3230, 0.0
      %v3265 = vadd.f32 %v3263, %v3264
      %v3266 = vsel %vm1035, %v3231, 0.0
      %v3267 = vadd.f32 %v3265, %v3266
      %v3268 = vsel %vm1035, %v3232, 0.0
      %v3269 = vadd.f32 %v3267, %v3268
      %v3270 = vsel %vm1035, %v3233, 0.0
      %v3271 = vadd.f32 %v3269, %v3270
      %v3272 = vsel %vm1035, %v3234, 0.0
      %v3273 = vadd.f32 %v3271, %v3272
      %v3274 = vsel %vm1035, %v3235, 0.0
      %v3275 = vadd.f32 %v3273, %v3274
      %v3276 = vsel %vm1035, %v3236, 0.0
      %v3277 = vadd.f32 %v3275, %v3276
      %v3278 = vsel %vm1035, %v3237, 0.0
      %v3279 = vadd.f32 %v3277, %v3278
      %v3280 = vsel %vm1035, %v3238, 0.0
      %v3281 = vadd.f32 %v3279, %v3280
      %v3282 = vsel %vm1035, %v3239, 0.0
      %v3283 = vadd.f32 %v3281, %v3282
      %v3284 = vsel %vm1035, %v3240, 0.0
      %v3285 = vadd.f32 %v3283, %v3284
      %v3286 = vsel %vm1035, %v3241, 0.0
      %v3287 = vadd.f32 %v3285, %v3286
      %v3288 = vsel %vm1035, %v3242, 0.0
      %v3289 = vadd.f32 %v3287, %v3288
      %v3290 = vrot.slane %v3289, 4
      %v3291 = vadd.f32 %v3289, %v3290
      %v3292 = vrot.slane %v3291, 2
      %v3293 = vadd.f32 %v3291, %v3292
      %v3294 = vrot.slane %v3293, 1
      %v3295 = vadd.f32 %v3293, %v3294
      %vm3296 = vcmask 24576
      %3297 = vst.msk [vmem:[%s268] sm:$0x1] %vm3296, %v3295
      %v3298 = vmul.f32 %v3227, %v3227
      %v3299 = vmul.f32 %v3228, %v3228
      %v3300 = vmul.f32 %v3229, %v3229
      %v3301 = vmul.f32 %v3230, %v3230
      %v3302 = vmul.f32 %v3231, %v3231
      %v3303 = vmul.f32 %v3232, %v3232
      %v3304 = vmul.f32 %v3233, %v3233
      %v3305 = vmul.f32 %v3234, %v3234
      %v3306 = vmul.f32 %v3235, %v3235
      %v3307 = vmul.f32 %v3236, %v3236
      %v3308 = vmul.f32 %v3237, %v3237
      %v3309 = vmul.f32 %v3238, %v3238
      %v3310 = vmul.f32 %v3239, %v3239
      %v3311 = vmul.f32 %v3240, %v3240
      %v3312 = vmul.f32 %v3241, %v3241
      %v3313 = vmul.f32 %v3242, %v3242
      %v3314 = vsel %vm1035, %v3298, 0.0
      %v3315 = vsel %vm1035, %v3299, 0.0
      %v3316 = vadd.f32 %v3314, %v3315
      %v3317 = vsel %vm1035, %v3300, 0.0
      %v3318 = vadd.f32 %v3316, %v3317
      %v3319 = vsel %vm1035, %v3301, 0.0
      %v3320 = vadd.f32 %v3318, %v3319
      %v3321 = vsel %vm1035, %v3302, 0.0
      %v3322 = vadd.f32 %v3320, %v3321
      %v3323 = vsel %vm1035, %v3303, 0.0
      %v3324 = vadd.f32 %v3322, %v3323
      %v3325 = vsel %vm1035, %v3304, 0.0
      %v3326 = vadd.f32 %v3324, %v3325
      %v3327 = vsel %vm1035, %v3305, 0.0
      %v3328 = vadd.f32 %v3326, %v3327
      %v3329 = vsel %vm1035, %v3306, 0.0
      %v3330 = vadd.f32 %v3328, %v3329
      %v3331 = vsel %vm1035, %v3307, 0.0
      %v3332 = vadd.f32 %v3330, %v3331
      %v3333 = vsel %vm1035, %v3308, 0.0
      %v3334 = vadd.f32 %v3332, %v3333
      %v3335 = vsel %vm1035, %v3309, 0.0
      %v3336 = vadd.f32 %v3334, %v3335
      %v3337 = vsel %vm1035, %v3310, 0.0
      %v3338 = vadd.f32 %v3336, %v3337
      %v3339 = vsel %vm1035, %v3311, 0.0
      %v3340 = vadd.f32 %v3338, %v3339
      %v3341 = vsel %vm1035, %v3312, 0.0
      %v3342 = vadd.f32 %v3340, %v3341
      %v3343 = vsel %vm1035, %v3313, 0.0
      %v3344 = vadd.f32 %v3342, %v3343
      %v3345 = vrot.slane %v3344, 4
      %v3346 = vadd.f32 %v3344, %v3345
      %v3347 = vrot.slane %v3346, 2
      %v3348 = vadd.f32 %v3346, %v3347
      %v3349 = vrot.slane %v3348, 1
      %v3350 = vadd.f32 %v3348, %v3349
      %3351 = vst.msk [vmem:[%s268 + $0x1] sm:$0x1] %vm3296, %v3350
      %s3352 = smul.u32 16, %s22
      %p3353 = scmp.lt.s32.totalorder %s21, 1
      %s3354 = scalar_select %p3353, %s21, 1
      %p3355 = scmp.lt.s32.totalorder %s3352, 31
      %s3356 = scalar_select %p3355, %s3352, 31
      %s3357 = smul.addr %s3354, 32
      %s3358 = sadd.s32 %s3356, %s3357
      %s3359 = smul.addr %s3358, 8
      %s3360 = scalar_lea.vmem %s4, %s3359
      %p3361 = scmp.lt.s32.totalorder %s21, 1
      %s3362 = scalar_select %p3361, %s21, 1
      %p3363 = scmp.lt.s32.totalorder %s22, 1
      %s3364 = scalar_select %p3363, %s22, 1
      %s3365 = smul.addr %s3362, 2
      %s3366 = sadd.s32 %s3364, %s3365
      %s3367 = smul.addr %s3366, 2
      %s3368 = scalar_lea.vmem %s5, %s3367
      // Predicated region
      $region37: #{up_forward.4} parent=35 // pred_check
        %p3369 = pneg %p138
      $region38: #{up_forward.4} parent=35 // pred_check_branch
        %3371 = sbr.rel (%p3369) target = $region40
      $region39: #{up_forward.4} parent=35 // pred_region
        %s3372 = smul.u32 16, %s22
      $region40: #{up_forward.4} parent=35 // pred_fallthru
        _
      // Predicated region
      $region41: #{up_forward.4} parent=35 // pred_check
        %p3373 = pneg %p166
      $region42: #{up_forward.4} parent=35 // pred_check_branch
        %3375 = sbr.rel (%p3373) target = $region44
      $region43: #{up_forward.4} parent=35 // pred_region
        _
      $region44: #{up_forward.4} parent=35 // pred_fallthru
        _
    $region36: #{up_forward.4} parent=5 // pred_fallthru
      _
    %p3376 = scmp.le.s32.totalorder 2, %s12
    // Predicated region
    $region45: #{up_forward.4} parent=5 // pred_check
      %p3377 = pneg %p3376
    $region46: #{up_forward.4} parent=5 // pred_check_branch
      %3379 = sbr.rel (%p3377) target = $region48
    $region47: #{up_forward.4} parent=5 // pred_region
      %s3380 = ssub.s32 %s12, 2
      // Predicated region
      $region49: #{up_forward.4} parent=47 // pred_check
        %p3381 = pneg %p144
      $region50: #{up_forward.4} parent=47 // pred_check_branch
        %3383 = sbr.rel (%p3381) target = $region52
      $region51: #{up_forward.4} parent=47 // pred_region
        %s3384 = smul.u32 16, %s24
        %p3385 = scmp.lt.s32.totalorder %s23, 1
        %s3386 = scalar_select %p3385, %s23, 1
        %p3387 = scmp.lt.s32.totalorder %s3384, 31
        %s3388 = scalar_select %p3387, %s3384, 31
        %s3389 = smul.addr %s3386, 32
        %s3390 = sadd.s32 %s3388, %s3389
        %s3391 = smul.addr %s3390, 8
        %s3392 = scalar_lea.vmem %s4, %s3391
      $region52: #{up_forward.4} parent=47 // pred_fallthru
        _
      // Predicated region
      $region53: #{up_forward.4} parent=47 // pred_check
        %p3393 = pneg %p172
      $region54: #{up_forward.4} parent=47 // pred_check_branch
        %3395 = sbr.rel (%p3393) target = $region56
      $region55: #{up_forward.4} parent=47 // pred_region
        %p3396 = scmp.lt.s32.totalorder %s23, 1
        %s3397 = scalar_select %p3396, %s23, 1
        %p3398 = scmp.lt.s32.totalorder %s24, 1
        %s3399 = scalar_select %p3398, %s24, 1
        %s3400 = smul.addr %s3397, 2
        %s3401 = sadd.s32 %s3399, %s3400
        %s3402 = smul.addr %s3401, 2
        %s3403 = scalar_lea.vmem %s5, %s3402
      $region56: #{up_forward.4} parent=47 // pred_fallthru
        _
    $region48: #{up_forward.4} parent=5 // pred_fallthru
      _
  $region6: #{up_forward.4} parent=0 // loop_footer
    %s16 = sadd.s32 1, %s12
  $region7: #{up_forward.4} parent=0 // loop_footer_branch
    %11 = sbr.rel target = $region3
  $region8: #{up_forward.4} parent=0 // loop_exit
    _

</llo_original>
